<compile_context>
chip_gen: v6e
topology: v6e:2x2x1
jax: 0.10.0
libtpu: 0.0.40
codegen_flags: <defaults>
</compile_context>

<pallas_src>
import jax
import jax.numpy as jnp
from jax.experimental import pallas as pl
from jax.experimental.pallas import tpu as pltpu


# -----------------------------------------------------------------------------
# Fused kernel
# -----------------------------------------------------------------------------
def _make_fused_bottleneck_kernel(H, W, Cin, Cmid, Cout, TH):
    def kernel(x_ref, w1_ref, b1_ref, w2_ref, b2_ref, w3_ref, b3_ref, o_ref):
        # x_ref : (H+2, W+2, Cin)  f32  -- full zero-padded image of this batch element
        # w1_ref: (Cin, Cmid)      bf16 (bn1 scale folded)   b1_ref: (1, Cmid) f32
        # w2_ref: (9, Cmid, Cmid)  bf16 (bn2 scale folded)   b2_ref: (1, Cmid) f32
        # w3_ref: (Cmid, Cout)     bf16 (bn3 scale folded)   b3_ref: (1, Cout) f32
        # o_ref : (TH, W, Cout)    f32
        j = pl.program_id(1)
        row0 = pl.multiple_of(j * TH, TH)          # window start (padded row coords)

        # ---- stage 1: conv1x1 + bn1 + relu over the whole (TH+2)-row window -------
        x_win = x_ref[pl.ds(row0, TH + 2), :, :]                    # (TH+2, W+2, Cin) f32
        y1 = jnp.einsum("hwc,cd->hwd", x_win.astype(jnp.bfloat16), w1_ref[...],
                        preferred_element_type=jnp.float32)
        y1 = jnp.maximum(y1 + b1_ref[...], 0.0)
        # zero positions outside the image (padded row p valid iff 1<=p<=H, col likewise);
        # these zeros are exactly conv2's pad=1 zero padding.
        prow = jax.lax.broadcasted_iota(jnp.int32, y1.shape, 0) + row0
        pcol = jax.lax.broadcasted_iota(jnp.int32, y1.shape, 1)
        valid = (prow >= 1) & (prow <= H) & (pcol >= 1) & (pcol <= W)
        y1 = jnp.where(valid, y1, 0.0).astype(jnp.bfloat16)          # (TH+2, W+2, Cmid)

        # ---- stage 2: conv3x3 (pad=1) + bn2 + relu as 9 accumulating MXU taps ------
        y1_cols = [y1[:, kw:kw + W, :] for kw in range(3)]           # column-shifted views
        acc = jnp.zeros((TH, W, Cmid), jnp.float32)
        for kh in range(3):
            for kw in range(3):
                tap = y1_cols[kw][kh:kh + TH, :, :]                  # (TH, W, Cmid) bf16
                acc = acc + jnp.einsum("hwc,cd->hwd", tap, w2_ref[kh * 3 + kw],
                                       preferred_element_type=jnp.float32)
        y2 = jnp.maximum(acc + b2_ref[...], 0.0).astype(jnp.bfloat16)

        # ---- stage 3: conv1x1 + bn3 + residual add (eval drop_path == identity) + relu
        y3 = jnp.einsum("hwc,cd->hwd", y2, w3_ref[...],
                        preferred_element_type=jnp.float32) + b3_ref[...]
        identity = x_win[1:TH + 1, 1:W + 1, :]                       # (TH, W, Cin) f32
        o_ref[...] = jnp.maximum(identity + y3, 0.0)

    return kernel


# -----------------------------------------------------------------------------
# Wrapper
# -----------------------------------------------------------------------------
def _bn_fold(gamma, beta, mean, var, eps=1e-5):
    scale = gamma / jnp.sqrt(var + eps)
    bias = beta - mean * scale
    return scale.reshape(1, -1), bias.reshape(1, -1)


def _pick_block_h(H, block_h):
    if block_h is not None and 0 < block_h <= H and H % block_h == 0:
        return block_h
    if H <= 64:
        return H                       # whole image per grid step
    for d in range(64, 7, -1):         # largest divisor of H that is a multiple of 8
        if d % 8 == 0 and H % d == 0:
            return d
    return H


def _vmem_limit_bytes(H, W, Cin, Cmid, Cout, TH):
    f32, bf16 = 4, 2
    x_img = (H + 2) * (W + 2) * Cin * f32
    out_blk = TH * W * Cout * f32
    weights = (Cin * Cmid + 9 * Cmid * Cmid + Cmid * Cout) * bf16 + (2 * Cmid + Cout) * f32
    live = ((TH + 2) * (W + 2) * (Cin * f32 + Cmid * (f32 + 3 * bf16))
            + TH * W * (Cmid * (f32 + bf16) + 2 * Cout * f32))
    est = 2 * (x_img + out_blk + weights) + live        # double-buffered blocks + live values
    return int(min(max(2 * est, 32 * 1024 * 1024), 64 * 1024 * 1024))


def stoch_depth_bottleneck_forward(x_nchw, params, block_h=None):
    """x_nchw: (N, inplanes, H, W) float32.  Returns (N, planes*4, H, W) float32."""
    N, Cin, H, W = x_nchw.shape
    # NOTE: keep the surrounding model NHWC in practice to drop these transposes;
    # they are retained here only for a PyTorch-faithful NCHW interface.
    x = jnp.transpose(x_nchw, (0, 2, 3, 1))                       # NCHW -> NHWC
    # one zero row/col on each side (conv2's pad=1 halo), done once on the host so the
    # kernel needs no per-step scratch zeroing and no halo branches.
    x = jnp.pad(x, ((0, 0), (1, 1), (1, 1), (0, 0)))

    Cmid = params["w1"].shape[1]
    Cout = params["w3"].shape[1]
    assert Cout == Cin, "identity residual requires inplanes == planes*expansion"

    s1, b1 = _bn_fold(*params["bn1"])
    s2, b2 = _bn_fold(*params["bn2"])
    s3, b3 = _bn_fold(*params["bn3"])

    # Fold BN scales into the conv weights; matmul operands in bf16, f32 accumulation.
    w1f = (params["w1"] * s1).astype(jnp.bfloat16)                        # (Cin, Cmid)
    w2f = (params["w2"] * s2[0]).reshape(9, Cmid, Cmid).astype(jnp.bfloat16)
    w3f = (params["w3"] * s3).astype(jnp.bfloat16)                        # (Cmid, Cout)

    TH = _pick_block_h(H, block_h)
    n_hb = H // TH

    kernel = _make_fused_bottleneck_kernel(H, W, Cin, Cmid, Cout, TH)
    out_nhwc = pl.pallas_call(
        kernel,
        out_shape=jax.ShapeDtypeStruct((N, H, W, Cout), jnp.float32),
        grid=(N, n_hb),
        in_specs=[
            # Full padded image of batch n stays resident across its row blocks.
            pl.BlockSpec((None, H + 2, W + 2, Cin), lambda n, j: (n, 0, 0, 0)),
            pl.BlockSpec((Cin, Cmid), lambda n, j: (0, 0)),
            pl.BlockSpec((1, Cmid), lambda n, j: (0, 0)),
            pl.BlockSpec((9, Cmid, Cmid), lambda n, j: (0, 0, 0)),
            pl.BlockSpec((1, Cmid), lambda n, j: (0, 0)),
            pl.BlockSpec((Cmid, Cout), lambda n, j: (0, 0)),
            pl.BlockSpec((1, Cout), lambda n, j: (0, 0)),
        ],
        out_specs=pl.BlockSpec((None, TH, W, Cout), lambda n, j: (n, j, 0, 0)),
        compiler_params=pltpu.CompilerParams(
            dimension_semantics=("parallel", "parallel"),
            vmem_limit_bytes=_vmem_limit_bytes(H, W, Cin, Cmid, Cout, TH)),
    )(x, w1f, b1, w2f, b2, w3f, b3)

    return jnp.transpose(out_nhwc, (0, 3, 1, 2))                  # NHWC -> NCHW


# -----------------------------------------------------------------------------
# Pure-JAX reference (same math, via lax.conv, all f32) for correctness check
# -----------------------------------------------------------------------------
def reference_forward(x_nchw, params):
    x = jnp.transpose(x_nchw, (0, 2, 3, 1))
    dn = ("NHWC", "HWIO", "NHWC")

    def bn(y, p):
        g, b, m, v = p
        return (y - m) / jnp.sqrt(v + 1e-5) * g + b

    w1 = params["w1"].reshape(1, 1, *params["w1"].shape)
    w3 = params["w3"].reshape(1, 1, *params["w3"].shape)
    o = jax.lax.conv_general_dilated(x, w1, (1, 1), "VALID", dimension_numbers=dn)
    o = jax.nn.relu(bn(o, params["bn1"]))
    o = jax.lax.conv_general_dilated(o, params["w2"], (1, 1), "SAME", dimension_numbers=dn)
    o = jax.nn.relu(bn(o, params["bn2"]))
    o = jax.lax.conv_general_dilated(o, w3, (1, 1), "VALID", dimension_numbers=dn)
    o = bn(o, params["bn3"])
    o = jax.nn.relu(x + o)
    return jnp.transpose(o, (0, 3, 1, 2))


# -----------------------------------------------------------------------------
def make_params(key, inplanes, planes, base_width=64, groups=1):
    width = int(planes * (base_width / 64.0)) * groups
    outp = planes * 4
    ks = jax.random.split(key, 6)

    def bn_params(k, c):
        k1, k2, k3, k4 = jax.random.split(k, 4)
        gamma = 1.0 + 0.1 * jax.random.normal(k1, (c,), jnp.float32)
        beta = 0.1 * jax.random.normal(k2, (c,), jnp.float32)
        mean = 0.1 * jax.random.normal(k3, (c,), jnp.float32)
        var = jax.random.uniform(k4, (c,), jnp.float32, 0.5, 1.5)
        return (gamma, beta, mean, var)

    return {
        # conv weights stored kernel-ready: 1x1 as (Cin, Cout), 3x3 as (3,3,Cin,Cout)
        "w1": 0.1 * jax.random.normal(ks[0], (inplanes, width), jnp.float32),
        "w2": 0.1 * jax.random.normal(ks[1], (3, 3, width, width), jnp.float32),
        "w3": 0.1 * jax.random.normal(ks[2], (width, outp), jnp.float32),
        "bn1": bn_params(ks[3], width),
        "bn2": bn_params(ks[4], width),
        "bn3": bn_params(ks[5], outp),
    }


if __name__ == "__main__":
    key = jax.random.PRNGKey(0)
    kx, kp = jax.random.split(key)

    # inplanes = planes * expansion = 16 so downsample=None (identity residual)
    N, inplanes, planes, H, W = 2, 16, 4, 16, 16
    x = jax.random.normal(kx, (N, inplanes, H, W), jnp.float32)
    params = make_params(kp, inplanes, planes)

    ref = jax.block_until_ready(reference_forward(x, params))

    # Run with the default row block (TH = H, one block per image) and with an explicit
    # smaller block (TH = 8, grid=(2,2)) to exercise the boundary-mask / multi-block path.
    for bh in (None, 8):
        out = stoch_depth_bottleneck_forward(x, params, block_h=bh)
        out = jax.block_until_ready(out)
        assert out.shape == (N, planes * 4, H, W)
        max_err = float(jnp.max(jnp.abs(out - ref)))
        # bf16 matmul operands vs pure-f32 reference -> loose tolerance
        assert jnp.allclose(out, ref, rtol=2e-2, atol=2e-2), (bh, max_err)

    print("KERNEL_OK")
</pallas_src>

<mosaic_0001>
module attributes {stable_mosaic.version = 11 : i64} {
  func.func @kernel(%arg0: i32, %arg1: i32, %arg2: memref<1x18x18x16xf32, #tpu.memory_space<vmem>>, %arg3: memref<16x4xbf16, #tpu.memory_space<vmem>>, %arg4: memref<1x4xf32, #tpu.memory_space<vmem>>, %arg5: memref<9x4x4xbf16, #tpu.memory_space<vmem>>, %arg6: memref<1x4xf32, #tpu.memory_space<vmem>>, %arg7: memref<4x16xbf16, #tpu.memory_space<vmem>>, %arg8: memref<1x16xf32, #tpu.memory_space<vmem>>, %arg9: memref<1x16x16x16xf32, #tpu.memory_space<vmem>>) attributes {dimension_semantics = [#tpu.dimension_semantics<parallel>, #tpu.dimension_semantics<parallel>], iteration_bounds = array<i64: 2, 1>, scalar_prefetch = 0 : i64, scratch_operands = 0 : i64, tpu.core_type = #tpu.core_type<tc>, window_params = [{transform_indices = @transform_0, window_bounds = array<i64: 1, 18, 18, 16>}, {pipeline_mode = #tpu.pipeline_mode<synchronous>, transform_indices = @transform_1, window_bounds = array<i64: 16, 4>}, {pipeline_mode = #tpu.pipeline_mode<synchronous>, transform_indices = @transform_2, window_bounds = array<i64: 1, 4>}, {pipeline_mode = #tpu.pipeline_mode<synchronous>, transform_indices = @transform_3, window_bounds = array<i64: 9, 4, 4>}, {pipeline_mode = #tpu.pipeline_mode<synchronous>, transform_indices = @transform_4, window_bounds = array<i64: 1, 4>}, {pipeline_mode = #tpu.pipeline_mode<synchronous>, transform_indices = @transform_5, window_bounds = array<i64: 4, 16>}, {pipeline_mode = #tpu.pipeline_mode<synchronous>, transform_indices = @transform_6, window_bounds = array<i64: 1, 16>}, {transform_indices = @transform_7, window_bounds = array<i64: 1, 16, 16, 16>}]} {
    %c16_i32 = arith.constant 16 : i32
    %0 = arith.muli %arg1, %c16_i32 : i32
    %1 = tpu.assume_multiple %0, 16 : i32
    %c0 = arith.constant 0 : index
    %2 = arith.index_cast %1 : i32 to index
    %c0_0 = arith.constant 0 : index
    %c0_1 = arith.constant 0 : index
    %3 = vector.load %arg2[%c0, %2, %c0_0, %c0_1] : memref<1x18x18x16xf32, #tpu.memory_space<vmem>>, vector<1x18x18x16xf32>
    %4 = vector.shape_cast %3 : vector<1x18x18x16xf32> to vector<18x18x16xf32>
    %5 = arith.truncf %4 : vector<18x18x16xf32> to vector<18x18x16xbf16>
    %c0_2 = arith.constant 0 : index
    %c0_3 = arith.constant 0 : index
    %6 = vector.load %arg3[%c0_2, %c0_3] : memref<16x4xbf16, #tpu.memory_space<vmem>>, vector<16x4xbf16>
    "tpu.trace_start"() <{level = 10 : i32, message = "hwc,cd->hwd"}> : () -> ()
    %cst = arith.constant dense<0.000000e+00> : vector<18x18x4xf32>
    %7 = tpu.matmul %5, %6, %cst {dimension_numbers = #tpu.dot_dimension_numbers<[2], [0], [0, 1], [1], [0, 0, 0, 1, 1, 1], [], []>} : vector<18x18x16xbf16>, vector<16x4xbf16>, vector<18x18x4xf32> -> vector<18x18x4xf32>
    "tpu.trace_stop"() : () -> ()
    %c0_4 = arith.constant 0 : index
    %c0_5 = arith.constant 0 : index
    %8 = vector.load %arg4[%c0_4, %c0_5] : memref<1x4xf32, #tpu.memory_space<vmem>>, vector<1x4xf32>
    %9 = vector.shape_cast %8 : vector<1x4xf32> to vector<1x1x4xf32>
    %10 = vector.broadcast %9 : vector<1x1x4xf32> to vector<18x18x4xf32>
    %11 = arith.addf %7, %10 : vector<18x18x4xf32>
    %cst_6 = arith.constant 0.000000e+00 : f32
    %12 = vector.broadcast %cst_6 : f32 to vector<18x18x4xf32>
    %13 = arith.maximumf %11, %12 : vector<18x18x4xf32>
    %14 = tpu.iota {dimensions = array<i32: 0>} : vector<18x18x4xi32>
    %15 = vector.broadcast %1 : i32 to vector<18x18x4xi32>
    %16 = arith.addi %14, %15 : vector<18x18x4xi32>
    %17 = tpu.iota {dimensions = array<i32: 1>} : vector<18x18x4xi32>
    %c1_i32 = arith.constant 1 : i32
    %18 = vector.broadcast %c1_i32 : i32 to vector<18x18x4xi32>
    %19 = arith.cmpi sge, %16, %18 : vector<18x18x4xi32>
    %c16_i32_7 = arith.constant 16 : i32
    %20 = vector.broadcast %c16_i32_7 : i32 to vector<18x18x4xi32>
    %21 = arith.cmpi sle, %16, %20 : vector<18x18x4xi32>
    %22 = arith.andi %19, %21 : vector<18x18x4xi1>
    %c1_i32_8 = arith.constant 1 : i32
    %23 = vector.broadcast %c1_i32_8 : i32 to vector<18x18x4xi32>
    %24 = arith.cmpi sge, %17, %23 : vector<18x18x4xi32>
    %25 = arith.andi %22, %24 : vector<18x18x4xi1>
    %c16_i32_9 = arith.constant 16 : i32
    %26 = vector.broadcast %c16_i32_9 : i32 to vector<18x18x4xi32>
    %27 = arith.cmpi sle, %17, %26 : vector<18x18x4xi32>
    %28 = arith.andi %25, %27 : vector<18x18x4xi1>
    %cst_10 = arith.constant 0.000000e+00 : f32
    %29 = vector.broadcast %cst_10 : f32 to vector<18x18x4xf32>
    %30 = arith.select %28, %13, %29 : vector<18x18x4xi1>, vector<18x18x4xf32>
    %31 = arith.truncf %30 : vector<18x18x4xf32> to vector<18x18x4xbf16>
    %32 = vector.extract_strided_slice %31 {offsets = [0, 0, 0], sizes = [18, 16, 4], strides = [1, 1, 1]} : vector<18x18x4xbf16> to vector<18x16x4xbf16>
    %33 = vector.extract_strided_slice %31 {offsets = [0, 1, 0], sizes = [18, 16, 4], strides = [1, 1, 1]} : vector<18x18x4xbf16> to vector<18x16x4xbf16>
    %34 = vector.extract_strided_slice %31 {offsets = [0, 2, 0], sizes = [18, 16, 4], strides = [1, 1, 1]} : vector<18x18x4xbf16> to vector<18x16x4xbf16>
    %cst_11 = arith.constant 0.000000e+00 : f32
    %35 = vector.broadcast %cst_11 : f32 to vector<16x16x4xf32>
    %36 = vector.extract_strided_slice %32 {offsets = [0, 0, 0], sizes = [16, 16, 4], strides = [1, 1, 1]} : vector<18x16x4xbf16> to vector<16x16x4xbf16>
    %c0_12 = arith.constant 0 : index
    %c0_13 = arith.constant 0 : index
    %c0_14 = arith.constant 0 : index
    %37 = vector.load %arg5[%c0_12, %c0_13, %c0_14] : memref<9x4x4xbf16, #tpu.memory_space<vmem>>, vector<1x4x4xbf16>
    %38 = vector.shape_cast %37 : vector<1x4x4xbf16> to vector<4x4xbf16>
    "tpu.trace_start"() <{level = 10 : i32, message = "hwc,cd->hwd"}> : () -> ()
    %cst_15 = arith.constant dense<0.000000e+00> : vector<16x16x4xf32>
    %39 = tpu.matmul %36, %38, %cst_15 {dimension_numbers = #tpu.dot_dimension_numbers<[2], [0], [0, 1], [1], [0, 0, 0, 1, 1, 1], [], []>} : vector<16x16x4xbf16>, vector<4x4xbf16>, vector<16x16x4xf32> -> vector<16x16x4xf32>
    "tpu.trace_stop"() : () -> ()
    %40 = arith.addf %35, %39 : vector<16x16x4xf32>
    %41 = vector.extract_strided_slice %33 {offsets = [0, 0, 0], sizes = [16, 16, 4], strides = [1, 1, 1]} : vector<18x16x4xbf16> to vector<16x16x4xbf16>
    %c1 = arith.constant 1 : index
    %c0_16 = arith.constant 0 : index
    %c0_17 = arith.constant 0 : index
    %42 = vector.load %arg5[%c1, %c0_16, %c0_17] : memref<9x4x4xbf16, #tpu.memory_space<vmem>>, vector<1x4x4xbf16>
    %43 = vector.shape_cast %42 : vector<1x4x4xbf16> to vector<4x4xbf16>
    "tpu.trace_start"() <{level = 10 : i32, message = "hwc,cd->hwd"}> : () -> ()
    %cst_18 = arith.constant dense<0.000000e+00> : vector<16x16x4xf32>
    %44 = tpu.matmul %41, %43, %cst_18 {dimension_numbers = #tpu.dot_dimension_numbers<[2], [0], [0, 1], [1], [0, 0, 0, 1, 1, 1], [], []>} : vector<16x16x4xbf16>, vector<4x4xbf16>, vector<16x16x4xf32> -> vector<16x16x4xf32>
    "tpu.trace_stop"() : () -> ()
    %45 = arith.addf %40, %44 : vector<16x16x4xf32>
    %46 = vector.extract_strided_slice %34 {offsets = [0, 0, 0], sizes = [16, 16, 4], strides = [1, 1, 1]} : vector<18x16x4xbf16> to vector<16x16x4xbf16>
    %c2 = arith.constant 2 : index
    %c0_19 = arith.constant 0 : index
    %c0_20 = arith.constant 0 : index
    %47 = vector.load %arg5[%c2, %c0_19, %c0_20] : memref<9x4x4xbf16, #tpu.memory_space<vmem>>, vector<1x4x4xbf16>
    %48 = vector.shape_cast %47 : vector<1x4x4xbf16> to vector<4x4xbf16>
    "tpu.trace_start"() <{level = 10 : i32, message = "hwc,cd->hwd"}> : () -> ()
    %cst_21 = arith.constant dense<0.000000e+00> : vector<16x16x4xf32>
    %49 = tpu.matmul %46, %48, %cst_21 {dimension_numbers = #tpu.dot_dimension_numbers<[2], [0], [0, 1], [1], [0, 0, 0, 1, 1, 1], [], []>} : vector<16x16x4xbf16>, vector<4x4xbf16>, vector<16x16x4xf32> -> vector<16x16x4xf32>
    "tpu.trace_stop"() : () -> ()
    %50 = arith.addf %45, %49 : vector<16x16x4xf32>
    %51 = vector.extract_strided_slice %32 {offsets = [1, 0, 0], sizes = [16, 16, 4], strides = [1, 1, 1]} : vector<18x16x4xbf16> to vector<16x16x4xbf16>
    %c3 = arith.constant 3 : index
    %c0_22 = arith.constant 0 : index
    %c0_23 = arith.constant 0 : index
    %52 = vector.load %arg5[%c3, %c0_22, %c0_23] : memref<9x4x4xbf16, #tpu.memory_space<vmem>>, vector<1x4x4xbf16>
    %53 = vector.shape_cast %52 : vector<1x4x4xbf16> to vector<4x4xbf16>
    "tpu.trace_start"() <{level = 10 : i32, message = "hwc,cd->hwd"}> : () -> ()
    %cst_24 = arith.constant dense<0.000000e+00> : vector<16x16x4xf32>
    %54 = tpu.matmul %51, %53, %cst_24 {dimension_numbers = #tpu.dot_dimension_numbers<[2], [0], [0, 1], [1], [0, 0, 0, 1, 1, 1], [], []>} : vector<16x16x4xbf16>, vector<4x4xbf16>, vector<16x16x4xf32> -> vector<16x16x4xf32>
    "tpu.trace_stop"() : () -> ()
    %55 = arith.addf %50, %54 : vector<16x16x4xf32>
    %56 = vector.extract_strided_slice %33 {offsets = [1, 0, 0], sizes = [16, 16, 4], strides = [1, 1, 1]} : vector<18x16x4xbf16> to vector<16x16x4xbf16>
    %c4 = arith.constant 4 : index
    %c0_25 = arith.constant 0 : index
    %c0_26 = arith.constant 0 : index
    %57 = vector.load %arg5[%c4, %c0_25, %c0_26] : memref<9x4x4xbf16, #tpu.memory_space<vmem>>, vector<1x4x4xbf16>
    %58 = vector.shape_cast %57 : vector<1x4x4xbf16> to vector<4x4xbf16>
    "tpu.trace_start"() <{level = 10 : i32, message = "hwc,cd->hwd"}> : () -> ()
    %cst_27 = arith.constant dense<0.000000e+00> : vector<16x16x4xf32>
    %59 = tpu.matmul %56, %58, %cst_27 {dimension_numbers = #tpu.dot_dimension_numbers<[2], [0], [0, 1], [1], [0, 0, 0, 1, 1, 1], [], []>} : vector<16x16x4xbf16>, vector<4x4xbf16>, vector<16x16x4xf32> -> vector<16x16x4xf32>
    "tpu.trace_stop"() : () -> ()
    %60 = arith.addf %55, %59 : vector<16x16x4xf32>
    %61 = vector.extract_strided_slice %34 {offsets = [1, 0, 0], sizes = [16, 16, 4], strides = [1, 1, 1]} : vector<18x16x4xbf16> to vector<16x16x4xbf16>
    %c5 = arith.constant 5 : index
    %c0_28 = arith.constant 0 : index
    %c0_29 = arith.constant 0 : index
    %62 = vector.load %arg5[%c5, %c0_28, %c0_29] : memref<9x4x4xbf16, #tpu.memory_space<vmem>>, vector<1x4x4xbf16>
    %63 = vector.shape_cast %62 : vector<1x4x4xbf16> to vector<4x4xbf16>
    "tpu.trace_start"() <{level = 10 : i32, message = "hwc,cd->hwd"}> : () -> ()
    %cst_30 = arith.constant dense<0.000000e+00> : vector<16x16x4xf32>
    %64 = tpu.matmul %61, %63, %cst_30 {dimension_numbers = #tpu.dot_dimension_numbers<[2], [0], [0, 1], [1], [0, 0, 0, 1, 1, 1], [], []>} : vector<16x16x4xbf16>, vector<4x4xbf16>, vector<16x16x4xf32> -> vector<16x16x4xf32>
    "tpu.trace_stop"() : () -> ()
    %65 = arith.addf %60, %64 : vector<16x16x4xf32>
    %66 = vector.extract_strided_slice %32 {offsets = [2, 0, 0], sizes = [16, 16, 4], strides = [1, 1, 1]} : vector<18x16x4xbf16> to vector<16x16x4xbf16>
    %c6 = arith.constant 6 : index
    %c0_31 = arith.constant 0 : index
    %c0_32 = arith.constant 0 : index
    %67 = vector.load %arg5[%c6, %c0_31, %c0_32] : memref<9x4x4xbf16, #tpu.memory_space<vmem>>, vector<1x4x4xbf16>
    %68 = vector.shape_cast %67 : vector<1x4x4xbf16> to vector<4x4xbf16>
    "tpu.trace_start"() <{level = 10 : i32, message = "hwc,cd->hwd"}> : () -> ()
    %cst_33 = arith.constant dense<0.000000e+00> : vector<16x16x4xf32>
    %69 = tpu.matmul %66, %68, %cst_33 {dimension_numbers = #tpu.dot_dimension_numbers<[2], [0], [0, 1], [1], [0, 0, 0, 1, 1, 1], [], []>} : vector<16x16x4xbf16>, vector<4x4xbf16>, vector<16x16x4xf32> -> vector<16x16x4xf32>
    "tpu.trace_stop"() : () -> ()
    %70 = arith.addf %65, %69 : vector<16x16x4xf32>
    %71 = vector.extract_strided_slice %33 {offsets = [2, 0, 0], sizes = [16, 16, 4], strides = [1, 1, 1]} : vector<18x16x4xbf16> to vector<16x16x4xbf16>
    %c7 = arith.constant 7 : index
    %c0_34 = arith.constant 0 : index
    %c0_35 = arith.constant 0 : index
    %72 = vector.load %arg5[%c7, %c0_34, %c0_35] : memref<9x4x4xbf16, #tpu.memory_space<vmem>>, vector<1x4x4xbf16>
    %73 = vector.shape_cast %72 : vector<1x4x4xbf16> to vector<4x4xbf16>
    "tpu.trace_start"() <{level = 10 : i32, message = "hwc,cd->hwd"}> : () -> ()
    %cst_36 = arith.constant dense<0.000000e+00> : vector<16x16x4xf32>
    %74 = tpu.matmul %71, %73, %cst_36 {dimension_numbers = #tpu.dot_dimension_numbers<[2], [0], [0, 1], [1], [0, 0, 0, 1, 1, 1], [], []>} : vector<16x16x4xbf16>, vector<4x4xbf16>, vector<16x16x4xf32> -> vector<16x16x4xf32>
    "tpu.trace_stop"() : () -> ()
    %75 = arith.addf %70, %74 : vector<16x16x4xf32>
    %76 = vector.extract_strided_slice %34 {offsets = [2, 0, 0], sizes = [16, 16, 4], strides = [1, 1, 1]} : vector<18x16x4xbf16> to vector<16x16x4xbf16>
    %c8 = arith.constant 8 : index
    %c0_37 = arith.constant 0 : index
    %c0_38 = arith.constant 0 : index
    %77 = vector.load %arg5[%c8, %c0_37, %c0_38] : memref<9x4x4xbf16, #tpu.memory_space<vmem>>, vector<1x4x4xbf16>
    %78 = vector.shape_cast %77 : vector<1x4x4xbf16> to vector<4x4xbf16>
    "tpu.trace_start"() <{level = 10 : i32, message = "hwc,cd->hwd"}> : () -> ()
    %cst_39 = arith.constant dense<0.000000e+00> : vector<16x16x4xf32>
    %79 = tpu.matmul %76, %78, %cst_39 {dimension_numbers = #tpu.dot_dimension_numbers<[2], [0], [0, 1], [1], [0, 0, 0, 1, 1, 1], [], []>} : vector<16x16x4xbf16>, vector<4x4xbf16>, vector<16x16x4xf32> -> vector<16x16x4xf32>
    "tpu.trace_stop"() : () -> ()
    %80 = arith.addf %75, %79 : vector<16x16x4xf32>
    %c0_40 = arith.constant 0 : index
    %c0_41 = arith.constant 0 : index
    %81 = vector.load %arg6[%c0_40, %c0_41] : memref<1x4xf32, #tpu.memory_space<vmem>>, vector<1x4xf32>
    %82 = vector.shape_cast %81 : vector<1x4xf32> to vector<1x1x4xf32>
    %83 = vector.broadcast %82 : vector<1x1x4xf32> to vector<16x16x4xf32>
    %84 = arith.addf %80, %83 : vector<16x16x4xf32>
    %cst_42 = arith.constant 0.000000e+00 : f32
    %85 = vector.broadcast %cst_42 : f32 to vector<16x16x4xf32>
    %86 = arith.maximumf %84, %85 : vector<16x16x4xf32>
    %87 = arith.truncf %86 : vector<16x16x4xf32> to vector<16x16x4xbf16>
    %c0_43 = arith.constant 0 : index
    %c0_44 = arith.constant 0 : index
    %88 = vector.load %arg7[%c0_43, %c0_44] : memref<4x16xbf16, #tpu.memory_space<vmem>>, vector<4x16xbf16>
    "tpu.trace_start"() <{level = 10 : i32, message = "hwc,cd->hwd"}> : () -> ()
    %cst_45 = arith.constant dense<0.000000e+00> : vector<16x16x16xf32>
    %89 = tpu.matmul %87, %88, %cst_45 {dimension_numbers = #tpu.dot_dimension_numbers<[2], [0], [0, 1], [1], [0, 0, 0, 1, 1, 1], [], []>} : vector<16x16x4xbf16>, vector<4x16xbf16>, vector<16x16x16xf32> -> vector<16x16x16xf32>
    "tpu.trace_stop"() : () -> ()
    %c0_46 = arith.constant 0 : index
    %c0_47 = arith.constant 0 : index
    %90 = vector.load %arg8[%c0_46, %c0_47] : memref<1x16xf32, #tpu.memory_space<vmem>>, vector<1x16xf32>
    %91 = vector.shape_cast %90 : vector<1x16xf32> to vector<1x1x16xf32>
    %92 = vector.broadcast %91 : vector<1x1x16xf32> to vector<16x16x16xf32>
    %93 = arith.addf %89, %92 : vector<16x16x16xf32>
    %94 = vector.extract_strided_slice %4 {offsets = [1, 1, 0], sizes = [16, 16, 16], strides = [1, 1, 1]} : vector<18x18x16xf32> to vector<16x16x16xf32>
    %95 = arith.addf %94, %93 : vector<16x16x16xf32>
    %cst_48 = arith.constant 0.000000e+00 : f32
    %96 = vector.broadcast %cst_48 : f32 to vector<16x16x16xf32>
    %97 = arith.maximumf %95, %96 : vector<16x16x16xf32>
    %c0_49 = arith.constant 0 : index
    %c0_50 = arith.constant 0 : index
    %c0_51 = arith.constant 0 : index
    %c0_52 = arith.constant 0 : index
    %98 = vector.load %arg9[%c0_49, %c0_50, %c0_51, %c0_52] : memref<1x16x16x16xf32, #tpu.memory_space<vmem>>, vector<1x16x16x16xf32>
    %99 = vector.shape_cast %98 : vector<1x16x16x16xf32> to vector<16x16x16xf32>
    %100 = vector.shape_cast %97 : vector<16x16x16xf32> to vector<1x16x16x16xf32>
    tpu.vector_store %arg9[%c0_49, %c0_50, %c0_51, %c0_52], %100 {strides = array<i32>} : memref<1x16x16x16xf32, #tpu.memory_space<vmem>>, vector<1x16x16x16xf32>,
    return
  }
  func.func @transform_0(%arg0: i32, %arg1: i32) -> (i32, i32, i32, i32) {
    %c0_i32 = arith.constant 0 : i32
    %c0_i32_0 = arith.constant 0 : i32
    %c0_i32_1 = arith.constant 0 : i32
    %c0_i32_2 = arith.constant 0 : i32
    return %arg0, %c0_i32, %c0_i32_0, %c0_i32_1 : i32, i32, i32, i32
  }
  func.func @transform_1(%arg0: i32, %arg1: i32) -> (i32, i32) {
    %c0_i32 = arith.constant 0 : i32
    %c0_i32_0 = arith.constant 0 : i32
    %c0_i32_1 = arith.constant 0 : i32
    return %c0_i32, %c0_i32_0 : i32, i32
  }
  func.func @transform_2(%arg0: i32, %arg1: i32) -> (i32, i32) {
    %c0_i32 = arith.constant 0 : i32
    %c0_i32_0 = arith.constant 0 : i32
    %c0_i32_1 = arith.constant 0 : i32
    return %c0_i32, %c0_i32_0 : i32, i32
  }
  func.func @transform_3(%arg0: i32, %arg1: i32) -> (i32, i32, i32) {
    %c0_i32 = arith.constant 0 : i32
    %c0_i32_0 = arith.constant 0 : i32
    %c0_i32_1 = arith.constant 0 : i32
    %c0_i32_2 = arith.constant 0 : i32
    return %c0_i32, %c0_i32_0, %c0_i32_1 : i32, i32, i32
  }
  func.func @transform_4(%arg0: i32, %arg1: i32) -> (i32, i32) {
    %c0_i32 = arith.constant 0 : i32
    %c0_i32_0 = arith.constant 0 : i32
    %c0_i32_1 = arith.constant 0 : i32
    return %c0_i32, %c0_i32_0 : i32, i32
  }
  func.func @transform_5(%arg0: i32, %arg1: i32) -> (i32, i32) {
    %c0_i32 = arith.constant 0 : i32
    %c0_i32_0 = arith.constant 0 : i32
    %c0_i32_1 = arith.constant 0 : i32
    return %c0_i32, %c0_i32_0 : i32, i32
  }
  func.func @transform_6(%arg0: i32, %arg1: i32) -> (i32, i32) {
    %c0_i32 = arith.constant 0 : i32
    %c0_i32_0 = arith.constant 0 : i32
    %c0_i32_1 = arith.constant 0 : i32
    return %c0_i32, %c0_i32_0 : i32, i32
  }
  func.func @transform_7(%arg0: i32, %arg1: i32) -> (i32, i32, i32, i32) {
    %c0_i32 = arith.constant 0 : i32
    %c0_i32_0 = arith.constant 0 : i32
    %c0_i32_1 = arith.constant 0 : i32
    return %arg0, %arg1, %c0_i32, %c0_i32_0 : i32, i32, i32, i32
  }
}

</mosaic_0001>

<llo_original>
// kernel: tpu_custom_call.1
$region0: #{tpu_custom_call.1}
  #allocation0 [shape = 'u32[]', space=smem, size = 0x4, offset = 0x4, fixed_abs, tag = 'smem constant byte address 0x4 - core index']
  #allocation1 [shape = 'u32[144,128]{1,0:T(1,128)}', space=vmem, size = 0x12000, scoped, tag = 'internal scratch']
  %s0 = inlined_call_operand.vmem [shape: f32[2,18,18,16], index: 0, kind: input, shape index: {}]
  %s1 = inlined_call_operand.vmem [shape: bf16[16,4], index: 1, kind: input, shape index: {}]
  %s2 = inlined_call_operand.vmem [shape: f32[1,4], index: 2, kind: input, shape index: {}]
  %s3 = inlined_call_operand.vmem [shape: bf16[9,4,4], index: 3, kind: input, shape index: {}]
  %s4 = inlined_call_operand.vmem [shape: f32[1,4], index: 4, kind: input, shape index: {}]
  %s5 = inlined_call_operand.vmem [shape: bf16[4,16], index: 5, kind: input, shape index: {}]
  %s6 = inlined_call_operand.vmem [shape: f32[1,16], index: 6, kind: input, shape index: {}]
  %s7 = inlined_call_operand.hbm [shape: f32[2,16,16,16], index: 7, kind: output, shape index: {}]
  %s8 = sld [smem:[#allocation0]]
  $region61: #{tpu_custom_call.1} parent=0
    _
  %s10 = ssub.s32 1, %s8
  %s11 = scalar_select 0, %s10, %s8
  $region1: #{tpu_custom_call.1} parent=0
    #allocation2 [shape = 'u8[262144]{0}', space=vmem, size = 0x40000, scoped, tag = 'output window, operand 0']
    #allocation3 [shape = 's32[2]{0}', space=sflag, size = 0x8, scoped, tag = 'scoped memory for tpu_custom_call.1']
    %12 = vsyncpa [#allocation3], 0
    %s13 = scalar_lea.sflag [#allocation3], 1
    %14 = vsyncpa %s13, 0
    loop: start=0, step=1, limit=4
    $region2: #{tpu_custom_call.1} parent=1 // loop_pre_header
      _
    $region3: #{tpu_custom_call.1} parent=1 // loop_header
      %s16 = sphi 0, %s20
      %p17 = scmp.ge.s32.totalorder %s16, 4
      %s23 = sphi 0, %s35
      %s24 = sphi 0, %s31
      %s25 = sphi 0, %s23
      %s26 = sphi 0, %s24
      %s27 = sphi 0, %s25
      %s28 = sphi 0, %s26
      %s38 = sphi 0, %s40
      %s41 = sphi 0, %s38
      %s42 = sphi 0, %s41
      %s58 = sphi 0, %s42
      %s62 = sphi 0, %s62
      %s64 = sphi 0, %s62
      %s65 = sphi 0, %s64
      %s79 = sphi 0, %s65
      %s83 = sphi 0, %s83
      %s85 = sphi 0, %s83
      %s86 = sphi 0, %s85
      %s100 = sphi 0, %s86
      %s104 = sphi 0, %s104
      %s106 = sphi 0, %s104
      %s107 = sphi 0, %s106
      %s121 = sphi 0, %s107
      %s125 = sphi 0, %s125
      %s127 = sphi 0, %s125
      %s128 = sphi 0, %s127
      %s142 = sphi 0, %s128
      %s146 = sphi 0, %s146
      %s148 = sphi 0, %s146
      %s149 = sphi 0, %s148
      %s163 = sphi 0, %s149
      %s167 = sphi 0, %s167
      %s169 = sphi 0, %s167
      %s170 = sphi 0, %s169
      %s184 = sphi 0, %s170
      %s192 = sphi 0, %s194
      %s195 = sphi 0, %s192
      %s196 = sphi 0, %s195
      %s212 = sphi 0, %s196
    $region4: #{tpu_custom_call.1} parent=1 // loop_header_branch
      %19 = sbr.rel (%p17) target = $region8
    $region5: #{tpu_custom_call.1} parent=1 // loop_body
      %s21 = ssub.s32 %s16, 1
      %s22 = ssub.s32 %s16, 2
      %s29 = sadd.s32 1, %s24
      %p30 = scmp.ge.s32.totalorder %s29, 1
      %s31 = scalar_select %p30, 0, %s29
      %s32 = sadd.s32 1, %s23
      %s33 = scalar_select %p30, %s32, %s23
      %p34 = scmp.ge.s32.totalorder %s33, 2
      %s35 = scalar_select %p34, 0, %s33
      %s36 = ssub.s32 %s23, %s35
      %p37 = scmp.eq.s32.totalorder %s36, 0
      %s39 = sadd.s32 %s38, 1
      %s40 = scalar_select %p37, %s38, %s39
      %p43 = pneg %p37
      %p44 = scmp.eq.s32.totalorder %s16, 1
      %p45 = por %p43, %p44
      %p46 = scmp.ne.s32.totalorder %s38, %s41
      %p47 = scmp.eq.s32.totalorder %s16, 0
      %p48 = por %p46, %p47
      %p49 = scmp.ne.s32.totalorder %s38, %s41
      %p50 = scmp.eq.s32.totalorder %s21, 1
      %p51 = por %p49, %p50
      %p52 = scmp.ne.s32.totalorder %s41, %s42
      %p53 = scmp.eq.s32.totalorder %s21, 0
      %p54 = por %p52, %p53
      %p55 = scmp.ne.s32.totalorder %s41, %s42
      %p56 = scmp.eq.s32.totalorder %s22, 1
      %p57 = por %p55, %p56
      %p59 = scmp.ne.s32.totalorder %s42, %s58
      %p60 = scmp.eq.s32.totalorder %s22, 0
      %p61 = por %p59, %p60
      %s63 = sadd.s32 %s62, 1
      %p66 = scmp.eq.s32.totalorder %s16, 1
      %p67 = scmp.ne.s32.totalorder %s62, %s64
      %p68 = scmp.eq.s32.totalorder %s16, 0
      %p69 = por %p67, %p68
      %p70 = scmp.ne.s32.totalorder %s62, %s64
      %p71 = scmp.eq.s32.totalorder %s21, 1
      %p72 = por %p70, %p71
      %p73 = scmp.ne.s32.totalorder %s64, %s65
      %p74 = scmp.eq.s32.totalorder %s21, 0
      %p75 = por %p73, %p74
      %p76 = scmp.ne.s32.totalorder %s64, %s65
      %p77 = scmp.eq.s32.totalorder %s22, 1
      %p78 = por %p76, %p77
      %p80 = scmp.ne.s32.totalorder %s65, %s79
      %p81 = scmp.eq.s32.totalorder %s22, 0
      %p82 = por %p80, %p81
      %s84 = sadd.s32 %s83, 1
      %p87 = scmp.eq.s32.totalorder %s16, 1
      %p88 = scmp.ne.s32.totalorder %s83, %s85
      %p89 = scmp.eq.s32.totalorder %s16, 0
      %p90 = por %p88, %p89
      %p91 = scmp.ne.s32.totalorder %s83, %s85
      %p92 = scmp.eq.s32.totalorder %s21, 1
      %p93 = por %p91, %p92
      %p94 = scmp.ne.s32.totalorder %s85, %s86
      %p95 = scmp.eq.s32.totalorder %s21, 0
      %p96 = por %p94, %p95
      %p97 = scmp.ne.s32.totalorder %s85, %s86
      %p98 = scmp.eq.s32.totalorder %s22, 1
      %p99 = por %p97, %p98
      %p101 = scmp.ne.s32.totalorder %s86, %s100
      %p102 = scmp.eq.s32.totalorder %s22, 0
      %p103 = por %p101, %p102
      %s105 = sadd.s32 %s104, 1
      %p108 = scmp.eq.s32.totalorder %s16, 1
      %p109 = scmp.ne.s32.totalorder %s104, %s106
      %p110 = scmp.eq.s32.totalorder %s16, 0
      %p111 = por %p109, %p110
      %p112 = scmp.ne.s32.totalorder %s104, %s106
      %p113 = scmp.eq.s32.totalorder %s21, 1
      %p114 = por %p112, %p113
      %p115 = scmp.ne.s32.totalorder %s106, %s107
      %p116 = scmp.eq.s32.totalorder %s21, 0
      %p117 = por %p115, %p116
      %p118 = scmp.ne.s32.totalorder %s106, %s107
      %p119 = scmp.eq.s32.totalorder %s22, 1
      %p120 = por %p118, %p119
      %p122 = scmp.ne.s32.totalorder %s107, %s121
      %p123 = scmp.eq.s32.totalorder %s22, 0
      %p124 = por %p122, %p123
      %s126 = sadd.s32 %s125, 1
      %p129 = scmp.eq.s32.totalorder %s16, 1
      %p130 = scmp.ne.s32.totalorder %s125, %s127
      %p131 = scmp.eq.s32.totalorder %s16, 0
      %p132 = por %p130, %p131
      %p133 = scmp.ne.s32.totalorder %s125, %s127
      %p134 = scmp.eq.s32.totalorder %s21, 1
      %p135 = por %p133, %p134
      %p136 = scmp.ne.s32.totalorder %s127, %s128
      %p137 = scmp.eq.s32.totalorder %s21, 0
      %p138 = por %p136, %p137
      %p139 = scmp.ne.s32.totalorder %s127, %s128
      %p140 = scmp.eq.s32.totalorder %s22, 1
      %p141 = por %p139, %p140
      %p143 = scmp.ne.s32.totalorder %s128, %s142
      %p144 = scmp.eq.s32.totalorder %s22, 0
      %p145 = por %p143, %p144
      %s147 = sadd.s32 %s146, 1
      %p150 = scmp.eq.s32.totalorder %s16, 1
      %p151 = scmp.ne.s32.totalorder %s146, %s148
      %p152 = scmp.eq.s32.totalorder %s16, 0
      %p153 = por %p151, %p152
      %p154 = scmp.ne.s32.totalorder %s146, %s148
      %p155 = scmp.eq.s32.totalorder %s21, 1
      %p156 = por %p154, %p155
      %p157 = scmp.ne.s32.totalorder %s148, %s149
      %p158 = scmp.eq.s32.totalorder %s21, 0
      %p159 = por %p157, %p158
      %p160 = scmp.ne.s32.totalorder %s148, %s149
      %p161 = scmp.eq.s32.totalorder %s22, 1
      %p162 = por %p160, %p161
      %p164 = scmp.ne.s32.totalorder %s149, %s163
      %p165 = scmp.eq.s32.totalorder %s22, 0
      %p166 = por %p164, %p165
      %s168 = sadd.s32 %s167, 1
      %p171 = scmp.eq.s32.totalorder %s16, 1
      %p172 = scmp.ne.s32.totalorder %s167, %s169
      %p173 = scmp.eq.s32.totalorder %s16, 0
      %p174 = por %p172, %p173
      %p175 = scmp.ne.s32.totalorder %s167, %s169
      %p176 = scmp.eq.s32.totalorder %s21, 1
      %p177 = por %p175, %p176
      %p178 = scmp.ne.s32.totalorder %s169, %s170
      %p179 = scmp.eq.s32.totalorder %s21, 0
      %p180 = por %p178, %p179
      %p181 = scmp.ne.s32.totalorder %s169, %s170
      %p182 = scmp.eq.s32.totalorder %s22, 1
      %p183 = por %p181, %p182
      %p185 = scmp.ne.s32.totalorder %s170, %s184
      %p186 = scmp.eq.s32.totalorder %s22, 0
      %p187 = por %p185, %p186
      %s188 = ssub.s32 %s23, %s35
      %s189 = ssub.s32 %s24, %s31
      %s190 = sor.u32 %s188, %s189
      %p191 = scmp.eq.s32.totalorder %s190, 0
      %s193 = sadd.s32 %s192, 1
      %s194 = scalar_select %p191, %s192, %s193
      %p197 = pneg %p191
      %p198 = scmp.eq.s32.totalorder %s16, 1
      %p199 = por %p197, %p198
      %p200 = scmp.ne.s32.totalorder %s192, %s195
      %p201 = scmp.eq.s32.totalorder %s16, 0
      %p202 = por %p200, %p201
      %p203 = scmp.ne.s32.totalorder %s192, %s195
      %p204 = scmp.eq.s32.totalorder %s21, 1
      %p205 = por %p203, %p204
      %p206 = scmp.ne.s32.totalorder %s195, %s196
      %p207 = scmp.eq.s32.totalorder %s21, 0
      %p208 = por %p206, %p207
      %p209 = scmp.ne.s32.totalorder %s195, %s196
      %p210 = scmp.eq.s32.totalorder %s22, 1
      %p211 = por %p209, %p210
      %p213 = scmp.ne.s32.totalorder %s196, %s212
      %p214 = scmp.eq.s32.totalorder %s22, 0
      %p215 = por %p213, %p214
      %p216 = scmp.le.s32.totalorder 1, %s16
      %p217 = scmp.lt.s32.totalorder %s16, 3
      %p218 = pnand %p216, %p217
      %p219 = pneg %p218
      // Predicated region
      $region9: #{tpu_custom_call.1} parent=5 // pred_check
        _
      $region10: #{tpu_custom_call.1} parent=5 // pred_check_branch
        %221 = sbr.rel (%p218) target = $region12
      $region11: #{tpu_custom_call.1} parent=5 // pred_region
        %s222 = ssub.s32 %s16, 1
        // Predicated region
        $region13: #{tpu_custom_call.1} parent=11 // pred_check
          %p223 = pneg %p75
        $region14: #{tpu_custom_call.1} parent=11 // pred_check_branch
          %225 = sbr.rel (%p223) target = $region16
        $region15: #{tpu_custom_call.1} parent=11 // pred_region
          _
        $region16: #{tpu_custom_call.1} parent=11 // pred_fallthru
          _
        // Predicated region
        $region17: #{tpu_custom_call.1} parent=11 // pred_check
          %p226 = pneg %p96
        $region18: #{tpu_custom_call.1} parent=11 // pred_check_branch
          %228 = sbr.rel (%p226) target = $region20
        $region19: #{tpu_custom_call.1} parent=11 // pred_region
          _
        $region20: #{tpu_custom_call.1} parent=11 // pred_fallthru
          _
        // Predicated region
        $region21: #{tpu_custom_call.1} parent=11 // pred_check
          %p229 = pneg %p117
        $region22: #{tpu_custom_call.1} parent=11 // pred_check_branch
          %231 = sbr.rel (%p229) target = $region24
        $region23: #{tpu_custom_call.1} parent=11 // pred_region
          _
        $region24: #{tpu_custom_call.1} parent=11 // pred_fallthru
          _
        // Predicated region
        $region25: #{tpu_custom_call.1} parent=11 // pred_check
          %p232 = pneg %p138
        $region26: #{tpu_custom_call.1} parent=11 // pred_check_branch
          %234 = sbr.rel (%p232) target = $region28
        $region27: #{tpu_custom_call.1} parent=11 // pred_region
          _
        $region28: #{tpu_custom_call.1} parent=11 // pred_fallthru
          _
        // Predicated region
        $region29: #{tpu_custom_call.1} parent=11 // pred_check
          %p235 = pneg %p159
        $region30: #{tpu_custom_call.1} parent=11 // pred_check_branch
          %237 = sbr.rel (%p235) target = $region32
        $region31: #{tpu_custom_call.1} parent=11 // pred_region
          _
        $region32: #{tpu_custom_call.1} parent=11 // pred_fallthru
          _
        // Predicated region
        $region33: #{tpu_custom_call.1} parent=11 // pred_check
          %p238 = pneg %p180
        $region34: #{tpu_custom_call.1} parent=11 // pred_check_branch
          %240 = sbr.rel (%p238) target = $region36
        $region35: #{tpu_custom_call.1} parent=11 // pred_region
          _
        $region36: #{tpu_custom_call.1} parent=11 // pred_fallthru
          _
      $region12: #{tpu_custom_call.1} parent=5 // pred_fallthru
        _
      %p241 = scmp.lt.s32.totalorder %s16, 2
      // Predicated region
      $region37: #{tpu_custom_call.1} parent=5 // pred_check
        %p242 = pneg %p241
      $region38: #{tpu_custom_call.1} parent=5 // pred_check_branch
        %244 = sbr.rel (%p242) target = $region40
      $region39: #{tpu_custom_call.1} parent=5 // pred_region
        // Predicated region
        $region41: #{tpu_custom_call.1} parent=39 // pred_check
          %p245 = pneg %p48
        $region42: #{tpu_custom_call.1} parent=39 // pred_check_branch
          %247 = sbr.rel (%p245) target = $region44
        $region43: #{tpu_custom_call.1} parent=39 // pred_region
          %p248 = scmp.lt.s32.totalorder %s23, 1
          %s249 = scalar_select %p248, %s23, 1
          %s250 = smul.addr %s249, 54
          %s251 = smul.addr %s250, 8
          %s252 = scalar_lea.vmem %s0, %s251
        $region44: #{tpu_custom_call.1} parent=39 // pred_fallthru
          _
      $region40: #{tpu_custom_call.1} parent=5 // pred_fallthru
        _
      %p253 = scmp.le.s32.totalorder 1, %s16
      %p254 = scmp.lt.s32.totalorder %s16, 3
      %p255 = pnand %p253, %p254
      %p256 = pneg %p255
      // Predicated region
      $region45: #{tpu_custom_call.1} parent=5 // pred_check
        _
      $region46: #{tpu_custom_call.1} parent=5 // pred_check_branch
        %258 = sbr.rel (%p255) target = $region48
      $region47: #{tpu_custom_call.1} parent=5 // pred_region
        %s259 = ssub.s32 %s16, 1
        %p260 = scmp.lt.s32.totalorder %s25, 1
        %s261 = scalar_select %p260, %s25, 1
        %s262 = smul.addr %s261, 54
        %s263 = smul.addr %s262, 8
        %s264 = scalar_lea.vmem %s0, %s263
        %p265 = pneg %p54
        %p266 = pneg %p51
        %p267 = pneg %p75
        %p268 = pneg %p72
        %p269 = pneg %p96
        %p270 = pneg %p93
        %p271 = pneg %p117
        %p272 = pneg %p114
        %p273 = pneg %p138
        %p274 = pneg %p135
        %p275 = pneg %p159
        %p276 = pneg %p156
        %p277 = pneg %p180
        %p278 = pneg %p177
        %p279 = pneg %p208
        %p280 = pneg %p205
        %s281 = sand.u32 %s195, 1
        %s282 = scalar_lea.sflag [#allocation3], %s281
        %s283 = sand.u32 %s195, 1
        %s284 = smul.addr %s283, 256
        %s285 = scalar_lea.vmem [#allocation2], %s284
        %p286 = scmp.lt.s32.totalorder %s25, 1
        %s287 = scalar_select %p286, %s25, 1
        %s288 = smul.addr %s287, 54
        %s289 = smul.addr %s288, 8
        %s290 = scalar_lea.vmem %s0, %s289
        %s291 = smul.u32 16, %s26
        %s293 = smul.u32 %s26, 16
        %s294 = smul.u32 %s293, 24
        %s295 = scalar_lea.vmem %s290, %s294
        %v296 = vld [vmem:[%s295] sm:$0xff]
        %v297 = vld [vmem:[%s295 + $0x8] sm:$0xff]
        %v298 = vld [vmem:[%s295 + $0x10] sm:$0x3]
        %v299 = vld [vmem:[%s295 + $0x18] sm:$0xff]
        %v300 = vld [vmem:[%s295 + $0x20] sm:$0xff]
        %v301 = vld [vmem:[%s295 + $0x28] sm:$0x3]
        %v302 = vld [vmem:[%s295 + $0x30] sm:$0xff]
        %v303 = vld [vmem:[%s295 + $0x38] sm:$0xff]
        %v304 = vld [vmem:[%s295 + $0x40] sm:$0x3]
        %v305 = vld [vmem:[%s295 + $0x48] sm:$0xff]
        %v306 = vld [vmem:[%s295 + $0x50] sm:$0xff]
        %v307 = vld [vmem:[%s295 + $0x58] sm:$0x3]
        %v308 = vld [vmem:[%s295 + $0x60] sm:$0xff]
        %v309 = vld [vmem:[%s295 + $0x68] sm:$0xff]
        %v310 = vld [vmem:[%s295 + $0x70] sm:$0x3]
        %v311 = vld [vmem:[%s295 + $0x78] sm:$0xff]
        %v312 = vld [vmem:[%s295 + $0x80] sm:$0xff]
        %v313 = vld [vmem:[%s295 + $0x88] sm:$0x3]
        %v314 = vld [vmem:[%s295 + $0x90] sm:$0xff]
        %v315 = vld [vmem:[%s295 + $0x98] sm:$0xff]
        %v316 = vld [vmem:[%s295 + $0xa0] sm:$0x3]
        %v317 = vld [vmem:[%s295 + $0xa8] sm:$0xff]
        %v318 = vld [vmem:[%s295 + $0xb0] sm:$0xff]
        %v319 = vld [vmem:[%s295 + $0xb8] sm:$0x3]
        %v320 = vld [vmem:[%s295 + $0xc0] sm:$0xff]
        %v321 = vld [vmem:[%s295 + $0xc8] sm:$0xff]
        %v322 = vld [vmem:[%s295 + $0xd0] sm:$0x3]
        %v323 = vld [vmem:[%s295 + $0xd8] sm:$0xff]
        %v324 = vld [vmem:[%s295 + $0xe0] sm:$0xff]
        %v325 = vld [vmem:[%s295 + $0xe8] sm:$0x3]
        %v326 = vld [vmem:[%s295 + $0xf0] sm:$0xff]
        %v327 = vld [vmem:[%s295 + $0xf8] sm:$0xff]
        %v328 = vld [vmem:[%s295 + $0x100] sm:$0x3]
        %v329 = vld [vmem:[%s295 + $0x108] sm:$0xff]
        %v330 = vld [vmem:[%s295 + $0x110] sm:$0xff]
        %v331 = vld [vmem:[%s295 + $0x118] sm:$0x3]
        %v332 = vld [vmem:[%s295 + $0x120] sm:$0xff]
        %v333 = vld [vmem:[%s295 + $0x128] sm:$0xff]
        %v334 = vld [vmem:[%s295 + $0x130] sm:$0x3]
        %v335 = vld [vmem:[%s295 + $0x138] sm:$0xff]
        %v336 = vld [vmem:[%s295 + $0x140] sm:$0xff]
        %v337 = vld [vmem:[%s295 + $0x148] sm:$0x3]
        %v338 = vld [vmem:[%s295 + $0x150] sm:$0xff]
        %v339 = vld [vmem:[%s295 + $0x158] sm:$0xff]
        %v340 = vld [vmem:[%s295 + $0x160] sm:$0x3]
        %v341 = vld [vmem:[%s295 + $0x168] sm:$0xff]
        %v342 = vld [vmem:[%s295 + $0x170] sm:$0xff]
        %v343 = vld [vmem:[%s295 + $0x178] sm:$0x3]
        %v344 = vld [vmem:[%s295 + $0x180] sm:$0xff]
        %v345 = vld [vmem:[%s295 + $0x188] sm:$0xff]
        %v346 = vld [vmem:[%s295 + $0x190] sm:$0x3]
        %v347 = vld [vmem:[%s295 + $0x198] sm:$0xff]
        %v348 = vld [vmem:[%s295 + $0x1a0] sm:$0xff]
        %v349 = vld [vmem:[%s295 + $0x1a8] sm:$0x3]
        %v350 = vpack.c.bf16 %v297, %v296
        %v351 = vpack.c.bf16 %v298, %v298
        %v352 = vpack.c.bf16 %v300, %v299
        %v353 = vpack.c.bf16 %v301, %v301
        %v354 = vpack.c.bf16 %v303, %v302
        %v355 = vpack.c.bf16 %v304, %v304
        %v356 = vpack.c.bf16 %v306, %v305
        %v357 = vpack.c.bf16 %v307, %v307
        %v358 = vpack.c.bf16 %v309, %v308
        %v359 = vpack.c.bf16 %v310, %v310
        %v360 = vpack.c.bf16 %v312, %v311
        %v361 = vpack.c.bf16 %v313, %v313
        %v362 = vpack.c.bf16 %v315, %v314
        %v363 = vpack.c.bf16 %v316, %v316
        %v364 = vpack.c.bf16 %v318, %v317
        %v365 = vpack.c.bf16 %v319, %v319
        %v366 = vpack.c.bf16 %v321, %v320
        %v367 = vpack.c.bf16 %v322, %v322
        %v368 = vpack.c.bf16 %v324, %v323
        %v369 = vpack.c.bf16 %v325, %v325
        %v370 = vpack.c.bf16 %v327, %v326
        %v371 = vpack.c.bf16 %v328, %v328
        %v372 = vpack.c.bf16 %v330, %v329
        %v373 = vpack.c.bf16 %v331, %v331
        %v374 = vpack.c.bf16 %v333, %v332
        %v375 = vpack.c.bf16 %v334, %v334
        %v376 = vpack.c.bf16 %v336, %v335
        %v377 = vpack.c.bf16 %v337, %v337
        %v378 = vpack.c.bf16 %v339, %v338
        %v379 = vpack.c.bf16 %v340, %v340
        %v380 = vpack.c.bf16 %v342, %v341
        %v381 = vpack.c.bf16 %v343, %v343
        %v382 = vpack.c.bf16 %v345, %v344
        %v383 = vpack.c.bf16 %v346, %v346
        %v384 = vpack.c.bf16 %v348, %v347
        %v385 = vpack.c.bf16 %v349, %v349
        %v386 = vld [vmem:[%s1] sm:$0xf]
        %v387 = vld [vmem:[%s1 + $0x4] sm:$0xf]
        %v388 = vld [vmem:[%s2] sm:$0x1]
        %v390 = vlaneseq
        %v391 = vshrl.u32 %v390, 7
        %v392 = vsub.s32 0, %v391
        %v393 = vrot.slane %v388, %v392
        %v430 = vcombine.high %v350, %v350
        %v432 = vunpack.c.l.s4 1966171168
        %v433 = vunpack.c.0.s8 %v432
        %v434 = vlaneseq
        %v435 = vshrl.u32 %v434, 7
        %v436 = vsub.s32 %v433, %v435
        %v437 = vrot.slane %v350, %v436
        %v439 = vunpack.c.l.s4 1966171168
        %v440 = vunpack.c.0.s8 %v439
        %v441 = vlaneseq
        %v442 = vshrl.u32 %v441, 7
        %v443 = vsub.s32 %v440, %v442
        %v444 = vrot.slane %v430, %v443
        %v445 = vcombine.high %v437, %v437
        %v446 = vcombine.high %v444, %v444
        %v448 = vunpack.c.l.s4 1966171168
        %v449 = vunpack.c.0.s8 %v448
        %v450 = vlaneseq
        %v451 = vshrl.u32 %v450, 7
        %v452 = vsub.s32 %v449, %v451
        %v453 = vrot.slane %v437, %v452
        %v455 = vunpack.c.l.s4 1966171168
        %v456 = vunpack.c.0.s8 %v455
        %v457 = vlaneseq
        %v458 = vshrl.u32 %v457, 7
        %v459 = vsub.s32 %v456, %v458
        %v460 = vrot.slane %v444, %v459
        %v462 = vunpack.c.l.s4 1966171168
        %v463 = vunpack.c.0.s8 %v462
        %v464 = vlaneseq
        %v465 = vshrl.u32 %v464, 7
        %v466 = vsub.s32 %v463, %v465
        %v467 = vrot.slane %v445, %v466
        %v469 = vunpack.c.l.s4 1966171168
        %v470 = vunpack.c.0.s8 %v469
        %v471 = vlaneseq
        %v472 = vshrl.u32 %v471, 7
        %v473 = vsub.s32 %v470, %v472
        %v474 = vrot.slane %v446, %v473
        %v475 = vcombine.high %v453, %v453
        %v476 = vcombine.high %v460, %v460
        %v477 = vcombine.high %v467, %v467
        %v478 = vcombine.high %v474, %v474
        %v480 = vunpack.c.l.s4 1966171168
        %v481 = vunpack.c.0.s8 %v480
        %v482 = vlaneseq
        %v483 = vshrl.u32 %v482, 7
        %v484 = vsub.s32 %v481, %v483
        %v485 = vrot.slane %v351, %v484
        %v487 = vunpack.c.l.s4 1966171168
        %v488 = vunpack.c.0.s8 %v487
        %v489 = vlaneseq
        %v490 = vshrl.u32 %v489, 7
        %v491 = vsub.s32 %v488, %v490
        %v492 = vrot.slane %v485, %v491
        %v493 = vcombine.high %v352, %v352
        %v495 = vunpack.c.l.s4 1966171168
        %v496 = vunpack.c.0.s8 %v495
        %v497 = vlaneseq
        %v498 = vshrl.u32 %v497, 7
        %v499 = vsub.s32 %v496, %v498
        %v500 = vrot.slane %v352, %v499
        %v502 = vunpack.c.l.s4 1966171168
        %v503 = vunpack.c.0.s8 %v502
        %v504 = vlaneseq
        %v505 = vshrl.u32 %v504, 7
        %v506 = vsub.s32 %v503, %v505
        %v507 = vrot.slane %v493, %v506
        %v508 = vcombine.high %v500, %v500
        %v509 = vcombine.high %v507, %v507
        %v511 = vunpack.c.l.s4 1966171168
        %v512 = vunpack.c.0.s8 %v511
        %v513 = vlaneseq
        %v514 = vshrl.u32 %v513, 7
        %v515 = vsub.s32 %v512, %v514
        %v516 = vrot.slane %v500, %v515
        %v518 = vunpack.c.l.s4 1966171168
        %v519 = vunpack.c.0.s8 %v518
        %v520 = vlaneseq
        %v521 = vshrl.u32 %v520, 7
        %v522 = vsub.s32 %v519, %v521
        %v523 = vrot.slane %v507, %v522
        %v525 = vunpack.c.l.s4 1966171168
        %v526 = vunpack.c.0.s8 %v525
        %v527 = vlaneseq
        %v528 = vshrl.u32 %v527, 7
        %v529 = vsub.s32 %v526, %v528
        %v530 = vrot.slane %v508, %v529
        %v532 = vunpack.c.l.s4 1966171168
        %v533 = vunpack.c.0.s8 %v532
        %v534 = vlaneseq
        %v535 = vshrl.u32 %v534, 7
        %v536 = vsub.s32 %v533, %v535
        %v537 = vrot.slane %v509, %v536
        %v538 = vcombine.high %v516, %v516
        %v539 = vcombine.high %v523, %v523
        %v540 = vcombine.high %v530, %v530
        %v541 = vcombine.high %v537, %v537
        %v543 = vunpack.c.l.s4 1966171168
        %v544 = vunpack.c.0.s8 %v543
        %v545 = vlaneseq
        %v546 = vshrl.u32 %v545, 7
        %v547 = vsub.s32 %v544, %v546
        %v548 = vrot.slane %v353, %v547
        %v550 = vunpack.c.l.s4 1966171168
        %v551 = vunpack.c.0.s8 %v550
        %v552 = vlaneseq
        %v553 = vshrl.u32 %v552, 7
        %v554 = vsub.s32 %v551, %v553
        %v555 = vrot.slane %v548, %v554
        %v556 = vcombine.high %v354, %v354
        %v558 = vunpack.c.l.s4 1966171168
        %v559 = vunpack.c.0.s8 %v558
        %v560 = vlaneseq
        %v561 = vshrl.u32 %v560, 7
        %v562 = vsub.s32 %v559, %v561
        %v563 = vrot.slane %v354, %v562
        %v565 = vunpack.c.l.s4 1966171168
        %v566 = vunpack.c.0.s8 %v565
        %v567 = vlaneseq
        %v568 = vshrl.u32 %v567, 7
        %v569 = vsub.s32 %v566, %v568
        %v570 = vrot.slane %v556, %v569
        %v571 = vcombine.high %v563, %v563
        %v572 = vcombine.high %v570, %v570
        %v574 = vunpack.c.l.s4 1966171168
        %v575 = vunpack.c.0.s8 %v574
        %v576 = vlaneseq
        %v577 = vshrl.u32 %v576, 7
        %v578 = vsub.s32 %v575, %v577
        %v579 = vrot.slane %v563, %v578
        %v581 = vunpack.c.l.s4 1966171168
        %v582 = vunpack.c.0.s8 %v581
        %v583 = vlaneseq
        %v584 = vshrl.u32 %v583, 7
        %v585 = vsub.s32 %v582, %v584
        %v586 = vrot.slane %v570, %v585
        %v588 = vunpack.c.l.s4 1966171168
        %v589 = vunpack.c.0.s8 %v588
        %v590 = vlaneseq
        %v591 = vshrl.u32 %v590, 7
        %v592 = vsub.s32 %v589, %v591
        %v593 = vrot.slane %v571, %v592
        %v595 = vunpack.c.l.s4 1966171168
        %v596 = vunpack.c.0.s8 %v595
        %v597 = vlaneseq
        %v598 = vshrl.u32 %v597, 7
        %v599 = vsub.s32 %v596, %v598
        %v600 = vrot.slane %v572, %v599
        %v601 = vcombine.high %v579, %v579
        %v602 = vcombine.high %v586, %v586
        %v603 = vcombine.high %v593, %v593
        %v604 = vcombine.high %v600, %v600
        %v606 = vunpack.c.l.s4 1966171168
        %v607 = vunpack.c.0.s8 %v606
        %v608 = vlaneseq
        %v609 = vshrl.u32 %v608, 7
        %v610 = vsub.s32 %v607, %v609
        %v611 = vrot.slane %v355, %v610
        %v613 = vunpack.c.l.s4 1966171168
        %v614 = vunpack.c.0.s8 %v613
        %v615 = vlaneseq
        %v616 = vshrl.u32 %v615, 7
        %v617 = vsub.s32 %v614, %v616
        %v618 = vrot.slane %v611, %v617
        %v619 = vcombine.high %v356, %v356
        %v621 = vunpack.c.l.s4 1966171168
        %v622 = vunpack.c.0.s8 %v621
        %v623 = vlaneseq
        %v624 = vshrl.u32 %v623, 7
        %v625 = vsub.s32 %v622, %v624
        %v626 = vrot.slane %v356, %v625
        %v628 = vunpack.c.l.s4 1966171168
        %v629 = vunpack.c.0.s8 %v628
        %v630 = vlaneseq
        %v631 = vshrl.u32 %v630, 7
        %v632 = vsub.s32 %v629, %v631
        %v633 = vrot.slane %v619, %v632
        %v634 = vcombine.high %v626, %v626
        %v635 = vcombine.high %v633, %v633
        %v637 = vunpack.c.l.s4 1966171168
        %v638 = vunpack.c.0.s8 %v637
        %v639 = vlaneseq
        %v640 = vshrl.u32 %v639, 7
        %v641 = vsub.s32 %v638, %v640
        %v642 = vrot.slane %v626, %v641
        %v644 = vunpack.c.l.s4 1966171168
        %v645 = vunpack.c.0.s8 %v644
        %v646 = vlaneseq
        %v647 = vshrl.u32 %v646, 7
        %v648 = vsub.s32 %v645, %v647
        %v649 = vrot.slane %v633, %v648
        %v651 = vunpack.c.l.s4 1966171168
        %v652 = vunpack.c.0.s8 %v651
        %v653 = vlaneseq
        %v654 = vshrl.u32 %v653, 7
        %v655 = vsub.s32 %v652, %v654
        %v656 = vrot.slane %v634, %v655
        %v658 = vunpack.c.l.s4 1966171168
        %v659 = vunpack.c.0.s8 %v658
        %v660 = vlaneseq
        %v661 = vshrl.u32 %v660, 7
        %v662 = vsub.s32 %v659, %v661
        %v663 = vrot.slane %v635, %v662
        %v664 = vcombine.high %v642, %v642
        %v665 = vcombine.high %v649, %v649
        %v666 = vcombine.high %v656, %v656
        %v667 = vcombine.high %v663, %v663
        %v669 = vunpack.c.l.s4 1966171168
        %v670 = vunpack.c.0.s8 %v669
        %v671 = vlaneseq
        %v672 = vshrl.u32 %v671, 7
        %v673 = vsub.s32 %v670, %v672
        %v674 = vrot.slane %v357, %v673
        %v676 = vunpack.c.l.s4 1966171168
        %v677 = vunpack.c.0.s8 %v676
        %v678 = vlaneseq
        %v679 = vshrl.u32 %v678, 7
        %v680 = vsub.s32 %v677, %v679
        %v681 = vrot.slane %v674, %v680
        %v682 = vcombine.high %v358, %v358
        %v684 = vunpack.c.l.s4 1966171168
        %v685 = vunpack.c.0.s8 %v684
        %v686 = vlaneseq
        %v687 = vshrl.u32 %v686, 7
        %v688 = vsub.s32 %v685, %v687
        %v689 = vrot.slane %v358, %v688
        %v691 = vunpack.c.l.s4 1966171168
        %v692 = vunpack.c.0.s8 %v691
        %v693 = vlaneseq
        %v694 = vshrl.u32 %v693, 7
        %v695 = vsub.s32 %v692, %v694
        %v696 = vrot.slane %v682, %v695
        %v697 = vcombine.high %v689, %v689
        %v698 = vcombine.high %v696, %v696
        %v700 = vunpack.c.l.s4 1966171168
        %v701 = vunpack.c.0.s8 %v700
        %v702 = vlaneseq
        %v703 = vshrl.u32 %v702, 7
        %v704 = vsub.s32 %v701, %v703
        %v705 = vrot.slane %v689, %v704
        %v707 = vunpack.c.l.s4 1966171168
        %v708 = vunpack.c.0.s8 %v707
        %v709 = vlaneseq
        %v710 = vshrl.u32 %v709, 7
        %v711 = vsub.s32 %v708, %v710
        %v712 = vrot.slane %v696, %v711
        %v714 = vunpack.c.l.s4 1966171168
        %v715 = vunpack.c.0.s8 %v714
        %v716 = vlaneseq
        %v717 = vshrl.u32 %v716, 7
        %v718 = vsub.s32 %v715, %v717
        %v719 = vrot.slane %v697, %v718
        %v721 = vunpack.c.l.s4 1966171168
        %v722 = vunpack.c.0.s8 %v721
        %v723 = vlaneseq
        %v724 = vshrl.u32 %v723, 7
        %v725 = vsub.s32 %v722, %v724
        %v726 = vrot.slane %v698, %v725
        %v727 = vcombine.high %v705, %v705
        %v728 = vcombine.high %v712, %v712
        %v729 = vcombine.high %v719, %v719
        %v730 = vcombine.high %v726, %v726
        %v732 = vunpack.c.l.s4 1966171168
        %v733 = vunpack.c.0.s8 %v732
        %v734 = vlaneseq
        %v735 = vshrl.u32 %v734, 7
        %v736 = vsub.s32 %v733, %v735
        %v737 = vrot.slane %v359, %v736
        %v739 = vunpack.c.l.s4 1966171168
        %v740 = vunpack.c.0.s8 %v739
        %v741 = vlaneseq
        %v742 = vshrl.u32 %v741, 7
        %v743 = vsub.s32 %v740, %v742
        %v744 = vrot.slane %v737, %v743
        %v745 = vcombine.high %v360, %v360
        %v747 = vunpack.c.l.s4 1966171168
        %v748 = vunpack.c.0.s8 %v747
        %v749 = vlaneseq
        %v750 = vshrl.u32 %v749, 7
        %v751 = vsub.s32 %v748, %v750
        %v752 = vrot.slane %v360, %v751
        %v754 = vunpack.c.l.s4 1966171168
        %v755 = vunpack.c.0.s8 %v754
        %v756 = vlaneseq
        %v757 = vshrl.u32 %v756, 7
        %v758 = vsub.s32 %v755, %v757
        %v759 = vrot.slane %v745, %v758
        %v760 = vcombine.high %v752, %v752
        %v761 = vcombine.high %v759, %v759
        %v763 = vunpack.c.l.s4 1966171168
        %v764 = vunpack.c.0.s8 %v763
        %v765 = vlaneseq
        %v766 = vshrl.u32 %v765, 7
        %v767 = vsub.s32 %v764, %v766
        %v768 = vrot.slane %v752, %v767
        %v770 = vunpack.c.l.s4 1966171168
        %v771 = vunpack.c.0.s8 %v770
        %v772 = vlaneseq
        %v773 = vshrl.u32 %v772, 7
        %v774 = vsub.s32 %v771, %v773
        %v775 = vrot.slane %v759, %v774
        %v777 = vunpack.c.l.s4 1966171168
        %v778 = vunpack.c.0.s8 %v777
        %v779 = vlaneseq
        %v780 = vshrl.u32 %v779, 7
        %v781 = vsub.s32 %v778, %v780
        %v782 = vrot.slane %v760, %v781
        %v784 = vunpack.c.l.s4 1966171168
        %v785 = vunpack.c.0.s8 %v784
        %v786 = vlaneseq
        %v787 = vshrl.u32 %v786, 7
        %v788 = vsub.s32 %v785, %v787
        %v789 = vrot.slane %v761, %v788
        %v790 = vcombine.high %v768, %v768
        %v791 = vcombine.high %v775, %v775
        %v792 = vcombine.high %v782, %v782
        %v793 = vcombine.high %v789, %v789
        %v795 = vunpack.c.l.s4 1966171168
        %v796 = vunpack.c.0.s8 %v795
        %v797 = vlaneseq
        %v798 = vshrl.u32 %v797, 7
        %v799 = vsub.s32 %v796, %v798
        %v800 = vrot.slane %v361, %v799
        %v802 = vunpack.c.l.s4 1966171168
        %v803 = vunpack.c.0.s8 %v802
        %v804 = vlaneseq
        %v805 = vshrl.u32 %v804, 7
        %v806 = vsub.s32 %v803, %v805
        %v807 = vrot.slane %v800, %v806
        %v808 = vcombine.high %v362, %v362
        %v810 = vunpack.c.l.s4 1966171168
        %v811 = vunpack.c.0.s8 %v810
        %v812 = vlaneseq
        %v813 = vshrl.u32 %v812, 7
        %v814 = vsub.s32 %v811, %v813
        %v815 = vrot.slane %v362, %v814
        %v817 = vunpack.c.l.s4 1966171168
        %v818 = vunpack.c.0.s8 %v817
        %v819 = vlaneseq
        %v820 = vshrl.u32 %v819, 7
        %v821 = vsub.s32 %v818, %v820
        %v822 = vrot.slane %v808, %v821
        %v823 = vcombine.high %v815, %v815
        %v824 = vcombine.high %v822, %v822
        %v826 = vunpack.c.l.s4 1966171168
        %v827 = vunpack.c.0.s8 %v826
        %v828 = vlaneseq
        %v829 = vshrl.u32 %v828, 7
        %v830 = vsub.s32 %v827, %v829
        %v831 = vrot.slane %v815, %v830
        %v833 = vunpack.c.l.s4 1966171168
        %v834 = vunpack.c.0.s8 %v833
        %v835 = vlaneseq
        %v836 = vshrl.u32 %v835, 7
        %v837 = vsub.s32 %v834, %v836
        %v838 = vrot.slane %v822, %v837
        %v840 = vunpack.c.l.s4 1966171168
        %v841 = vunpack.c.0.s8 %v840
        %v842 = vlaneseq
        %v843 = vshrl.u32 %v842, 7
        %v844 = vsub.s32 %v841, %v843
        %v845 = vrot.slane %v823, %v844
        %v847 = vunpack.c.l.s4 1966171168
        %v848 = vunpack.c.0.s8 %v847
        %v849 = vlaneseq
        %v850 = vshrl.u32 %v849, 7
        %v851 = vsub.s32 %v848, %v850
        %v852 = vrot.slane %v824, %v851
        %v853 = vcombine.high %v831, %v831
        %v854 = vcombine.high %v838, %v838
        %v855 = vcombine.high %v845, %v845
        %v856 = vcombine.high %v852, %v852
        %v858 = vunpack.c.l.s4 1966171168
        %v859 = vunpack.c.0.s8 %v858
        %v860 = vlaneseq
        %v861 = vshrl.u32 %v860, 7
        %v862 = vsub.s32 %v859, %v861
        %v863 = vrot.slane %v363, %v862
        %v865 = vunpack.c.l.s4 1966171168
        %v866 = vunpack.c.0.s8 %v865
        %v867 = vlaneseq
        %v868 = vshrl.u32 %v867, 7
        %v869 = vsub.s32 %v866, %v868
        %v870 = vrot.slane %v863, %v869
        %v871 = vcombine.high %v364, %v364
        %v873 = vunpack.c.l.s4 1966171168
        %v874 = vunpack.c.0.s8 %v873
        %v875 = vlaneseq
        %v876 = vshrl.u32 %v875, 7
        %v877 = vsub.s32 %v874, %v876
        %v878 = vrot.slane %v364, %v877
        %v880 = vunpack.c.l.s4 1966171168
        %v881 = vunpack.c.0.s8 %v880
        %v882 = vlaneseq
        %v883 = vshrl.u32 %v882, 7
        %v884 = vsub.s32 %v881, %v883
        %v885 = vrot.slane %v871, %v884
        %v886 = vcombine.high %v878, %v878
        %v887 = vcombine.high %v885, %v885
        %v889 = vunpack.c.l.s4 1966171168
        %v890 = vunpack.c.0.s8 %v889
        %v891 = vlaneseq
        %v892 = vshrl.u32 %v891, 7
        %v893 = vsub.s32 %v890, %v892
        %v894 = vrot.slane %v878, %v893
        %v896 = vunpack.c.l.s4 1966171168
        %v897 = vunpack.c.0.s8 %v896
        %v898 = vlaneseq
        %v899 = vshrl.u32 %v898, 7
        %v900 = vsub.s32 %v897, %v899
        %v901 = vrot.slane %v885, %v900
        %v903 = vunpack.c.l.s4 1966171168
        %v904 = vunpack.c.0.s8 %v903
        %v905 = vlaneseq
        %v906 = vshrl.u32 %v905, 7
        %v907 = vsub.s32 %v904, %v906
        %v908 = vrot.slane %v886, %v907
        %v910 = vunpack.c.l.s4 1966171168
        %v911 = vunpack.c.0.s8 %v910
        %v912 = vlaneseq
        %v913 = vshrl.u32 %v912, 7
        %v914 = vsub.s32 %v911, %v913
        %v915 = vrot.slane %v887, %v914
        %v916 = vcombine.high %v894, %v894
        %v917 = vcombine.high %v901, %v901
        %v918 = vcombine.high %v908, %v908
        %v919 = vcombine.high %v915, %v915
        %v921 = vunpack.c.l.s4 1966171168
        %v922 = vunpack.c.0.s8 %v921
        %v923 = vlaneseq
        %v924 = vshrl.u32 %v923, 7
        %v925 = vsub.s32 %v922, %v924
        %v926 = vrot.slane %v365, %v925
        %v928 = vunpack.c.l.s4 1966171168
        %v929 = vunpack.c.0.s8 %v928
        %v930 = vlaneseq
        %v931 = vshrl.u32 %v930, 7
        %v932 = vsub.s32 %v929, %v931
        %v933 = vrot.slane %v926, %v932
        %v934 = vcombine.high %v366, %v366
        %v936 = vunpack.c.l.s4 1966171168
        %v937 = vunpack.c.0.s8 %v936
        %v938 = vlaneseq
        %v939 = vshrl.u32 %v938, 7
        %v940 = vsub.s32 %v937, %v939
        %v941 = vrot.slane %v366, %v940
        %v943 = vunpack.c.l.s4 1966171168
        %v944 = vunpack.c.0.s8 %v943
        %v945 = vlaneseq
        %v946 = vshrl.u32 %v945, 7
        %v947 = vsub.s32 %v944, %v946
        %v948 = vrot.slane %v934, %v947
        %v949 = vcombine.high %v941, %v941
        %v950 = vcombine.high %v948, %v948
        %v952 = vunpack.c.l.s4 1966171168
        %v953 = vunpack.c.0.s8 %v952
        %v954 = vlaneseq
        %v955 = vshrl.u32 %v954, 7
        %v956 = vsub.s32 %v953, %v955
        %v957 = vrot.slane %v941, %v956
        %v959 = vunpack.c.l.s4 1966171168
        %v960 = vunpack.c.0.s8 %v959
        %v961 = vlaneseq
        %v962 = vshrl.u32 %v961, 7
        %v963 = vsub.s32 %v960, %v962
        %v964 = vrot.slane %v948, %v963
        %v966 = vunpack.c.l.s4 1966171168
        %v967 = vunpack.c.0.s8 %v966
        %v968 = vlaneseq
        %v969 = vshrl.u32 %v968, 7
        %v970 = vsub.s32 %v967, %v969
        %v971 = vrot.slane %v949, %v970
        %v973 = vunpack.c.l.s4 1966171168
        %v974 = vunpack.c.0.s8 %v973
        %v975 = vlaneseq
        %v976 = vshrl.u32 %v975, 7
        %v977 = vsub.s32 %v974, %v976
        %v978 = vrot.slane %v950, %v977
        %v979 = vcombine.high %v957, %v957
        %v980 = vcombine.high %v964, %v964
        %v981 = vcombine.high %v971, %v971
        %v982 = vcombine.high %v978, %v978
        %v984 = vunpack.c.l.s4 1966171168
        %v985 = vunpack.c.0.s8 %v984
        %v986 = vlaneseq
        %v987 = vshrl.u32 %v986, 7
        %v988 = vsub.s32 %v985, %v987
        %v989 = vrot.slane %v367, %v988
        %v991 = vunpack.c.l.s4 1966171168
        %v992 = vunpack.c.0.s8 %v991
        %v993 = vlaneseq
        %v994 = vshrl.u32 %v993, 7
        %v995 = vsub.s32 %v992, %v994
        %v996 = vrot.slane %v989, %v995
        %v997 = vcombine.high %v368, %v368
        %v999 = vunpack.c.l.s4 1966171168
        %v1000 = vunpack.c.0.s8 %v999
        %v1001 = vlaneseq
        %v1002 = vshrl.u32 %v1001, 7
        %v1003 = vsub.s32 %v1000, %v1002
        %v1004 = vrot.slane %v368, %v1003
        %v1006 = vunpack.c.l.s4 1966171168
        %v1007 = vunpack.c.0.s8 %v1006
        %v1008 = vlaneseq
        %v1009 = vshrl.u32 %v1008, 7
        %v1010 = vsub.s32 %v1007, %v1009
        %v1011 = vrot.slane %v997, %v1010
        %v1012 = vcombine.high %v1004, %v1004
        %v1013 = vcombine.high %v1011, %v1011
        %v1015 = vunpack.c.l.s4 1966171168
        %v1016 = vunpack.c.0.s8 %v1015
        %v1017 = vlaneseq
        %v1018 = vshrl.u32 %v1017, 7
        %v1019 = vsub.s32 %v1016, %v1018
        %v1020 = vrot.slane %v1004, %v1019
        %v1022 = vunpack.c.l.s4 1966171168
        %v1023 = vunpack.c.0.s8 %v1022
        %v1024 = vlaneseq
        %v1025 = vshrl.u32 %v1024, 7
        %v1026 = vsub.s32 %v1023, %v1025
        %v1027 = vrot.slane %v1011, %v1026
        %v1029 = vunpack.c.l.s4 1966171168
        %v1030 = vunpack.c.0.s8 %v1029
        %v1031 = vlaneseq
        %v1032 = vshrl.u32 %v1031, 7
        %v1033 = vsub.s32 %v1030, %v1032
        %v1034 = vrot.slane %v1012, %v1033
        %v1036 = vunpack.c.l.s4 1966171168
        %v1037 = vunpack.c.0.s8 %v1036
        %v1038 = vlaneseq
        %v1039 = vshrl.u32 %v1038, 7
        %v1040 = vsub.s32 %v1037, %v1039
        %v1041 = vrot.slane %v1013, %v1040
        %v1042 = vcombine.high %v1020, %v1020
        %v1043 = vcombine.high %v1027, %v1027
        %v1044 = vcombine.high %v1034, %v1034
        %v1045 = vcombine.high %v1041, %v1041
        %v1047 = vunpack.c.l.s4 1966171168
        %v1048 = vunpack.c.0.s8 %v1047
        %v1049 = vlaneseq
        %v1050 = vshrl.u32 %v1049, 7
        %v1051 = vsub.s32 %v1048, %v1050
        %v1052 = vrot.slane %v369, %v1051
        %v1054 = vunpack.c.l.s4 1966171168
        %v1055 = vunpack.c.0.s8 %v1054
        %v1056 = vlaneseq
        %v1057 = vshrl.u32 %v1056, 7
        %v1058 = vsub.s32 %v1055, %v1057
        %v1059 = vrot.slane %v1052, %v1058
        %v1060 = vcombine.high %v370, %v370
        %v1062 = vunpack.c.l.s4 1966171168
        %v1063 = vunpack.c.0.s8 %v1062
        %v1064 = vlaneseq
        %v1065 = vshrl.u32 %v1064, 7
        %v1066 = vsub.s32 %v1063, %v1065
        %v1067 = vrot.slane %v370, %v1066
        %v1069 = vunpack.c.l.s4 1966171168
        %v1070 = vunpack.c.0.s8 %v1069
        %v1071 = vlaneseq
        %v1072 = vshrl.u32 %v1071, 7
        %v1073 = vsub.s32 %v1070, %v1072
        %v1074 = vrot.slane %v1060, %v1073
        %v1075 = vcombine.high %v1067, %v1067
        %v1076 = vcombine.high %v1074, %v1074
        %v1078 = vunpack.c.l.s4 1966171168
        %v1079 = vunpack.c.0.s8 %v1078
        %v1080 = vlaneseq
        %v1081 = vshrl.u32 %v1080, 7
        %v1082 = vsub.s32 %v1079, %v1081
        %v1083 = vrot.slane %v1067, %v1082
        %v1085 = vunpack.c.l.s4 1966171168
        %v1086 = vunpack.c.0.s8 %v1085
        %v1087 = vlaneseq
        %v1088 = vshrl.u32 %v1087, 7
        %v1089 = vsub.s32 %v1086, %v1088
        %v1090 = vrot.slane %v1074, %v1089
        %v1092 = vunpack.c.l.s4 1966171168
        %v1093 = vunpack.c.0.s8 %v1092
        %v1094 = vlaneseq
        %v1095 = vshrl.u32 %v1094, 7
        %v1096 = vsub.s32 %v1093, %v1095
        %v1097 = vrot.slane %v1075, %v1096
        %v1099 = vunpack.c.l.s4 1966171168
        %v1100 = vunpack.c.0.s8 %v1099
        %v1101 = vlaneseq
        %v1102 = vshrl.u32 %v1101, 7
        %v1103 = vsub.s32 %v1100, %v1102
        %v1104 = vrot.slane %v1076, %v1103
        %v1105 = vcombine.high %v1083, %v1083
        %v1106 = vcombine.high %v1090, %v1090
        %v1107 = vcombine.high %v1097, %v1097
        %v1108 = vcombine.high %v1104, %v1104
        %v1110 = vunpack.c.l.s4 1966171168
        %v1111 = vunpack.c.0.s8 %v1110
        %v1112 = vlaneseq
        %v1113 = vshrl.u32 %v1112, 7
        %v1114 = vsub.s32 %v1111, %v1113
        %v1115 = vrot.slane %v371, %v1114
        %v1117 = vunpack.c.l.s4 1966171168
        %v1118 = vunpack.c.0.s8 %v1117
        %v1119 = vlaneseq
        %v1120 = vshrl.u32 %v1119, 7
        %v1121 = vsub.s32 %v1118, %v1120
        %v1122 = vrot.slane %v1115, %v1121
        %v1123 = vcombine.high %v372, %v372
        %v1125 = vunpack.c.l.s4 1966171168
        %v1126 = vunpack.c.0.s8 %v1125
        %v1127 = vlaneseq
        %v1128 = vshrl.u32 %v1127, 7
        %v1129 = vsub.s32 %v1126, %v1128
        %v1130 = vrot.slane %v372, %v1129
        %v1132 = vunpack.c.l.s4 1966171168
        %v1133 = vunpack.c.0.s8 %v1132
        %v1134 = vlaneseq
        %v1135 = vshrl.u32 %v1134, 7
        %v1136 = vsub.s32 %v1133, %v1135
        %v1137 = vrot.slane %v1123, %v1136
        %v1138 = vcombine.high %v1130, %v1130
        %v1139 = vcombine.high %v1137, %v1137
        %v1141 = vunpack.c.l.s4 1966171168
        %v1142 = vunpack.c.0.s8 %v1141
        %v1143 = vlaneseq
        %v1144 = vshrl.u32 %v1143, 7
        %v1145 = vsub.s32 %v1142, %v1144
        %v1146 = vrot.slane %v1130, %v1145
        %v1148 = vunpack.c.l.s4 1966171168
        %v1149 = vunpack.c.0.s8 %v1148
        %v1150 = vlaneseq
        %v1151 = vshrl.u32 %v1150, 7
        %v1152 = vsub.s32 %v1149, %v1151
        %v1153 = vrot.slane %v1137, %v1152
        %v1155 = vunpack.c.l.s4 1966171168
        %v1156 = vunpack.c.0.s8 %v1155
        %v1157 = vlaneseq
        %v1158 = vshrl.u32 %v1157, 7
        %v1159 = vsub.s32 %v1156, %v1158
        %v1160 = vrot.slane %v1138, %v1159
        %v1162 = vunpack.c.l.s4 1966171168
        %v1163 = vunpack.c.0.s8 %v1162
        %v1164 = vlaneseq
        %v1165 = vshrl.u32 %v1164, 7
        %v1166 = vsub.s32 %v1163, %v1165
        %v1167 = vrot.slane %v1139, %v1166
        %v1168 = vcombine.high %v1146, %v1146
        %v1169 = vcombine.high %v1153, %v1153
        %v1170 = vcombine.high %v1160, %v1160
        %v1171 = vcombine.high %v1167, %v1167
        %v1173 = vunpack.c.l.s4 1966171168
        %v1174 = vunpack.c.0.s8 %v1173
        %v1175 = vlaneseq
        %v1176 = vshrl.u32 %v1175, 7
        %v1177 = vsub.s32 %v1174, %v1176
        %v1178 = vrot.slane %v373, %v1177
        %v1180 = vunpack.c.l.s4 1966171168
        %v1181 = vunpack.c.0.s8 %v1180
        %v1182 = vlaneseq
        %v1183 = vshrl.u32 %v1182, 7
        %v1184 = vsub.s32 %v1181, %v1183
        %v1185 = vrot.slane %v1178, %v1184
        %v1186 = vcombine.high %v374, %v374
        %v1188 = vunpack.c.l.s4 1966171168
        %v1189 = vunpack.c.0.s8 %v1188
        %v1190 = vlaneseq
        %v1191 = vshrl.u32 %v1190, 7
        %v1192 = vsub.s32 %v1189, %v1191
        %v1193 = vrot.slane %v374, %v1192
        %v1195 = vunpack.c.l.s4 1966171168
        %v1196 = vunpack.c.0.s8 %v1195
        %v1197 = vlaneseq
        %v1198 = vshrl.u32 %v1197, 7
        %v1199 = vsub.s32 %v1196, %v1198
        %v1200 = vrot.slane %v1186, %v1199
        %v1201 = vcombine.high %v1193, %v1193
        %v1202 = vcombine.high %v1200, %v1200
        %v1204 = vunpack.c.l.s4 1966171168
        %v1205 = vunpack.c.0.s8 %v1204
        %v1206 = vlaneseq
        %v1207 = vshrl.u32 %v1206, 7
        %v1208 = vsub.s32 %v1205, %v1207
        %v1209 = vrot.slane %v1193, %v1208
        %v1211 = vunpack.c.l.s4 1966171168
        %v1212 = vunpack.c.0.s8 %v1211
        %v1213 = vlaneseq
        %v1214 = vshrl.u32 %v1213, 7
        %v1215 = vsub.s32 %v1212, %v1214
        %v1216 = vrot.slane %v1200, %v1215
        %v1218 = vunpack.c.l.s4 1966171168
        %v1219 = vunpack.c.0.s8 %v1218
        %v1220 = vlaneseq
        %v1221 = vshrl.u32 %v1220, 7
        %v1222 = vsub.s32 %v1219, %v1221
        %v1223 = vrot.slane %v1201, %v1222
        %v1225 = vunpack.c.l.s4 1966171168
        %v1226 = vunpack.c.0.s8 %v1225
        %v1227 = vlaneseq
        %v1228 = vshrl.u32 %v1227, 7
        %v1229 = vsub.s32 %v1226, %v1228
        %v1230 = vrot.slane %v1202, %v1229
        %v1231 = vcombine.high %v1209, %v1209
        %v1232 = vcombine.high %v1216, %v1216
        %v1233 = vcombine.high %v1223, %v1223
        %v1234 = vcombine.high %v1230, %v1230
        %v1236 = vunpack.c.l.s4 1966171168
        %v1237 = vunpack.c.0.s8 %v1236
        %v1238 = vlaneseq
        %v1239 = vshrl.u32 %v1238, 7
        %v1240 = vsub.s32 %v1237, %v1239
        %v1241 = vrot.slane %v375, %v1240
        %v1243 = vunpack.c.l.s4 1966171168
        %v1244 = vunpack.c.0.s8 %v1243
        %v1245 = vlaneseq
        %v1246 = vshrl.u32 %v1245, 7
        %v1247 = vsub.s32 %v1244, %v1246
        %v1248 = vrot.slane %v1241, %v1247
        %v1249 = vcombine.high %v376, %v376
        %v1251 = vunpack.c.l.s4 1966171168
        %v1252 = vunpack.c.0.s8 %v1251
        %v1253 = vlaneseq
        %v1254 = vshrl.u32 %v1253, 7
        %v1255 = vsub.s32 %v1252, %v1254
        %v1256 = vrot.slane %v376, %v1255
        %v1258 = vunpack.c.l.s4 1966171168
        %v1259 = vunpack.c.0.s8 %v1258
        %v1260 = vlaneseq
        %v1261 = vshrl.u32 %v1260, 7
        %v1262 = vsub.s32 %v1259, %v1261
        %v1263 = vrot.slane %v1249, %v1262
        %v1264 = vcombine.high %v1256, %v1256
        %v1265 = vcombine.high %v1263, %v1263
        %v1267 = vunpack.c.l.s4 1966171168
        %v1268 = vunpack.c.0.s8 %v1267
        %v1269 = vlaneseq
        %v1270 = vshrl.u32 %v1269, 7
        %v1271 = vsub.s32 %v1268, %v1270
        %v1272 = vrot.slane %v1256, %v1271
        %v1274 = vunpack.c.l.s4 1966171168
        %v1275 = vunpack.c.0.s8 %v1274
        %v1276 = vlaneseq
        %v1277 = vshrl.u32 %v1276, 7
        %v1278 = vsub.s32 %v1275, %v1277
        %v1279 = vrot.slane %v1263, %v1278
        %v1281 = vunpack.c.l.s4 1966171168
        %v1282 = vunpack.c.0.s8 %v1281
        %v1283 = vlaneseq
        %v1284 = vshrl.u32 %v1283, 7
        %v1285 = vsub.s32 %v1282, %v1284
        %v1286 = vrot.slane %v1264, %v1285
        %v1288 = vunpack.c.l.s4 1966171168
        %v1289 = vunpack.c.0.s8 %v1288
        %v1290 = vlaneseq
        %v1291 = vshrl.u32 %v1290, 7
        %v1292 = vsub.s32 %v1289, %v1291
        %v1293 = vrot.slane %v1265, %v1292
        %v1294 = vcombine.high %v1272, %v1272
        %v1295 = vcombine.high %v1279, %v1279
        %v1296 = vcombine.high %v1286, %v1286
        %v1297 = vcombine.high %v1293, %v1293
        %v1299 = vunpack.c.l.s4 1966171168
        %v1300 = vunpack.c.0.s8 %v1299
        %v1301 = vlaneseq
        %v1302 = vshrl.u32 %v1301, 7
        %v1303 = vsub.s32 %v1300, %v1302
        %v1304 = vrot.slane %v377, %v1303
        %v1306 = vunpack.c.l.s4 1966171168
        %v1307 = vunpack.c.0.s8 %v1306
        %v1308 = vlaneseq
        %v1309 = vshrl.u32 %v1308, 7
        %v1310 = vsub.s32 %v1307, %v1309
        %v1311 = vrot.slane %v1304, %v1310
        %v1312 = vcombine.high %v378, %v378
        %v1314 = vunpack.c.l.s4 1966171168
        %v1315 = vunpack.c.0.s8 %v1314
        %v1316 = vlaneseq
        %v1317 = vshrl.u32 %v1316, 7
        %v1318 = vsub.s32 %v1315, %v1317
        %v1319 = vrot.slane %v378, %v1318
        %v1321 = vunpack.c.l.s4 1966171168
        %v1322 = vunpack.c.0.s8 %v1321
        %v1323 = vlaneseq
        %v1324 = vshrl.u32 %v1323, 7
        %v1325 = vsub.s32 %v1322, %v1324
        %v1326 = vrot.slane %v1312, %v1325
        %v1327 = vcombine.high %v1319, %v1319
        %v1328 = vcombine.high %v1326, %v1326
        %v1330 = vunpack.c.l.s4 1966171168
        %v1331 = vunpack.c.0.s8 %v1330
        %v1332 = vlaneseq
        %v1333 = vshrl.u32 %v1332, 7
        %v1334 = vsub.s32 %v1331, %v1333
        %v1335 = vrot.slane %v1319, %v1334
        %v1337 = vunpack.c.l.s4 1966171168
        %v1338 = vunpack.c.0.s8 %v1337
        %v1339 = vlaneseq
        %v1340 = vshrl.u32 %v1339, 7
        %v1341 = vsub.s32 %v1338, %v1340
        %v1342 = vrot.slane %v1326, %v1341
        %v1344 = vunpack.c.l.s4 1966171168
        %v1345 = vunpack.c.0.s8 %v1344
        %v1346 = vlaneseq
        %v1347 = vshrl.u32 %v1346, 7
        %v1348 = vsub.s32 %v1345, %v1347
        %v1349 = vrot.slane %v1327, %v1348
        %v1351 = vunpack.c.l.s4 1966171168
        %v1352 = vunpack.c.0.s8 %v1351
        %v1353 = vlaneseq
        %v1354 = vshrl.u32 %v1353, 7
        %v1355 = vsub.s32 %v1352, %v1354
        %v1356 = vrot.slane %v1328, %v1355
        %v1357 = vcombine.high %v1335, %v1335
        %v1358 = vcombine.high %v1342, %v1342
        %v1359 = vcombine.high %v1349, %v1349
        %v1360 = vcombine.high %v1356, %v1356
        %v1362 = vunpack.c.l.s4 1966171168
        %v1363 = vunpack.c.0.s8 %v1362
        %v1364 = vlaneseq
        %v1365 = vshrl.u32 %v1364, 7
        %v1366 = vsub.s32 %v1363, %v1365
        %v1367 = vrot.slane %v379, %v1366
        %v1369 = vunpack.c.l.s4 1966171168
        %v1370 = vunpack.c.0.s8 %v1369
        %v1371 = vlaneseq
        %v1372 = vshrl.u32 %v1371, 7
        %v1373 = vsub.s32 %v1370, %v1372
        %v1374 = vrot.slane %v1367, %v1373
        %v1375 = vcombine.high %v380, %v380
        %v1377 = vunpack.c.l.s4 1966171168
        %v1378 = vunpack.c.0.s8 %v1377
        %v1379 = vlaneseq
        %v1380 = vshrl.u32 %v1379, 7
        %v1381 = vsub.s32 %v1378, %v1380
        %v1382 = vrot.slane %v380, %v1381
        %v1384 = vunpack.c.l.s4 1966171168
        %v1385 = vunpack.c.0.s8 %v1384
        %v1386 = vlaneseq
        %v1387 = vshrl.u32 %v1386, 7
        %v1388 = vsub.s32 %v1385, %v1387
        %v1389 = vrot.slane %v1375, %v1388
        %v1390 = vcombine.high %v1382, %v1382
        %v1391 = vcombine.high %v1389, %v1389
        %v1393 = vunpack.c.l.s4 1966171168
        %v1394 = vunpack.c.0.s8 %v1393
        %v1395 = vlaneseq
        %v1396 = vshrl.u32 %v1395, 7
        %v1397 = vsub.s32 %v1394, %v1396
        %v1398 = vrot.slane %v1382, %v1397
        %v1400 = vunpack.c.l.s4 1966171168
        %v1401 = vunpack.c.0.s8 %v1400
        %v1402 = vlaneseq
        %v1403 = vshrl.u32 %v1402, 7
        %v1404 = vsub.s32 %v1401, %v1403
        %v1405 = vrot.slane %v1389, %v1404
        %v1407 = vunpack.c.l.s4 1966171168
        %v1408 = vunpack.c.0.s8 %v1407
        %v1409 = vlaneseq
        %v1410 = vshrl.u32 %v1409, 7
        %v1411 = vsub.s32 %v1408, %v1410
        %v1412 = vrot.slane %v1390, %v1411
        %v1414 = vunpack.c.l.s4 1966171168
        %v1415 = vunpack.c.0.s8 %v1414
        %v1416 = vlaneseq
        %v1417 = vshrl.u32 %v1416, 7
        %v1418 = vsub.s32 %v1415, %v1417
        %v1419 = vrot.slane %v1391, %v1418
        %v1420 = vcombine.high %v1398, %v1398
        %v1421 = vcombine.high %v1405, %v1405
        %v1422 = vcombine.high %v1412, %v1412
        %v1423 = vcombine.high %v1419, %v1419
        %v1425 = vunpack.c.l.s4 1966171168
        %v1426 = vunpack.c.0.s8 %v1425
        %v1427 = vlaneseq
        %v1428 = vshrl.u32 %v1427, 7
        %v1429 = vsub.s32 %v1426, %v1428
        %v1430 = vrot.slane %v381, %v1429
        %v1432 = vunpack.c.l.s4 1966171168
        %v1433 = vunpack.c.0.s8 %v1432
        %v1434 = vlaneseq
        %v1435 = vshrl.u32 %v1434, 7
        %v1436 = vsub.s32 %v1433, %v1435
        %v1437 = vrot.slane %v1430, %v1436
        %v1438 = vcombine.high %v382, %v382
        %v1440 = vunpack.c.l.s4 1966171168
        %v1441 = vunpack.c.0.s8 %v1440
        %v1442 = vlaneseq
        %v1443 = vshrl.u32 %v1442, 7
        %v1444 = vsub.s32 %v1441, %v1443
        %v1445 = vrot.slane %v382, %v1444
        %v1447 = vunpack.c.l.s4 1966171168
        %v1448 = vunpack.c.0.s8 %v1447
        %v1449 = vlaneseq
        %v1450 = vshrl.u32 %v1449, 7
        %v1451 = vsub.s32 %v1448, %v1450
        %v1452 = vrot.slane %v1438, %v1451
        %v1453 = vcombine.high %v1445, %v1445
        %v1454 = vcombine.high %v1452, %v1452
        %v1456 = vunpack.c.l.s4 1966171168
        %v1457 = vunpack.c.0.s8 %v1456
        %v1458 = vlaneseq
        %v1459 = vshrl.u32 %v1458, 7
        %v1460 = vsub.s32 %v1457, %v1459
        %v1461 = vrot.slane %v1445, %v1460
        %v1463 = vunpack.c.l.s4 1966171168
        %v1464 = vunpack.c.0.s8 %v1463
        %v1465 = vlaneseq
        %v1466 = vshrl.u32 %v1465, 7
        %v1467 = vsub.s32 %v1464, %v1466
        %v1468 = vrot.slane %v1452, %v1467
        %v1470 = vunpack.c.l.s4 1966171168
        %v1471 = vunpack.c.0.s8 %v1470
        %v1472 = vlaneseq
        %v1473 = vshrl.u32 %v1472, 7
        %v1474 = vsub.s32 %v1471, %v1473
        %v1475 = vrot.slane %v1453, %v1474
        %v1477 = vunpack.c.l.s4 1966171168
        %v1478 = vunpack.c.0.s8 %v1477
        %v1479 = vlaneseq
        %v1480 = vshrl.u32 %v1479, 7
        %v1481 = vsub.s32 %v1478, %v1480
        %v1482 = vrot.slane %v1454, %v1481
        %v1483 = vcombine.high %v1461, %v1461
        %v1484 = vcombine.high %v1468, %v1468
        %v1485 = vcombine.high %v1475, %v1475
        %v1486 = vcombine.high %v1482, %v1482
        %v1488 = vunpack.c.l.s4 1966171168
        %v1489 = vunpack.c.0.s8 %v1488
        %v1490 = vlaneseq
        %v1491 = vshrl.u32 %v1490, 7
        %v1492 = vsub.s32 %v1489, %v1491
        %v1493 = vrot.slane %v383, %v1492
        %v1495 = vunpack.c.l.s4 1966171168
        %v1496 = vunpack.c.0.s8 %v1495
        %v1497 = vlaneseq
        %v1498 = vshrl.u32 %v1497, 7
        %v1499 = vsub.s32 %v1496, %v1498
        %v1500 = vrot.slane %v1493, %v1499
        %v1501 = vcombine.high %v384, %v384
        %v1503 = vunpack.c.l.s4 1966171168
        %v1504 = vunpack.c.0.s8 %v1503
        %v1505 = vlaneseq
        %v1506 = vshrl.u32 %v1505, 7
        %v1507 = vsub.s32 %v1504, %v1506
        %v1508 = vrot.slane %v384, %v1507
        %v1510 = vunpack.c.l.s4 1966171168
        %v1511 = vunpack.c.0.s8 %v1510
        %v1512 = vlaneseq
        %v1513 = vshrl.u32 %v1512, 7
        %v1514 = vsub.s32 %v1511, %v1513
        %v1515 = vrot.slane %v1501, %v1514
        %v1516 = vcombine.high %v1508, %v1508
        %v1517 = vcombine.high %v1515, %v1515
        %v1519 = vunpack.c.l.s4 1966171168
        %v1520 = vunpack.c.0.s8 %v1519
        %v1521 = vlaneseq
        %v1522 = vshrl.u32 %v1521, 7
        %v1523 = vsub.s32 %v1520, %v1522
        %v1524 = vrot.slane %v1508, %v1523
        %v1526 = vunpack.c.l.s4 1966171168
        %v1527 = vunpack.c.0.s8 %v1526
        %v1528 = vlaneseq
        %v1529 = vshrl.u32 %v1528, 7
        %v1530 = vsub.s32 %v1527, %v1529
        %v1531 = vrot.slane %v1515, %v1530
        %v1533 = vunpack.c.l.s4 1966171168
        %v1534 = vunpack.c.0.s8 %v1533
        %v1535 = vlaneseq
        %v1536 = vshrl.u32 %v1535, 7
        %v1537 = vsub.s32 %v1534, %v1536
        %v1538 = vrot.slane %v1516, %v1537
        %v1540 = vunpack.c.l.s4 1966171168
        %v1541 = vunpack.c.0.s8 %v1540
        %v1542 = vlaneseq
        %v1543 = vshrl.u32 %v1542, 7
        %v1544 = vsub.s32 %v1541, %v1543
        %v1545 = vrot.slane %v1517, %v1544
        %v1546 = vcombine.high %v1524, %v1524
        %v1547 = vcombine.high %v1531, %v1531
        %v1548 = vcombine.high %v1538, %v1538
        %v1549 = vcombine.high %v1545, %v1545
        %v1551 = vunpack.c.l.s4 1966171168
        %v1552 = vunpack.c.0.s8 %v1551
        %v1553 = vlaneseq
        %v1554 = vshrl.u32 %v1553, 7
        %v1555 = vsub.s32 %v1552, %v1554
        %v1556 = vrot.slane %v385, %v1555
        %v1558 = vunpack.c.l.s4 1966171168
        %v1559 = vunpack.c.0.s8 %v1558
        %v1560 = vlaneseq
        %v1561 = vshrl.u32 %v1560, 7
        %v1562 = vsub.s32 %v1559, %v1561
        %v1563 = vrot.slane %v1556, %v1562
        %v1564 = vcombine.high %v393, %v393
        %v1566 = vunpack.c.l.s4 1983009808
        %v1567 = vunpack.c.0.s8 %v1566
        %v1568 = vlaneseq
        %v1569 = vshrl.u32 %v1568, 7
        %v1570 = vsub.s32 %v1567, %v1569
        %v1571 = vrot.slane %v393, %v1570
        %v1573 = vunpack.c.l.s4 1983009808
        %v1574 = vunpack.c.0.s8 %v1573
        %v1575 = vlaneseq
        %v1576 = vshrl.u32 %v1575, 7
        %v1577 = vsub.s32 %v1574, %v1576
        %v1578 = vrot.slane %v1564, %v1577
        %v1579 = vcombine.high %v1571, %v1571
        %v1580 = vcombine.high %v1578, %v1578
        %v1581 = vcombine.low %v453, %v467
        %v1582 = vcombine.low %v475, %v477
        %v1583 = vcombine.low %v460, %v474
        %v1584 = vcombine.low %v476, %v478
        %v1586 = vunpack.c.l.s4 1966171168
        %v1587 = vunpack.c.0.s8 %v1586
        %v1588 = vlaneseq
        %v1589 = vshrl.u32 %v1588, 7
        %v1590 = vsub.s32 %v1587, %v1589
        %v1591 = vrot.slane %v1581, %v1590
        %v1593 = vunpack.c.l.s4 1966171168
        %v1594 = vunpack.c.0.s8 %v1593
        %v1595 = vlaneseq
        %v1596 = vshrl.u32 %v1595, 7
        %v1597 = vsub.s32 %v1594, %v1596
        %v1598 = vrot.slane %v1582, %v1597
        %v1600 = vunpack.c.l.s4 1966171168
        %v1601 = vunpack.c.0.s8 %v1600
        %v1602 = vlaneseq
        %v1603 = vshrl.u32 %v1602, 7
        %v1604 = vsub.s32 %v1601, %v1603
        %v1605 = vrot.slane %v1583, %v1604
        %v1607 = vunpack.c.l.s4 1966171168
        %v1608 = vunpack.c.0.s8 %v1607
        %v1609 = vlaneseq
        %v1610 = vshrl.u32 %v1609, 7
        %v1611 = vsub.s32 %v1608, %v1610
        %v1612 = vrot.slane %v1584, %v1611
        %v1613 = vcombine.low %v1591, %v1598
        %v1614 = vcombine.low %v1605, %v1612
        %v1616 = vunpack.c.l.s4 1966171168
        %v1617 = vunpack.c.0.s8 %v1616
        %v1618 = vlaneseq
        %v1619 = vshrl.u32 %v1618, 7
        %v1620 = vsub.s32 %v1617, %v1619
        %v1621 = vrot.slane %v1613, %v1620
        %v1623 = vunpack.c.l.s4 1966171168
        %v1624 = vunpack.c.0.s8 %v1623
        %v1625 = vlaneseq
        %v1626 = vshrl.u32 %v1625, 7
        %v1627 = vsub.s32 %v1624, %v1626
        %v1628 = vrot.slane %v1614, %v1627
        %v1629 = vcombine.low %v1621, %v1628
        %v1630 = vcombine.low %v492, %v516
        %v1631 = vcombine.low %v530, %v538
        %v1632 = vcombine.low %v540, %v523
        %v1633 = vcombine.low %v537, %v539
        %v1635 = vunpack.c.l.s4 1966171168
        %v1636 = vunpack.c.0.s8 %v1635
        %v1637 = vlaneseq
        %v1638 = vshrl.u32 %v1637, 7
        %v1639 = vsub.s32 %v1636, %v1638
        %v1640 = vrot.slane %v1630, %v1639
        %v1642 = vunpack.c.l.s4 1966171168
        %v1643 = vunpack.c.0.s8 %v1642
        %v1644 = vlaneseq
        %v1645 = vshrl.u32 %v1644, 7
        %v1646 = vsub.s32 %v1643, %v1645
        %v1647 = vrot.slane %v1631, %v1646
        %v1649 = vunpack.c.l.s4 1966171168
        %v1650 = vunpack.c.0.s8 %v1649
        %v1651 = vlaneseq
        %v1652 = vshrl.u32 %v1651, 7
        %v1653 = vsub.s32 %v1650, %v1652
        %v1654 = vrot.slane %v1632, %v1653
        %v1656 = vunpack.c.l.s4 1966171168
        %v1657 = vunpack.c.0.s8 %v1656
        %v1658 = vlaneseq
        %v1659 = vshrl.u32 %v1658, 7
        %v1660 = vsub.s32 %v1657, %v1659
        %v1661 = vrot.slane %v1633, %v1660
        %v1662 = vcombine.low %v1640, %v1647
        %v1663 = vcombine.low %v1654, %v1661
        %v1665 = vunpack.c.l.s4 1966171168
        %v1666 = vunpack.c.0.s8 %v1665
        %v1667 = vlaneseq
        %v1668 = vshrl.u32 %v1667, 7
        %v1669 = vsub.s32 %v1666, %v1668
        %v1670 = vrot.slane %v1662, %v1669
        %v1672 = vunpack.c.l.s4 1966171168
        %v1673 = vunpack.c.0.s8 %v1672
        %v1674 = vlaneseq
        %v1675 = vshrl.u32 %v1674, 7
        %v1676 = vsub.s32 %v1673, %v1675
        %v1677 = vrot.slane %v1663, %v1676
        %v1678 = vcombine.low %v1670, %v1677
        %v1679 = vcombine.low %v541, %v555
        %v1680 = vcombine.low %v579, %v593
        %v1681 = vcombine.low %v601, %v603
        %v1682 = vcombine.low %v586, %v600
        %v1684 = vunpack.c.l.s4 1966171168
        %v1685 = vunpack.c.0.s8 %v1684
        %v1686 = vlaneseq
        %v1687 = vshrl.u32 %v1686, 7
        %v1688 = vsub.s32 %v1685, %v1687
        %v1689 = vrot.slane %v1679, %v1688
        %v1691 = vunpack.c.l.s4 1966171168
        %v1692 = vunpack.c.0.s8 %v1691
        %v1693 = vlaneseq
        %v1694 = vshrl.u32 %v1693, 7
        %v1695 = vsub.s32 %v1692, %v1694
        %v1696 = vrot.slane %v1680, %v1695
        %v1698 = vunpack.c.l.s4 1966171168
        %v1699 = vunpack.c.0.s8 %v1698
        %v1700 = vlaneseq
        %v1701 = vshrl.u32 %v1700, 7
        %v1702 = vsub.s32 %v1699, %v1701
        %v1703 = vrot.slane %v1681, %v1702
        %v1705 = vunpack.c.l.s4 1966171168
        %v1706 = vunpack.c.0.s8 %v1705
        %v1707 = vlaneseq
        %v1708 = vshrl.u32 %v1707, 7
        %v1709 = vsub.s32 %v1706, %v1708
        %v1710 = vrot.slane %v1682, %v1709
        %v1711 = vcombine.low %v1689, %v1696
        %v1712 = vcombine.low %v1703, %v1710
        %v1714 = vunpack.c.l.s4 1966171168
        %v1715 = vunpack.c.0.s8 %v1714
        %v1716 = vlaneseq
        %v1717 = vshrl.u32 %v1716, 7
        %v1718 = vsub.s32 %v1715, %v1717
        %v1719 = vrot.slane %v1711, %v1718
        %v1721 = vunpack.c.l.s4 1966171168
        %v1722 = vunpack.c.0.s8 %v1721
        %v1723 = vlaneseq
        %v1724 = vshrl.u32 %v1723, 7
        %v1725 = vsub.s32 %v1722, %v1724
        %v1726 = vrot.slane %v1712, %v1725
        %v1727 = vcombine.low %v1719, %v1726
        %v1728 = vcombine.low %v602, %v604
        %v1729 = vcombine.low %v618, %v642
        %v1730 = vcombine.low %v656, %v664
        %v1731 = vcombine.low %v666, %v649
        %v1733 = vunpack.c.l.s4 1966171168
        %v1734 = vunpack.c.0.s8 %v1733
        %v1735 = vlaneseq
        %v1736 = vshrl.u32 %v1735, 7
        %v1737 = vsub.s32 %v1734, %v1736
        %v1738 = vrot.slane %v1728, %v1737
        %v1740 = vunpack.c.l.s4 1966171168
        %v1741 = vunpack.c.0.s8 %v1740
        %v1742 = vlaneseq
        %v1743 = vshrl.u32 %v1742, 7
        %v1744 = vsub.s32 %v1741, %v1743
        %v1745 = vrot.slane %v1729, %v1744
        %v1747 = vunpack.c.l.s4 1966171168
        %v1748 = vunpack.c.0.s8 %v1747
        %v1749 = vlaneseq
        %v1750 = vshrl.u32 %v1749, 7
        %v1751 = vsub.s32 %v1748, %v1750
        %v1752 = vrot.slane %v1730, %v1751
        %v1754 = vunpack.c.l.s4 1966171168
        %v1755 = vunpack.c.0.s8 %v1754
        %v1756 = vlaneseq
        %v1757 = vshrl.u32 %v1756, 7
        %v1758 = vsub.s32 %v1755, %v1757
        %v1759 = vrot.slane %v1731, %v1758
        %v1760 = vcombine.low %v1738, %v1745
        %v1761 = vcombine.low %v1752, %v1759
        %v1763 = vunpack.c.l.s4 1966171168
        %v1764 = vunpack.c.0.s8 %v1763
        %v1765 = vlaneseq
        %v1766 = vshrl.u32 %v1765, 7
        %v1767 = vsub.s32 %v1764, %v1766
        %v1768 = vrot.slane %v1760, %v1767
        %v1770 = vunpack.c.l.s4 1966171168
        %v1771 = vunpack.c.0.s8 %v1770
        %v1772 = vlaneseq
        %v1773 = vshrl.u32 %v1772, 7
        %v1774 = vsub.s32 %v1771, %v1773
        %v1775 = vrot.slane %v1761, %v1774
        %v1776 = vcombine.low %v1768, %v1775
        %v1777 = vcombine.low %v663, %v665
        %v1778 = vcombine.low %v667, %v681
        %v1779 = vcombine.low %v705, %v719
        %v1780 = vcombine.low %v727, %v729
        %v1782 = vunpack.c.l.s4 1966171168
        %v1783 = vunpack.c.0.s8 %v1782
        %v1784 = vlaneseq
        %v1785 = vshrl.u32 %v1784, 7
        %v1786 = vsub.s32 %v1783, %v1785
        %v1787 = vrot.slane %v1777, %v1786
        %v1789 = vunpack.c.l.s4 1966171168
        %v1790 = vunpack.c.0.s8 %v1789
        %v1791 = vlaneseq
        %v1792 = vshrl.u32 %v1791, 7
        %v1793 = vsub.s32 %v1790, %v1792
        %v1794 = vrot.slane %v1778, %v1793
        %v1796 = vunpack.c.l.s4 1966171168
        %v1797 = vunpack.c.0.s8 %v1796
        %v1798 = vlaneseq
        %v1799 = vshrl.u32 %v1798, 7
        %v1800 = vsub.s32 %v1797, %v1799
        %v1801 = vrot.slane %v1779, %v1800
        %v1803 = vunpack.c.l.s4 1966171168
        %v1804 = vunpack.c.0.s8 %v1803
        %v1805 = vlaneseq
        %v1806 = vshrl.u32 %v1805, 7
        %v1807 = vsub.s32 %v1804, %v1806
        %v1808 = vrot.slane %v1780, %v1807
        %v1809 = vcombine.low %v1787, %v1794
        %v1810 = vcombine.low %v1801, %v1808
        %v1812 = vunpack.c.l.s4 1966171168
        %v1813 = vunpack.c.0.s8 %v1812
        %v1814 = vlaneseq
        %v1815 = vshrl.u32 %v1814, 7
        %v1816 = vsub.s32 %v1813, %v1815
        %v1817 = vrot.slane %v1809, %v1816
        %v1819 = vunpack.c.l.s4 1966171168
        %v1820 = vunpack.c.0.s8 %v1819
        %v1821 = vlaneseq
        %v1822 = vshrl.u32 %v1821, 7
        %v1823 = vsub.s32 %v1820, %v1822
        %v1824 = vrot.slane %v1810, %v1823
        %v1825 = vcombine.low %v1817, %v1824
        %v1826 = vcombine.low %v712, %v726
        %v1827 = vcombine.low %v728, %v730
        %v1828 = vcombine.low %v744, %v768
        %v1829 = vcombine.low %v782, %v790
        %v1831 = vunpack.c.l.s4 1966171168
        %v1832 = vunpack.c.0.s8 %v1831
        %v1833 = vlaneseq
        %v1834 = vshrl.u32 %v1833, 7
        %v1835 = vsub.s32 %v1832, %v1834
        %v1836 = vrot.slane %v1826, %v1835
        %v1838 = vunpack.c.l.s4 1966171168
        %v1839 = vunpack.c.0.s8 %v1838
        %v1840 = vlaneseq
        %v1841 = vshrl.u32 %v1840, 7
        %v1842 = vsub.s32 %v1839, %v1841
        %v1843 = vrot.slane %v1827, %v1842
        %v1845 = vunpack.c.l.s4 1966171168
        %v1846 = vunpack.c.0.s8 %v1845
        %v1847 = vlaneseq
        %v1848 = vshrl.u32 %v1847, 7
        %v1849 = vsub.s32 %v1846, %v1848
        %v1850 = vrot.slane %v1828, %v1849
        %v1852 = vunpack.c.l.s4 1966171168
        %v1853 = vunpack.c.0.s8 %v1852
        %v1854 = vlaneseq
        %v1855 = vshrl.u32 %v1854, 7
        %v1856 = vsub.s32 %v1853, %v1855
        %v1857 = vrot.slane %v1829, %v1856
        %v1858 = vcombine.low %v1836, %v1843
        %v1859 = vcombine.low %v1850, %v1857
        %v1861 = vunpack.c.l.s4 1966171168
        %v1862 = vunpack.c.0.s8 %v1861
        %v1863 = vlaneseq
        %v1864 = vshrl.u32 %v1863, 7
        %v1865 = vsub.s32 %v1862, %v1864
        %v1866 = vrot.slane %v1858, %v1865
        %v1868 = vunpack.c.l.s4 1966171168
        %v1869 = vunpack.c.0.s8 %v1868
        %v1870 = vlaneseq
        %v1871 = vshrl.u32 %v1870, 7
        %v1872 = vsub.s32 %v1869, %v1871
        %v1873 = vrot.slane %v1859, %v1872
        %v1874 = vcombine.low %v1866, %v1873
        %v1875 = vcombine.low %v792, %v775
        %v1876 = vcombine.low %v789, %v791
        %v1877 = vcombine.low %v793, %v807
        %v1878 = vcombine.low %v831, %v845
        %v1880 = vunpack.c.l.s4 1966171168
        %v1881 = vunpack.c.0.s8 %v1880
        %v1882 = vlaneseq
        %v1883 = vshrl.u32 %v1882, 7
        %v1884 = vsub.s32 %v1881, %v1883
        %v1885 = vrot.slane %v1875, %v1884
        %v1887 = vunpack.c.l.s4 1966171168
        %v1888 = vunpack.c.0.s8 %v1887
        %v1889 = vlaneseq
        %v1890 = vshrl.u32 %v1889, 7
        %v1891 = vsub.s32 %v1888, %v1890
        %v1892 = vrot.slane %v1876, %v1891
        %v1894 = vunpack.c.l.s4 1966171168
        %v1895 = vunpack.c.0.s8 %v1894
        %v1896 = vlaneseq
        %v1897 = vshrl.u32 %v1896, 7
        %v1898 = vsub.s32 %v1895, %v1897
        %v1899 = vrot.slane %v1877, %v1898
        %v1901 = vunpack.c.l.s4 1966171168
        %v1902 = vunpack.c.0.s8 %v1901
        %v1903 = vlaneseq
        %v1904 = vshrl.u32 %v1903, 7
        %v1905 = vsub.s32 %v1902, %v1904
        %v1906 = vrot.slane %v1878, %v1905
        %v1907 = vcombine.low %v1885, %v1892
        %v1908 = vcombine.low %v1899, %v1906
        %v1910 = vunpack.c.l.s4 1966171168
        %v1911 = vunpack.c.0.s8 %v1910
        %v1912 = vlaneseq
        %v1913 = vshrl.u32 %v1912, 7
        %v1914 = vsub.s32 %v1911, %v1913
        %v1915 = vrot.slane %v1907, %v1914
        %v1917 = vunpack.c.l.s4 1966171168
        %v1918 = vunpack.c.0.s8 %v1917
        %v1919 = vlaneseq
        %v1920 = vshrl.u32 %v1919, 7
        %v1921 = vsub.s32 %v1918, %v1920
        %v1922 = vrot.slane %v1908, %v1921
        %v1923 = vcombine.low %v1915, %v1922
        %v1924 = vcombine.low %v853, %v855
        %v1925 = vcombine.low %v838, %v852
        %v1926 = vcombine.low %v854, %v856
        %v1927 = vcombine.low %v870, %v894
        %v1929 = vunpack.c.l.s4 1966171168
        %v1930 = vunpack.c.0.s8 %v1929
        %v1931 = vlaneseq
        %v1932 = vshrl.u32 %v1931, 7
        %v1933 = vsub.s32 %v1930, %v1932
        %v1934 = vrot.slane %v1924, %v1933
        %v1936 = vunpack.c.l.s4 1966171168
        %v1937 = vunpack.c.0.s8 %v1936
        %v1938 = vlaneseq
        %v1939 = vshrl.u32 %v1938, 7
        %v1940 = vsub.s32 %v1937, %v1939
        %v1941 = vrot.slane %v1925, %v1940
        %v1943 = vunpack.c.l.s4 1966171168
        %v1944 = vunpack.c.0.s8 %v1943
        %v1945 = vlaneseq
        %v1946 = vshrl.u32 %v1945, 7
        %v1947 = vsub.s32 %v1944, %v1946
        %v1948 = vrot.slane %v1926, %v1947
        %v1950 = vunpack.c.l.s4 1966171168
        %v1951 = vunpack.c.0.s8 %v1950
        %v1952 = vlaneseq
        %v1953 = vshrl.u32 %v1952, 7
        %v1954 = vsub.s32 %v1951, %v1953
        %v1955 = vrot.slane %v1927, %v1954
        %v1956 = vcombine.low %v1934, %v1941
        %v1957 = vcombine.low %v1948, %v1955
        %v1959 = vunpack.c.l.s4 1966171168
        %v1960 = vunpack.c.0.s8 %v1959
        %v1961 = vlaneseq
        %v1962 = vshrl.u32 %v1961, 7
        %v1963 = vsub.s32 %v1960, %v1962
        %v1964 = vrot.slane %v1956, %v1963
        %v1966 = vunpack.c.l.s4 1966171168
        %v1967 = vunpack.c.0.s8 %v1966
        %v1968 = vlaneseq
        %v1969 = vshrl.u32 %v1968, 7
        %v1970 = vsub.s32 %v1967, %v1969
        %v1971 = vrot.slane %v1957, %v1970
        %v1972 = vcombine.low %v1964, %v1971
        %v1973 = vcombine.low %v908, %v916
        %v1974 = vcombine.low %v918, %v901
        %v1975 = vcombine.low %v915, %v917
        %v1976 = vcombine.low %v919, %v933
        %v1978 = vunpack.c.l.s4 1966171168
        %v1979 = vunpack.c.0.s8 %v1978
        %v1980 = vlaneseq
        %v1981 = vshrl.u32 %v1980, 7
        %v1982 = vsub.s32 %v1979, %v1981
        %v1983 = vrot.slane %v1973, %v1982
        %v1985 = vunpack.c.l.s4 1966171168
        %v1986 = vunpack.c.0.s8 %v1985
        %v1987 = vlaneseq
        %v1988 = vshrl.u32 %v1987, 7
        %v1989 = vsub.s32 %v1986, %v1988
        %v1990 = vrot.slane %v1974, %v1989
        %v1992 = vunpack.c.l.s4 1966171168
        %v1993 = vunpack.c.0.s8 %v1992
        %v1994 = vlaneseq
        %v1995 = vshrl.u32 %v1994, 7
        %v1996 = vsub.s32 %v1993, %v1995
        %v1997 = vrot.slane %v1975, %v1996
        %v1999 = vunpack.c.l.s4 1966171168
        %v2000 = vunpack.c.0.s8 %v1999
        %v2001 = vlaneseq
        %v2002 = vshrl.u32 %v2001, 7
        %v2003 = vsub.s32 %v2000, %v2002
        %v2004 = vrot.slane %v1976, %v2003
        %v2005 = vcombine.low %v1983, %v1990
        %v2006 = vcombine.low %v1997, %v2004
        %v2008 = vunpack.c.l.s4 1966171168
        %v2009 = vunpack.c.0.s8 %v2008
        %v2010 = vlaneseq
        %v2011 = vshrl.u32 %v2010, 7
        %v2012 = vsub.s32 %v2009, %v2011
        %v2013 = vrot.slane %v2005, %v2012
        %v2015 = vunpack.c.l.s4 1966171168
        %v2016 = vunpack.c.0.s8 %v2015
        %v2017 = vlaneseq
        %v2018 = vshrl.u32 %v2017, 7
        %v2019 = vsub.s32 %v2016, %v2018
        %v2020 = vrot.slane %v2006, %v2019
        %v2021 = vcombine.low %v2013, %v2020
        %v2022 = vcombine.low %v957, %v971
        %v2023 = vcombine.low %v979, %v981
        %v2024 = vcombine.low %v964, %v978
        %v2025 = vcombine.low %v980, %v982
        %v2027 = vunpack.c.l.s4 1966171168
        %v2028 = vunpack.c.0.s8 %v2027
        %v2029 = vlaneseq
        %v2030 = vshrl.u32 %v2029, 7
        %v2031 = vsub.s32 %v2028, %v2030
        %v2032 = vrot.slane %v2022, %v2031
        %v2034 = vunpack.c.l.s4 1966171168
        %v2035 = vunpack.c.0.s8 %v2034
        %v2036 = vlaneseq
        %v2037 = vshrl.u32 %v2036, 7
        %v2038 = vsub.s32 %v2035, %v2037
        %v2039 = vrot.slane %v2023, %v2038
        %v2041 = vunpack.c.l.s4 1966171168
        %v2042 = vunpack.c.0.s8 %v2041
        %v2043 = vlaneseq
        %v2044 = vshrl.u32 %v2043, 7
        %v2045 = vsub.s32 %v2042, %v2044
        %v2046 = vrot.slane %v2024, %v2045
        %v2048 = vunpack.c.l.s4 1966171168
        %v2049 = vunpack.c.0.s8 %v2048
        %v2050 = vlaneseq
        %v2051 = vshrl.u32 %v2050, 7
        %v2052 = vsub.s32 %v2049, %v2051
        %v2053 = vrot.slane %v2025, %v2052
        %v2054 = vcombine.low %v2032, %v2039
        %v2055 = vcombine.low %v2046, %v2053
        %v2057 = vunpack.c.l.s4 1966171168
        %v2058 = vunpack.c.0.s8 %v2057
        %v2059 = vlaneseq
        %v2060 = vshrl.u32 %v2059, 7
        %v2061 = vsub.s32 %v2058, %v2060
        %v2062 = vrot.slane %v2054, %v2061
        %v2064 = vunpack.c.l.s4 1966171168
        %v2065 = vunpack.c.0.s8 %v2064
        %v2066 = vlaneseq
        %v2067 = vshrl.u32 %v2066, 7
        %v2068 = vsub.s32 %v2065, %v2067
        %v2069 = vrot.slane %v2055, %v2068
        %v2070 = vcombine.low %v2062, %v2069
        %v2071 = vcombine.low %v996, %v1020
        %v2072 = vcombine.low %v1034, %v1042
        %v2073 = vcombine.low %v1044, %v1027
        %v2074 = vcombine.low %v1041, %v1043
        %v2076 = vunpack.c.l.s4 1966171168
        %v2077 = vunpack.c.0.s8 %v2076
        %v2078 = vlaneseq
        %v2079 = vshrl.u32 %v2078, 7
        %v2080 = vsub.s32 %v2077, %v2079
        %v2081 = vrot.slane %v2071, %v2080
        %v2083 = vunpack.c.l.s4 1966171168
        %v2084 = vunpack.c.0.s8 %v2083
        %v2085 = vlaneseq
        %v2086 = vshrl.u32 %v2085, 7
        %v2087 = vsub.s32 %v2084, %v2086
        %v2088 = vrot.slane %v2072, %v2087
        %v2090 = vunpack.c.l.s4 1966171168
        %v2091 = vunpack.c.0.s8 %v2090
        %v2092 = vlaneseq
        %v2093 = vshrl.u32 %v2092, 7
        %v2094 = vsub.s32 %v2091, %v2093
        %v2095 = vrot.slane %v2073, %v2094
        %v2097 = vunpack.c.l.s4 1966171168
        %v2098 = vunpack.c.0.s8 %v2097
        %v2099 = vlaneseq
        %v2100 = vshrl.u32 %v2099, 7
        %v2101 = vsub.s32 %v2098, %v2100
        %v2102 = vrot.slane %v2074, %v2101
        %v2103 = vcombine.low %v2081, %v2088
        %v2104 = vcombine.low %v2095, %v2102
        %v2106 = vunpack.c.l.s4 1966171168
        %v2107 = vunpack.c.0.s8 %v2106
        %v2108 = vlaneseq
        %v2109 = vshrl.u32 %v2108, 7
        %v2110 = vsub.s32 %v2107, %v2109
        %v2111 = vrot.slane %v2103, %v2110
        %v2113 = vunpack.c.l.s4 1966171168
        %v2114 = vunpack.c.0.s8 %v2113
        %v2115 = vlaneseq
        %v2116 = vshrl.u32 %v2115, 7
        %v2117 = vsub.s32 %v2114, %v2116
        %v2118 = vrot.slane %v2104, %v2117
        %v2119 = vcombine.low %v2111, %v2118
        %v2120 = vcombine.low %v1045, %v1059
        %v2121 = vcombine.low %v1083, %v1097
        %v2122 = vcombine.low %v1105, %v1107
        %v2123 = vcombine.low %v1090, %v1104
        %v2125 = vunpack.c.l.s4 1966171168
        %v2126 = vunpack.c.0.s8 %v2125
        %v2127 = vlaneseq
        %v2128 = vshrl.u32 %v2127, 7
        %v2129 = vsub.s32 %v2126, %v2128
        %v2130 = vrot.slane %v2120, %v2129
        %v2132 = vunpack.c.l.s4 1966171168
        %v2133 = vunpack.c.0.s8 %v2132
        %v2134 = vlaneseq
        %v2135 = vshrl.u32 %v2134, 7
        %v2136 = vsub.s32 %v2133, %v2135
        %v2137 = vrot.slane %v2121, %v2136
        %v2139 = vunpack.c.l.s4 1966171168
        %v2140 = vunpack.c.0.s8 %v2139
        %v2141 = vlaneseq
        %v2142 = vshrl.u32 %v2141, 7
        %v2143 = vsub.s32 %v2140, %v2142
        %v2144 = vrot.slane %v2122, %v2143
        %v2146 = vunpack.c.l.s4 1966171168
        %v2147 = vunpack.c.0.s8 %v2146
        %v2148 = vlaneseq
        %v2149 = vshrl.u32 %v2148, 7
        %v2150 = vsub.s32 %v2147, %v2149
        %v2151 = vrot.slane %v2123, %v2150
        %v2152 = vcombine.low %v2130, %v2137
        %v2153 = vcombine.low %v2144, %v2151
        %v2155 = vunpack.c.l.s4 1966171168
        %v2156 = vunpack.c.0.s8 %v2155
        %v2157 = vlaneseq
        %v2158 = vshrl.u32 %v2157, 7
        %v2159 = vsub.s32 %v2156, %v2158
        %v2160 = vrot.slane %v2152, %v2159
        %v2162 = vunpack.c.l.s4 1966171168
        %v2163 = vunpack.c.0.s8 %v2162
        %v2164 = vlaneseq
        %v2165 = vshrl.u32 %v2164, 7
        %v2166 = vsub.s32 %v2163, %v2165
        %v2167 = vrot.slane %v2153, %v2166
        %v2168 = vcombine.low %v2160, %v2167
        %v2169 = vcombine.low %v1106, %v1108
        %v2170 = vcombine.low %v1122, %v1146
        %v2171 = vcombine.low %v1160, %v1168
        %v2172 = vcombine.low %v1170, %v1153
        %v2174 = vunpack.c.l.s4 1966171168
        %v2175 = vunpack.c.0.s8 %v2174
        %v2176 = vlaneseq
        %v2177 = vshrl.u32 %v2176, 7
        %v2178 = vsub.s32 %v2175, %v2177
        %v2179 = vrot.slane %v2169, %v2178
        %v2181 = vunpack.c.l.s4 1966171168
        %v2182 = vunpack.c.0.s8 %v2181
        %v2183 = vlaneseq
        %v2184 = vshrl.u32 %v2183, 7
        %v2185 = vsub.s32 %v2182, %v2184
        %v2186 = vrot.slane %v2170, %v2185
        %v2188 = vunpack.c.l.s4 1966171168
        %v2189 = vunpack.c.0.s8 %v2188
        %v2190 = vlaneseq
        %v2191 = vshrl.u32 %v2190, 7
        %v2192 = vsub.s32 %v2189, %v2191
        %v2193 = vrot.slane %v2171, %v2192
        %v2195 = vunpack.c.l.s4 1966171168
        %v2196 = vunpack.c.0.s8 %v2195
        %v2197 = vlaneseq
        %v2198 = vshrl.u32 %v2197, 7
        %v2199 = vsub.s32 %v2196, %v2198
        %v2200 = vrot.slane %v2172, %v2199
        %v2201 = vcombine.low %v2179, %v2186
        %v2202 = vcombine.low %v2193, %v2200
        %v2204 = vunpack.c.l.s4 1966171168
        %v2205 = vunpack.c.0.s8 %v2204
        %v2206 = vlaneseq
        %v2207 = vshrl.u32 %v2206, 7
        %v2208 = vsub.s32 %v2205, %v2207
        %v2209 = vrot.slane %v2201, %v2208
        %v2211 = vunpack.c.l.s4 1966171168
        %v2212 = vunpack.c.0.s8 %v2211
        %v2213 = vlaneseq
        %v2214 = vshrl.u32 %v2213, 7
        %v2215 = vsub.s32 %v2212, %v2214
        %v2216 = vrot.slane %v2202, %v2215
        %v2217 = vcombine.low %v2209, %v2216
        %v2218 = vcombine.low %v1167, %v1169
        %v2219 = vcombine.low %v1171, %v1185
        %v2220 = vcombine.low %v1209, %v1223
        %v2221 = vcombine.low %v1231, %v1233
        %v2223 = vunpack.c.l.s4 1966171168
        %v2224 = vunpack.c.0.s8 %v2223
        %v2225 = vlaneseq
        %v2226 = vshrl.u32 %v2225, 7
        %v2227 = vsub.s32 %v2224, %v2226
        %v2228 = vrot.slane %v2218, %v2227
        %v2230 = vunpack.c.l.s4 1966171168
        %v2231 = vunpack.c.0.s8 %v2230
        %v2232 = vlaneseq
        %v2233 = vshrl.u32 %v2232, 7
        %v2234 = vsub.s32 %v2231, %v2233
        %v2235 = vrot.slane %v2219, %v2234
        %v2237 = vunpack.c.l.s4 1966171168
        %v2238 = vunpack.c.0.s8 %v2237
        %v2239 = vlaneseq
        %v2240 = vshrl.u32 %v2239, 7
        %v2241 = vsub.s32 %v2238, %v2240
        %v2242 = vrot.slane %v2220, %v2241
        %v2244 = vunpack.c.l.s4 1966171168
        %v2245 = vunpack.c.0.s8 %v2244
        %v2246 = vlaneseq
        %v2247 = vshrl.u32 %v2246, 7
        %v2248 = vsub.s32 %v2245, %v2247
        %v2249 = vrot.slane %v2221, %v2248
        %v2250 = vcombine.low %v2228, %v2235
        %v2251 = vcombine.low %v2242, %v2249
        %v2253 = vunpack.c.l.s4 1966171168
        %v2254 = vunpack.c.0.s8 %v2253
        %v2255 = vlaneseq
        %v2256 = vshrl.u32 %v2255, 7
        %v2257 = vsub.s32 %v2254, %v2256
        %v2258 = vrot.slane %v2250, %v2257
        %v2260 = vunpack.c.l.s4 1966171168
        %v2261 = vunpack.c.0.s8 %v2260
        %v2262 = vlaneseq
        %v2263 = vshrl.u32 %v2262, 7
        %v2264 = vsub.s32 %v2261, %v2263
        %v2265 = vrot.slane %v2251, %v2264
        %v2266 = vcombine.low %v2258, %v2265
        %v2267 = vcombine.low %v1216, %v1230
        %v2268 = vcombine.low %v1232, %v1234
        %v2269 = vcombine.low %v1248, %v1272
        %v2270 = vcombine.low %v1286, %v1294
        %v2272 = vunpack.c.l.s4 1966171168
        %v2273 = vunpack.c.0.s8 %v2272
        %v2274 = vlaneseq
        %v2275 = vshrl.u32 %v2274, 7
        %v2276 = vsub.s32 %v2273, %v2275
        %v2277 = vrot.slane %v2267, %v2276
        %v2279 = vunpack.c.l.s4 1966171168
        %v2280 = vunpack.c.0.s8 %v2279
        %v2281 = vlaneseq
        %v2282 = vshrl.u32 %v2281, 7
        %v2283 = vsub.s32 %v2280, %v2282
        %v2284 = vrot.slane %v2268, %v2283
        %v2286 = vunpack.c.l.s4 1966171168
        %v2287 = vunpack.c.0.s8 %v2286
        %v2288 = vlaneseq
        %v2289 = vshrl.u32 %v2288, 7
        %v2290 = vsub.s32 %v2287, %v2289
        %v2291 = vrot.slane %v2269, %v2290
        %v2293 = vunpack.c.l.s4 1966171168
        %v2294 = vunpack.c.0.s8 %v2293
        %v2295 = vlaneseq
        %v2296 = vshrl.u32 %v2295, 7
        %v2297 = vsub.s32 %v2294, %v2296
        %v2298 = vrot.slane %v2270, %v2297
        %v2299 = vcombine.low %v2277, %v2284
        %v2300 = vcombine.low %v2291, %v2298
        %v2302 = vunpack.c.l.s4 1966171168
        %v2303 = vunpack.c.0.s8 %v2302
        %v2304 = vlaneseq
        %v2305 = vshrl.u32 %v2304, 7
        %v2306 = vsub.s32 %v2303, %v2305
        %v2307 = vrot.slane %v2299, %v2306
        %v2309 = vunpack.c.l.s4 1966171168
        %v2310 = vunpack.c.0.s8 %v2309
        %v2311 = vlaneseq
        %v2312 = vshrl.u32 %v2311, 7
        %v2313 = vsub.s32 %v2310, %v2312
        %v2314 = vrot.slane %v2300, %v2313
        %v2315 = vcombine.low %v2307, %v2314
        %v2316 = vcombine.low %v1296, %v1279
        %v2317 = vcombine.low %v1293, %v1295
        %v2318 = vcombine.low %v1297, %v1311
        %v2319 = vcombine.low %v1335, %v1349
        %v2321 = vunpack.c.l.s4 1966171168
        %v2322 = vunpack.c.0.s8 %v2321
        %v2323 = vlaneseq
        %v2324 = vshrl.u32 %v2323, 7
        %v2325 = vsub.s32 %v2322, %v2324
        %v2326 = vrot.slane %v2316, %v2325
        %v2328 = vunpack.c.l.s4 1966171168
        %v2329 = vunpack.c.0.s8 %v2328
        %v2330 = vlaneseq
        %v2331 = vshrl.u32 %v2330, 7
        %v2332 = vsub.s32 %v2329, %v2331
        %v2333 = vrot.slane %v2317, %v2332
        %v2335 = vunpack.c.l.s4 1966171168
        %v2336 = vunpack.c.0.s8 %v2335
        %v2337 = vlaneseq
        %v2338 = vshrl.u32 %v2337, 7
        %v2339 = vsub.s32 %v2336, %v2338
        %v2340 = vrot.slane %v2318, %v2339
        %v2342 = vunpack.c.l.s4 1966171168
        %v2343 = vunpack.c.0.s8 %v2342
        %v2344 = vlaneseq
        %v2345 = vshrl.u32 %v2344, 7
        %v2346 = vsub.s32 %v2343, %v2345
        %v2347 = vrot.slane %v2319, %v2346
        %v2348 = vcombine.low %v2326, %v2333
        %v2349 = vcombine.low %v2340, %v2347
        %v2351 = vunpack.c.l.s4 1966171168
        %v2352 = vunpack.c.0.s8 %v2351
        %v2353 = vlaneseq
        %v2354 = vshrl.u32 %v2353, 7
        %v2355 = vsub.s32 %v2352, %v2354
        %v2356 = vrot.slane %v2348, %v2355
        %v2358 = vunpack.c.l.s4 1966171168
        %v2359 = vunpack.c.0.s8 %v2358
        %v2360 = vlaneseq
        %v2361 = vshrl.u32 %v2360, 7
        %v2362 = vsub.s32 %v2359, %v2361
        %v2363 = vrot.slane %v2349, %v2362
        %v2364 = vcombine.low %v2356, %v2363
        %v2365 = vcombine.low %v1357, %v1359
        %v2366 = vcombine.low %v1342, %v1356
        %v2367 = vcombine.low %v1358, %v1360
        %v2368 = vcombine.low %v1374, %v1398
        %v2370 = vunpack.c.l.s4 1966171168
        %v2371 = vunpack.c.0.s8 %v2370
        %v2372 = vlaneseq
        %v2373 = vshrl.u32 %v2372, 7
        %v2374 = vsub.s32 %v2371, %v2373
        %v2375 = vrot.slane %v2365, %v2374
        %v2377 = vunpack.c.l.s4 1966171168
        %v2378 = vunpack.c.0.s8 %v2377
        %v2379 = vlaneseq
        %v2380 = vshrl.u32 %v2379, 7
        %v2381 = vsub.s32 %v2378, %v2380
        %v2382 = vrot.slane %v2366, %v2381
        %v2384 = vunpack.c.l.s4 1966171168
        %v2385 = vunpack.c.0.s8 %v2384
        %v2386 = vlaneseq
        %v2387 = vshrl.u32 %v2386, 7
        %v2388 = vsub.s32 %v2385, %v2387
        %v2389 = vrot.slane %v2367, %v2388
        %v2391 = vunpack.c.l.s4 1966171168
        %v2392 = vunpack.c.0.s8 %v2391
        %v2393 = vlaneseq
        %v2394 = vshrl.u32 %v2393, 7
        %v2395 = vsub.s32 %v2392, %v2394
        %v2396 = vrot.slane %v2368, %v2395
        %v2397 = vcombine.low %v2375, %v2382
        %v2398 = vcombine.low %v2389, %v2396
        %v2400 = vunpack.c.l.s4 1966171168
        %v2401 = vunpack.c.0.s8 %v2400
        %v2402 = vlaneseq
        %v2403 = vshrl.u32 %v2402, 7
        %v2404 = vsub.s32 %v2401, %v2403
        %v2405 = vrot.slane %v2397, %v2404
        %v2407 = vunpack.c.l.s4 1966171168
        %v2408 = vunpack.c.0.s8 %v2407
        %v2409 = vlaneseq
        %v2410 = vshrl.u32 %v2409, 7
        %v2411 = vsub.s32 %v2408, %v2410
        %v2412 = vrot.slane %v2398, %v2411
        %v2413 = vcombine.low %v2405, %v2412
        %v2414 = vcombine.low %v1412, %v1420
        %v2415 = vcombine.low %v1422, %v1405
        %v2416 = vcombine.low %v1419, %v1421
        %v2417 = vcombine.low %v1423, %v1437
        %v2419 = vunpack.c.l.s4 1966171168
        %v2420 = vunpack.c.0.s8 %v2419
        %v2421 = vlaneseq
        %v2422 = vshrl.u32 %v2421, 7
        %v2423 = vsub.s32 %v2420, %v2422
        %v2424 = vrot.slane %v2414, %v2423
        %v2426 = vunpack.c.l.s4 1966171168
        %v2427 = vunpack.c.0.s8 %v2426
        %v2428 = vlaneseq
        %v2429 = vshrl.u32 %v2428, 7
        %v2430 = vsub.s32 %v2427, %v2429
        %v2431 = vrot.slane %v2415, %v2430
        %v2433 = vunpack.c.l.s4 1966171168
        %v2434 = vunpack.c.0.s8 %v2433
        %v2435 = vlaneseq
        %v2436 = vshrl.u32 %v2435, 7
        %v2437 = vsub.s32 %v2434, %v2436
        %v2438 = vrot.slane %v2416, %v2437
        %v2440 = vunpack.c.l.s4 1966171168
        %v2441 = vunpack.c.0.s8 %v2440
        %v2442 = vlaneseq
        %v2443 = vshrl.u32 %v2442, 7
        %v2444 = vsub.s32 %v2441, %v2443
        %v2445 = vrot.slane %v2417, %v2444
        %v2446 = vcombine.low %v2424, %v2431
        %v2447 = vcombine.low %v2438, %v2445
        %v2449 = vunpack.c.l.s4 1966171168
        %v2450 = vunpack.c.0.s8 %v2449
        %v2451 = vlaneseq
        %v2452 = vshrl.u32 %v2451, 7
        %v2453 = vsub.s32 %v2450, %v2452
        %v2454 = vrot.slane %v2446, %v2453
        %v2456 = vunpack.c.l.s4 1966171168
        %v2457 = vunpack.c.0.s8 %v2456
        %v2458 = vlaneseq
        %v2459 = vshrl.u32 %v2458, 7
        %v2460 = vsub.s32 %v2457, %v2459
        %v2461 = vrot.slane %v2447, %v2460
        %v2462 = vcombine.low %v2454, %v2461
        %v2463 = vcombine.low %v1461, %v1475
        %v2464 = vcombine.low %v1483, %v1485
        %v2465 = vcombine.low %v1468, %v1482
        %v2466 = vcombine.low %v1484, %v1486
        %v2468 = vunpack.c.l.s4 1966171168
        %v2469 = vunpack.c.0.s8 %v2468
        %v2470 = vlaneseq
        %v2471 = vshrl.u32 %v2470, 7
        %v2472 = vsub.s32 %v2469, %v2471
        %v2473 = vrot.slane %v2463, %v2472
        %v2475 = vunpack.c.l.s4 1966171168
        %v2476 = vunpack.c.0.s8 %v2475
        %v2477 = vlaneseq
        %v2478 = vshrl.u32 %v2477, 7
        %v2479 = vsub.s32 %v2476, %v2478
        %v2480 = vrot.slane %v2464, %v2479
        %v2482 = vunpack.c.l.s4 1966171168
        %v2483 = vunpack.c.0.s8 %v2482
        %v2484 = vlaneseq
        %v2485 = vshrl.u32 %v2484, 7
        %v2486 = vsub.s32 %v2483, %v2485
        %v2487 = vrot.slane %v2465, %v2486
        %v2489 = vunpack.c.l.s4 1966171168
        %v2490 = vunpack.c.0.s8 %v2489
        %v2491 = vlaneseq
        %v2492 = vshrl.u32 %v2491, 7
        %v2493 = vsub.s32 %v2490, %v2492
        %v2494 = vrot.slane %v2466, %v2493
        %v2495 = vcombine.low %v2473, %v2480
        %v2496 = vcombine.low %v2487, %v2494
        %v2498 = vunpack.c.l.s4 1966171168
        %v2499 = vunpack.c.0.s8 %v2498
        %v2500 = vlaneseq
        %v2501 = vshrl.u32 %v2500, 7
        %v2502 = vsub.s32 %v2499, %v2501
        %v2503 = vrot.slane %v2495, %v2502
        %v2505 = vunpack.c.l.s4 1966171168
        %v2506 = vunpack.c.0.s8 %v2505
        %v2507 = vlaneseq
        %v2508 = vshrl.u32 %v2507, 7
        %v2509 = vsub.s32 %v2506, %v2508
        %v2510 = vrot.slane %v2496, %v2509
        %v2511 = vcombine.low %v2503, %v2510
        %v2512 = vcombine.low %v1500, %v1524
        %v2513 = vcombine.low %v1538, %v1546
        %v2514 = vcombine.low %v1548, %v1531
        %v2515 = vcombine.low %v1545, %v1547
        %v2517 = vunpack.c.l.s4 1966171168
        %v2518 = vunpack.c.0.s8 %v2517
        %v2519 = vlaneseq
        %v2520 = vshrl.u32 %v2519, 7
        %v2521 = vsub.s32 %v2518, %v2520
        %v2522 = vrot.slane %v2512, %v2521
        %v2524 = vunpack.c.l.s4 1966171168
        %v2525 = vunpack.c.0.s8 %v2524
        %v2526 = vlaneseq
        %v2527 = vshrl.u32 %v2526, 7
        %v2528 = vsub.s32 %v2525, %v2527
        %v2529 = vrot.slane %v2513, %v2528
        %v2531 = vunpack.c.l.s4 1966171168
        %v2532 = vunpack.c.0.s8 %v2531
        %v2533 = vlaneseq
        %v2534 = vshrl.u32 %v2533, 7
        %v2535 = vsub.s32 %v2532, %v2534
        %v2536 = vrot.slane %v2514, %v2535
        %v2538 = vunpack.c.l.s4 1966171168
        %v2539 = vunpack.c.0.s8 %v2538
        %v2540 = vlaneseq
        %v2541 = vshrl.u32 %v2540, 7
        %v2542 = vsub.s32 %v2539, %v2541
        %v2543 = vrot.slane %v2515, %v2542
        %v2544 = vcombine.low %v2522, %v2529
        %v2545 = vcombine.low %v2536, %v2543
        %v2547 = vunpack.c.l.s4 1966171168
        %v2548 = vunpack.c.0.s8 %v2547
        %v2549 = vlaneseq
        %v2550 = vshrl.u32 %v2549, 7
        %v2551 = vsub.s32 %v2548, %v2550
        %v2552 = vrot.slane %v2544, %v2551
        %v2554 = vunpack.c.l.s4 1966171168
        %v2555 = vunpack.c.0.s8 %v2554
        %v2556 = vlaneseq
        %v2557 = vshrl.u32 %v2556, 7
        %v2558 = vsub.s32 %v2555, %v2557
        %v2559 = vrot.slane %v2545, %v2558
        %v2560 = vcombine.low %v2552, %v2559
        %v2561 = vcombine.low %v1549, %v1563
        %v2563 = vunpack.c.l.s4 1966171168
        %v2564 = vunpack.c.0.s8 %v2563
        %v2565 = vlaneseq
        %v2566 = vshrl.u32 %v2565, 7
        %v2567 = vsub.s32 %v2564, %v2566
        %v2568 = vrot.slane %v2561, %v2567
        %v2570 = vunpack.c.l.s4 1966171168
        %v2571 = vunpack.c.0.s8 %v2570
        %v2572 = vlaneseq
        %v2573 = vshrl.u32 %v2572, 7
        %v2574 = vsub.s32 %v2571, %v2573
        %v2575 = vrot.slane %v2568, %v2574
        %v2578 = vunpack.c.l.b16 %v386
        %v2579 = vunpack.c.l.b16 %v387
        %v2580 = vpack.c.b16 %v2579, %v2578
        %v2582 = vcombine.low %v1571, %v1579
        %v2583 = vcombine.low %v1578, %v1580
        %v2585 = vunpack.c.l.s4 1983009808
        %v2586 = vunpack.c.0.s8 %v2585
        %v2587 = vlaneseq
        %v2588 = vshrl.u32 %v2587, 7
        %v2589 = vsub.s32 %v2586, %v2588
        %v2590 = vrot.slane %v2582, %v2589
        %v2592 = vunpack.c.l.s4 1983009808
        %v2593 = vunpack.c.0.s8 %v2592
        %v2594 = vlaneseq
        %v2595 = vshrl.u32 %v2594, 7
        %v2596 = vsub.s32 %v2593, %v2595
        %v2597 = vrot.slane %v2583, %v2596
        %v2598 = vcombine.low %v2590, %v2597
        %v2599 = vcombine.low %v1571, %v1571
        %v2600 = vcombine.low %v1579, %v1578
        %v2602 = vunpack.c.l.s4 1983009808
        %v2603 = vunpack.c.0.s8 %v2602
        %v2604 = vlaneseq
        %v2605 = vshrl.u32 %v2604, 7
        %v2606 = vsub.s32 %v2603, %v2605
        %v2607 = vrot.slane %v2599, %v2606
        %v2609 = vunpack.c.l.s4 1983009808
        %v2610 = vunpack.c.0.s8 %v2609
        %v2611 = vlaneseq
        %v2612 = vshrl.u32 %v2611, 7
        %v2613 = vsub.s32 %v2610, %v2612
        %v2614 = vrot.slane %v2600, %v2613
        %v2615 = vcombine.low %v2607, %v2614
        %v2616 = vcombine.low %v1580, %v1571
        %v2618 = vunpack.c.l.s4 1983009808
        %v2619 = vunpack.c.0.s8 %v2618
        %v2620 = vlaneseq
        %v2621 = vshrl.u32 %v2620, 7
        %v2622 = vsub.s32 %v2619, %v2621
        %v2623 = vrot.slane %v2616, %v2622
        %v2624 = vcombine.low %v2623, %v2614
        %v2625 = vcombine.low %v2623, %v2590
        %v2626 = vcombine.low %v2597, %v2590
        %v2627 = vcombine.low %v2597, %v2607
        %v2628 = vcombine.low %v2614, %v2623
        %vm2637 = vcmask 130048
        %v2639 = vsel %vm2637, %v1629, 0
        %v2642 = vsel %vm2637, %v1678, 0
        %v2645 = vsel %vm2637, %v1727, 0
        %v2648 = vsel %vm2637, %v1776, 0
        %v2651 = vsel %vm2637, %v1825, 0
        %v2654 = vsel %vm2637, %v1874, 0
        %v2657 = vsel %vm2637, %v1923, 0
        %v2660 = vsel %vm2637, %v1972, 0
        %v2663 = vsel %vm2637, %v2021, 0
        %v2666 = vsel %vm2637, %v2070, 0
        %v2669 = vsel %vm2637, %v2119, 0
        %v2672 = vsel %vm2637, %v2168, 0
        %v2675 = vsel %vm2637, %v2217, 0
        %v2678 = vsel %vm2637, %v2266, 0
        %v2681 = vsel %vm2637, %v2315, 0
        %v2684 = vsel %vm2637, %v2364, 0
        %v2687 = vsel %vm2637, %v2413, 0
        %v2690 = vsel %vm2637, %v2462, 0
        %v2693 = vsel %vm2637, %v2511, 0
        %v2696 = vsel %vm2637, %v2560, 0
        %v2699 = vsel %vm2637, %v2575, 0
        %2701 = vmatprep.subr.bf16.mxu0 0
        %2702 = vmatpush1.bf16.msra.mxu0 0
        %2703 = vmatprep.subr.bf16.mxu0 0
        %2704 = vmatpush1.bf16.msra.mxu0 0
        %2705 = vmatprep.subr.bf16.mxu0 0
        %2706 = vmatpush1.bf16.msra.mxu0 0
        %2707 = vmatprep.subr.bf16.mxu0 0
        %2708 = vmatpush1.bf16.msra.mxu0 0
        %2709 = vmatprep.subr.bf16.mxu0 0
        %2710 = vmatpush1.bf16.msra.mxu0 0
        %2711 = vmatprep.subr.bf16.mxu0 0
        %2712 = vmatpush1.bf16.msra.mxu0 0
        %2713 = vmatprep.subr.bf16.mxu0 0
        %2714 = vmatpush1.bf16.msra.mxu0 0
        %2715 = vmatprep.subr.bf16.mxu0 0
        %2716 = vmatpush1.bf16.msra.mxu0 %v2580
        %2717 = vmatprep.subr.bf16.mxu0 0
        %2718 = vmatpush2.bf16.msra.mxu0 0
        %2719 = vmatprep.subr.bf16.mxu0 0
        %2720 = vmatpush2.bf16.msra.mxu0 0
        %2721 = vmatprep.subr.bf16.mxu0 0
        %2722 = vmatpush2.bf16.msra.mxu0 0
        %2723 = vmatprep.subr.bf16.mxu0 0
        %2724 = vmatpush2.bf16.msra.mxu0 0
        %2725 = vmatprep.subr.bf16.mxu0 0
        %2726 = vmatpush2.bf16.msra.mxu0 0
        %2727 = vmatprep.subr.bf16.mxu0 0
        %2728 = vmatpush2.bf16.msra.mxu0 0
        %2729 = vmatprep.subr.bf16.mxu0 0
        %2730 = vmatpush2.bf16.msra.mxu0 0
        %2731 = vmatprep.subr.bf16.mxu0 0
        %2732 = vmatpush2.bf16.msra.mxu0 0
        %2733 = vmatprep.mubr.bf16.mxu0 0
        %2734 = vmatmul.mubr.bf16.gmra.mxu0 %v2639
        %v2735 = vpop.f32.mrf.mxu0
        %v2736 = vadd.f32 %v2598, %v2735
        %v2737 = vpop.f32.mrf.mxu0
        %v2738 = vpop.f32.mrf.mxu0
        %v2739 = vadd.f32 %v2598, %v2738
        %v2740 = vpop.f32.mrf.mxu0
        %2741 = vmatprep.mubr.bf16.mxu0 0
        %2742 = vmatmul.mubr.bf16.gmra.mxu0 %v2642
        %v2743 = vpop.f32.mrf.mxu0
        %v2744 = vadd.f32 %v2615, %v2743
        %v2745 = vpop.f32.mrf.mxu0
        %v2746 = vpop.f32.mrf.mxu0
        %v2747 = vadd.f32 %v2624, %v2746
        %v2748 = vpop.f32.mrf.mxu0
        %2749 = vmatprep.mubr.bf16.mxu0 0
        %2750 = vmatmul.mubr.bf16.gmra.mxu0 %v2645
        %v2751 = vpop.f32.mrf.mxu0
        %v2752 = vadd.f32 %v2625, %v2751
        %v2753 = vpop.f32.mrf.mxu0
        %v2754 = vpop.f32.mrf.mxu0
        %v2755 = vadd.f32 %v2626, %v2754
        %v2756 = vpop.f32.mrf.mxu0
        %2757 = vmatprep.mubr.bf16.mxu0 0
        %2758 = vmatmul.mubr.bf16.gmra.mxu0 %v2648
        %v2759 = vpop.f32.mrf.mxu0
        %v2760 = vadd.f32 %v2627, %v2759
        %v2761 = vpop.f32.mrf.mxu0
        %v2762 = vpop.f32.mrf.mxu0
        %v2763 = vadd.f32 %v2628, %v2762
        %v2764 = vpop.f32.mrf.mxu0
        %2765 = vmatprep.mubr.bf16.mxu0 0
        %2766 = vmatmul.mubr.bf16.gmra.mxu0 %v2651
        %v2767 = vpop.f32.mrf.mxu0
        %v2768 = vadd.f32 %v2628, %v2767
        %v2769 = vpop.f32.mrf.mxu0
        %v2770 = vpop.f32.mrf.mxu0
        %v2771 = vadd.f32 %v2598, %v2770
        %v2772 = vpop.f32.mrf.mxu0
        %2773 = vmatprep.mubr.bf16.mxu0 0
        %2774 = vmatmul.mubr.bf16.gmra.mxu0 %v2654
        %v2775 = vpop.f32.mrf.mxu0
        %v2776 = vadd.f32 %v2598, %v2775
        %v2777 = vpop.f32.mrf.mxu0
        %v2778 = vpop.f32.mrf.mxu0
        %v2779 = vadd.f32 %v2615, %v2778
        %v2780 = vpop.f32.mrf.mxu0
        %2781 = vmatprep.mubr.bf16.mxu0 0
        %2782 = vmatmul.mubr.bf16.gmra.mxu0 %v2657
        %v2783 = vpop.f32.mrf.mxu0
        %v2784 = vadd.f32 %v2624, %v2783
        %v2785 = vpop.f32.mrf.mxu0
        %v2786 = vpop.f32.mrf.mxu0
        %v2787 = vadd.f32 %v2625, %v2786
        %v2788 = vpop.f32.mrf.mxu0
        %2789 = vmatprep.mubr.bf16.mxu0 0
        %2790 = vmatmul.mubr.bf16.gmra.mxu0 %v2660
        %v2791 = vpop.f32.mrf.mxu0
        %v2792 = vadd.f32 %v2626, %v2791
        %v2793 = vpop.f32.mrf.mxu0
        %v2794 = vpop.f32.mrf.mxu0
        %v2795 = vadd.f32 %v2627, %v2794
        %v2796 = vpop.f32.mrf.mxu0
        %2797 = vmatprep.mubr.bf16.mxu0 0
        %2798 = vmatmul.mubr.bf16.gmra.mxu0 %v2663
        %v2799 = vpop.f32.mrf.mxu0
        %v2800 = vadd.f32 %v2628, %v2799
        %v2801 = vpop.f32.mrf.mxu0
        %v2802 = vpop.f32.mrf.mxu0
        %v2803 = vadd.f32 %v2628, %v2802
        %v2804 = vpop.f32.mrf.mxu0
        %2805 = vmatprep.mubr.bf16.mxu0 0
        %2806 = vmatmul.mubr.bf16.gmra.mxu0 %v2666
        %v2807 = vpop.f32.mrf.mxu0
        %v2808 = vadd.f32 %v2598, %v2807
        %v2809 = vpop.f32.mrf.mxu0
        %v2810 = vpop.f32.mrf.mxu0
        %v2811 = vadd.f32 %v2598, %v2810
        %v2812 = vpop.f32.mrf.mxu0
        %2813 = vmatprep.mubr.bf16.mxu0 0
        %2814 = vmatmul.mubr.bf16.gmra.mxu0 %v2669
        %v2815 = vpop.f32.mrf.mxu0
        %v2816 = vadd.f32 %v2615, %v2815
        %v2817 = vpop.f32.mrf.mxu0
        %v2818 = vpop.f32.mrf.mxu0
        %v2819 = vadd.f32 %v2624, %v2818
        %v2820 = vpop.f32.mrf.mxu0
        %2821 = vmatprep.mubr.bf16.mxu0 0
        %2822 = vmatmul.mubr.bf16.gmra.mxu0 %v2672
        %v2823 = vpop.f32.mrf.mxu0
        %v2824 = vadd.f32 %v2625, %v2823
        %v2825 = vpop.f32.mrf.mxu0
        %v2826 = vpop.f32.mrf.mxu0
        %v2827 = vadd.f32 %v2626, %v2826
        %v2828 = vpop.f32.mrf.mxu0
        %2829 = vmatprep.mubr.bf16.mxu0 0
        %2830 = vmatmul.mubr.bf16.gmra.mxu0 %v2675
        %v2831 = vpop.f32.mrf.mxu0
        %v2832 = vadd.f32 %v2627, %v2831
        %v2833 = vpop.f32.mrf.mxu0
        %v2834 = vpop.f32.mrf.mxu0
        %v2835 = vadd.f32 %v2628, %v2834
        %v2836 = vpop.f32.mrf.mxu0
        %2837 = vmatprep.mubr.bf16.mxu0 0
        %2838 = vmatmul.mubr.bf16.gmra.mxu0 %v2678
        %v2839 = vpop.f32.mrf.mxu0
        %v2840 = vadd.f32 %v2628, %v2839
        %v2841 = vpop.f32.mrf.mxu0
        %v2842 = vpop.f32.mrf.mxu0
        %v2843 = vadd.f32 %v2598, %v2842
        %v2844 = vpop.f32.mrf.mxu0
        %2845 = vmatprep.mubr.bf16.mxu0 0
        %2846 = vmatmul.mubr.bf16.gmra.mxu0 %v2681
        %v2847 = vpop.f32.mrf.mxu0
        %v2848 = vadd.f32 %v2598, %v2847
        %v2849 = vpop.f32.mrf.mxu0
        %v2850 = vpop.f32.mrf.mxu0
        %v2851 = vadd.f32 %v2615, %v2850
        %v2852 = vpop.f32.mrf.mxu0
        %2853 = vmatprep.mubr.bf16.mxu0 0
        %2854 = vmatmul.mubr.bf16.gmra.mxu0 %v2684
        %v2855 = vpop.f32.mrf.mxu0
        %v2856 = vadd.f32 %v2624, %v2855
        %v2857 = vpop.f32.mrf.mxu0
        %v2858 = vpop.f32.mrf.mxu0
        %v2859 = vadd.f32 %v2625, %v2858
        %v2860 = vpop.f32.mrf.mxu0
        %2861 = vmatprep.mubr.bf16.mxu0 0
        %2862 = vmatmul.mubr.bf16.gmra.mxu0 %v2687
        %v2863 = vpop.f32.mrf.mxu0
        %v2864 = vadd.f32 %v2626, %v2863
        %v2865 = vpop.f32.mrf.mxu0
        %v2866 = vpop.f32.mrf.mxu0
        %v2867 = vadd.f32 %v2627, %v2866
        %v2868 = vpop.f32.mrf.mxu0
        %2869 = vmatprep.mubr.bf16.mxu0 0
        %2870 = vmatmul.mubr.bf16.gmra.mxu0 %v2690
        %v2871 = vpop.f32.mrf.mxu0
        %v2872 = vadd.f32 %v2628, %v2871
        %v2873 = vpop.f32.mrf.mxu0
        %v2874 = vpop.f32.mrf.mxu0
        %v2875 = vadd.f32 %v2628, %v2874
        %v2876 = vpop.f32.mrf.mxu0
        %2877 = vmatprep.mubr.bf16.mxu0 0
        %2878 = vmatmul.mubr.bf16.gmra.mxu0 %v2693
        %v2879 = vpop.f32.mrf.mxu0
        %v2880 = vadd.f32 %v2598, %v2879
        %v2881 = vpop.f32.mrf.mxu0
        %v2882 = vpop.f32.mrf.mxu0
        %v2883 = vadd.f32 %v2598, %v2882
        %v2884 = vpop.f32.mrf.mxu0
        %2885 = vmatprep.mubr.bf16.mxu0 0
        %2886 = vmatmul.mubr.bf16.gmra.mxu0 %v2696
        %v2887 = vpop.f32.mrf.mxu0
        %v2888 = vadd.f32 %v2615, %v2887
        %v2889 = vpop.f32.mrf.mxu0
        %v2890 = vpop.f32.mrf.mxu0
        %v2891 = vadd.f32 %v2624, %v2890
        %v2892 = vpop.f32.mrf.mxu0
        %2893 = vmatprep.mubr.bf16.mxu0 0
        %2894 = vmatmul.mubr.bf16.gmra.mxu0 %v2699
        %v2895 = vpop.f32.mrf.mxu0
        %v2896 = vadd.f32 %v2623, %v2895
        %v2897 = vpop.f32.mrf.mxu0
        %v2898 = vpop.f32.mrf.mxu0
        %v2899 = vpop.f32.mrf.mxu0
        %2900 = vdwg.mxu0
        %v2942 = vcombine.high %v2736, %v2736
        %v2944 = vunpack.c.l.s4 1983009808
        %v2945 = vunpack.c.0.s8 %v2944
        %v2946 = vlaneseq
        %v2947 = vshrl.u32 %v2946, 7
        %v2948 = vsub.s32 %v2945, %v2947
        %v2949 = vrot.slane %v2736, %v2948
        %v2951 = vunpack.c.l.s4 1983009808
        %v2952 = vunpack.c.0.s8 %v2951
        %v2953 = vlaneseq
        %v2954 = vshrl.u32 %v2953, 7
        %v2955 = vsub.s32 %v2952, %v2954
        %v2956 = vrot.slane %v2942, %v2955
        %v2957 = vcombine.high %v2949, %v2949
        %v2958 = vcombine.high %v2956, %v2956
        %v2959 = vcombine.high %v2739, %v2739
        %v2961 = vunpack.c.l.s4 1983009808
        %v2962 = vunpack.c.0.s8 %v2961
        %v2963 = vlaneseq
        %v2964 = vshrl.u32 %v2963, 7
        %v2965 = vsub.s32 %v2962, %v2964
        %v2966 = vrot.slane %v2739, %v2965
        %v2968 = vunpack.c.l.s4 1983009808
        %v2969 = vunpack.c.0.s8 %v2968
        %v2970 = vlaneseq
        %v2971 = vshrl.u32 %v2970, 7
        %v2972 = vsub.s32 %v2969, %v2971
        %v2973 = vrot.slane %v2959, %v2972
        %v2974 = vcombine.high %v2966, %v2966
        %v2975 = vcombine.high %v2973, %v2973
        %v2976 = vcombine.high %v2744, %v2744
        %v2978 = vunpack.c.l.s4 1983009808
        %v2979 = vunpack.c.0.s8 %v2978
        %v2980 = vlaneseq
        %v2981 = vshrl.u32 %v2980, 7
        %v2982 = vsub.s32 %v2979, %v2981
        %v2983 = vrot.slane %v2744, %v2982
        %v2985 = vunpack.c.l.s4 1983009808
        %v2986 = vunpack.c.0.s8 %v2985
        %v2987 = vlaneseq
        %v2988 = vshrl.u32 %v2987, 7
        %v2989 = vsub.s32 %v2986, %v2988
        %v2990 = vrot.slane %v2976, %v2989
        %v2991 = vcombine.high %v2983, %v2983
        %v2992 = vcombine.high %v2990, %v2990
        %v2993 = vcombine.high %v2747, %v2747
        %v2995 = vunpack.c.l.s4 1983009808
        %v2996 = vunpack.c.0.s8 %v2995
        %v2997 = vlaneseq
        %v2998 = vshrl.u32 %v2997, 7
        %v2999 = vsub.s32 %v2996, %v2998
        %v3000 = vrot.slane %v2747, %v2999
        %v3002 = vunpack.c.l.s4 1983009808
        %v3003 = vunpack.c.0.s8 %v3002
        %v3004 = vlaneseq
        %v3005 = vshrl.u32 %v3004, 7
        %v3006 = vsub.s32 %v3003, %v3005
        %v3007 = vrot.slane %v2993, %v3006
        %v3008 = vcombine.high %v3000, %v3000
        %v3009 = vcombine.high %v3007, %v3007
        %v3010 = vcombine.high %v2752, %v2752
        %v3012 = vunpack.c.l.s4 1983009808
        %v3013 = vunpack.c.0.s8 %v3012
        %v3014 = vlaneseq
        %v3015 = vshrl.u32 %v3014, 7
        %v3016 = vsub.s32 %v3013, %v3015
        %v3017 = vrot.slane %v2752, %v3016
        %v3019 = vunpack.c.l.s4 1983009808
        %v3020 = vunpack.c.0.s8 %v3019
        %v3021 = vlaneseq
        %v3022 = vshrl.u32 %v3021, 7
        %v3023 = vsub.s32 %v3020, %v3022
        %v3024 = vrot.slane %v3010, %v3023
        %v3025 = vcombine.high %v3017, %v3017
        %v3026 = vcombine.high %v3024, %v3024
        %v3027 = vcombine.high %v2755, %v2755
        %v3029 = vunpack.c.l.s4 1983009808
        %v3030 = vunpack.c.0.s8 %v3029
        %v3031 = vlaneseq
        %v3032 = vshrl.u32 %v3031, 7
        %v3033 = vsub.s32 %v3030, %v3032
        %v3034 = vrot.slane %v2755, %v3033
        %v3036 = vunpack.c.l.s4 1983009808
        %v3037 = vunpack.c.0.s8 %v3036
        %v3038 = vlaneseq
        %v3039 = vshrl.u32 %v3038, 7
        %v3040 = vsub.s32 %v3037, %v3039
        %v3041 = vrot.slane %v3027, %v3040
        %v3042 = vcombine.high %v3034, %v3034
        %v3043 = vcombine.high %v3041, %v3041
        %v3044 = vcombine.high %v2760, %v2760
        %v3046 = vunpack.c.l.s4 1983009808
        %v3047 = vunpack.c.0.s8 %v3046
        %v3048 = vlaneseq
        %v3049 = vshrl.u32 %v3048, 7
        %v3050 = vsub.s32 %v3047, %v3049
        %v3051 = vrot.slane %v2760, %v3050
        %v3053 = vunpack.c.l.s4 1983009808
        %v3054 = vunpack.c.0.s8 %v3053
        %v3055 = vlaneseq
        %v3056 = vshrl.u32 %v3055, 7
        %v3057 = vsub.s32 %v3054, %v3056
        %v3058 = vrot.slane %v3044, %v3057
        %v3059 = vcombine.high %v3051, %v3051
        %v3060 = vcombine.high %v3058, %v3058
        %v3061 = vcombine.high %v2763, %v2763
        %v3063 = vunpack.c.l.s4 1983009808
        %v3064 = vunpack.c.0.s8 %v3063
        %v3065 = vlaneseq
        %v3066 = vshrl.u32 %v3065, 7
        %v3067 = vsub.s32 %v3064, %v3066
        %v3068 = vrot.slane %v2763, %v3067
        %v3070 = vunpack.c.l.s4 1983009808
        %v3071 = vunpack.c.0.s8 %v3070
        %v3072 = vlaneseq
        %v3073 = vshrl.u32 %v3072, 7
        %v3074 = vsub.s32 %v3071, %v3073
        %v3075 = vrot.slane %v3061, %v3074
        %v3076 = vcombine.high %v3068, %v3068
        %v3077 = vcombine.high %v3075, %v3075
        %v3078 = vcombine.high %v2768, %v2768
        %v3080 = vunpack.c.l.s4 1983009808
        %v3081 = vunpack.c.0.s8 %v3080
        %v3082 = vlaneseq
        %v3083 = vshrl.u32 %v3082, 7
        %v3084 = vsub.s32 %v3081, %v3083
        %v3085 = vrot.slane %v2768, %v3084
        %v3087 = vunpack.c.l.s4 1983009808
        %v3088 = vunpack.c.0.s8 %v3087
        %v3089 = vlaneseq
        %v3090 = vshrl.u32 %v3089, 7
        %v3091 = vsub.s32 %v3088, %v3090
        %v3092 = vrot.slane %v3078, %v3091
        %v3093 = vcombine.high %v3085, %v3085
        %v3094 = vcombine.high %v3092, %v3092
        %v3095 = vcombine.high %v2771, %v2771
        %v3097 = vunpack.c.l.s4 1983009808
        %v3098 = vunpack.c.0.s8 %v3097
        %v3099 = vlaneseq
        %v3100 = vshrl.u32 %v3099, 7
        %v3101 = vsub.s32 %v3098, %v3100
        %v3102 = vrot.slane %v2771, %v3101
        %v3104 = vunpack.c.l.s4 1983009808
        %v3105 = vunpack.c.0.s8 %v3104
        %v3106 = vlaneseq
        %v3107 = vshrl.u32 %v3106, 7
        %v3108 = vsub.s32 %v3105, %v3107
        %v3109 = vrot.slane %v3095, %v3108
        %v3110 = vcombine.high %v3102, %v3102
        %v3111 = vcombine.high %v3109, %v3109
        %v3112 = vcombine.high %v2776, %v2776
        %v3114 = vunpack.c.l.s4 1983009808
        %v3115 = vunpack.c.0.s8 %v3114
        %v3116 = vlaneseq
        %v3117 = vshrl.u32 %v3116, 7
        %v3118 = vsub.s32 %v3115, %v3117
        %v3119 = vrot.slane %v2776, %v3118
        %v3121 = vunpack.c.l.s4 1983009808
        %v3122 = vunpack.c.0.s8 %v3121
        %v3123 = vlaneseq
        %v3124 = vshrl.u32 %v3123, 7
        %v3125 = vsub.s32 %v3122, %v3124
        %v3126 = vrot.slane %v3112, %v3125
        %v3127 = vcombine.high %v3119, %v3119
        %v3128 = vcombine.high %v3126, %v3126
        %v3129 = vcombine.high %v2779, %v2779
        %v3131 = vunpack.c.l.s4 1983009808
        %v3132 = vunpack.c.0.s8 %v3131
        %v3133 = vlaneseq
        %v3134 = vshrl.u32 %v3133, 7
        %v3135 = vsub.s32 %v3132, %v3134
        %v3136 = vrot.slane %v2779, %v3135
        %v3138 = vunpack.c.l.s4 1983009808
        %v3139 = vunpack.c.0.s8 %v3138
        %v3140 = vlaneseq
        %v3141 = vshrl.u32 %v3140, 7
        %v3142 = vsub.s32 %v3139, %v3141
        %v3143 = vrot.slane %v3129, %v3142
        %v3144 = vcombine.high %v3136, %v3136
        %v3145 = vcombine.high %v3143, %v3143
        %v3146 = vcombine.high %v2784, %v2784
        %v3148 = vunpack.c.l.s4 1983009808
        %v3149 = vunpack.c.0.s8 %v3148
        %v3150 = vlaneseq
        %v3151 = vshrl.u32 %v3150, 7
        %v3152 = vsub.s32 %v3149, %v3151
        %v3153 = vrot.slane %v2784, %v3152
        %v3155 = vunpack.c.l.s4 1983009808
        %v3156 = vunpack.c.0.s8 %v3155
        %v3157 = vlaneseq
        %v3158 = vshrl.u32 %v3157, 7
        %v3159 = vsub.s32 %v3156, %v3158
        %v3160 = vrot.slane %v3146, %v3159
        %v3161 = vcombine.high %v3153, %v3153
        %v3162 = vcombine.high %v3160, %v3160
        %v3163 = vcombine.high %v2787, %v2787
        %v3165 = vunpack.c.l.s4 1983009808
        %v3166 = vunpack.c.0.s8 %v3165
        %v3167 = vlaneseq
        %v3168 = vshrl.u32 %v3167, 7
        %v3169 = vsub.s32 %v3166, %v3168
        %v3170 = vrot.slane %v2787, %v3169
        %v3172 = vunpack.c.l.s4 1983009808
        %v3173 = vunpack.c.0.s8 %v3172
        %v3174 = vlaneseq
        %v3175 = vshrl.u32 %v3174, 7
        %v3176 = vsub.s32 %v3173, %v3175
        %v3177 = vrot.slane %v3163, %v3176
        %v3178 = vcombine.high %v3170, %v3170
        %v3179 = vcombine.high %v3177, %v3177
        %v3180 = vcombine.high %v2792, %v2792
        %v3182 = vunpack.c.l.s4 1983009808
        %v3183 = vunpack.c.0.s8 %v3182
        %v3184 = vlaneseq
        %v3185 = vshrl.u32 %v3184, 7
        %v3186 = vsub.s32 %v3183, %v3185
        %v3187 = vrot.slane %v2792, %v3186
        %v3189 = vunpack.c.l.s4 1983009808
        %v3190 = vunpack.c.0.s8 %v3189
        %v3191 = vlaneseq
        %v3192 = vshrl.u32 %v3191, 7
        %v3193 = vsub.s32 %v3190, %v3192
        %v3194 = vrot.slane %v3180, %v3193
        %v3195 = vcombine.high %v3187, %v3187
        %v3196 = vcombine.high %v3194, %v3194
        %v3197 = vcombine.high %v2795, %v2795
        %v3199 = vunpack.c.l.s4 1983009808
        %v3200 = vunpack.c.0.s8 %v3199
        %v3201 = vlaneseq
        %v3202 = vshrl.u32 %v3201, 7
        %v3203 = vsub.s32 %v3200, %v3202
        %v3204 = vrot.slane %v2795, %v3203
        %v3206 = vunpack.c.l.s4 1983009808
        %v3207 = vunpack.c.0.s8 %v3206
        %v3208 = vlaneseq
        %v3209 = vshrl.u32 %v3208, 7
        %v3210 = vsub.s32 %v3207, %v3209
        %v3211 = vrot.slane %v3197, %v3210
        %v3212 = vcombine.high %v3204, %v3204
        %v3213 = vcombine.high %v3211, %v3211
        %v3214 = vcombine.high %v2800, %v2800
        %v3216 = vunpack.c.l.s4 1983009808
        %v3217 = vunpack.c.0.s8 %v3216
        %v3218 = vlaneseq
        %v3219 = vshrl.u32 %v3218, 7
        %v3220 = vsub.s32 %v3217, %v3219
        %v3221 = vrot.slane %v2800, %v3220
        %v3223 = vunpack.c.l.s4 1983009808
        %v3224 = vunpack.c.0.s8 %v3223
        %v3225 = vlaneseq
        %v3226 = vshrl.u32 %v3225, 7
        %v3227 = vsub.s32 %v3224, %v3226
        %v3228 = vrot.slane %v3214, %v3227
        %v3229 = vcombine.high %v3221, %v3221
        %v3230 = vcombine.high %v3228, %v3228
        %v3231 = vcombine.high %v2803, %v2803
        %v3233 = vunpack.c.l.s4 1983009808
        %v3234 = vunpack.c.0.s8 %v3233
        %v3235 = vlaneseq
        %v3236 = vshrl.u32 %v3235, 7
        %v3237 = vsub.s32 %v3234, %v3236
        %v3238 = vrot.slane %v2803, %v3237
        %v3240 = vunpack.c.l.s4 1983009808
        %v3241 = vunpack.c.0.s8 %v3240
        %v3242 = vlaneseq
        %v3243 = vshrl.u32 %v3242, 7
        %v3244 = vsub.s32 %v3241, %v3243
        %v3245 = vrot.slane %v3231, %v3244
        %v3246 = vcombine.high %v3238, %v3238
        %v3247 = vcombine.high %v3245, %v3245
        %v3248 = vcombine.high %v2808, %v2808
        %v3250 = vunpack.c.l.s4 1983009808
        %v3251 = vunpack.c.0.s8 %v3250
        %v3252 = vlaneseq
        %v3253 = vshrl.u32 %v3252, 7
        %v3254 = vsub.s32 %v3251, %v3253
        %v3255 = vrot.slane %v2808, %v3254
        %v3257 = vunpack.c.l.s4 1983009808
        %v3258 = vunpack.c.0.s8 %v3257
        %v3259 = vlaneseq
        %v3260 = vshrl.u32 %v3259, 7
        %v3261 = vsub.s32 %v3258, %v3260
        %v3262 = vrot.slane %v3248, %v3261
        %v3263 = vcombine.high %v3255, %v3255
        %v3264 = vcombine.high %v3262, %v3262
        %v3265 = vcombine.high %v2811, %v2811
        %v3267 = vunpack.c.l.s4 1983009808
        %v3268 = vunpack.c.0.s8 %v3267
        %v3269 = vlaneseq
        %v3270 = vshrl.u32 %v3269, 7
        %v3271 = vsub.s32 %v3268, %v3270
        %v3272 = vrot.slane %v2811, %v3271
        %v3274 = vunpack.c.l.s4 1983009808
        %v3275 = vunpack.c.0.s8 %v3274
        %v3276 = vlaneseq
        %v3277 = vshrl.u32 %v3276, 7
        %v3278 = vsub.s32 %v3275, %v3277
        %v3279 = vrot.slane %v3265, %v3278
        %v3280 = vcombine.high %v3272, %v3272
        %v3281 = vcombine.high %v3279, %v3279
        %v3282 = vcombine.high %v2816, %v2816
        %v3284 = vunpack.c.l.s4 1983009808
        %v3285 = vunpack.c.0.s8 %v3284
        %v3286 = vlaneseq
        %v3287 = vshrl.u32 %v3286, 7
        %v3288 = vsub.s32 %v3285, %v3287
        %v3289 = vrot.slane %v2816, %v3288
        %v3291 = vunpack.c.l.s4 1983009808
        %v3292 = vunpack.c.0.s8 %v3291
        %v3293 = vlaneseq
        %v3294 = vshrl.u32 %v3293, 7
        %v3295 = vsub.s32 %v3292, %v3294
        %v3296 = vrot.slane %v3282, %v3295
        %v3297 = vcombine.high %v3289, %v3289
        %v3298 = vcombine.high %v3296, %v3296
        %v3299 = vcombine.high %v2819, %v2819
        %v3301 = vunpack.c.l.s4 1983009808
        %v3302 = vunpack.c.0.s8 %v3301
        %v3303 = vlaneseq
        %v3304 = vshrl.u32 %v3303, 7
        %v3305 = vsub.s32 %v3302, %v3304
        %v3306 = vrot.slane %v2819, %v3305
        %v3308 = vunpack.c.l.s4 1983009808
        %v3309 = vunpack.c.0.s8 %v3308
        %v3310 = vlaneseq
        %v3311 = vshrl.u32 %v3310, 7
        %v3312 = vsub.s32 %v3309, %v3311
        %v3313 = vrot.slane %v3299, %v3312
        %v3314 = vcombine.high %v3306, %v3306
        %v3315 = vcombine.high %v3313, %v3313
        %v3316 = vcombine.high %v2824, %v2824
        %v3318 = vunpack.c.l.s4 1983009808
        %v3319 = vunpack.c.0.s8 %v3318
        %v3320 = vlaneseq
        %v3321 = vshrl.u32 %v3320, 7
        %v3322 = vsub.s32 %v3319, %v3321
        %v3323 = vrot.slane %v2824, %v3322
        %v3325 = vunpack.c.l.s4 1983009808
        %v3326 = vunpack.c.0.s8 %v3325
        %v3327 = vlaneseq
        %v3328 = vshrl.u32 %v3327, 7
        %v3329 = vsub.s32 %v3326, %v3328
        %v3330 = vrot.slane %v3316, %v3329
        %v3331 = vcombine.high %v3323, %v3323
        %v3332 = vcombine.high %v3330, %v3330
        %v3333 = vcombine.high %v2827, %v2827
        %v3335 = vunpack.c.l.s4 1983009808
        %v3336 = vunpack.c.0.s8 %v3335
        %v3337 = vlaneseq
        %v3338 = vshrl.u32 %v3337, 7
        %v3339 = vsub.s32 %v3336, %v3338
        %v3340 = vrot.slane %v2827, %v3339
        %v3342 = vunpack.c.l.s4 1983009808
        %v3343 = vunpack.c.0.s8 %v3342
        %v3344 = vlaneseq
        %v3345 = vshrl.u32 %v3344, 7
        %v3346 = vsub.s32 %v3343, %v3345
        %v3347 = vrot.slane %v3333, %v3346
        %v3348 = vcombine.high %v3340, %v3340
        %v3349 = vcombine.high %v3347, %v3347
        %v3350 = vcombine.high %v2832, %v2832
        %v3352 = vunpack.c.l.s4 1983009808
        %v3353 = vunpack.c.0.s8 %v3352
        %v3354 = vlaneseq
        %v3355 = vshrl.u32 %v3354, 7
        %v3356 = vsub.s32 %v3353, %v3355
        %v3357 = vrot.slane %v2832, %v3356
        %v3359 = vunpack.c.l.s4 1983009808
        %v3360 = vunpack.c.0.s8 %v3359
        %v3361 = vlaneseq
        %v3362 = vshrl.u32 %v3361, 7
        %v3363 = vsub.s32 %v3360, %v3362
        %v3364 = vrot.slane %v3350, %v3363
        %v3365 = vcombine.high %v3357, %v3357
        %v3366 = vcombine.high %v3364, %v3364
        %v3367 = vcombine.high %v2835, %v2835
        %v3369 = vunpack.c.l.s4 1983009808
        %v3370 = vunpack.c.0.s8 %v3369
        %v3371 = vlaneseq
        %v3372 = vshrl.u32 %v3371, 7
        %v3373 = vsub.s32 %v3370, %v3372
        %v3374 = vrot.slane %v2835, %v3373
        %v3376 = vunpack.c.l.s4 1983009808
        %v3377 = vunpack.c.0.s8 %v3376
        %v3378 = vlaneseq
        %v3379 = vshrl.u32 %v3378, 7
        %v3380 = vsub.s32 %v3377, %v3379
        %v3381 = vrot.slane %v3367, %v3380
        %v3382 = vcombine.high %v3374, %v3374
        %v3383 = vcombine.high %v3381, %v3381
        %v3384 = vcombine.high %v2840, %v2840
        %v3386 = vunpack.c.l.s4 1983009808
        %v3387 = vunpack.c.0.s8 %v3386
        %v3388 = vlaneseq
        %v3389 = vshrl.u32 %v3388, 7
        %v3390 = vsub.s32 %v3387, %v3389
        %v3391 = vrot.slane %v2840, %v3390
        %v3393 = vunpack.c.l.s4 1983009808
        %v3394 = vunpack.c.0.s8 %v3393
        %v3395 = vlaneseq
        %v3396 = vshrl.u32 %v3395, 7
        %v3397 = vsub.s32 %v3394, %v3396
        %v3398 = vrot.slane %v3384, %v3397
        %v3399 = vcombine.high %v3391, %v3391
        %v3400 = vcombine.high %v3398, %v3398
        %v3401 = vcombine.high %v2843, %v2843
        %v3403 = vunpack.c.l.s4 1983009808
        %v3404 = vunpack.c.0.s8 %v3403
        %v3405 = vlaneseq
        %v3406 = vshrl.u32 %v3405, 7
        %v3407 = vsub.s32 %v3404, %v3406
        %v3408 = vrot.slane %v2843, %v3407
        %v3410 = vunpack.c.l.s4 1983009808
        %v3411 = vunpack.c.0.s8 %v3410
        %v3412 = vlaneseq
        %v3413 = vshrl.u32 %v3412, 7
        %v3414 = vsub.s32 %v3411, %v3413
        %v3415 = vrot.slane %v3401, %v3414
        %v3416 = vcombine.high %v3408, %v3408
        %v3417 = vcombine.high %v3415, %v3415
        %v3418 = vcombine.high %v2848, %v2848
        %v3420 = vunpack.c.l.s4 1983009808
        %v3421 = vunpack.c.0.s8 %v3420
        %v3422 = vlaneseq
        %v3423 = vshrl.u32 %v3422, 7
        %v3424 = vsub.s32 %v3421, %v3423
        %v3425 = vrot.slane %v2848, %v3424
        %v3427 = vunpack.c.l.s4 1983009808
        %v3428 = vunpack.c.0.s8 %v3427
        %v3429 = vlaneseq
        %v3430 = vshrl.u32 %v3429, 7
        %v3431 = vsub.s32 %v3428, %v3430
        %v3432 = vrot.slane %v3418, %v3431
        %v3433 = vcombine.high %v3425, %v3425
        %v3434 = vcombine.high %v3432, %v3432
        %v3435 = vcombine.high %v2851, %v2851
        %v3437 = vunpack.c.l.s4 1983009808
        %v3438 = vunpack.c.0.s8 %v3437
        %v3439 = vlaneseq
        %v3440 = vshrl.u32 %v3439, 7
        %v3441 = vsub.s32 %v3438, %v3440
        %v3442 = vrot.slane %v2851, %v3441
        %v3444 = vunpack.c.l.s4 1983009808
        %v3445 = vunpack.c.0.s8 %v3444
        %v3446 = vlaneseq
        %v3447 = vshrl.u32 %v3446, 7
        %v3448 = vsub.s32 %v3445, %v3447
        %v3449 = vrot.slane %v3435, %v3448
        %v3450 = vcombine.high %v3442, %v3442
        %v3451 = vcombine.high %v3449, %v3449
        %v3452 = vcombine.high %v2856, %v2856
        %v3454 = vunpack.c.l.s4 1983009808
        %v3455 = vunpack.c.0.s8 %v3454
        %v3456 = vlaneseq
        %v3457 = vshrl.u32 %v3456, 7
        %v3458 = vsub.s32 %v3455, %v3457
        %v3459 = vrot.slane %v2856, %v3458
        %v3461 = vunpack.c.l.s4 1983009808
        %v3462 = vunpack.c.0.s8 %v3461
        %v3463 = vlaneseq
        %v3464 = vshrl.u32 %v3463, 7
        %v3465 = vsub.s32 %v3462, %v3464
        %v3466 = vrot.slane %v3452, %v3465
        %v3467 = vcombine.high %v3459, %v3459
        %v3468 = vcombine.high %v3466, %v3466
        %v3469 = vcombine.high %v2859, %v2859
        %v3471 = vunpack.c.l.s4 1983009808
        %v3472 = vunpack.c.0.s8 %v3471
        %v3473 = vlaneseq
        %v3474 = vshrl.u32 %v3473, 7
        %v3475 = vsub.s32 %v3472, %v3474
        %v3476 = vrot.slane %v2859, %v3475
        %v3478 = vunpack.c.l.s4 1983009808
        %v3479 = vunpack.c.0.s8 %v3478
        %v3480 = vlaneseq
        %v3481 = vshrl.u32 %v3480, 7
        %v3482 = vsub.s32 %v3479, %v3481
        %v3483 = vrot.slane %v3469, %v3482
        %v3484 = vcombine.high %v3476, %v3476
        %v3485 = vcombine.high %v3483, %v3483
        %v3486 = vcombine.high %v2864, %v2864
        %v3488 = vunpack.c.l.s4 1983009808
        %v3489 = vunpack.c.0.s8 %v3488
        %v3490 = vlaneseq
        %v3491 = vshrl.u32 %v3490, 7
        %v3492 = vsub.s32 %v3489, %v3491
        %v3493 = vrot.slane %v2864, %v3492
        %v3495 = vunpack.c.l.s4 1983009808
        %v3496 = vunpack.c.0.s8 %v3495
        %v3497 = vlaneseq
        %v3498 = vshrl.u32 %v3497, 7
        %v3499 = vsub.s32 %v3496, %v3498
        %v3500 = vrot.slane %v3486, %v3499
        %v3501 = vcombine.high %v3493, %v3493
        %v3502 = vcombine.high %v3500, %v3500
        %v3503 = vcombine.high %v2867, %v2867
        %v3505 = vunpack.c.l.s4 1983009808
        %v3506 = vunpack.c.0.s8 %v3505
        %v3507 = vlaneseq
        %v3508 = vshrl.u32 %v3507, 7
        %v3509 = vsub.s32 %v3506, %v3508
        %v3510 = vrot.slane %v2867, %v3509
        %v3512 = vunpack.c.l.s4 1983009808
        %v3513 = vunpack.c.0.s8 %v3512
        %v3514 = vlaneseq
        %v3515 = vshrl.u32 %v3514, 7
        %v3516 = vsub.s32 %v3513, %v3515
        %v3517 = vrot.slane %v3503, %v3516
        %v3518 = vcombine.high %v3510, %v3510
        %v3519 = vcombine.high %v3517, %v3517
        %v3520 = vcombine.high %v2872, %v2872
        %v3522 = vunpack.c.l.s4 1983009808
        %v3523 = vunpack.c.0.s8 %v3522
        %v3524 = vlaneseq
        %v3525 = vshrl.u32 %v3524, 7
        %v3526 = vsub.s32 %v3523, %v3525
        %v3527 = vrot.slane %v2872, %v3526
        %v3529 = vunpack.c.l.s4 1983009808
        %v3530 = vunpack.c.0.s8 %v3529
        %v3531 = vlaneseq
        %v3532 = vshrl.u32 %v3531, 7
        %v3533 = vsub.s32 %v3530, %v3532
        %v3534 = vrot.slane %v3520, %v3533
        %v3535 = vcombine.high %v3527, %v3527
        %v3536 = vcombine.high %v3534, %v3534
        %v3537 = vcombine.high %v2875, %v2875
        %v3539 = vunpack.c.l.s4 1983009808
        %v3540 = vunpack.c.0.s8 %v3539
        %v3541 = vlaneseq
        %v3542 = vshrl.u32 %v3541, 7
        %v3543 = vsub.s32 %v3540, %v3542
        %v3544 = vrot.slane %v2875, %v3543
        %v3546 = vunpack.c.l.s4 1983009808
        %v3547 = vunpack.c.0.s8 %v3546
        %v3548 = vlaneseq
        %v3549 = vshrl.u32 %v3548, 7
        %v3550 = vsub.s32 %v3547, %v3549
        %v3551 = vrot.slane %v3537, %v3550
        %v3552 = vcombine.high %v3544, %v3544
        %v3553 = vcombine.high %v3551, %v3551
        %v3554 = vcombine.high %v2880, %v2880
        %v3556 = vunpack.c.l.s4 1983009808
        %v3557 = vunpack.c.0.s8 %v3556
        %v3558 = vlaneseq
        %v3559 = vshrl.u32 %v3558, 7
        %v3560 = vsub.s32 %v3557, %v3559
        %v3561 = vrot.slane %v2880, %v3560
        %v3563 = vunpack.c.l.s4 1983009808
        %v3564 = vunpack.c.0.s8 %v3563
        %v3565 = vlaneseq
        %v3566 = vshrl.u32 %v3565, 7
        %v3567 = vsub.s32 %v3564, %v3566
        %v3568 = vrot.slane %v3554, %v3567
        %v3569 = vcombine.high %v3561, %v3561
        %v3570 = vcombine.high %v3568, %v3568
        %v3571 = vcombine.high %v2883, %v2883
        %v3573 = vunpack.c.l.s4 1983009808
        %v3574 = vunpack.c.0.s8 %v3573
        %v3575 = vlaneseq
        %v3576 = vshrl.u32 %v3575, 7
        %v3577 = vsub.s32 %v3574, %v3576
        %v3578 = vrot.slane %v2883, %v3577
        %v3580 = vunpack.c.l.s4 1983009808
        %v3581 = vunpack.c.0.s8 %v3580
        %v3582 = vlaneseq
        %v3583 = vshrl.u32 %v3582, 7
        %v3584 = vsub.s32 %v3581, %v3583
        %v3585 = vrot.slane %v3571, %v3584
        %v3586 = vcombine.high %v3578, %v3578
        %v3587 = vcombine.high %v3585, %v3585
        %v3588 = vcombine.high %v2888, %v2888
        %v3590 = vunpack.c.l.s4 1983009808
        %v3591 = vunpack.c.0.s8 %v3590
        %v3592 = vlaneseq
        %v3593 = vshrl.u32 %v3592, 7
        %v3594 = vsub.s32 %v3591, %v3593
        %v3595 = vrot.slane %v2888, %v3594
        %v3597 = vunpack.c.l.s4 1983009808
        %v3598 = vunpack.c.0.s8 %v3597
        %v3599 = vlaneseq
        %v3600 = vshrl.u32 %v3599, 7
        %v3601 = vsub.s32 %v3598, %v3600
        %v3602 = vrot.slane %v3588, %v3601
        %v3603 = vcombine.high %v3595, %v3595
        %v3604 = vcombine.high %v3602, %v3602
        %v3605 = vcombine.high %v2891, %v2891
        %v3607 = vunpack.c.l.s4 1983009808
        %v3608 = vunpack.c.0.s8 %v3607
        %v3609 = vlaneseq
        %v3610 = vshrl.u32 %v3609, 7
        %v3611 = vsub.s32 %v3608, %v3610
        %v3612 = vrot.slane %v2891, %v3611
        %v3614 = vunpack.c.l.s4 1983009808
        %v3615 = vunpack.c.0.s8 %v3614
        %v3616 = vlaneseq
        %v3617 = vshrl.u32 %v3616, 7
        %v3618 = vsub.s32 %v3615, %v3617
        %v3619 = vrot.slane %v3605, %v3618
        %v3620 = vcombine.high %v3612, %v3612
        %v3621 = vcombine.high %v3619, %v3619
        %v3623 = vunpack.c.l.s4 1983009808
        %v3624 = vunpack.c.0.s8 %v3623
        %v3625 = vlaneseq
        %v3626 = vshrl.u32 %v3625, 7
        %v3627 = vsub.s32 %v3624, %v3626
        %v3628 = vrot.slane %v2896, %v3627
        %v3629 = vcombine.high %v3628, %v3628
        %v3792 = vmax.f32 %v2949, 0.0
        %v3793 = vmax.f32 %v2957, 0.0
        %v3794 = vmax.f32 %v2956, 0.0
        %v3795 = vmax.f32 %v2958, 0.0
        %v3796 = vmax.f32 %v2966, 0.0
        %v3797 = vmax.f32 %v2974, 0.0
        %v3798 = vmax.f32 %v2973, 0.0
        %v3799 = vmax.f32 %v2975, 0.0
        %v3800 = vmax.f32 %v2983, 0.0
        %v3801 = vmax.f32 %v2991, 0.0
        %v3802 = vmax.f32 %v2990, 0.0
        %v3803 = vmax.f32 %v2992, 0.0
        %v3804 = vmax.f32 %v3000, 0.0
        %v3805 = vmax.f32 %v3008, 0.0
        %v3806 = vmax.f32 %v3007, 0.0
        %v3807 = vmax.f32 %v3009, 0.0
        %v3808 = vmax.f32 %v3017, 0.0
        %v3809 = vmax.f32 %v3025, 0.0
        %v3810 = vmax.f32 %v3024, 0.0
        %v3811 = vmax.f32 %v3026, 0.0
        %v3812 = vmax.f32 %v3034, 0.0
        %v3813 = vmax.f32 %v3042, 0.0
        %v3814 = vmax.f32 %v3041, 0.0
        %v3815 = vmax.f32 %v3043, 0.0
        %v3816 = vmax.f32 %v3051, 0.0
        %v3817 = vmax.f32 %v3059, 0.0
        %v3818 = vmax.f32 %v3058, 0.0
        %v3819 = vmax.f32 %v3060, 0.0
        %v3820 = vmax.f32 %v3068, 0.0
        %v3821 = vmax.f32 %v3076, 0.0
        %v3822 = vmax.f32 %v3075, 0.0
        %v3823 = vmax.f32 %v3077, 0.0
        %v3824 = vmax.f32 %v3085, 0.0
        %v3825 = vmax.f32 %v3093, 0.0
        %v3826 = vmax.f32 %v3092, 0.0
        %v3827 = vmax.f32 %v3094, 0.0
        %v3828 = vmax.f32 %v3102, 0.0
        %v3829 = vmax.f32 %v3110, 0.0
        %v3830 = vmax.f32 %v3109, 0.0
        %v3831 = vmax.f32 %v3111, 0.0
        %v3832 = vmax.f32 %v3119, 0.0
        %v3833 = vmax.f32 %v3127, 0.0
        %v3834 = vmax.f32 %v3126, 0.0
        %v3835 = vmax.f32 %v3128, 0.0
        %v3836 = vmax.f32 %v3136, 0.0
        %v3837 = vmax.f32 %v3144, 0.0
        %v3838 = vmax.f32 %v3143, 0.0
        %v3839 = vmax.f32 %v3145, 0.0
        %v3840 = vmax.f32 %v3153, 0.0
        %v3841 = vmax.f32 %v3161, 0.0
        %v3842 = vmax.f32 %v3160, 0.0
        %v3843 = vmax.f32 %v3162, 0.0
        %v3844 = vmax.f32 %v3170, 0.0
        %v3845 = vmax.f32 %v3178, 0.0
        %v3846 = vmax.f32 %v3177, 0.0
        %v3847 = vmax.f32 %v3179, 0.0
        %v3848 = vmax.f32 %v3187, 0.0
        %v3849 = vmax.f32 %v3195, 0.0
        %v3850 = vmax.f32 %v3194, 0.0
        %v3851 = vmax.f32 %v3196, 0.0
        %v3852 = vmax.f32 %v3204, 0.0
        %v3853 = vmax.f32 %v3212, 0.0
        %v3854 = vmax.f32 %v3211, 0.0
        %v3855 = vmax.f32 %v3213, 0.0
        %v3856 = vmax.f32 %v3221, 0.0
        %v3857 = vmax.f32 %v3229, 0.0
        %v3858 = vmax.f32 %v3228, 0.0
        %v3859 = vmax.f32 %v3230, 0.0
        %v3860 = vmax.f32 %v3238, 0.0
        %v3861 = vmax.f32 %v3246, 0.0
        %v3862 = vmax.f32 %v3245, 0.0
        %v3863 = vmax.f32 %v3247, 0.0
        %v3864 = vmax.f32 %v3255, 0.0
        %v3865 = vmax.f32 %v3263, 0.0
        %v3866 = vmax.f32 %v3262, 0.0
        %v3867 = vmax.f32 %v3264, 0.0
        %v3868 = vmax.f32 %v3272, 0.0
        %v3869 = vmax.f32 %v3280, 0.0
        %v3870 = vmax.f32 %v3279, 0.0
        %v3871 = vmax.f32 %v3281, 0.0
        %v3872 = vmax.f32 %v3289, 0.0
        %v3873 = vmax.f32 %v3297, 0.0
        %v3874 = vmax.f32 %v3296, 0.0
        %v3875 = vmax.f32 %v3298, 0.0
        %v3876 = vmax.f32 %v3306, 0.0
        %v3877 = vmax.f32 %v3314, 0.0
        %v3878 = vmax.f32 %v3313, 0.0
        %v3879 = vmax.f32 %v3315, 0.0
        %v3880 = vmax.f32 %v3323, 0.0
        %v3881 = vmax.f32 %v3331, 0.0
        %v3882 = vmax.f32 %v3330, 0.0
        %v3883 = vmax.f32 %v3332, 0.0
        %v3884 = vmax.f32 %v3340, 0.0
        %v3885 = vmax.f32 %v3348, 0.0
        %v3886 = vmax.f32 %v3347, 0.0
        %v3887 = vmax.f32 %v3349, 0.0
        %v3888 = vmax.f32 %v3357, 0.0
        %v3889 = vmax.f32 %v3365, 0.0
        %v3890 = vmax.f32 %v3364, 0.0
        %v3891 = vmax.f32 %v3366, 0.0
        %v3892 = vmax.f32 %v3374, 0.0
        %v3893 = vmax.f32 %v3382, 0.0
        %v3894 = vmax.f32 %v3381, 0.0
        %v3895 = vmax.f32 %v3383, 0.0
        %v3896 = vmax.f32 %v3391, 0.0
        %v3897 = vmax.f32 %v3399, 0.0
        %v3898 = vmax.f32 %v3398, 0.0
        %v3899 = vmax.f32 %v3400, 0.0
        %v3900 = vmax.f32 %v3408, 0.0
        %v3901 = vmax.f32 %v3416, 0.0
        %v3902 = vmax.f32 %v3415, 0.0
        %v3903 = vmax.f32 %v3417, 0.0
        %v3904 = vmax.f32 %v3425, 0.0
        %v3905 = vmax.f32 %v3433, 0.0
        %v3906 = vmax.f32 %v3432, 0.0
        %v3907 = vmax.f32 %v3434, 0.0
        %v3908 = vmax.f32 %v3442, 0.0
        %v3909 = vmax.f32 %v3450, 0.0
        %v3910 = vmax.f32 %v3449, 0.0
        %v3911 = vmax.f32 %v3451, 0.0
        %v3912 = vmax.f32 %v3459, 0.0
        %v3913 = vmax.f32 %v3467, 0.0
        %v3914 = vmax.f32 %v3466, 0.0
        %v3915 = vmax.f32 %v3468, 0.0
        %v3916 = vmax.f32 %v3476, 0.0
        %v3917 = vmax.f32 %v3484, 0.0
        %v3918 = vmax.f32 %v3483, 0.0
        %v3919 = vmax.f32 %v3485, 0.0
        %v3920 = vmax.f32 %v3493, 0.0
        %v3921 = vmax.f32 %v3501, 0.0
        %v3922 = vmax.f32 %v3500, 0.0
        %v3923 = vmax.f32 %v3502, 0.0
        %v3924 = vmax.f32 %v3510, 0.0
        %v3925 = vmax.f32 %v3518, 0.0
        %v3926 = vmax.f32 %v3517, 0.0
        %v3927 = vmax.f32 %v3519, 0.0
        %v3928 = vmax.f32 %v3527, 0.0
        %v3929 = vmax.f32 %v3535, 0.0
        %v3930 = vmax.f32 %v3534, 0.0
        %v3931 = vmax.f32 %v3536, 0.0
        %v3932 = vmax.f32 %v3544, 0.0
        %v3933 = vmax.f32 %v3552, 0.0
        %v3934 = vmax.f32 %v3551, 0.0
        %v3935 = vmax.f32 %v3553, 0.0
        %v3936 = vmax.f32 %v3561, 0.0
        %v3937 = vmax.f32 %v3569, 0.0
        %v3938 = vmax.f32 %v3568, 0.0
        %v3939 = vmax.f32 %v3570, 0.0
        %v3940 = vmax.f32 %v3578, 0.0
        %v3941 = vmax.f32 %v3586, 0.0
        %v3942 = vmax.f32 %v3585, 0.0
        %v3943 = vmax.f32 %v3587, 0.0
        %v3944 = vmax.f32 %v3595, 0.0
        %v3945 = vmax.f32 %v3603, 0.0
        %v3946 = vmax.f32 %v3602, 0.0
        %v3947 = vmax.f32 %v3604, 0.0
        %v3948 = vmax.f32 %v3612, 0.0
        %v3949 = vmax.f32 %v3620, 0.0
        %v3950 = vmax.f32 %v3619, 0.0
        %v3951 = vmax.f32 %v3621, 0.0
        %v3952 = vmax.f32 %v3628, 0.0
        %v3953 = vmax.f32 %v3629, 0.0
        %v3954 = vstv %s293
        %v3955 = vadd.s32 %v3954, 1
        %v3956 = vadd.s32 %v3954, 2
        %v3957 = vadd.s32 %v3954, 3
        %v3958 = vadd.s32 %v3954, 4
        %v3959 = vadd.s32 %v3954, 5
        %v3960 = vadd.s32 %v3954, 6
        %v3961 = vadd.s32 %v3954, 7
        %v3962 = vadd.s32 %v3954, 8
        %v3963 = vadd.s32 %v3954, 9
        %v3964 = vadd.s32 %v3954, 10
        %v3965 = vadd.s32 %v3954, 11
        %v3966 = vadd.s32 %v3954, 12
        %v3967 = vadd.s32 %v3954, 13
        %v3968 = vadd.s32 %v3954, 14
        %v3969 = vadd.s32 %v3954, 15
        %v3970 = vadd.s32 %v3954, 16
        %v3971 = vadd.s32 %v3954, 17
        %v3972 = vlaneseq
        %v3973 = vshrl.u32 %v3972, 7
        %v3974 = vadd.s32 %v3973, 8
        %v3975 = vadd.s32 %v3973, 16
        %vm3976 = vcmp.ge.s32.totalorder %v3954, 1
        %vm3977 = vcmp.ge.s32.totalorder %v3955, 1
        %vm3978 = vcmp.ge.s32.totalorder %v3956, 1
        %vm3979 = vcmp.ge.s32.totalorder %v3957, 1
        %vm3980 = vcmp.ge.s32.totalorder %v3958, 1
        %vm3981 = vcmp.ge.s32.totalorder %v3959, 1
        %vm3982 = vcmp.ge.s32.totalorder %v3960, 1
        %vm3983 = vcmp.ge.s32.totalorder %v3961, 1
        %vm3984 = vcmp.ge.s32.totalorder %v3962, 1
        %vm3985 = vcmp.ge.s32.totalorder %v3963, 1
        %vm3986 = vcmp.ge.s32.totalorder %v3964, 1
        %vm3987 = vcmp.ge.s32.totalorder %v3965, 1
        %vm3988 = vcmp.ge.s32.totalorder %v3966, 1
        %vm3989 = vcmp.ge.s32.totalorder %v3967, 1
        %vm3990 = vcmp.ge.s32.totalorder %v3968, 1
        %vm3991 = vcmp.ge.s32.totalorder %v3969, 1
        %vm3992 = vcmp.ge.s32.totalorder %v3970, 1
        %vm3993 = vcmp.ge.s32.totalorder %v3971, 1
        %vm3994 = vcmp.le.s32.totalorder %v3954, 16
        %vm3995 = vcmp.le.s32.totalorder %v3955, 16
        %vm3996 = vcmp.le.s32.totalorder %v3956, 16
        %vm3997 = vcmp.le.s32.totalorder %v3957, 16
        %vm3998 = vcmp.le.s32.totalorder %v3958, 16
        %vm3999 = vcmp.le.s32.totalorder %v3959, 16
        %vm4000 = vcmp.le.s32.totalorder %v3960, 16
        %vm4001 = vcmp.le.s32.totalorder %v3961, 16
        %vm4002 = vcmp.le.s32.totalorder %v3962, 16
        %vm4003 = vcmp.le.s32.totalorder %v3963, 16
        %vm4004 = vcmp.le.s32.totalorder %v3964, 16
        %vm4005 = vcmp.le.s32.totalorder %v3965, 16
        %vm4006 = vcmp.le.s32.totalorder %v3966, 16
        %vm4007 = vcmp.le.s32.totalorder %v3967, 16
        %vm4008 = vcmp.le.s32.totalorder %v3968, 16
        %vm4009 = vcmp.le.s32.totalorder %v3969, 16
        %vm4010 = vcmp.le.s32.totalorder %v3970, 16
        %vm4011 = vcmp.le.s32.totalorder %v3971, 16
        %vm4012 = vmand %vm3976, %vm3994
        %vm4013 = vmand %vm3977, %vm3995
        %vm4014 = vmand %vm3978, %vm3996
        %vm4015 = vmand %vm3979, %vm3997
        %vm4016 = vmand %vm3980, %vm3998
        %vm4017 = vmand %vm3981, %vm3999
        %vm4018 = vmand %vm3982, %vm4000
        %vm4019 = vmand %vm3983, %vm4001
        %vm4020 = vmand %vm3984, %vm4002
        %vm4021 = vmand %vm3985, %vm4003
        %vm4022 = vmand %vm3986, %vm4004
        %vm4023 = vmand %vm3987, %vm4005
        %vm4024 = vmand %vm3988, %vm4006
        %vm4025 = vmand %vm3989, %vm4007
        %vm4026 = vmand %vm3990, %vm4008
        %vm4027 = vmand %vm3991, %vm4009
        %vm4028 = vmand %vm3992, %vm4010
        %vm4029 = vmand %vm3993, %vm4011
        %vm4030 = vcmp.ge.s32.totalorder %v3973, 1
        %vm4031 = vcmp.ge.s32.totalorder %v3974, 1
        %vm4032 = vcmp.ge.s32.totalorder %v3975, 1
        %vm4033 = vmand %vm4012, %vm4030
        %vm4034 = vmand %vm4012, %vm4031
        %vm4035 = vmand %vm4012, %vm4032
        %vm4036 = vmand %vm4013, %vm4030
        %vm4037 = vmand %vm4013, %vm4031
        %vm4038 = vmand %vm4013, %vm4032
        %vm4039 = vmand %vm4014, %vm4030
        %vm4040 = vmand %vm4014, %vm4031
        %vm4041 = vmand %vm4014, %vm4032
        %vm4042 = vmand %vm4015, %vm4030
        %vm4043 = vmand %vm4015, %vm4031
        %vm4044 = vmand %vm4015, %vm4032
        %vm4045 = vmand %vm4016, %vm4030
        %vm4046 = vmand %vm4016, %vm4031
        %vm4047 = vmand %vm4016, %vm4032
        %vm4048 = vmand %vm4017, %vm4030
        %vm4049 = vmand %vm4017, %vm4031
        %vm4050 = vmand %vm4017, %vm4032
        %vm4051 = vmand %vm4018, %vm4030
        %vm4052 = vmand %vm4018, %vm4031
        %vm4053 = vmand %vm4018, %vm4032
        %vm4054 = vmand %vm4019, %vm4030
        %vm4055 = vmand %vm4019, %vm4031
        %vm4056 = vmand %vm4019, %vm4032
        %vm4057 = vmand %vm4020, %vm4030
        %vm4058 = vmand %vm4020, %vm4031
        %vm4059 = vmand %vm4020, %vm4032
        %vm4060 = vmand %vm4021, %vm4030
        %vm4061 = vmand %vm4021, %vm4031
        %vm4062 = vmand %vm4021, %vm4032
        %vm4063 = vmand %vm4022, %vm4030
        %vm4064 = vmand %vm4022, %vm4031
        %vm4065 = vmand %vm4022, %vm4032
        %vm4066 = vmand %vm4023, %vm4030
        %vm4067 = vmand %vm4023, %vm4031
        %vm4068 = vmand %vm4023, %vm4032
        %vm4069 = vmand %vm4024, %vm4030
        %vm4070 = vmand %vm4024, %vm4031
        %vm4071 = vmand %vm4024, %vm4032
        %vm4072 = vmand %vm4025, %vm4030
        %vm4073 = vmand %vm4025, %vm4031
        %vm4074 = vmand %vm4025, %vm4032
        %vm4075 = vmand %vm4026, %vm4030
        %vm4076 = vmand %vm4026, %vm4031
        %vm4077 = vmand %vm4026, %vm4032
        %vm4078 = vmand %vm4027, %vm4030
        %vm4079 = vmand %vm4027, %vm4031
        %vm4080 = vmand %vm4027, %vm4032
        %vm4081 = vmand %vm4028, %vm4030
        %vm4082 = vmand %vm4028, %vm4031
        %vm4083 = vmand %vm4028, %vm4032
        %vm4084 = vmand %vm4029, %vm4030
        %vm4085 = vmand %vm4029, %vm4031
        %vm4086 = vmand %vm4029, %vm4032
        %vm4087 = vcmp.le.s32.totalorder %v3973, 16
        %vm4088 = vcmp.le.s32.totalorder %v3974, 16
        %vm4089 = vcmp.le.s32.totalorder %v3975, 16
        %vm4090 = vmand %vm4033, %vm4087
        %vm4091 = vmand %vm4034, %vm4088
        %vm4092 = vmand %vm4035, %vm4089
        %vm4093 = vmand %vm4036, %vm4087
        %vm4094 = vmand %vm4037, %vm4088
        %vm4095 = vmand %vm4038, %vm4089
        %vm4096 = vmand %vm4039, %vm4087
        %vm4097 = vmand %vm4040, %vm4088
        %vm4098 = vmand %vm4041, %vm4089
        %vm4099 = vmand %vm4042, %vm4087
        %vm4100 = vmand %vm4043, %vm4088
        %vm4101 = vmand %vm4044, %vm4089
        %vm4102 = vmand %vm4045, %vm4087
        %vm4103 = vmand %vm4046, %vm4088
        %vm4104 = vmand %vm4047, %vm4089
        %vm4105 = vmand %vm4048, %vm4087
        %vm4106 = vmand %vm4049, %vm4088
        %vm4107 = vmand %vm4050, %vm4089
        %vm4108 = vmand %vm4051, %vm4087
        %vm4109 = vmand %vm4052, %vm4088
        %vm4110 = vmand %vm4053, %vm4089
        %vm4111 = vmand %vm4054, %vm4087
        %vm4112 = vmand %vm4055, %vm4088
        %vm4113 = vmand %vm4056, %vm4089
        %vm4114 = vmand %vm4057, %vm4087
        %vm4115 = vmand %vm4058, %vm4088
        %vm4116 = vmand %vm4059, %vm4089
        %vm4117 = vmand %vm4060, %vm4087
        %vm4118 = vmand %vm4061, %vm4088
        %vm4119 = vmand %vm4062, %vm4089
        %vm4120 = vmand %vm4063, %vm4087
        %vm4121 = vmand %vm4064, %vm4088
        %vm4122 = vmand %vm4065, %vm4089
        %vm4123 = vmand %vm4066, %vm4087
        %vm4124 = vmand %vm4067, %vm4088
        %vm4125 = vmand %vm4068, %vm4089
        %vm4126 = vmand %vm4069, %vm4087
        %vm4127 = vmand %vm4070, %vm4088
        %vm4128 = vmand %vm4071, %vm4089
        %vm4129 = vmand %vm4072, %vm4087
        %vm4130 = vmand %vm4073, %vm4088
        %vm4131 = vmand %vm4074, %vm4089
        %vm4132 = vmand %vm4075, %vm4087
        %vm4133 = vmand %vm4076, %vm4088
        %vm4134 = vmand %vm4077, %vm4089
        %vm4135 = vmand %vm4078, %vm4087
        %vm4136 = vmand %vm4079, %vm4088
        %vm4137 = vmand %vm4080, %vm4089
        %vm4138 = vmand %vm4081, %vm4087
        %vm4139 = vmand %vm4082, %vm4088
        %vm4140 = vmand %vm4083, %vm4089
        %vm4141 = vmand %vm4084, %vm4087
        %vm4142 = vmand %vm4085, %vm4088
        %vm4143 = vmand %vm4086, %vm4089
        %v4306 = vcombine.low %v3792, %v3793
        %v4307 = vcombine.low %v3794, %v3795
        %v4309 = vunpack.c.l.s4 1983009808
        %v4310 = vunpack.c.0.s8 %v4309
        %v4311 = vlaneseq
        %v4312 = vshrl.u32 %v4311, 7
        %v4313 = vsub.s32 %v4310, %v4312
        %v4314 = vrot.slane %v4306, %v4313
        %v4316 = vunpack.c.l.s4 1983009808
        %v4317 = vunpack.c.0.s8 %v4316
        %v4318 = vlaneseq
        %v4319 = vshrl.u32 %v4318, 7
        %v4320 = vsub.s32 %v4317, %v4319
        %v4321 = vrot.slane %v4307, %v4320
        %v4322 = vcombine.low %v4314, %v4321
        %v4323 = vcombine.low %v3796, %v3797
        %v4324 = vcombine.low %v3798, %v3799
        %v4326 = vunpack.c.l.s4 1983009808
        %v4327 = vunpack.c.0.s8 %v4326
        %v4328 = vlaneseq
        %v4329 = vshrl.u32 %v4328, 7
        %v4330 = vsub.s32 %v4327, %v4329
        %v4331 = vrot.slane %v4323, %v4330
        %v4333 = vunpack.c.l.s4 1983009808
        %v4334 = vunpack.c.0.s8 %v4333
        %v4335 = vlaneseq
        %v4336 = vshrl.u32 %v4335, 7
        %v4337 = vsub.s32 %v4334, %v4336
        %v4338 = vrot.slane %v4324, %v4337
        %v4339 = vcombine.low %v4331, %v4338
        %v4341 = vunpack.c.l.s4 1983009808
        %v4342 = vunpack.c.0.s8 %v4341
        %v4343 = vlaneseq
        %v4344 = vshrl.u32 %v4343, 7
        %v4345 = vsub.s32 %v4342, %v4344
        %v4346 = vrot.slane %v3800, %v4345
        %v4347 = vcombine.low %v3801, %v3802
        %v4348 = vcombine.low %v3803, %v3804
        %v4350 = vunpack.c.l.s4 1983009808
        %v4351 = vunpack.c.0.s8 %v4350
        %v4352 = vlaneseq
        %v4353 = vshrl.u32 %v4352, 7
        %v4354 = vsub.s32 %v4351, %v4353
        %v4355 = vrot.slane %v4347, %v4354
        %v4357 = vunpack.c.l.s4 1983009808
        %v4358 = vunpack.c.0.s8 %v4357
        %v4359 = vlaneseq
        %v4360 = vshrl.u32 %v4359, 7
        %v4361 = vsub.s32 %v4358, %v4360
        %v4362 = vrot.slane %v4348, %v4361
        %v4363 = vcombine.low %v4355, %v4362
        %v4364 = vcombine.low %v3805, %v3806
        %v4365 = vcombine.low %v3807, %v3808
        %v4367 = vunpack.c.l.s4 1983009808
        %v4368 = vunpack.c.0.s8 %v4367
        %v4369 = vlaneseq
        %v4370 = vshrl.u32 %v4369, 7
        %v4371 = vsub.s32 %v4368, %v4370
        %v4372 = vrot.slane %v4364, %v4371
        %v4374 = vunpack.c.l.s4 1983009808
        %v4375 = vunpack.c.0.s8 %v4374
        %v4376 = vlaneseq
        %v4377 = vshrl.u32 %v4376, 7
        %v4378 = vsub.s32 %v4375, %v4377
        %v4379 = vrot.slane %v4365, %v4378
        %v4380 = vcombine.low %v4372, %v4379
        %v4382 = vunpack.c.l.s4 1983009808
        %v4383 = vunpack.c.0.s8 %v4382
        %v4384 = vlaneseq
        %v4385 = vshrl.u32 %v4384, 7
        %v4386 = vsub.s32 %v4383, %v4385
        %v4387 = vrot.slane %v3809, %v4386
        %v4388 = vcombine.low %v3810, %v3811
        %v4389 = vcombine.low %v3812, %v3813
        %v4391 = vunpack.c.l.s4 1983009808
        %v4392 = vunpack.c.0.s8 %v4391
        %v4393 = vlaneseq
        %v4394 = vshrl.u32 %v4393, 7
        %v4395 = vsub.s32 %v4392, %v4394
        %v4396 = vrot.slane %v4388, %v4395
        %v4398 = vunpack.c.l.s4 1983009808
        %v4399 = vunpack.c.0.s8 %v4398
        %v4400 = vlaneseq
        %v4401 = vshrl.u32 %v4400, 7
        %v4402 = vsub.s32 %v4399, %v4401
        %v4403 = vrot.slane %v4389, %v4402
        %v4404 = vcombine.low %v4396, %v4403
        %v4405 = vcombine.low %v3814, %v3815
        %v4406 = vcombine.low %v3816, %v3817
        %v4408 = vunpack.c.l.s4 1983009808
        %v4409 = vunpack.c.0.s8 %v4408
        %v4410 = vlaneseq
        %v4411 = vshrl.u32 %v4410, 7
        %v4412 = vsub.s32 %v4409, %v4411
        %v4413 = vrot.slane %v4405, %v4412
        %v4415 = vunpack.c.l.s4 1983009808
        %v4416 = vunpack.c.0.s8 %v4415
        %v4417 = vlaneseq
        %v4418 = vshrl.u32 %v4417, 7
        %v4419 = vsub.s32 %v4416, %v4418
        %v4420 = vrot.slane %v4406, %v4419
        %v4421 = vcombine.low %v4413, %v4420
        %v4423 = vunpack.c.l.s4 1983009808
        %v4424 = vunpack.c.0.s8 %v4423
        %v4425 = vlaneseq
        %v4426 = vshrl.u32 %v4425, 7
        %v4427 = vsub.s32 %v4424, %v4426
        %v4428 = vrot.slane %v3818, %v4427
        %v4429 = vcombine.low %v3819, %v3820
        %v4430 = vcombine.low %v3821, %v3822
        %v4432 = vunpack.c.l.s4 1983009808
        %v4433 = vunpack.c.0.s8 %v4432
        %v4434 = vlaneseq
        %v4435 = vshrl.u32 %v4434, 7
        %v4436 = vsub.s32 %v4433, %v4435
        %v4437 = vrot.slane %v4429, %v4436
        %v4439 = vunpack.c.l.s4 1983009808
        %v4440 = vunpack.c.0.s8 %v4439
        %v4441 = vlaneseq
        %v4442 = vshrl.u32 %v4441, 7
        %v4443 = vsub.s32 %v4440, %v4442
        %v4444 = vrot.slane %v4430, %v4443
        %v4445 = vcombine.low %v4437, %v4444
        %v4446 = vcombine.low %v3823, %v3824
        %v4447 = vcombine.low %v3825, %v3826
        %v4449 = vunpack.c.l.s4 1983009808
        %v4450 = vunpack.c.0.s8 %v4449
        %v4451 = vlaneseq
        %v4452 = vshrl.u32 %v4451, 7
        %v4453 = vsub.s32 %v4450, %v4452
        %v4454 = vrot.slane %v4446, %v4453
        %v4456 = vunpack.c.l.s4 1983009808
        %v4457 = vunpack.c.0.s8 %v4456
        %v4458 = vlaneseq
        %v4459 = vshrl.u32 %v4458, 7
        %v4460 = vsub.s32 %v4457, %v4459
        %v4461 = vrot.slane %v4447, %v4460
        %v4462 = vcombine.low %v4454, %v4461
        %v4464 = vunpack.c.l.s4 1983009808
        %v4465 = vunpack.c.0.s8 %v4464
        %v4466 = vlaneseq
        %v4467 = vshrl.u32 %v4466, 7
        %v4468 = vsub.s32 %v4465, %v4467
        %v4469 = vrot.slane %v3827, %v4468
        %v4470 = vcombine.low %v3828, %v3829
        %v4471 = vcombine.low %v3830, %v3831
        %v4473 = vunpack.c.l.s4 1983009808
        %v4474 = vunpack.c.0.s8 %v4473
        %v4475 = vlaneseq
        %v4476 = vshrl.u32 %v4475, 7
        %v4477 = vsub.s32 %v4474, %v4476
        %v4478 = vrot.slane %v4470, %v4477
        %v4480 = vunpack.c.l.s4 1983009808
        %v4481 = vunpack.c.0.s8 %v4480
        %v4482 = vlaneseq
        %v4483 = vshrl.u32 %v4482, 7
        %v4484 = vsub.s32 %v4481, %v4483
        %v4485 = vrot.slane %v4471, %v4484
        %v4486 = vcombine.low %v4478, %v4485
        %v4487 = vcombine.low %v3832, %v3833
        %v4488 = vcombine.low %v3834, %v3835
        %v4490 = vunpack.c.l.s4 1983009808
        %v4491 = vunpack.c.0.s8 %v4490
        %v4492 = vlaneseq
        %v4493 = vshrl.u32 %v4492, 7
        %v4494 = vsub.s32 %v4491, %v4493
        %v4495 = vrot.slane %v4487, %v4494
        %v4497 = vunpack.c.l.s4 1983009808
        %v4498 = vunpack.c.0.s8 %v4497
        %v4499 = vlaneseq
        %v4500 = vshrl.u32 %v4499, 7
        %v4501 = vsub.s32 %v4498, %v4500
        %v4502 = vrot.slane %v4488, %v4501
        %v4503 = vcombine.low %v4495, %v4502
        %v4505 = vunpack.c.l.s4 1983009808
        %v4506 = vunpack.c.0.s8 %v4505
        %v4507 = vlaneseq
        %v4508 = vshrl.u32 %v4507, 7
        %v4509 = vsub.s32 %v4506, %v4508
        %v4510 = vrot.slane %v3836, %v4509
        %v4511 = vcombine.low %v3837, %v3838
        %v4512 = vcombine.low %v3839, %v3840
        %v4514 = vunpack.c.l.s4 1983009808
        %v4515 = vunpack.c.0.s8 %v4514
        %v4516 = vlaneseq
        %v4517 = vshrl.u32 %v4516, 7
        %v4518 = vsub.s32 %v4515, %v4517
        %v4519 = vrot.slane %v4511, %v4518
        %v4521 = vunpack.c.l.s4 1983009808
        %v4522 = vunpack.c.0.s8 %v4521
        %v4523 = vlaneseq
        %v4524 = vshrl.u32 %v4523, 7
        %v4525 = vsub.s32 %v4522, %v4524
        %v4526 = vrot.slane %v4512, %v4525
        %v4527 = vcombine.low %v4519, %v4526
        %v4528 = vcombine.low %v3841, %v3842
        %v4529 = vcombine.low %v3843, %v3844
        %v4531 = vunpack.c.l.s4 1983009808
        %v4532 = vunpack.c.0.s8 %v4531
        %v4533 = vlaneseq
        %v4534 = vshrl.u32 %v4533, 7
        %v4535 = vsub.s32 %v4532, %v4534
        %v4536 = vrot.slane %v4528, %v4535
        %v4538 = vunpack.c.l.s4 1983009808
        %v4539 = vunpack.c.0.s8 %v4538
        %v4540 = vlaneseq
        %v4541 = vshrl.u32 %v4540, 7
        %v4542 = vsub.s32 %v4539, %v4541
        %v4543 = vrot.slane %v4529, %v4542
        %v4544 = vcombine.low %v4536, %v4543
        %v4546 = vunpack.c.l.s4 1983009808
        %v4547 = vunpack.c.0.s8 %v4546
        %v4548 = vlaneseq
        %v4549 = vshrl.u32 %v4548, 7
        %v4550 = vsub.s32 %v4547, %v4549
        %v4551 = vrot.slane %v3845, %v4550
        %v4552 = vcombine.low %v3846, %v3847
        %v4553 = vcombine.low %v3848, %v3849
        %v4555 = vunpack.c.l.s4 1983009808
        %v4556 = vunpack.c.0.s8 %v4555
        %v4557 = vlaneseq
        %v4558 = vshrl.u32 %v4557, 7
        %v4559 = vsub.s32 %v4556, %v4558
        %v4560 = vrot.slane %v4552, %v4559
        %v4562 = vunpack.c.l.s4 1983009808
        %v4563 = vunpack.c.0.s8 %v4562
        %v4564 = vlaneseq
        %v4565 = vshrl.u32 %v4564, 7
        %v4566 = vsub.s32 %v4563, %v4565
        %v4567 = vrot.slane %v4553, %v4566
        %v4568 = vcombine.low %v4560, %v4567
        %v4569 = vcombine.low %v3850, %v3851
        %v4570 = vcombine.low %v3852, %v3853
        %v4572 = vunpack.c.l.s4 1983009808
        %v4573 = vunpack.c.0.s8 %v4572
        %v4574 = vlaneseq
        %v4575 = vshrl.u32 %v4574, 7
        %v4576 = vsub.s32 %v4573, %v4575
        %v4577 = vrot.slane %v4569, %v4576
        %v4579 = vunpack.c.l.s4 1983009808
        %v4580 = vunpack.c.0.s8 %v4579
        %v4581 = vlaneseq
        %v4582 = vshrl.u32 %v4581, 7
        %v4583 = vsub.s32 %v4580, %v4582
        %v4584 = vrot.slane %v4570, %v4583
        %v4585 = vcombine.low %v4577, %v4584
        %v4587 = vunpack.c.l.s4 1983009808
        %v4588 = vunpack.c.0.s8 %v4587
        %v4589 = vlaneseq
        %v4590 = vshrl.u32 %v4589, 7
        %v4591 = vsub.s32 %v4588, %v4590
        %v4592 = vrot.slane %v3854, %v4591
        %v4593 = vcombine.low %v3855, %v3856
        %v4594 = vcombine.low %v3857, %v3858
        %v4596 = vunpack.c.l.s4 1983009808
        %v4597 = vunpack.c.0.s8 %v4596
        %v4598 = vlaneseq
        %v4599 = vshrl.u32 %v4598, 7
        %v4600 = vsub.s32 %v4597, %v4599
        %v4601 = vrot.slane %v4593, %v4600
        %v4603 = vunpack.c.l.s4 1983009808
        %v4604 = vunpack.c.0.s8 %v4603
        %v4605 = vlaneseq
        %v4606 = vshrl.u32 %v4605, 7
        %v4607 = vsub.s32 %v4604, %v4606
        %v4608 = vrot.slane %v4594, %v4607
        %v4609 = vcombine.low %v4601, %v4608
        %v4610 = vcombine.low %v3859, %v3860
        %v4611 = vcombine.low %v3861, %v3862
        %v4613 = vunpack.c.l.s4 1983009808
        %v4614 = vunpack.c.0.s8 %v4613
        %v4615 = vlaneseq
        %v4616 = vshrl.u32 %v4615, 7
        %v4617 = vsub.s32 %v4614, %v4616
        %v4618 = vrot.slane %v4610, %v4617
        %v4620 = vunpack.c.l.s4 1983009808
        %v4621 = vunpack.c.0.s8 %v4620
        %v4622 = vlaneseq
        %v4623 = vshrl.u32 %v4622, 7
        %v4624 = vsub.s32 %v4621, %v4623
        %v4625 = vrot.slane %v4611, %v4624
        %v4626 = vcombine.low %v4618, %v4625
        %v4628 = vunpack.c.l.s4 1983009808
        %v4629 = vunpack.c.0.s8 %v4628
        %v4630 = vlaneseq
        %v4631 = vshrl.u32 %v4630, 7
        %v4632 = vsub.s32 %v4629, %v4631
        %v4633 = vrot.slane %v3863, %v4632
        %v4634 = vcombine.low %v3864, %v3865
        %v4635 = vcombine.low %v3866, %v3867
        %v4637 = vunpack.c.l.s4 1983009808
        %v4638 = vunpack.c.0.s8 %v4637
        %v4639 = vlaneseq
        %v4640 = vshrl.u32 %v4639, 7
        %v4641 = vsub.s32 %v4638, %v4640
        %v4642 = vrot.slane %v4634, %v4641
        %v4644 = vunpack.c.l.s4 1983009808
        %v4645 = vunpack.c.0.s8 %v4644
        %v4646 = vlaneseq
        %v4647 = vshrl.u32 %v4646, 7
        %v4648 = vsub.s32 %v4645, %v4647
        %v4649 = vrot.slane %v4635, %v4648
        %v4650 = vcombine.low %v4642, %v4649
        %v4651 = vcombine.low %v3868, %v3869
        %v4652 = vcombine.low %v3870, %v3871
        %v4654 = vunpack.c.l.s4 1983009808
        %v4655 = vunpack.c.0.s8 %v4654
        %v4656 = vlaneseq
        %v4657 = vshrl.u32 %v4656, 7
        %v4658 = vsub.s32 %v4655, %v4657
        %v4659 = vrot.slane %v4651, %v4658
        %v4661 = vunpack.c.l.s4 1983009808
        %v4662 = vunpack.c.0.s8 %v4661
        %v4663 = vlaneseq
        %v4664 = vshrl.u32 %v4663, 7
        %v4665 = vsub.s32 %v4662, %v4664
        %v4666 = vrot.slane %v4652, %v4665
        %v4667 = vcombine.low %v4659, %v4666
        %v4669 = vunpack.c.l.s4 1983009808
        %v4670 = vunpack.c.0.s8 %v4669
        %v4671 = vlaneseq
        %v4672 = vshrl.u32 %v4671, 7
        %v4673 = vsub.s32 %v4670, %v4672
        %v4674 = vrot.slane %v3872, %v4673
        %v4675 = vcombine.low %v3873, %v3874
        %v4676 = vcombine.low %v3875, %v3876
        %v4678 = vunpack.c.l.s4 1983009808
        %v4679 = vunpack.c.0.s8 %v4678
        %v4680 = vlaneseq
        %v4681 = vshrl.u32 %v4680, 7
        %v4682 = vsub.s32 %v4679, %v4681
        %v4683 = vrot.slane %v4675, %v4682
        %v4685 = vunpack.c.l.s4 1983009808
        %v4686 = vunpack.c.0.s8 %v4685
        %v4687 = vlaneseq
        %v4688 = vshrl.u32 %v4687, 7
        %v4689 = vsub.s32 %v4686, %v4688
        %v4690 = vrot.slane %v4676, %v4689
        %v4691 = vcombine.low %v4683, %v4690
        %v4692 = vcombine.low %v3877, %v3878
        %v4693 = vcombine.low %v3879, %v3880
        %v4695 = vunpack.c.l.s4 1983009808
        %v4696 = vunpack.c.0.s8 %v4695
        %v4697 = vlaneseq
        %v4698 = vshrl.u32 %v4697, 7
        %v4699 = vsub.s32 %v4696, %v4698
        %v4700 = vrot.slane %v4692, %v4699
        %v4702 = vunpack.c.l.s4 1983009808
        %v4703 = vunpack.c.0.s8 %v4702
        %v4704 = vlaneseq
        %v4705 = vshrl.u32 %v4704, 7
        %v4706 = vsub.s32 %v4703, %v4705
        %v4707 = vrot.slane %v4693, %v4706
        %v4708 = vcombine.low %v4700, %v4707
        %v4710 = vunpack.c.l.s4 1983009808
        %v4711 = vunpack.c.0.s8 %v4710
        %v4712 = vlaneseq
        %v4713 = vshrl.u32 %v4712, 7
        %v4714 = vsub.s32 %v4711, %v4713
        %v4715 = vrot.slane %v3881, %v4714
        %v4716 = vcombine.low %v3882, %v3883
        %v4717 = vcombine.low %v3884, %v3885
        %v4719 = vunpack.c.l.s4 1983009808
        %v4720 = vunpack.c.0.s8 %v4719
        %v4721 = vlaneseq
        %v4722 = vshrl.u32 %v4721, 7
        %v4723 = vsub.s32 %v4720, %v4722
        %v4724 = vrot.slane %v4716, %v4723
        %v4726 = vunpack.c.l.s4 1983009808
        %v4727 = vunpack.c.0.s8 %v4726
        %v4728 = vlaneseq
        %v4729 = vshrl.u32 %v4728, 7
        %v4730 = vsub.s32 %v4727, %v4729
        %v4731 = vrot.slane %v4717, %v4730
        %v4732 = vcombine.low %v4724, %v4731
        %v4733 = vcombine.low %v3886, %v3887
        %v4734 = vcombine.low %v3888, %v3889
        %v4736 = vunpack.c.l.s4 1983009808
        %v4737 = vunpack.c.0.s8 %v4736
        %v4738 = vlaneseq
        %v4739 = vshrl.u32 %v4738, 7
        %v4740 = vsub.s32 %v4737, %v4739
        %v4741 = vrot.slane %v4733, %v4740
        %v4743 = vunpack.c.l.s4 1983009808
        %v4744 = vunpack.c.0.s8 %v4743
        %v4745 = vlaneseq
        %v4746 = vshrl.u32 %v4745, 7
        %v4747 = vsub.s32 %v4744, %v4746
        %v4748 = vrot.slane %v4734, %v4747
        %v4749 = vcombine.low %v4741, %v4748
        %v4751 = vunpack.c.l.s4 1983009808
        %v4752 = vunpack.c.0.s8 %v4751
        %v4753 = vlaneseq
        %v4754 = vshrl.u32 %v4753, 7
        %v4755 = vsub.s32 %v4752, %v4754
        %v4756 = vrot.slane %v3890, %v4755
        %v4757 = vcombine.low %v3891, %v3892
        %v4758 = vcombine.low %v3893, %v3894
        %v4760 = vunpack.c.l.s4 1983009808
        %v4761 = vunpack.c.0.s8 %v4760
        %v4762 = vlaneseq
        %v4763 = vshrl.u32 %v4762, 7
        %v4764 = vsub.s32 %v4761, %v4763
        %v4765 = vrot.slane %v4757, %v4764
        %v4767 = vunpack.c.l.s4 1983009808
        %v4768 = vunpack.c.0.s8 %v4767
        %v4769 = vlaneseq
        %v4770 = vshrl.u32 %v4769, 7
        %v4771 = vsub.s32 %v4768, %v4770
        %v4772 = vrot.slane %v4758, %v4771
        %v4773 = vcombine.low %v4765, %v4772
        %v4774 = vcombine.low %v3895, %v3896
        %v4775 = vcombine.low %v3897, %v3898
        %v4777 = vunpack.c.l.s4 1983009808
        %v4778 = vunpack.c.0.s8 %v4777
        %v4779 = vlaneseq
        %v4780 = vshrl.u32 %v4779, 7
        %v4781 = vsub.s32 %v4778, %v4780
        %v4782 = vrot.slane %v4774, %v4781
        %v4784 = vunpack.c.l.s4 1983009808
        %v4785 = vunpack.c.0.s8 %v4784
        %v4786 = vlaneseq
        %v4787 = vshrl.u32 %v4786, 7
        %v4788 = vsub.s32 %v4785, %v4787
        %v4789 = vrot.slane %v4775, %v4788
        %v4790 = vcombine.low %v4782, %v4789
        %v4792 = vunpack.c.l.s4 1983009808
        %v4793 = vunpack.c.0.s8 %v4792
        %v4794 = vlaneseq
        %v4795 = vshrl.u32 %v4794, 7
        %v4796 = vsub.s32 %v4793, %v4795
        %v4797 = vrot.slane %v3899, %v4796
        %v4798 = vcombine.low %v3900, %v3901
        %v4799 = vcombine.low %v3902, %v3903
        %v4801 = vunpack.c.l.s4 1983009808
        %v4802 = vunpack.c.0.s8 %v4801
        %v4803 = vlaneseq
        %v4804 = vshrl.u32 %v4803, 7
        %v4805 = vsub.s32 %v4802, %v4804
        %v4806 = vrot.slane %v4798, %v4805
        %v4808 = vunpack.c.l.s4 1983009808
        %v4809 = vunpack.c.0.s8 %v4808
        %v4810 = vlaneseq
        %v4811 = vshrl.u32 %v4810, 7
        %v4812 = vsub.s32 %v4809, %v4811
        %v4813 = vrot.slane %v4799, %v4812
        %v4814 = vcombine.low %v4806, %v4813
        %v4815 = vcombine.low %v3904, %v3905
        %v4816 = vcombine.low %v3906, %v3907
        %v4818 = vunpack.c.l.s4 1983009808
        %v4819 = vunpack.c.0.s8 %v4818
        %v4820 = vlaneseq
        %v4821 = vshrl.u32 %v4820, 7
        %v4822 = vsub.s32 %v4819, %v4821
        %v4823 = vrot.slane %v4815, %v4822
        %v4825 = vunpack.c.l.s4 1983009808
        %v4826 = vunpack.c.0.s8 %v4825
        %v4827 = vlaneseq
        %v4828 = vshrl.u32 %v4827, 7
        %v4829 = vsub.s32 %v4826, %v4828
        %v4830 = vrot.slane %v4816, %v4829
        %v4831 = vcombine.low %v4823, %v4830
        %v4833 = vunpack.c.l.s4 1983009808
        %v4834 = vunpack.c.0.s8 %v4833
        %v4835 = vlaneseq
        %v4836 = vshrl.u32 %v4835, 7
        %v4837 = vsub.s32 %v4834, %v4836
        %v4838 = vrot.slane %v3908, %v4837
        %v4839 = vcombine.low %v3909, %v3910
        %v4840 = vcombine.low %v3911, %v3912
        %v4842 = vunpack.c.l.s4 1983009808
        %v4843 = vunpack.c.0.s8 %v4842
        %v4844 = vlaneseq
        %v4845 = vshrl.u32 %v4844, 7
        %v4846 = vsub.s32 %v4843, %v4845
        %v4847 = vrot.slane %v4839, %v4846
        %v4849 = vunpack.c.l.s4 1983009808
        %v4850 = vunpack.c.0.s8 %v4849
        %v4851 = vlaneseq
        %v4852 = vshrl.u32 %v4851, 7
        %v4853 = vsub.s32 %v4850, %v4852
        %v4854 = vrot.slane %v4840, %v4853
        %v4855 = vcombine.low %v4847, %v4854
        %v4856 = vcombine.low %v3913, %v3914
        %v4857 = vcombine.low %v3915, %v3916
        %v4859 = vunpack.c.l.s4 1983009808
        %v4860 = vunpack.c.0.s8 %v4859
        %v4861 = vlaneseq
        %v4862 = vshrl.u32 %v4861, 7
        %v4863 = vsub.s32 %v4860, %v4862
        %v4864 = vrot.slane %v4856, %v4863
        %v4866 = vunpack.c.l.s4 1983009808
        %v4867 = vunpack.c.0.s8 %v4866
        %v4868 = vlaneseq
        %v4869 = vshrl.u32 %v4868, 7
        %v4870 = vsub.s32 %v4867, %v4869
        %v4871 = vrot.slane %v4857, %v4870
        %v4872 = vcombine.low %v4864, %v4871
        %v4874 = vunpack.c.l.s4 1983009808
        %v4875 = vunpack.c.0.s8 %v4874
        %v4876 = vlaneseq
        %v4877 = vshrl.u32 %v4876, 7
        %v4878 = vsub.s32 %v4875, %v4877
        %v4879 = vrot.slane %v3917, %v4878
        %v4880 = vcombine.low %v3918, %v3919
        %v4881 = vcombine.low %v3920, %v3921
        %v4883 = vunpack.c.l.s4 1983009808
        %v4884 = vunpack.c.0.s8 %v4883
        %v4885 = vlaneseq
        %v4886 = vshrl.u32 %v4885, 7
        %v4887 = vsub.s32 %v4884, %v4886
        %v4888 = vrot.slane %v4880, %v4887
        %v4890 = vunpack.c.l.s4 1983009808
        %v4891 = vunpack.c.0.s8 %v4890
        %v4892 = vlaneseq
        %v4893 = vshrl.u32 %v4892, 7
        %v4894 = vsub.s32 %v4891, %v4893
        %v4895 = vrot.slane %v4881, %v4894
        %v4896 = vcombine.low %v4888, %v4895
        %v4897 = vcombine.low %v3922, %v3923
        %v4898 = vcombine.low %v3924, %v3925
        %v4900 = vunpack.c.l.s4 1983009808
        %v4901 = vunpack.c.0.s8 %v4900
        %v4902 = vlaneseq
        %v4903 = vshrl.u32 %v4902, 7
        %v4904 = vsub.s32 %v4901, %v4903
        %v4905 = vrot.slane %v4897, %v4904
        %v4907 = vunpack.c.l.s4 1983009808
        %v4908 = vunpack.c.0.s8 %v4907
        %v4909 = vlaneseq
        %v4910 = vshrl.u32 %v4909, 7
        %v4911 = vsub.s32 %v4908, %v4910
        %v4912 = vrot.slane %v4898, %v4911
        %v4913 = vcombine.low %v4905, %v4912
        %v4915 = vunpack.c.l.s4 1983009808
        %v4916 = vunpack.c.0.s8 %v4915
        %v4917 = vlaneseq
        %v4918 = vshrl.u32 %v4917, 7
        %v4919 = vsub.s32 %v4916, %v4918
        %v4920 = vrot.slane %v3926, %v4919
        %v4921 = vcombine.low %v3927, %v3928
        %v4922 = vcombine.low %v3929, %v3930
        %v4924 = vunpack.c.l.s4 1983009808
        %v4925 = vunpack.c.0.s8 %v4924
        %v4926 = vlaneseq
        %v4927 = vshrl.u32 %v4926, 7
        %v4928 = vsub.s32 %v4925, %v4927
        %v4929 = vrot.slane %v4921, %v4928
        %v4931 = vunpack.c.l.s4 1983009808
        %v4932 = vunpack.c.0.s8 %v4931
        %v4933 = vlaneseq
        %v4934 = vshrl.u32 %v4933, 7
        %v4935 = vsub.s32 %v4932, %v4934
        %v4936 = vrot.slane %v4922, %v4935
        %v4937 = vcombine.low %v4929, %v4936
        %v4938 = vcombine.low %v3931, %v3932
        %v4939 = vcombine.low %v3933, %v3934
        %v4941 = vunpack.c.l.s4 1983009808
        %v4942 = vunpack.c.0.s8 %v4941
        %v4943 = vlaneseq
        %v4944 = vshrl.u32 %v4943, 7
        %v4945 = vsub.s32 %v4942, %v4944
        %v4946 = vrot.slane %v4938, %v4945
        %v4948 = vunpack.c.l.s4 1983009808
        %v4949 = vunpack.c.0.s8 %v4948
        %v4950 = vlaneseq
        %v4951 = vshrl.u32 %v4950, 7
        %v4952 = vsub.s32 %v4949, %v4951
        %v4953 = vrot.slane %v4939, %v4952
        %v4954 = vcombine.low %v4946, %v4953
        %v4956 = vunpack.c.l.s4 1983009808
        %v4957 = vunpack.c.0.s8 %v4956
        %v4958 = vlaneseq
        %v4959 = vshrl.u32 %v4958, 7
        %v4960 = vsub.s32 %v4957, %v4959
        %v4961 = vrot.slane %v3935, %v4960
        %v4962 = vcombine.low %v3936, %v3937
        %v4963 = vcombine.low %v3938, %v3939
        %v4965 = vunpack.c.l.s4 1983009808
        %v4966 = vunpack.c.0.s8 %v4965
        %v4967 = vlaneseq
        %v4968 = vshrl.u32 %v4967, 7
        %v4969 = vsub.s32 %v4966, %v4968
        %v4970 = vrot.slane %v4962, %v4969
        %v4972 = vunpack.c.l.s4 1983009808
        %v4973 = vunpack.c.0.s8 %v4972
        %v4974 = vlaneseq
        %v4975 = vshrl.u32 %v4974, 7
        %v4976 = vsub.s32 %v4973, %v4975
        %v4977 = vrot.slane %v4963, %v4976
        %v4978 = vcombine.low %v4970, %v4977
        %v4979 = vcombine.low %v3940, %v3941
        %v4980 = vcombine.low %v3942, %v3943
        %v4982 = vunpack.c.l.s4 1983009808
        %v4983 = vunpack.c.0.s8 %v4982
        %v4984 = vlaneseq
        %v4985 = vshrl.u32 %v4984, 7
        %v4986 = vsub.s32 %v4983, %v4985
        %v4987 = vrot.slane %v4979, %v4986
        %v4989 = vunpack.c.l.s4 1983009808
        %v4990 = vunpack.c.0.s8 %v4989
        %v4991 = vlaneseq
        %v4992 = vshrl.u32 %v4991, 7
        %v4993 = vsub.s32 %v4990, %v4992
        %v4994 = vrot.slane %v4980, %v4993
        %v4995 = vcombine.low %v4987, %v4994
        %v4997 = vunpack.c.l.s4 1983009808
        %v4998 = vunpack.c.0.s8 %v4997
        %v4999 = vlaneseq
        %v5000 = vshrl.u32 %v4999, 7
        %v5001 = vsub.s32 %v4998, %v5000
        %v5002 = vrot.slane %v3944, %v5001
        %v5003 = vcombine.low %v3945, %v3946
        %v5004 = vcombine.low %v3947, %v3948
        %v5006 = vunpack.c.l.s4 1983009808
        %v5007 = vunpack.c.0.s8 %v5006
        %v5008 = vlaneseq
        %v5009 = vshrl.u32 %v5008, 7
        %v5010 = vsub.s32 %v5007, %v5009
        %v5011 = vrot.slane %v5003, %v5010
        %v5013 = vunpack.c.l.s4 1983009808
        %v5014 = vunpack.c.0.s8 %v5013
        %v5015 = vlaneseq
        %v5016 = vshrl.u32 %v5015, 7
        %v5017 = vsub.s32 %v5014, %v5016
        %v5018 = vrot.slane %v5004, %v5017
        %v5019 = vcombine.low %v5011, %v5018
        %v5020 = vcombine.low %v3949, %v3950
        %v5021 = vcombine.low %v3951, %v3952
        %v5023 = vunpack.c.l.s4 1983009808
        %v5024 = vunpack.c.0.s8 %v5023
        %v5025 = vlaneseq
        %v5026 = vshrl.u32 %v5025, 7
        %v5027 = vsub.s32 %v5024, %v5026
        %v5028 = vrot.slane %v5020, %v5027
        %v5030 = vunpack.c.l.s4 1983009808
        %v5031 = vunpack.c.0.s8 %v5030
        %v5032 = vlaneseq
        %v5033 = vshrl.u32 %v5032, 7
        %v5034 = vsub.s32 %v5031, %v5033
        %v5035 = vrot.slane %v5021, %v5034
        %v5036 = vcombine.low %v5028, %v5035
        %v5038 = vunpack.c.l.s4 1983009808
        %v5039 = vunpack.c.0.s8 %v5038
        %v5040 = vlaneseq
        %v5041 = vshrl.u32 %v5040, 7
        %v5042 = vsub.s32 %v5039, %v5041
        %v5043 = vrot.slane %v3953, %v5042
        %v5098 = vsel %vm4090, %v4322, 0.0
        %v5099 = vsel %vm4091, %v4339, 0.0
        %v5100 = vsel %vm4092, %v4346, 0.0
        %v5101 = vsel %vm4093, %v4363, 0.0
        %v5102 = vsel %vm4094, %v4380, 0.0
        %v5103 = vsel %vm4095, %v4387, 0.0
        %v5104 = vsel %vm4096, %v4404, 0.0
        %v5105 = vsel %vm4097, %v4421, 0.0
        %v5106 = vsel %vm4098, %v4428, 0.0
        %v5107 = vsel %vm4099, %v4445, 0.0
        %v5108 = vsel %vm4100, %v4462, 0.0
        %v5109 = vsel %vm4101, %v4469, 0.0
        %v5110 = vsel %vm4102, %v4486, 0.0
        %v5111 = vsel %vm4103, %v4503, 0.0
        %v5112 = vsel %vm4104, %v4510, 0.0
        %v5113 = vsel %vm4105, %v4527, 0.0
        %v5114 = vsel %vm4106, %v4544, 0.0
        %v5115 = vsel %vm4107, %v4551, 0.0
        %v5116 = vsel %vm4108, %v4568, 0.0
        %v5117 = vsel %vm4109, %v4585, 0.0
        %v5118 = vsel %vm4110, %v4592, 0.0
        %v5119 = vsel %vm4111, %v4609, 0.0
        %v5120 = vsel %vm4112, %v4626, 0.0
        %v5121 = vsel %vm4113, %v4633, 0.0
        %v5122 = vsel %vm4114, %v4650, 0.0
        %v5123 = vsel %vm4115, %v4667, 0.0
        %v5124 = vsel %vm4116, %v4674, 0.0
        %v5125 = vsel %vm4117, %v4691, 0.0
        %v5126 = vsel %vm4118, %v4708, 0.0
        %v5127 = vsel %vm4119, %v4715, 0.0
        %v5128 = vsel %vm4120, %v4732, 0.0
        %v5129 = vsel %vm4121, %v4749, 0.0
        %v5130 = vsel %vm4122, %v4756, 0.0
        %v5131 = vsel %vm4123, %v4773, 0.0
        %v5132 = vsel %vm4124, %v4790, 0.0
        %v5133 = vsel %vm4125, %v4797, 0.0
        %v5134 = vsel %vm4126, %v4814, 0.0
        %v5135 = vsel %vm4127, %v4831, 0.0
        %v5136 = vsel %vm4128, %v4838, 0.0
        %v5137 = vsel %vm4129, %v4855, 0.0
        %v5138 = vsel %vm4130, %v4872, 0.0
        %v5139 = vsel %vm4131, %v4879, 0.0
        %v5140 = vsel %vm4132, %v4896, 0.0
        %v5141 = vsel %vm4133, %v4913, 0.0
        %v5142 = vsel %vm4134, %v4920, 0.0
        %v5143 = vsel %vm4135, %v4937, 0.0
        %v5144 = vsel %vm4136, %v4954, 0.0
        %v5145 = vsel %vm4137, %v4961, 0.0
        %v5146 = vsel %vm4138, %v4978, 0.0
        %v5147 = vsel %vm4139, %v4995, 0.0
        %v5148 = vsel %vm4140, %v5002, 0.0
        %v5149 = vsel %vm4141, %v5019, 0.0
        %v5150 = vsel %vm4142, %v5036, 0.0
        %v5151 = vsel %vm4143, %v5043, 0.0
        %v5152 = vpack.c.bf16 %v5099, %v5098
        %v5153 = vpack.c.bf16 %v5100, %v5100
        %v5154 = vpack.c.bf16 %v5102, %v5101
        %v5155 = vpack.c.bf16 %v5103, %v5103
        %v5156 = vpack.c.bf16 %v5105, %v5104
        %v5157 = vpack.c.bf16 %v5106, %v5106
        %v5158 = vpack.c.bf16 %v5108, %v5107
        %v5159 = vpack.c.bf16 %v5109, %v5109
        %v5160 = vpack.c.bf16 %v5111, %v5110
        %v5161 = vpack.c.bf16 %v5112, %v5112
        %v5162 = vpack.c.bf16 %v5114, %v5113
        %v5163 = vpack.c.bf16 %v5115, %v5115
        %v5164 = vpack.c.bf16 %v5117, %v5116
        %v5165 = vpack.c.bf16 %v5118, %v5118
        %v5166 = vpack.c.bf16 %v5120, %v5119
        %v5167 = vpack.c.bf16 %v5121, %v5121
        %v5168 = vpack.c.bf16 %v5123, %v5122
        %v5169 = vpack.c.bf16 %v5124, %v5124
        %v5170 = vpack.c.bf16 %v5126, %v5125
        %v5171 = vpack.c.bf16 %v5127, %v5127
        %v5172 = vpack.c.bf16 %v5129, %v5128
        %v5173 = vpack.c.bf16 %v5130, %v5130
        %v5174 = vpack.c.bf16 %v5132, %v5131
        %v5175 = vpack.c.bf16 %v5133, %v5133
        %v5176 = vpack.c.bf16 %v5135, %v5134
        %v5177 = vpack.c.bf16 %v5136, %v5136
        %v5178 = vpack.c.bf16 %v5138, %v5137
        %v5179 = vpack.c.bf16 %v5139, %v5139
        %v5180 = vpack.c.bf16 %v5141, %v5140
        %v5181 = vpack.c.bf16 %v5142, %v5142
        %v5182 = vpack.c.bf16 %v5144, %v5143
        %v5183 = vpack.c.bf16 %v5145, %v5145
        %v5184 = vpack.c.bf16 %v5147, %v5146
        %v5185 = vpack.c.bf16 %v5148, %v5148
        %v5186 = vpack.c.bf16 %v5150, %v5149
        %v5187 = vpack.c.bf16 %v5151, %v5151
        %v5188 = vld [vmem:[%s3] sm:$0x3]
        %s5189 = scalar_lea.vmem %s3, 2
        %v5190 = vld [vmem:[%s5189] sm:$0x3]
        %vm5191 = vsmask.f32 7424
        %v5193 = vshrl.u32 %v5152, 16
        %v5195 = vshll.u32 %v5152, 16
        %v5197 = vrot.slane %v5195, 1
        %v5198 = vor.u32 %v5193, %v5197
        %v5200 = vshll.u32 %v5153, 16
        %v5202 = vrot.slane %v5200, 1
        %v5203 = vsel %vm5191, %v5198, %v5202
        %v5205 = vshrl.u32 %v5154, 16
        %v5207 = vshll.u32 %v5154, 16
        %v5209 = vrot.slane %v5207, 1
        %v5210 = vor.u32 %v5205, %v5209
        %v5212 = vshll.u32 %v5155, 16
        %v5214 = vrot.slane %v5212, 1
        %v5215 = vsel %vm5191, %v5210, %v5214
        %v5217 = vshrl.u32 %v5156, 16
        %v5219 = vshll.u32 %v5156, 16
        %v5221 = vrot.slane %v5219, 1
        %v5222 = vor.u32 %v5217, %v5221
        %v5224 = vshll.u32 %v5157, 16
        %v5226 = vrot.slane %v5224, 1
        %v5227 = vsel %vm5191, %v5222, %v5226
        %v5229 = vshrl.u32 %v5158, 16
        %v5231 = vshll.u32 %v5158, 16
        %v5233 = vrot.slane %v5231, 1
        %v5234 = vor.u32 %v5229, %v5233
        %v5236 = vshll.u32 %v5159, 16
        %v5238 = vrot.slane %v5236, 1
        %v5239 = vsel %vm5191, %v5234, %v5238
        %v5241 = vshrl.u32 %v5160, 16
        %v5243 = vshll.u32 %v5160, 16
        %v5245 = vrot.slane %v5243, 1
        %v5246 = vor.u32 %v5241, %v5245
        %v5248 = vshll.u32 %v5161, 16
        %v5250 = vrot.slane %v5248, 1
        %v5251 = vsel %vm5191, %v5246, %v5250
        %v5253 = vshrl.u32 %v5162, 16
        %v5255 = vshll.u32 %v5162, 16
        %v5257 = vrot.slane %v5255, 1
        %v5258 = vor.u32 %v5253, %v5257
        %v5260 = vshll.u32 %v5163, 16
        %v5262 = vrot.slane %v5260, 1
        %v5263 = vsel %vm5191, %v5258, %v5262
        %v5265 = vshrl.u32 %v5164, 16
        %v5267 = vshll.u32 %v5164, 16
        %v5269 = vrot.slane %v5267, 1
        %v5270 = vor.u32 %v5265, %v5269
        %v5272 = vshll.u32 %v5165, 16
        %v5274 = vrot.slane %v5272, 1
        %v5275 = vsel %vm5191, %v5270, %v5274
        %v5277 = vshrl.u32 %v5166, 16
        %v5279 = vshll.u32 %v5166, 16
        %v5281 = vrot.slane %v5279, 1
        %v5282 = vor.u32 %v5277, %v5281
        %v5284 = vshll.u32 %v5167, 16
        %v5286 = vrot.slane %v5284, 1
        %v5287 = vsel %vm5191, %v5282, %v5286
        %v5289 = vshrl.u32 %v5168, 16
        %v5291 = vshll.u32 %v5168, 16
        %v5293 = vrot.slane %v5291, 1
        %v5294 = vor.u32 %v5289, %v5293
        %v5296 = vshll.u32 %v5169, 16
        %v5298 = vrot.slane %v5296, 1
        %v5299 = vsel %vm5191, %v5294, %v5298
        %v5301 = vshrl.u32 %v5170, 16
        %v5303 = vshll.u32 %v5170, 16
        %v5305 = vrot.slane %v5303, 1
        %v5306 = vor.u32 %v5301, %v5305
        %v5308 = vshll.u32 %v5171, 16
        %v5310 = vrot.slane %v5308, 1
        %v5311 = vsel %vm5191, %v5306, %v5310
        %v5313 = vshrl.u32 %v5172, 16
        %v5315 = vshll.u32 %v5172, 16
        %v5317 = vrot.slane %v5315, 1
        %v5318 = vor.u32 %v5313, %v5317
        %v5320 = vshll.u32 %v5173, 16
        %v5322 = vrot.slane %v5320, 1
        %v5323 = vsel %vm5191, %v5318, %v5322
        %v5325 = vshrl.u32 %v5174, 16
        %v5327 = vshll.u32 %v5174, 16
        %v5329 = vrot.slane %v5327, 1
        %v5330 = vor.u32 %v5325, %v5329
        %v5332 = vshll.u32 %v5175, 16
        %v5334 = vrot.slane %v5332, 1
        %v5335 = vsel %vm5191, %v5330, %v5334
        %v5337 = vshrl.u32 %v5176, 16
        %v5339 = vshll.u32 %v5176, 16
        %v5341 = vrot.slane %v5339, 1
        %v5342 = vor.u32 %v5337, %v5341
        %v5344 = vshll.u32 %v5177, 16
        %v5346 = vrot.slane %v5344, 1
        %v5347 = vsel %vm5191, %v5342, %v5346
        %v5349 = vshrl.u32 %v5178, 16
        %v5351 = vshll.u32 %v5178, 16
        %v5353 = vrot.slane %v5351, 1
        %v5354 = vor.u32 %v5349, %v5353
        %v5356 = vshll.u32 %v5179, 16
        %v5358 = vrot.slane %v5356, 1
        %v5359 = vsel %vm5191, %v5354, %v5358
        %v5361 = vshrl.u32 %v5180, 16
        %v5363 = vshll.u32 %v5180, 16
        %v5365 = vrot.slane %v5363, 1
        %v5366 = vor.u32 %v5361, %v5365
        %v5368 = vshll.u32 %v5181, 16
        %v5370 = vrot.slane %v5368, 1
        %v5371 = vsel %vm5191, %v5366, %v5370
        %v5373 = vshrl.u32 %v5182, 16
        %v5375 = vshll.u32 %v5182, 16
        %v5377 = vrot.slane %v5375, 1
        %v5378 = vor.u32 %v5373, %v5377
        %v5380 = vshll.u32 %v5183, 16
        %v5382 = vrot.slane %v5380, 1
        %v5383 = vsel %vm5191, %v5378, %v5382
        %vm5384 = vcmask 31744
        %v5386 = vsel %vm5384, %v5203, 0
        %v5389 = vsel %vm5384, %v5215, 0
        %v5392 = vsel %vm5384, %v5227, 0
        %v5395 = vsel %vm5384, %v5239, 0
        %v5398 = vsel %vm5384, %v5251, 0
        %v5401 = vsel %vm5384, %v5263, 0
        %v5404 = vsel %vm5384, %v5275, 0
        %v5407 = vsel %vm5384, %v5287, 0
        %v5410 = vsel %vm5384, %v5299, 0
        %v5413 = vsel %vm5384, %v5311, 0
        %v5416 = vsel %vm5384, %v5323, 0
        %v5419 = vsel %vm5384, %v5335, 0
        %v5422 = vsel %vm5384, %v5347, 0
        %v5425 = vsel %vm5384, %v5359, 0
        %v5428 = vsel %vm5384, %v5371, 0
        %v5431 = vsel %vm5384, %v5383, 0
        %vm5433 = vcmask 1041408
        %v5435 = vsel %vm5433, %v5190, 0
        %5437 = vmatprep.subr.bf16.mxu0 0
        %5438 = vmatpush1.bf16.msra.mxu0 0
        %5439 = vmatprep.subr.bf16.mxu0 0
        %5440 = vmatpush1.bf16.msra.mxu0 0
        %5441 = vmatprep.subr.bf16.mxu0 0
        %5442 = vmatpush1.bf16.msra.mxu0 0
        %5443 = vmatprep.subr.bf16.mxu0 0
        %5444 = vmatpush1.bf16.msra.mxu0 0
        %5445 = vmatprep.subr.bf16.mxu0 0
        %5446 = vmatpush1.bf16.msra.mxu0 0
        %5447 = vmatprep.subr.bf16.mxu0 0
        %5448 = vmatpush1.bf16.msra.mxu0 0
        %5449 = vmatprep.subr.bf16.mxu0 0
        %5450 = vmatpush1.bf16.msra.mxu0 0
        %5451 = vmatprep.subr.bf16.mxu0 0
        %5452 = vmatpush1.bf16.msra.mxu0 %v5435
        %5453 = vmatprep.subr.bf16.mxu0 0
        %5454 = vmatpush2.bf16.msra.mxu0 0
        %5455 = vmatprep.subr.bf16.mxu0 0
        %5456 = vmatpush2.bf16.msra.mxu0 0
        %5457 = vmatprep.subr.bf16.mxu0 0
        %5458 = vmatpush2.bf16.msra.mxu0 0
        %5459 = vmatprep.subr.bf16.mxu0 0
        %5460 = vmatpush2.bf16.msra.mxu0 0
        %5461 = vmatprep.subr.bf16.mxu0 0
        %5462 = vmatpush2.bf16.msra.mxu0 0
        %5463 = vmatprep.subr.bf16.mxu0 0
        %5464 = vmatpush2.bf16.msra.mxu0 0
        %5465 = vmatprep.subr.bf16.mxu0 0
        %5466 = vmatpush2.bf16.msra.mxu0 0
        %5467 = vmatprep.subr.bf16.mxu0 0
        %5468 = vmatpush2.bf16.msra.mxu0 0
        %5469 = vmatprep.mubr.bf16.mxu0 0
        %5470 = vmatmul.mubr.bf16.gmra.mxu0 %v5386
        %v5471 = vpop.f32.mrf.mxu0
        %v5472 = vadd.f32 0.0, %v5471
        %v5473 = vpop.f32.mrf.mxu0
        %v5474 = vpop.f32.mrf.mxu0
        %v5475 = vadd.f32 0.0, %v5474
        %v5476 = vpop.f32.mrf.mxu0
        %5477 = vmatprep.mubr.bf16.mxu0 0
        %5478 = vmatmul.mubr.bf16.gmra.mxu0 %v5389
        %v5479 = vpop.f32.mrf.mxu0
        %v5480 = vadd.f32 0.0, %v5479
        %v5481 = vpop.f32.mrf.mxu0
        %v5482 = vpop.f32.mrf.mxu0
        %v5483 = vadd.f32 0.0, %v5482
        %v5484 = vpop.f32.mrf.mxu0
        %5485 = vmatprep.mubr.bf16.mxu0 0
        %5486 = vmatmul.mubr.bf16.gmra.mxu0 %v5392
        %v5487 = vpop.f32.mrf.mxu0
        %v5488 = vadd.f32 0.0, %v5487
        %v5489 = vpop.f32.mrf.mxu0
        %v5490 = vpop.f32.mrf.mxu0
        %v5491 = vadd.f32 0.0, %v5490
        %v5492 = vpop.f32.mrf.mxu0
        %5493 = vmatprep.mubr.bf16.mxu0 0
        %5494 = vmatmul.mubr.bf16.gmra.mxu0 %v5395
        %v5495 = vpop.f32.mrf.mxu0
        %v5496 = vadd.f32 0.0, %v5495
        %v5497 = vpop.f32.mrf.mxu0
        %v5498 = vpop.f32.mrf.mxu0
        %v5499 = vadd.f32 0.0, %v5498
        %v5500 = vpop.f32.mrf.mxu0
        %5501 = vmatprep.mubr.bf16.mxu0 0
        %5502 = vmatmul.mubr.bf16.gmra.mxu0 %v5398
        %v5503 = vpop.f32.mrf.mxu0
        %v5504 = vadd.f32 0.0, %v5503
        %v5505 = vpop.f32.mrf.mxu0
        %v5506 = vpop.f32.mrf.mxu0
        %v5507 = vadd.f32 0.0, %v5506
        %v5508 = vpop.f32.mrf.mxu0
        %5509 = vmatprep.mubr.bf16.mxu0 0
        %5510 = vmatmul.mubr.bf16.gmra.mxu0 %v5401
        %v5511 = vpop.f32.mrf.mxu0
        %v5512 = vadd.f32 0.0, %v5511
        %v5513 = vpop.f32.mrf.mxu0
        %v5514 = vpop.f32.mrf.mxu0
        %v5515 = vadd.f32 0.0, %v5514
        %v5516 = vpop.f32.mrf.mxu0
        %5517 = vmatprep.mubr.bf16.mxu0 0
        %5518 = vmatmul.mubr.bf16.gmra.mxu0 %v5404
        %v5519 = vpop.f32.mrf.mxu0
        %v5520 = vadd.f32 0.0, %v5519
        %v5521 = vpop.f32.mrf.mxu0
        %v5522 = vpop.f32.mrf.mxu0
        %v5523 = vadd.f32 0.0, %v5522
        %v5524 = vpop.f32.mrf.mxu0
        %5525 = vmatprep.mubr.bf16.mxu0 0
        %5526 = vmatmul.mubr.bf16.gmra.mxu0 %v5407
        %v5527 = vpop.f32.mrf.mxu0
        %v5528 = vadd.f32 0.0, %v5527
        %v5529 = vpop.f32.mrf.mxu0
        %v5530 = vpop.f32.mrf.mxu0
        %v5531 = vadd.f32 0.0, %v5530
        %v5532 = vpop.f32.mrf.mxu0
        %5533 = vmatprep.mubr.bf16.mxu0 0
        %5534 = vmatmul.mubr.bf16.gmra.mxu0 %v5410
        %v5535 = vpop.f32.mrf.mxu0
        %v5536 = vadd.f32 0.0, %v5535
        %v5537 = vpop.f32.mrf.mxu0
        %v5538 = vpop.f32.mrf.mxu0
        %v5539 = vadd.f32 0.0, %v5538
        %v5540 = vpop.f32.mrf.mxu0
        %5541 = vmatprep.mubr.bf16.mxu0 0
        %5542 = vmatmul.mubr.bf16.gmra.mxu0 %v5413
        %v5543 = vpop.f32.mrf.mxu0
        %v5544 = vadd.f32 0.0, %v5543
        %v5545 = vpop.f32.mrf.mxu0
        %v5546 = vpop.f32.mrf.mxu0
        %v5547 = vadd.f32 0.0, %v5546
        %v5548 = vpop.f32.mrf.mxu0
        %5549 = vmatprep.mubr.bf16.mxu0 0
        %5550 = vmatmul.mubr.bf16.gmra.mxu0 %v5416
        %v5551 = vpop.f32.mrf.mxu0
        %v5552 = vadd.f32 0.0, %v5551
        %v5553 = vpop.f32.mrf.mxu0
        %v5554 = vpop.f32.mrf.mxu0
        %v5555 = vadd.f32 0.0, %v5554
        %v5556 = vpop.f32.mrf.mxu0
        %5557 = vmatprep.mubr.bf16.mxu0 0
        %5558 = vmatmul.mubr.bf16.gmra.mxu0 %v5419
        %v5559 = vpop.f32.mrf.mxu0
        %v5560 = vadd.f32 0.0, %v5559
        %v5561 = vpop.f32.mrf.mxu0
        %v5562 = vpop.f32.mrf.mxu0
        %v5563 = vadd.f32 0.0, %v5562
        %v5564 = vpop.f32.mrf.mxu0
        %5565 = vmatprep.mubr.bf16.mxu0 0
        %5566 = vmatmul.mubr.bf16.gmra.mxu0 %v5422
        %v5567 = vpop.f32.mrf.mxu0
        %v5568 = vadd.f32 0.0, %v5567
        %v5569 = vpop.f32.mrf.mxu0
        %v5570 = vpop.f32.mrf.mxu0
        %v5571 = vadd.f32 0.0, %v5570
        %v5572 = vpop.f32.mrf.mxu0
        %5573 = vmatprep.mubr.bf16.mxu0 0
        %5574 = vmatmul.mubr.bf16.gmra.mxu0 %v5425
        %v5575 = vpop.f32.mrf.mxu0
        %v5576 = vadd.f32 0.0, %v5575
        %v5577 = vpop.f32.mrf.mxu0
        %v5578 = vpop.f32.mrf.mxu0
        %v5579 = vadd.f32 0.0, %v5578
        %v5580 = vpop.f32.mrf.mxu0
        %5581 = vmatprep.mubr.bf16.mxu0 0
        %5582 = vmatmul.mubr.bf16.gmra.mxu0 %v5428
        %v5583 = vpop.f32.mrf.mxu0
        %v5584 = vadd.f32 0.0, %v5583
        %v5585 = vpop.f32.mrf.mxu0
        %v5586 = vpop.f32.mrf.mxu0
        %v5587 = vadd.f32 0.0, %v5586
        %v5588 = vpop.f32.mrf.mxu0
        %5589 = vmatprep.mubr.bf16.mxu0 0
        %5590 = vmatmul.mubr.bf16.gmra.mxu0 %v5431
        %v5591 = vpop.f32.mrf.mxu0
        %v5592 = vadd.f32 0.0, %v5591
        %v5593 = vpop.f32.mrf.mxu0
        %v5594 = vpop.f32.mrf.mxu0
        %v5595 = vadd.f32 0.0, %v5594
        %v5596 = vpop.f32.mrf.mxu0
        %5597 = vdwg.mxu0
        %v5598 = vsel %vm5384, %v5152, 0
        %v5600 = vsel %vm5384, %v5154, 0
        %v5602 = vsel %vm5384, %v5156, 0
        %v5604 = vsel %vm5384, %v5158, 0
        %v5606 = vsel %vm5384, %v5160, 0
        %v5608 = vsel %vm5384, %v5162, 0
        %v5610 = vsel %vm5384, %v5164, 0
        %v5612 = vsel %vm5384, %v5166, 0
        %v5614 = vsel %vm5384, %v5168, 0
        %v5616 = vsel %vm5384, %v5170, 0
        %v5618 = vsel %vm5384, %v5172, 0
        %v5620 = vsel %vm5384, %v5174, 0
        %v5622 = vsel %vm5384, %v5176, 0
        %v5624 = vsel %vm5384, %v5178, 0
        %v5626 = vsel %vm5384, %v5180, 0
        %v5628 = vsel %vm5384, %v5182, 0
        %v5631 = vsel %vm5433, %v5188, 0
        %5633 = vmatprep.subr.bf16.mxu0 0
        %5634 = vmatpush1.bf16.msra.mxu0 0
        %5635 = vmatprep.subr.bf16.mxu0 0
        %5636 = vmatpush1.bf16.msra.mxu0 0
        %5637 = vmatprep.subr.bf16.mxu0 0
        %5638 = vmatpush1.bf16.msra.mxu0 0
        %5639 = vmatprep.subr.bf16.mxu0 0
        %5640 = vmatpush1.bf16.msra.mxu0 0
        %5641 = vmatprep.subr.bf16.mxu0 0
        %5642 = vmatpush1.bf16.msra.mxu0 0
        %5643 = vmatprep.subr.bf16.mxu0 0
        %5644 = vmatpush1.bf16.msra.mxu0 0
        %5645 = vmatprep.subr.bf16.mxu0 0
        %5646 = vmatpush1.bf16.msra.mxu0 0
        %5647 = vmatprep.subr.bf16.mxu0 0
        %5648 = vmatpush1.bf16.msra.mxu0 %v5631
        %5649 = vmatprep.subr.bf16.mxu0 0
        %5650 = vmatpush2.bf16.msra.mxu0 0
        %5651 = vmatprep.subr.bf16.mxu0 0
        %5652 = vmatpush2.bf16.msra.mxu0 0
        %5653 = vmatprep.subr.bf16.mxu0 0
        %5654 = vmatpush2.bf16.msra.mxu0 0
        %5655 = vmatprep.subr.bf16.mxu0 0
        %5656 = vmatpush2.bf16.msra.mxu0 0
        %5657 = vmatprep.subr.bf16.mxu0 0
        %5658 = vmatpush2.bf16.msra.mxu0 0
        %5659 = vmatprep.subr.bf16.mxu0 0
        %5660 = vmatpush2.bf16.msra.mxu0 0
        %5661 = vmatprep.subr.bf16.mxu0 0
        %5662 = vmatpush2.bf16.msra.mxu0 0
        %5663 = vmatprep.subr.bf16.mxu0 0
        %5664 = vmatpush2.bf16.msra.mxu0 0
        %5665 = vmatprep.mubr.bf16.mxu0 0
        %5666 = vmatmul.mubr.bf16.gmra.mxu0 %v5598
        %v5667 = vpop.f32.mrf.mxu0
        %v5668 = vadd.f32 %v5472, %v5667
        %v5669 = vpop.f32.mrf.mxu0
        %v5670 = vpop.f32.mrf.mxu0
        %v5671 = vadd.f32 %v5475, %v5670
        %v5672 = vpop.f32.mrf.mxu0
        %5673 = vmatprep.mubr.bf16.mxu0 0
        %5674 = vmatmul.mubr.bf16.gmra.mxu0 %v5600
        %v5675 = vpop.f32.mrf.mxu0
        %v5676 = vadd.f32 %v5480, %v5675
        %v5677 = vpop.f32.mrf.mxu0
        %v5678 = vpop.f32.mrf.mxu0
        %v5679 = vadd.f32 %v5483, %v5678
        %v5680 = vpop.f32.mrf.mxu0
        %5681 = vmatprep.mubr.bf16.mxu0 0
        %5682 = vmatmul.mubr.bf16.gmra.mxu0 %v5602
        %v5683 = vpop.f32.mrf.mxu0
        %v5684 = vadd.f32 %v5488, %v5683
        %v5685 = vpop.f32.mrf.mxu0
        %v5686 = vpop.f32.mrf.mxu0
        %v5687 = vadd.f32 %v5491, %v5686
        %v5688 = vpop.f32.mrf.mxu0
        %5689 = vmatprep.mubr.bf16.mxu0 0
        %5690 = vmatmul.mubr.bf16.gmra.mxu0 %v5604
        %v5691 = vpop.f32.mrf.mxu0
        %v5692 = vadd.f32 %v5496, %v5691
        %v5693 = vpop.f32.mrf.mxu0
        %v5694 = vpop.f32.mrf.mxu0
        %v5695 = vadd.f32 %v5499, %v5694
        %v5696 = vpop.f32.mrf.mxu0
        %5697 = vmatprep.mubr.bf16.mxu0 0
        %5698 = vmatmul.mubr.bf16.gmra.mxu0 %v5606
        %v5699 = vpop.f32.mrf.mxu0
        %v5700 = vadd.f32 %v5504, %v5699
        %v5701 = vpop.f32.mrf.mxu0
        %v5702 = vpop.f32.mrf.mxu0
        %v5703 = vadd.f32 %v5507, %v5702
        %v5704 = vpop.f32.mrf.mxu0
        %5705 = vmatprep.mubr.bf16.mxu0 0
        %5706 = vmatmul.mubr.bf16.gmra.mxu0 %v5608
        %v5707 = vpop.f32.mrf.mxu0
        %v5708 = vadd.f32 %v5512, %v5707
        %v5709 = vpop.f32.mrf.mxu0
        %v5710 = vpop.f32.mrf.mxu0
        %v5711 = vadd.f32 %v5515, %v5710
        %v5712 = vpop.f32.mrf.mxu0
        %5713 = vmatprep.mubr.bf16.mxu0 0
        %5714 = vmatmul.mubr.bf16.gmra.mxu0 %v5610
        %v5715 = vpop.f32.mrf.mxu0
        %v5716 = vadd.f32 %v5520, %v5715
        %v5717 = vpop.f32.mrf.mxu0
        %v5718 = vpop.f32.mrf.mxu0
        %v5719 = vadd.f32 %v5523, %v5718
        %v5720 = vpop.f32.mrf.mxu0
        %5721 = vmatprep.mubr.bf16.mxu0 0
        %5722 = vmatmul.mubr.bf16.gmra.mxu0 %v5612
        %v5723 = vpop.f32.mrf.mxu0
        %v5724 = vadd.f32 %v5528, %v5723
        %v5725 = vpop.f32.mrf.mxu0
        %v5726 = vpop.f32.mrf.mxu0
        %v5727 = vadd.f32 %v5531, %v5726
        %v5728 = vpop.f32.mrf.mxu0
        %5729 = vmatprep.mubr.bf16.mxu0 0
        %5730 = vmatmul.mubr.bf16.gmra.mxu0 %v5614
        %v5731 = vpop.f32.mrf.mxu0
        %v5732 = vadd.f32 %v5536, %v5731
        %v5733 = vpop.f32.mrf.mxu0
        %v5734 = vpop.f32.mrf.mxu0
        %v5735 = vadd.f32 %v5539, %v5734
        %v5736 = vpop.f32.mrf.mxu0
        %5737 = vmatprep.mubr.bf16.mxu0 0
        %5738 = vmatmul.mubr.bf16.gmra.mxu0 %v5616
        %v5739 = vpop.f32.mrf.mxu0
        %v5740 = vadd.f32 %v5544, %v5739
        %v5741 = vpop.f32.mrf.mxu0
        %v5742 = vpop.f32.mrf.mxu0
        %v5743 = vadd.f32 %v5547, %v5742
        %v5744 = vpop.f32.mrf.mxu0
        %5745 = vmatprep.mubr.bf16.mxu0 0
        %5746 = vmatmul.mubr.bf16.gmra.mxu0 %v5618
        %v5747 = vpop.f32.mrf.mxu0
        %v5748 = vadd.f32 %v5552, %v5747
        %v5749 = vpop.f32.mrf.mxu0
        %v5750 = vpop.f32.mrf.mxu0
        %v5751 = vadd.f32 %v5555, %v5750
        %v5752 = vpop.f32.mrf.mxu0
        %5753 = vmatprep.mubr.bf16.mxu0 0
        %5754 = vmatmul.mubr.bf16.gmra.mxu0 %v5620
        %v5755 = vpop.f32.mrf.mxu0
        %v5756 = vadd.f32 %v5560, %v5755
        %v5757 = vpop.f32.mrf.mxu0
        %v5758 = vpop.f32.mrf.mxu0
        %v5759 = vadd.f32 %v5563, %v5758
        %v5760 = vpop.f32.mrf.mxu0
        %5761 = vmatprep.mubr.bf16.mxu0 0
        %5762 = vmatmul.mubr.bf16.gmra.mxu0 %v5622
        %v5763 = vpop.f32.mrf.mxu0
        %v5764 = vadd.f32 %v5568, %v5763
        %v5765 = vpop.f32.mrf.mxu0
        %v5766 = vpop.f32.mrf.mxu0
        %v5767 = vadd.f32 %v5571, %v5766
        %v5768 = vpop.f32.mrf.mxu0
        %5769 = vmatprep.mubr.bf16.mxu0 0
        %5770 = vmatmul.mubr.bf16.gmra.mxu0 %v5624
        %v5771 = vpop.f32.mrf.mxu0
        %v5772 = vadd.f32 %v5576, %v5771
        %v5773 = vpop.f32.mrf.mxu0
        %v5774 = vpop.f32.mrf.mxu0
        %v5775 = vadd.f32 %v5579, %v5774
        %v5776 = vpop.f32.mrf.mxu0
        %5777 = vmatprep.mubr.bf16.mxu0 0
        %5778 = vmatmul.mubr.bf16.gmra.mxu0 %v5626
        %v5779 = vpop.f32.mrf.mxu0
        %v5780 = vadd.f32 %v5584, %v5779
        %v5781 = vpop.f32.mrf.mxu0
        %v5782 = vpop.f32.mrf.mxu0
        %v5783 = vadd.f32 %v5587, %v5782
        %v5784 = vpop.f32.mrf.mxu0
        %5785 = vmatprep.mubr.bf16.mxu0 0
        %5786 = vmatmul.mubr.bf16.gmra.mxu0 %v5628
        %v5787 = vpop.f32.mrf.mxu0
        %v5788 = vadd.f32 %v5592, %v5787
        %v5789 = vpop.f32.mrf.mxu0
        %v5790 = vpop.f32.mrf.mxu0
        %v5791 = vadd.f32 %v5595, %v5790
        %v5792 = vpop.f32.mrf.mxu0
        %5793 = vdwg.mxu0
        %s5794 = scalar_lea.vmem %s3, 4
        %v5795 = vld [vmem:[%s5794] sm:$0x3]
        %vm5828 = vcmask 1046528
        %v5829 = vrot.slane %v5152, 1
        %v5830 = vrot.slane %v5153, 1
        %v5831 = vsel %vm5828, %v5829, %v5830
        %v5832 = vrot.slane %v5154, 1
        %v5833 = vrot.slane %v5155, 1
        %v5834 = vsel %vm5828, %v5832, %v5833
        %v5835 = vrot.slane %v5156, 1
        %v5836 = vrot.slane %v5157, 1
        %v5837 = vsel %vm5828, %v5835, %v5836
        %v5838 = vrot.slane %v5158, 1
        %v5839 = vrot.slane %v5159, 1
        %v5840 = vsel %vm5828, %v5838, %v5839
        %v5841 = vrot.slane %v5160, 1
        %v5842 = vrot.slane %v5161, 1
        %v5843 = vsel %vm5828, %v5841, %v5842
        %v5844 = vrot.slane %v5162, 1
        %v5845 = vrot.slane %v5163, 1
        %v5846 = vsel %vm5828, %v5844, %v5845
        %v5847 = vrot.slane %v5164, 1
        %v5848 = vrot.slane %v5165, 1
        %v5849 = vsel %vm5828, %v5847, %v5848
        %v5850 = vrot.slane %v5166, 1
        %v5851 = vrot.slane %v5167, 1
        %v5852 = vsel %vm5828, %v5850, %v5851
        %v5853 = vrot.slane %v5168, 1
        %v5854 = vrot.slane %v5169, 1
        %v5855 = vsel %vm5828, %v5853, %v5854
        %v5856 = vrot.slane %v5170, 1
        %v5857 = vrot.slane %v5171, 1
        %v5858 = vsel %vm5828, %v5856, %v5857
        %v5859 = vrot.slane %v5172, 1
        %v5860 = vrot.slane %v5173, 1
        %v5861 = vsel %vm5828, %v5859, %v5860
        %v5862 = vrot.slane %v5174, 1
        %v5863 = vrot.slane %v5175, 1
        %v5864 = vsel %vm5828, %v5862, %v5863
        %v5865 = vrot.slane %v5176, 1
        %v5866 = vrot.slane %v5177, 1
        %v5867 = vsel %vm5828, %v5865, %v5866
        %v5868 = vrot.slane %v5178, 1
        %v5869 = vrot.slane %v5179, 1
        %v5870 = vsel %vm5828, %v5868, %v5869
        %v5871 = vrot.slane %v5180, 1
        %v5872 = vrot.slane %v5181, 1
        %v5873 = vsel %vm5828, %v5871, %v5872
        %v5874 = vrot.slane %v5182, 1
        %v5875 = vrot.slane %v5183, 1
        %v5876 = vsel %vm5828, %v5874, %v5875
        %v5878 = vsel %vm5384, %v5831, 0
        %v5881 = vsel %vm5384, %v5834, 0
        %v5884 = vsel %vm5384, %v5837, 0
        %v5887 = vsel %vm5384, %v5840, 0
        %v5890 = vsel %vm5384, %v5843, 0
        %v5893 = vsel %vm5384, %v5846, 0
        %v5896 = vsel %vm5384, %v5849, 0
        %v5899 = vsel %vm5384, %v5852, 0
        %v5902 = vsel %vm5384, %v5855, 0
        %v5905 = vsel %vm5384, %v5858, 0
        %v5908 = vsel %vm5384, %v5861, 0
        %v5911 = vsel %vm5384, %v5864, 0
        %v5914 = vsel %vm5384, %v5867, 0
        %v5917 = vsel %vm5384, %v5870, 0
        %v5920 = vsel %vm5384, %v5873, 0
        %v5923 = vsel %vm5384, %v5876, 0
        %v5926 = vsel %vm5433, %v5795, 0
        %5928 = vmatprep.subr.bf16.mxu0 0
        %5929 = vmatpush1.bf16.msra.mxu0 0
        %5930 = vmatprep.subr.bf16.mxu0 0
        %5931 = vmatpush1.bf16.msra.mxu0 0
        %5932 = vmatprep.subr.bf16.mxu0 0
        %5933 = vmatpush1.bf16.msra.mxu0 0
        %5934 = vmatprep.subr.bf16.mxu0 0
        %5935 = vmatpush1.bf16.msra.mxu0 0
        %5936 = vmatprep.subr.bf16.mxu0 0
        %5937 = vmatpush1.bf16.msra.mxu0 0
        %5938 = vmatprep.subr.bf16.mxu0 0
        %5939 = vmatpush1.bf16.msra.mxu0 0
        %5940 = vmatprep.subr.bf16.mxu0 0
        %5941 = vmatpush1.bf16.msra.mxu0 0
        %5942 = vmatprep.subr.bf16.mxu0 0
        %5943 = vmatpush1.bf16.msra.mxu0 %v5926
        %5944 = vmatprep.subr.bf16.mxu0 0
        %5945 = vmatpush2.bf16.msra.mxu0 0
        %5946 = vmatprep.subr.bf16.mxu0 0
        %5947 = vmatpush2.bf16.msra.mxu0 0
        %5948 = vmatprep.subr.bf16.mxu0 0
        %5949 = vmatpush2.bf16.msra.mxu0 0
        %5950 = vmatprep.subr.bf16.mxu0 0
        %5951 = vmatpush2.bf16.msra.mxu0 0
        %5952 = vmatprep.subr.bf16.mxu0 0
        %5953 = vmatpush2.bf16.msra.mxu0 0
        %5954 = vmatprep.subr.bf16.mxu0 0
        %5955 = vmatpush2.bf16.msra.mxu0 0
        %5956 = vmatprep.subr.bf16.mxu0 0
        %5957 = vmatpush2.bf16.msra.mxu0 0
        %5958 = vmatprep.subr.bf16.mxu0 0
        %5959 = vmatpush2.bf16.msra.mxu0 0
        %5960 = vmatprep.mubr.bf16.mxu0 0
        %5961 = vmatmul.mubr.bf16.gmra.mxu0 %v5878
        %v5962 = vpop.f32.mrf.mxu0
        %v5963 = vadd.f32 0.0, %v5962
        %v5964 = vpop.f32.mrf.mxu0
        %v5965 = vpop.f32.mrf.mxu0
        %v5966 = vadd.f32 0.0, %v5965
        %v5967 = vpop.f32.mrf.mxu0
        %5968 = vmatprep.mubr.bf16.mxu0 0
        %5969 = vmatmul.mubr.bf16.gmra.mxu0 %v5881
        %v5970 = vpop.f32.mrf.mxu0
        %v5971 = vadd.f32 0.0, %v5970
        %v5972 = vpop.f32.mrf.mxu0
        %v5973 = vpop.f32.mrf.mxu0
        %v5974 = vadd.f32 0.0, %v5973
        %v5975 = vpop.f32.mrf.mxu0
        %5976 = vmatprep.mubr.bf16.mxu0 0
        %5977 = vmatmul.mubr.bf16.gmra.mxu0 %v5884
        %v5978 = vpop.f32.mrf.mxu0
        %v5979 = vadd.f32 0.0, %v5978
        %v5980 = vpop.f32.mrf.mxu0
        %v5981 = vpop.f32.mrf.mxu0
        %v5982 = vadd.f32 0.0, %v5981
        %v5983 = vpop.f32.mrf.mxu0
        %5984 = vmatprep.mubr.bf16.mxu0 0
        %5985 = vmatmul.mubr.bf16.gmra.mxu0 %v5887
        %v5986 = vpop.f32.mrf.mxu0
        %v5987 = vadd.f32 0.0, %v5986
        %v5988 = vpop.f32.mrf.mxu0
        %v5989 = vpop.f32.mrf.mxu0
        %v5990 = vadd.f32 0.0, %v5989
        %v5991 = vpop.f32.mrf.mxu0
        %5992 = vmatprep.mubr.bf16.mxu0 0
        %5993 = vmatmul.mubr.bf16.gmra.mxu0 %v5890
        %v5994 = vpop.f32.mrf.mxu0
        %v5995 = vadd.f32 0.0, %v5994
        %v5996 = vpop.f32.mrf.mxu0
        %v5997 = vpop.f32.mrf.mxu0
        %v5998 = vadd.f32 0.0, %v5997
        %v5999 = vpop.f32.mrf.mxu0
        %6000 = vmatprep.mubr.bf16.mxu0 0
        %6001 = vmatmul.mubr.bf16.gmra.mxu0 %v5893
        %v6002 = vpop.f32.mrf.mxu0
        %v6003 = vadd.f32 0.0, %v6002
        %v6004 = vpop.f32.mrf.mxu0
        %v6005 = vpop.f32.mrf.mxu0
        %v6006 = vadd.f32 0.0, %v6005
        %v6007 = vpop.f32.mrf.mxu0
        %6008 = vmatprep.mubr.bf16.mxu0 0
        %6009 = vmatmul.mubr.bf16.gmra.mxu0 %v5896
        %v6010 = vpop.f32.mrf.mxu0
        %v6011 = vadd.f32 0.0, %v6010
        %v6012 = vpop.f32.mrf.mxu0
        %v6013 = vpop.f32.mrf.mxu0
        %v6014 = vadd.f32 0.0, %v6013
        %v6015 = vpop.f32.mrf.mxu0
        %6016 = vmatprep.mubr.bf16.mxu0 0
        %6017 = vmatmul.mubr.bf16.gmra.mxu0 %v5899
        %v6018 = vpop.f32.mrf.mxu0
        %v6019 = vadd.f32 0.0, %v6018
        %v6020 = vpop.f32.mrf.mxu0
        %v6021 = vpop.f32.mrf.mxu0
        %v6022 = vadd.f32 0.0, %v6021
        %v6023 = vpop.f32.mrf.mxu0
        %6024 = vmatprep.mubr.bf16.mxu0 0
        %6025 = vmatmul.mubr.bf16.gmra.mxu0 %v5902
        %v6026 = vpop.f32.mrf.mxu0
        %v6027 = vadd.f32 0.0, %v6026
        %v6028 = vpop.f32.mrf.mxu0
        %v6029 = vpop.f32.mrf.mxu0
        %v6030 = vadd.f32 0.0, %v6029
        %v6031 = vpop.f32.mrf.mxu0
        %6032 = vmatprep.mubr.bf16.mxu0 0
        %6033 = vmatmul.mubr.bf16.gmra.mxu0 %v5905
        %v6034 = vpop.f32.mrf.mxu0
        %v6035 = vadd.f32 0.0, %v6034
        %v6036 = vpop.f32.mrf.mxu0
        %v6037 = vpop.f32.mrf.mxu0
        %v6038 = vadd.f32 0.0, %v6037
        %v6039 = vpop.f32.mrf.mxu0
        %6040 = vmatprep.mubr.bf16.mxu0 0
        %6041 = vmatmul.mubr.bf16.gmra.mxu0 %v5908
        %v6042 = vpop.f32.mrf.mxu0
        %v6043 = vadd.f32 0.0, %v6042
        %v6044 = vpop.f32.mrf.mxu0
        %v6045 = vpop.f32.mrf.mxu0
        %v6046 = vadd.f32 0.0, %v6045
        %v6047 = vpop.f32.mrf.mxu0
        %6048 = vmatprep.mubr.bf16.mxu0 0
        %6049 = vmatmul.mubr.bf16.gmra.mxu0 %v5911
        %v6050 = vpop.f32.mrf.mxu0
        %v6051 = vadd.f32 0.0, %v6050
        %v6052 = vpop.f32.mrf.mxu0
        %v6053 = vpop.f32.mrf.mxu0
        %v6054 = vadd.f32 0.0, %v6053
        %v6055 = vpop.f32.mrf.mxu0
        %6056 = vmatprep.mubr.bf16.mxu0 0
        %6057 = vmatmul.mubr.bf16.gmra.mxu0 %v5914
        %v6058 = vpop.f32.mrf.mxu0
        %v6059 = vadd.f32 0.0, %v6058
        %v6060 = vpop.f32.mrf.mxu0
        %v6061 = vpop.f32.mrf.mxu0
        %v6062 = vadd.f32 0.0, %v6061
        %v6063 = vpop.f32.mrf.mxu0
        %6064 = vmatprep.mubr.bf16.mxu0 0
        %6065 = vmatmul.mubr.bf16.gmra.mxu0 %v5917
        %v6066 = vpop.f32.mrf.mxu0
        %v6067 = vadd.f32 0.0, %v6066
        %v6068 = vpop.f32.mrf.mxu0
        %v6069 = vpop.f32.mrf.mxu0
        %v6070 = vadd.f32 0.0, %v6069
        %v6071 = vpop.f32.mrf.mxu0
        %6072 = vmatprep.mubr.bf16.mxu0 0
        %6073 = vmatmul.mubr.bf16.gmra.mxu0 %v5920
        %v6074 = vpop.f32.mrf.mxu0
        %v6075 = vadd.f32 0.0, %v6074
        %v6076 = vpop.f32.mrf.mxu0
        %v6077 = vpop.f32.mrf.mxu0
        %v6078 = vadd.f32 0.0, %v6077
        %v6079 = vpop.f32.mrf.mxu0
        %6080 = vmatprep.mubr.bf16.mxu0 0
        %6081 = vmatmul.mubr.bf16.gmra.mxu0 %v5923
        %v6082 = vpop.f32.mrf.mxu0
        %v6083 = vadd.f32 0.0, %v6082
        %v6084 = vpop.f32.mrf.mxu0
        %v6085 = vpop.f32.mrf.mxu0
        %v6086 = vadd.f32 0.0, %v6085
        %v6087 = vpop.f32.mrf.mxu0
        %6088 = vdwg.mxu0
        %v6089 = vadd.f32 %v5668, %v5963
        %v6090 = vadd.f32 %v5671, %v5966
        %v6091 = vadd.f32 %v5676, %v5971
        %v6092 = vadd.f32 %v5679, %v5974
        %v6093 = vadd.f32 %v5684, %v5979
        %v6094 = vadd.f32 %v5687, %v5982
        %v6095 = vadd.f32 %v5692, %v5987
        %v6096 = vadd.f32 %v5695, %v5990
        %v6097 = vadd.f32 %v5700, %v5995
        %v6098 = vadd.f32 %v5703, %v5998
        %v6099 = vadd.f32 %v5708, %v6003
        %v6100 = vadd.f32 %v5711, %v6006
        %v6101 = vadd.f32 %v5716, %v6011
        %v6102 = vadd.f32 %v5719, %v6014
        %v6103 = vadd.f32 %v5724, %v6019
        %v6104 = vadd.f32 %v5727, %v6022
        %v6105 = vadd.f32 %v5732, %v6027
        %v6106 = vadd.f32 %v5735, %v6030
        %v6107 = vadd.f32 %v5740, %v6035
        %v6108 = vadd.f32 %v5743, %v6038
        %v6109 = vadd.f32 %v5748, %v6043
        %v6110 = vadd.f32 %v5751, %v6046
        %v6111 = vadd.f32 %v5756, %v6051
        %v6112 = vadd.f32 %v5759, %v6054
        %v6113 = vadd.f32 %v5764, %v6059
        %v6114 = vadd.f32 %v5767, %v6062
        %v6115 = vadd.f32 %v5772, %v6067
        %v6116 = vadd.f32 %v5775, %v6070
        %v6117 = vadd.f32 %v5780, %v6075
        %v6118 = vadd.f32 %v5783, %v6078
        %v6119 = vadd.f32 %v5788, %v6083
        %v6120 = vadd.f32 %v5791, %v6086
        %s6121 = scalar_lea.vmem %s3, 6
        %v6122 = vld [vmem:[%s6121] sm:$0x3]
        %v6124 = vsel %vm5384, %v5184, 0
        %v6127 = vsel %vm5433, %v6122, 0
        %6129 = vmatprep.subr.bf16.mxu0 0
        %6130 = vmatpush1.bf16.msra.mxu0 0
        %6131 = vmatprep.subr.bf16.mxu0 0
        %6132 = vmatpush1.bf16.msra.mxu0 0
        %6133 = vmatprep.subr.bf16.mxu0 0
        %6134 = vmatpush1.bf16.msra.mxu0 0
        %6135 = vmatprep.subr.bf16.mxu0 0
        %6136 = vmatpush1.bf16.msra.mxu0 0
        %6137 = vmatprep.subr.bf16.mxu0 0
        %6138 = vmatpush1.bf16.msra.mxu0 0
        %6139 = vmatprep.subr.bf16.mxu0 0
        %6140 = vmatpush1.bf16.msra.mxu0 0
        %6141 = vmatprep.subr.bf16.mxu0 0
        %6142 = vmatpush1.bf16.msra.mxu0 0
        %6143 = vmatprep.subr.bf16.mxu0 0
        %6144 = vmatpush1.bf16.msra.mxu0 %v6127
        %6145 = vmatprep.subr.bf16.mxu0 0
        %6146 = vmatpush2.bf16.msra.mxu0 0
        %6147 = vmatprep.subr.bf16.mxu0 0
        %6148 = vmatpush2.bf16.msra.mxu0 0
        %6149 = vmatprep.subr.bf16.mxu0 0
        %6150 = vmatpush2.bf16.msra.mxu0 0
        %6151 = vmatprep.subr.bf16.mxu0 0
        %6152 = vmatpush2.bf16.msra.mxu0 0
        %6153 = vmatprep.subr.bf16.mxu0 0
        %6154 = vmatpush2.bf16.msra.mxu0 0
        %6155 = vmatprep.subr.bf16.mxu0 0
        %6156 = vmatpush2.bf16.msra.mxu0 0
        %6157 = vmatprep.subr.bf16.mxu0 0
        %6158 = vmatpush2.bf16.msra.mxu0 0
        %6159 = vmatprep.subr.bf16.mxu0 0
        %6160 = vmatpush2.bf16.msra.mxu0 0
        %6161 = vmatprep.mubr.bf16.mxu0 0
        %6162 = vmatmul.mubr.bf16.gmra.mxu0 %v5600
        %v6163 = vpop.f32.mrf.mxu0
        %v6164 = vadd.f32 0.0, %v6163
        %v6165 = vpop.f32.mrf.mxu0
        %v6166 = vpop.f32.mrf.mxu0
        %v6167 = vadd.f32 0.0, %v6166
        %v6168 = vpop.f32.mrf.mxu0
        %6169 = vmatprep.mubr.bf16.mxu0 0
        %6170 = vmatmul.mubr.bf16.gmra.mxu0 %v5602
        %v6171 = vpop.f32.mrf.mxu0
        %v6172 = vadd.f32 0.0, %v6171
        %v6173 = vpop.f32.mrf.mxu0
        %v6174 = vpop.f32.mrf.mxu0
        %v6175 = vadd.f32 0.0, %v6174
        %v6176 = vpop.f32.mrf.mxu0
        %6177 = vmatprep.mubr.bf16.mxu0 0
        %6178 = vmatmul.mubr.bf16.gmra.mxu0 %v5604
        %v6179 = vpop.f32.mrf.mxu0
        %v6180 = vadd.f32 0.0, %v6179
        %v6181 = vpop.f32.mrf.mxu0
        %v6182 = vpop.f32.mrf.mxu0
        %v6183 = vadd.f32 0.0, %v6182
        %v6184 = vpop.f32.mrf.mxu0
        %6185 = vmatprep.mubr.bf16.mxu0 0
        %6186 = vmatmul.mubr.bf16.gmra.mxu0 %v5606
        %v6187 = vpop.f32.mrf.mxu0
        %v6188 = vadd.f32 0.0, %v6187
        %v6189 = vpop.f32.mrf.mxu0
        %v6190 = vpop.f32.mrf.mxu0
        %v6191 = vadd.f32 0.0, %v6190
        %v6192 = vpop.f32.mrf.mxu0
        %6193 = vmatprep.mubr.bf16.mxu0 0
        %6194 = vmatmul.mubr.bf16.gmra.mxu0 %v5608
        %v6195 = vpop.f32.mrf.mxu0
        %v6196 = vadd.f32 0.0, %v6195
        %v6197 = vpop.f32.mrf.mxu0
        %v6198 = vpop.f32.mrf.mxu0
        %v6199 = vadd.f32 0.0, %v6198
        %v6200 = vpop.f32.mrf.mxu0
        %6201 = vmatprep.mubr.bf16.mxu0 0
        %6202 = vmatmul.mubr.bf16.gmra.mxu0 %v5610
        %v6203 = vpop.f32.mrf.mxu0
        %v6204 = vadd.f32 0.0, %v6203
        %v6205 = vpop.f32.mrf.mxu0
        %v6206 = vpop.f32.mrf.mxu0
        %v6207 = vadd.f32 0.0, %v6206
        %v6208 = vpop.f32.mrf.mxu0
        %6209 = vmatprep.mubr.bf16.mxu0 0
        %6210 = vmatmul.mubr.bf16.gmra.mxu0 %v5612
        %v6211 = vpop.f32.mrf.mxu0
        %v6212 = vadd.f32 0.0, %v6211
        %v6213 = vpop.f32.mrf.mxu0
        %v6214 = vpop.f32.mrf.mxu0
        %v6215 = vadd.f32 0.0, %v6214
        %v6216 = vpop.f32.mrf.mxu0
        %6217 = vmatprep.mubr.bf16.mxu0 0
        %6218 = vmatmul.mubr.bf16.gmra.mxu0 %v5614
        %v6219 = vpop.f32.mrf.mxu0
        %v6220 = vadd.f32 0.0, %v6219
        %v6221 = vpop.f32.mrf.mxu0
        %v6222 = vpop.f32.mrf.mxu0
        %v6223 = vadd.f32 0.0, %v6222
        %v6224 = vpop.f32.mrf.mxu0
        %6225 = vmatprep.mubr.bf16.mxu0 0
        %6226 = vmatmul.mubr.bf16.gmra.mxu0 %v5616
        %v6227 = vpop.f32.mrf.mxu0
        %v6228 = vadd.f32 0.0, %v6227
        %v6229 = vpop.f32.mrf.mxu0
        %v6230 = vpop.f32.mrf.mxu0
        %v6231 = vadd.f32 0.0, %v6230
        %v6232 = vpop.f32.mrf.mxu0
        %6233 = vmatprep.mubr.bf16.mxu0 0
        %6234 = vmatmul.mubr.bf16.gmra.mxu0 %v5618
        %v6235 = vpop.f32.mrf.mxu0
        %v6236 = vadd.f32 0.0, %v6235
        %v6237 = vpop.f32.mrf.mxu0
        %v6238 = vpop.f32.mrf.mxu0
        %v6239 = vadd.f32 0.0, %v6238
        %v6240 = vpop.f32.mrf.mxu0
        %6241 = vmatprep.mubr.bf16.mxu0 0
        %6242 = vmatmul.mubr.bf16.gmra.mxu0 %v5620
        %v6243 = vpop.f32.mrf.mxu0
        %v6244 = vadd.f32 0.0, %v6243
        %v6245 = vpop.f32.mrf.mxu0
        %v6246 = vpop.f32.mrf.mxu0
        %v6247 = vadd.f32 0.0, %v6246
        %v6248 = vpop.f32.mrf.mxu0
        %6249 = vmatprep.mubr.bf16.mxu0 0
        %6250 = vmatmul.mubr.bf16.gmra.mxu0 %v5622
        %v6251 = vpop.f32.mrf.mxu0
        %v6252 = vadd.f32 0.0, %v6251
        %v6253 = vpop.f32.mrf.mxu0
        %v6254 = vpop.f32.mrf.mxu0
        %v6255 = vadd.f32 0.0, %v6254
        %v6256 = vpop.f32.mrf.mxu0
        %6257 = vmatprep.mubr.bf16.mxu0 0
        %6258 = vmatmul.mubr.bf16.gmra.mxu0 %v5624
        %v6259 = vpop.f32.mrf.mxu0
        %v6260 = vadd.f32 0.0, %v6259
        %v6261 = vpop.f32.mrf.mxu0
        %v6262 = vpop.f32.mrf.mxu0
        %v6263 = vadd.f32 0.0, %v6262
        %v6264 = vpop.f32.mrf.mxu0
        %6265 = vmatprep.mubr.bf16.mxu0 0
        %6266 = vmatmul.mubr.bf16.gmra.mxu0 %v5626
        %v6267 = vpop.f32.mrf.mxu0
        %v6268 = vadd.f32 0.0, %v6267
        %v6269 = vpop.f32.mrf.mxu0
        %v6270 = vpop.f32.mrf.mxu0
        %v6271 = vadd.f32 0.0, %v6270
        %v6272 = vpop.f32.mrf.mxu0
        %6273 = vmatprep.mubr.bf16.mxu0 0
        %6274 = vmatmul.mubr.bf16.gmra.mxu0 %v5628
        %v6275 = vpop.f32.mrf.mxu0
        %v6276 = vadd.f32 0.0, %v6275
        %v6277 = vpop.f32.mrf.mxu0
        %v6278 = vpop.f32.mrf.mxu0
        %v6279 = vadd.f32 0.0, %v6278
        %v6280 = vpop.f32.mrf.mxu0
        %6281 = vmatprep.mubr.bf16.mxu0 0
        %6282 = vmatmul.mubr.bf16.gmra.mxu0 %v6124
        %v6283 = vpop.f32.mrf.mxu0
        %v6284 = vadd.f32 0.0, %v6283
        %v6285 = vpop.f32.mrf.mxu0
        %v6286 = vpop.f32.mrf.mxu0
        %v6287 = vadd.f32 0.0, %v6286
        %v6288 = vpop.f32.mrf.mxu0
        %6289 = vdwg.mxu0
        %v6290 = vadd.f32 %v6089, %v6164
        %v6291 = vadd.f32 %v6090, %v6167
        %v6292 = vadd.f32 %v6091, %v6172
        %v6293 = vadd.f32 %v6092, %v6175
        %v6294 = vadd.f32 %v6093, %v6180
        %v6295 = vadd.f32 %v6094, %v6183
        %v6296 = vadd.f32 %v6095, %v6188
        %v6297 = vadd.f32 %v6096, %v6191
        %v6298 = vadd.f32 %v6097, %v6196
        %v6299 = vadd.f32 %v6098, %v6199
        %v6300 = vadd.f32 %v6099, %v6204
        %v6301 = vadd.f32 %v6100, %v6207
        %v6302 = vadd.f32 %v6101, %v6212
        %v6303 = vadd.f32 %v6102, %v6215
        %v6304 = vadd.f32 %v6103, %v6220
        %v6305 = vadd.f32 %v6104, %v6223
        %v6306 = vadd.f32 %v6105, %v6228
        %v6307 = vadd.f32 %v6106, %v6231
        %v6308 = vadd.f32 %v6107, %v6236
        %v6309 = vadd.f32 %v6108, %v6239
        %v6310 = vadd.f32 %v6109, %v6244
        %v6311 = vadd.f32 %v6110, %v6247
        %v6312 = vadd.f32 %v6111, %v6252
        %v6313 = vadd.f32 %v6112, %v6255
        %v6314 = vadd.f32 %v6113, %v6260
        %v6315 = vadd.f32 %v6114, %v6263
        %v6316 = vadd.f32 %v6115, %v6268
        %v6317 = vadd.f32 %v6116, %v6271
        %v6318 = vadd.f32 %v6117, %v6276
        %v6319 = vadd.f32 %v6118, %v6279
        %v6320 = vadd.f32 %v6119, %v6284
        %v6321 = vadd.f32 %v6120, %v6287
        %s6322 = scalar_lea.vmem %s3, 8
        %v6323 = vld [vmem:[%s6322] sm:$0x3]
        %v6324 = vshrl.u32 %v5184, 16
        %v6326 = vshll.u32 %v5184, 16
        %v6328 = vrot.slane %v6326, 1
        %v6329 = vor.u32 %v6324, %v6328
        %v6331 = vshll.u32 %v5185, 16
        %v6333 = vrot.slane %v6331, 1
        %v6334 = vsel %vm5191, %v6329, %v6333
        %v6336 = vsel %vm5384, %v6334, 0
        %v6339 = vsel %vm5433, %v6323, 0
        %6341 = vmatprep.subr.bf16.mxu0 0
        %6342 = vmatpush1.bf16.msra.mxu0 0
        %6343 = vmatprep.subr.bf16.mxu0 0
        %6344 = vmatpush1.bf16.msra.mxu0 0
        %6345 = vmatprep.subr.bf16.mxu0 0
        %6346 = vmatpush1.bf16.msra.mxu0 0
        %6347 = vmatprep.subr.bf16.mxu0 0
        %6348 = vmatpush1.bf16.msra.mxu0 0
        %6349 = vmatprep.subr.bf16.mxu0 0
        %6350 = vmatpush1.bf16.msra.mxu0 0
        %6351 = vmatprep.subr.bf16.mxu0 0
        %6352 = vmatpush1.bf16.msra.mxu0 0
        %6353 = vmatprep.subr.bf16.mxu0 0
        %6354 = vmatpush1.bf16.msra.mxu0 0
        %6355 = vmatprep.subr.bf16.mxu0 0
        %6356 = vmatpush1.bf16.msra.mxu0 %v6339
        %6357 = vmatprep.subr.bf16.mxu0 0
        %6358 = vmatpush2.bf16.msra.mxu0 0
        %6359 = vmatprep.subr.bf16.mxu0 0
        %6360 = vmatpush2.bf16.msra.mxu0 0
        %6361 = vmatprep.subr.bf16.mxu0 0
        %6362 = vmatpush2.bf16.msra.mxu0 0
        %6363 = vmatprep.subr.bf16.mxu0 0
        %6364 = vmatpush2.bf16.msra.mxu0 0
        %6365 = vmatprep.subr.bf16.mxu0 0
        %6366 = vmatpush2.bf16.msra.mxu0 0
        %6367 = vmatprep.subr.bf16.mxu0 0
        %6368 = vmatpush2.bf16.msra.mxu0 0
        %6369 = vmatprep.subr.bf16.mxu0 0
        %6370 = vmatpush2.bf16.msra.mxu0 0
        %6371 = vmatprep.subr.bf16.mxu0 0
        %6372 = vmatpush2.bf16.msra.mxu0 0
        %6373 = vmatprep.mubr.bf16.mxu0 0
        %6374 = vmatmul.mubr.bf16.gmra.mxu0 %v5389
        %v6375 = vpop.f32.mrf.mxu0
        %v6376 = vadd.f32 0.0, %v6375
        %v6377 = vpop.f32.mrf.mxu0
        %v6378 = vpop.f32.mrf.mxu0
        %v6379 = vadd.f32 0.0, %v6378
        %v6380 = vpop.f32.mrf.mxu0
        %6381 = vmatprep.mubr.bf16.mxu0 0
        %6382 = vmatmul.mubr.bf16.gmra.mxu0 %v5392
        %v6383 = vpop.f32.mrf.mxu0
        %v6384 = vadd.f32 0.0, %v6383
        %v6385 = vpop.f32.mrf.mxu0
        %v6386 = vpop.f32.mrf.mxu0
        %v6387 = vadd.f32 0.0, %v6386
        %v6388 = vpop.f32.mrf.mxu0
        %6389 = vmatprep.mubr.bf16.mxu0 0
        %6390 = vmatmul.mubr.bf16.gmra.mxu0 %v5395
        %v6391 = vpop.f32.mrf.mxu0
        %v6392 = vadd.f32 0.0, %v6391
        %v6393 = vpop.f32.mrf.mxu0
        %v6394 = vpop.f32.mrf.mxu0
        %v6395 = vadd.f32 0.0, %v6394
        %v6396 = vpop.f32.mrf.mxu0
        %6397 = vmatprep.mubr.bf16.mxu0 0
        %6398 = vmatmul.mubr.bf16.gmra.mxu0 %v5398
        %v6399 = vpop.f32.mrf.mxu0
        %v6400 = vadd.f32 0.0, %v6399
        %v6401 = vpop.f32.mrf.mxu0
        %v6402 = vpop.f32.mrf.mxu0
        %v6403 = vadd.f32 0.0, %v6402
        %v6404 = vpop.f32.mrf.mxu0
        %6405 = vmatprep.mubr.bf16.mxu0 0
        %6406 = vmatmul.mubr.bf16.gmra.mxu0 %v5401
        %v6407 = vpop.f32.mrf.mxu0
        %v6408 = vadd.f32 0.0, %v6407
        %v6409 = vpop.f32.mrf.mxu0
        %v6410 = vpop.f32.mrf.mxu0
        %v6411 = vadd.f32 0.0, %v6410
        %v6412 = vpop.f32.mrf.mxu0
        %6413 = vmatprep.mubr.bf16.mxu0 0
        %6414 = vmatmul.mubr.bf16.gmra.mxu0 %v5404
        %v6415 = vpop.f32.mrf.mxu0
        %v6416 = vadd.f32 0.0, %v6415
        %v6417 = vpop.f32.mrf.mxu0
        %v6418 = vpop.f32.mrf.mxu0
        %v6419 = vadd.f32 0.0, %v6418
        %v6420 = vpop.f32.mrf.mxu0
        %6421 = vmatprep.mubr.bf16.mxu0 0
        %6422 = vmatmul.mubr.bf16.gmra.mxu0 %v5407
        %v6423 = vpop.f32.mrf.mxu0
        %v6424 = vadd.f32 0.0, %v6423
        %v6425 = vpop.f32.mrf.mxu0
        %v6426 = vpop.f32.mrf.mxu0
        %v6427 = vadd.f32 0.0, %v6426
        %v6428 = vpop.f32.mrf.mxu0
        %6429 = vmatprep.mubr.bf16.mxu0 0
        %6430 = vmatmul.mubr.bf16.gmra.mxu0 %v5410
        %v6431 = vpop.f32.mrf.mxu0
        %v6432 = vadd.f32 0.0, %v6431
        %v6433 = vpop.f32.mrf.mxu0
        %v6434 = vpop.f32.mrf.mxu0
        %v6435 = vadd.f32 0.0, %v6434
        %v6436 = vpop.f32.mrf.mxu0
        %6437 = vmatprep.mubr.bf16.mxu0 0
        %6438 = vmatmul.mubr.bf16.gmra.mxu0 %v5413
        %v6439 = vpop.f32.mrf.mxu0
        %v6440 = vadd.f32 0.0, %v6439
        %v6441 = vpop.f32.mrf.mxu0
        %v6442 = vpop.f32.mrf.mxu0
        %v6443 = vadd.f32 0.0, %v6442
        %v6444 = vpop.f32.mrf.mxu0
        %6445 = vmatprep.mubr.bf16.mxu0 0
        %6446 = vmatmul.mubr.bf16.gmra.mxu0 %v5416
        %v6447 = vpop.f32.mrf.mxu0
        %v6448 = vadd.f32 0.0, %v6447
        %v6449 = vpop.f32.mrf.mxu0
        %v6450 = vpop.f32.mrf.mxu0
        %v6451 = vadd.f32 0.0, %v6450
        %v6452 = vpop.f32.mrf.mxu0
        %6453 = vmatprep.mubr.bf16.mxu0 0
        %6454 = vmatmul.mubr.bf16.gmra.mxu0 %v5419
        %v6455 = vpop.f32.mrf.mxu0
        %v6456 = vadd.f32 0.0, %v6455
        %v6457 = vpop.f32.mrf.mxu0
        %v6458 = vpop.f32.mrf.mxu0
        %v6459 = vadd.f32 0.0, %v6458
        %v6460 = vpop.f32.mrf.mxu0
        %6461 = vmatprep.mubr.bf16.mxu0 0
        %6462 = vmatmul.mubr.bf16.gmra.mxu0 %v5422
        %v6463 = vpop.f32.mrf.mxu0
        %v6464 = vadd.f32 0.0, %v6463
        %v6465 = vpop.f32.mrf.mxu0
        %v6466 = vpop.f32.mrf.mxu0
        %v6467 = vadd.f32 0.0, %v6466
        %v6468 = vpop.f32.mrf.mxu0
        %6469 = vmatprep.mubr.bf16.mxu0 0
        %6470 = vmatmul.mubr.bf16.gmra.mxu0 %v5425
        %v6471 = vpop.f32.mrf.mxu0
        %v6472 = vadd.f32 0.0, %v6471
        %v6473 = vpop.f32.mrf.mxu0
        %v6474 = vpop.f32.mrf.mxu0
        %v6475 = vadd.f32 0.0, %v6474
        %v6476 = vpop.f32.mrf.mxu0
        %6477 = vmatprep.mubr.bf16.mxu0 0
        %6478 = vmatmul.mubr.bf16.gmra.mxu0 %v5428
        %v6479 = vpop.f32.mrf.mxu0
        %v6480 = vadd.f32 0.0, %v6479
        %v6481 = vpop.f32.mrf.mxu0
        %v6482 = vpop.f32.mrf.mxu0
        %v6483 = vadd.f32 0.0, %v6482
        %v6484 = vpop.f32.mrf.mxu0
        %6485 = vmatprep.mubr.bf16.mxu0 0
        %6486 = vmatmul.mubr.bf16.gmra.mxu0 %v5431
        %v6487 = vpop.f32.mrf.mxu0
        %v6488 = vadd.f32 0.0, %v6487
        %v6489 = vpop.f32.mrf.mxu0
        %v6490 = vpop.f32.mrf.mxu0
        %v6491 = vadd.f32 0.0, %v6490
        %v6492 = vpop.f32.mrf.mxu0
        %6493 = vmatprep.mubr.bf16.mxu0 0
        %6494 = vmatmul.mubr.bf16.gmra.mxu0 %v6336
        %v6495 = vpop.f32.mrf.mxu0
        %v6496 = vadd.f32 0.0, %v6495
        %v6497 = vpop.f32.mrf.mxu0
        %v6498 = vpop.f32.mrf.mxu0
        %v6499 = vadd.f32 0.0, %v6498
        %v6500 = vpop.f32.mrf.mxu0
        %6501 = vdwg.mxu0
        %v6502 = vadd.f32 %v6290, %v6376
        %v6503 = vadd.f32 %v6291, %v6379
        %v6504 = vadd.f32 %v6292, %v6384
        %v6505 = vadd.f32 %v6293, %v6387
        %v6506 = vadd.f32 %v6294, %v6392
        %v6507 = vadd.f32 %v6295, %v6395
        %v6508 = vadd.f32 %v6296, %v6400
        %v6509 = vadd.f32 %v6297, %v6403
        %v6510 = vadd.f32 %v6298, %v6408
        %v6511 = vadd.f32 %v6299, %v6411
        %v6512 = vadd.f32 %v6300, %v6416
        %v6513 = vadd.f32 %v6301, %v6419
        %v6514 = vadd.f32 %v6302, %v6424
        %v6515 = vadd.f32 %v6303, %v6427
        %v6516 = vadd.f32 %v6304, %v6432
        %v6517 = vadd.f32 %v6305, %v6435
        %v6518 = vadd.f32 %v6306, %v6440
        %v6519 = vadd.f32 %v6307, %v6443
        %v6520 = vadd.f32 %v6308, %v6448
        %v6521 = vadd.f32 %v6309, %v6451
        %v6522 = vadd.f32 %v6310, %v6456
        %v6523 = vadd.f32 %v6311, %v6459
        %v6524 = vadd.f32 %v6312, %v6464
        %v6525 = vadd.f32 %v6313, %v6467
        %v6526 = vadd.f32 %v6314, %v6472
        %v6527 = vadd.f32 %v6315, %v6475
        %v6528 = vadd.f32 %v6316, %v6480
        %v6529 = vadd.f32 %v6317, %v6483
        %v6530 = vadd.f32 %v6318, %v6488
        %v6531 = vadd.f32 %v6319, %v6491
        %v6532 = vadd.f32 %v6320, %v6496
        %v6533 = vadd.f32 %v6321, %v6499
        %s6534 = scalar_lea.vmem %s3, 10
        %v6535 = vld [vmem:[%s6534] sm:$0x3]
        %v6538 = vrot.slane %v5184, 1
        %v6539 = vrot.slane %v5185, 1
        %v6540 = vsel %vm5828, %v6538, %v6539
        %v6542 = vsel %vm5384, %v6540, 0
        %v6545 = vsel %vm5433, %v6535, 0
        %6547 = vmatprep.subr.bf16.mxu0 0
        %6548 = vmatpush1.bf16.msra.mxu0 0
        %6549 = vmatprep.subr.bf16.mxu0 0
        %6550 = vmatpush1.bf16.msra.mxu0 0
        %6551 = vmatprep.subr.bf16.mxu0 0
        %6552 = vmatpush1.bf16.msra.mxu0 0
        %6553 = vmatprep.subr.bf16.mxu0 0
        %6554 = vmatpush1.bf16.msra.mxu0 0
        %6555 = vmatprep.subr.bf16.mxu0 0
        %6556 = vmatpush1.bf16.msra.mxu0 0
        %6557 = vmatprep.subr.bf16.mxu0 0
        %6558 = vmatpush1.bf16.msra.mxu0 0
        %6559 = vmatprep.subr.bf16.mxu0 0
        %6560 = vmatpush1.bf16.msra.mxu0 0
        %6561 = vmatprep.subr.bf16.mxu0 0
        %6562 = vmatpush1.bf16.msra.mxu0 %v6545
        %6563 = vmatprep.subr.bf16.mxu0 0
        %6564 = vmatpush2.bf16.msra.mxu0 0
        %6565 = vmatprep.subr.bf16.mxu0 0
        %6566 = vmatpush2.bf16.msra.mxu0 0
        %6567 = vmatprep.subr.bf16.mxu0 0
        %6568 = vmatpush2.bf16.msra.mxu0 0
        %6569 = vmatprep.subr.bf16.mxu0 0
        %6570 = vmatpush2.bf16.msra.mxu0 0
        %6571 = vmatprep.subr.bf16.mxu0 0
        %6572 = vmatpush2.bf16.msra.mxu0 0
        %6573 = vmatprep.subr.bf16.mxu0 0
        %6574 = vmatpush2.bf16.msra.mxu0 0
        %6575 = vmatprep.subr.bf16.mxu0 0
        %6576 = vmatpush2.bf16.msra.mxu0 0
        %6577 = vmatprep.subr.bf16.mxu0 0
        %6578 = vmatpush2.bf16.msra.mxu0 0
        %6579 = vmatprep.mubr.bf16.mxu0 0
        %6580 = vmatmul.mubr.bf16.gmra.mxu0 %v5881
        %v6581 = vpop.f32.mrf.mxu0
        %v6582 = vadd.f32 0.0, %v6581
        %v6583 = vpop.f32.mrf.mxu0
        %v6584 = vpop.f32.mrf.mxu0
        %v6585 = vadd.f32 0.0, %v6584
        %v6586 = vpop.f32.mrf.mxu0
        %6587 = vmatprep.mubr.bf16.mxu0 0
        %6588 = vmatmul.mubr.bf16.gmra.mxu0 %v5884
        %v6589 = vpop.f32.mrf.mxu0
        %v6590 = vadd.f32 0.0, %v6589
        %v6591 = vpop.f32.mrf.mxu0
        %v6592 = vpop.f32.mrf.mxu0
        %v6593 = vadd.f32 0.0, %v6592
        %v6594 = vpop.f32.mrf.mxu0
        %6595 = vmatprep.mubr.bf16.mxu0 0
        %6596 = vmatmul.mubr.bf16.gmra.mxu0 %v5887
        %v6597 = vpop.f32.mrf.mxu0
        %v6598 = vadd.f32 0.0, %v6597
        %v6599 = vpop.f32.mrf.mxu0
        %v6600 = vpop.f32.mrf.mxu0
        %v6601 = vadd.f32 0.0, %v6600
        %v6602 = vpop.f32.mrf.mxu0
        %6603 = vmatprep.mubr.bf16.mxu0 0
        %6604 = vmatmul.mubr.bf16.gmra.mxu0 %v5890
        %v6605 = vpop.f32.mrf.mxu0
        %v6606 = vadd.f32 0.0, %v6605
        %v6607 = vpop.f32.mrf.mxu0
        %v6608 = vpop.f32.mrf.mxu0
        %v6609 = vadd.f32 0.0, %v6608
        %v6610 = vpop.f32.mrf.mxu0
        %6611 = vmatprep.mubr.bf16.mxu0 0
        %6612 = vmatmul.mubr.bf16.gmra.mxu0 %v5893
        %v6613 = vpop.f32.mrf.mxu0
        %v6614 = vadd.f32 0.0, %v6613
        %v6615 = vpop.f32.mrf.mxu0
        %v6616 = vpop.f32.mrf.mxu0
        %v6617 = vadd.f32 0.0, %v6616
        %v6618 = vpop.f32.mrf.mxu0
        %6619 = vmatprep.mubr.bf16.mxu0 0
        %6620 = vmatmul.mubr.bf16.gmra.mxu0 %v5896
        %v6621 = vpop.f32.mrf.mxu0
        %v6622 = vadd.f32 0.0, %v6621
        %v6623 = vpop.f32.mrf.mxu0
        %v6624 = vpop.f32.mrf.mxu0
        %v6625 = vadd.f32 0.0, %v6624
        %v6626 = vpop.f32.mrf.mxu0
        %6627 = vmatprep.mubr.bf16.mxu0 0
        %6628 = vmatmul.mubr.bf16.gmra.mxu0 %v5899
        %v6629 = vpop.f32.mrf.mxu0
        %v6630 = vadd.f32 0.0, %v6629
        %v6631 = vpop.f32.mrf.mxu0
        %v6632 = vpop.f32.mrf.mxu0
        %v6633 = vadd.f32 0.0, %v6632
        %v6634 = vpop.f32.mrf.mxu0
        %6635 = vmatprep.mubr.bf16.mxu0 0
        %6636 = vmatmul.mubr.bf16.gmra.mxu0 %v5902
        %v6637 = vpop.f32.mrf.mxu0
        %v6638 = vadd.f32 0.0, %v6637
        %v6639 = vpop.f32.mrf.mxu0
        %v6640 = vpop.f32.mrf.mxu0
        %v6641 = vadd.f32 0.0, %v6640
        %v6642 = vpop.f32.mrf.mxu0
        %6643 = vmatprep.mubr.bf16.mxu0 0
        %6644 = vmatmul.mubr.bf16.gmra.mxu0 %v5905
        %v6645 = vpop.f32.mrf.mxu0
        %v6646 = vadd.f32 0.0, %v6645
        %v6647 = vpop.f32.mrf.mxu0
        %v6648 = vpop.f32.mrf.mxu0
        %v6649 = vadd.f32 0.0, %v6648
        %v6650 = vpop.f32.mrf.mxu0
        %6651 = vmatprep.mubr.bf16.mxu0 0
        %6652 = vmatmul.mubr.bf16.gmra.mxu0 %v5908
        %v6653 = vpop.f32.mrf.mxu0
        %v6654 = vadd.f32 0.0, %v6653
        %v6655 = vpop.f32.mrf.mxu0
        %v6656 = vpop.f32.mrf.mxu0
        %v6657 = vadd.f32 0.0, %v6656
        %v6658 = vpop.f32.mrf.mxu0
        %6659 = vmatprep.mubr.bf16.mxu0 0
        %6660 = vmatmul.mubr.bf16.gmra.mxu0 %v5911
        %v6661 = vpop.f32.mrf.mxu0
        %v6662 = vadd.f32 0.0, %v6661
        %v6663 = vpop.f32.mrf.mxu0
        %v6664 = vpop.f32.mrf.mxu0
        %v6665 = vadd.f32 0.0, %v6664
        %v6666 = vpop.f32.mrf.mxu0
        %6667 = vmatprep.mubr.bf16.mxu0 0
        %6668 = vmatmul.mubr.bf16.gmra.mxu0 %v5914
        %v6669 = vpop.f32.mrf.mxu0
        %v6670 = vadd.f32 0.0, %v6669
        %v6671 = vpop.f32.mrf.mxu0
        %v6672 = vpop.f32.mrf.mxu0
        %v6673 = vadd.f32 0.0, %v6672
        %v6674 = vpop.f32.mrf.mxu0
        %6675 = vmatprep.mubr.bf16.mxu0 0
        %6676 = vmatmul.mubr.bf16.gmra.mxu0 %v5917
        %v6677 = vpop.f32.mrf.mxu0
        %v6678 = vadd.f32 0.0, %v6677
        %v6679 = vpop.f32.mrf.mxu0
        %v6680 = vpop.f32.mrf.mxu0
        %v6681 = vadd.f32 0.0, %v6680
        %v6682 = vpop.f32.mrf.mxu0
        %6683 = vmatprep.mubr.bf16.mxu0 0
        %6684 = vmatmul.mubr.bf16.gmra.mxu0 %v5920
        %v6685 = vpop.f32.mrf.mxu0
        %v6686 = vadd.f32 0.0, %v6685
        %v6687 = vpop.f32.mrf.mxu0
        %v6688 = vpop.f32.mrf.mxu0
        %v6689 = vadd.f32 0.0, %v6688
        %v6690 = vpop.f32.mrf.mxu0
        %6691 = vmatprep.mubr.bf16.mxu0 0
        %6692 = vmatmul.mubr.bf16.gmra.mxu0 %v5923
        %v6693 = vpop.f32.mrf.mxu0
        %v6694 = vadd.f32 0.0, %v6693
        %v6695 = vpop.f32.mrf.mxu0
        %v6696 = vpop.f32.mrf.mxu0
        %v6697 = vadd.f32 0.0, %v6696
        %v6698 = vpop.f32.mrf.mxu0
        %6699 = vmatprep.mubr.bf16.mxu0 0
        %6700 = vmatmul.mubr.bf16.gmra.mxu0 %v6542
        %v6701 = vpop.f32.mrf.mxu0
        %v6702 = vadd.f32 0.0, %v6701
        %v6703 = vpop.f32.mrf.mxu0
        %v6704 = vpop.f32.mrf.mxu0
        %v6705 = vadd.f32 0.0, %v6704
        %v6706 = vpop.f32.mrf.mxu0
        %6707 = vdwg.mxu0
        %v6708 = vadd.f32 %v6502, %v6582
        %v6709 = vadd.f32 %v6503, %v6585
        %v6710 = vadd.f32 %v6504, %v6590
        %v6711 = vadd.f32 %v6505, %v6593
        %v6712 = vadd.f32 %v6506, %v6598
        %v6713 = vadd.f32 %v6507, %v6601
        %v6714 = vadd.f32 %v6508, %v6606
        %v6715 = vadd.f32 %v6509, %v6609
        %v6716 = vadd.f32 %v6510, %v6614
        %v6717 = vadd.f32 %v6511, %v6617
        %v6718 = vadd.f32 %v6512, %v6622
        %v6719 = vadd.f32 %v6513, %v6625
        %v6720 = vadd.f32 %v6514, %v6630
        %v6721 = vadd.f32 %v6515, %v6633
        %v6722 = vadd.f32 %v6516, %v6638
        %v6723 = vadd.f32 %v6517, %v6641
        %v6724 = vadd.f32 %v6518, %v6646
        %v6725 = vadd.f32 %v6519, %v6649
        %v6726 = vadd.f32 %v6520, %v6654
        %v6727 = vadd.f32 %v6521, %v6657
        %v6728 = vadd.f32 %v6522, %v6662
        %v6729 = vadd.f32 %v6523, %v6665
        %v6730 = vadd.f32 %v6524, %v6670
        %v6731 = vadd.f32 %v6525, %v6673
        %v6732 = vadd.f32 %v6526, %v6678
        %v6733 = vadd.f32 %v6527, %v6681
        %v6734 = vadd.f32 %v6528, %v6686
        %v6735 = vadd.f32 %v6529, %v6689
        %v6736 = vadd.f32 %v6530, %v6694
        %v6737 = vadd.f32 %v6531, %v6697
        %v6738 = vadd.f32 %v6532, %v6702
        %v6739 = vadd.f32 %v6533, %v6705
        %s6740 = scalar_lea.vmem %s3, 12
        %v6741 = vld [vmem:[%s6740] sm:$0x3]
        %v6743 = vsel %vm5384, %v5186, 0
        %v6746 = vsel %vm5433, %v6741, 0
        %6748 = vmatprep.subr.bf16.mxu0 0
        %6749 = vmatpush1.bf16.msra.mxu0 0
        %6750 = vmatprep.subr.bf16.mxu0 0
        %6751 = vmatpush1.bf16.msra.mxu0 0
        %6752 = vmatprep.subr.bf16.mxu0 0
        %6753 = vmatpush1.bf16.msra.mxu0 0
        %6754 = vmatprep.subr.bf16.mxu0 0
        %6755 = vmatpush1.bf16.msra.mxu0 0
        %6756 = vmatprep.subr.bf16.mxu0 0
        %6757 = vmatpush1.bf16.msra.mxu0 0
        %6758 = vmatprep.subr.bf16.mxu0 0
        %6759 = vmatpush1.bf16.msra.mxu0 0
        %6760 = vmatprep.subr.bf16.mxu0 0
        %6761 = vmatpush1.bf16.msra.mxu0 0
        %6762 = vmatprep.subr.bf16.mxu0 0
        %6763 = vmatpush1.bf16.msra.mxu0 %v6746
        %6764 = vmatprep.subr.bf16.mxu0 0
        %6765 = vmatpush2.bf16.msra.mxu0 0
        %6766 = vmatprep.subr.bf16.mxu0 0
        %6767 = vmatpush2.bf16.msra.mxu0 0
        %6768 = vmatprep.subr.bf16.mxu0 0
        %6769 = vmatpush2.bf16.msra.mxu0 0
        %6770 = vmatprep.subr.bf16.mxu0 0
        %6771 = vmatpush2.bf16.msra.mxu0 0
        %6772 = vmatprep.subr.bf16.mxu0 0
        %6773 = vmatpush2.bf16.msra.mxu0 0
        %6774 = vmatprep.subr.bf16.mxu0 0
        %6775 = vmatpush2.bf16.msra.mxu0 0
        %6776 = vmatprep.subr.bf16.mxu0 0
        %6777 = vmatpush2.bf16.msra.mxu0 0
        %6778 = vmatprep.subr.bf16.mxu0 0
        %6779 = vmatpush2.bf16.msra.mxu0 0
        %6780 = vmatprep.mubr.bf16.mxu0 0
        %6781 = vmatmul.mubr.bf16.gmra.mxu0 %v5602
        %v6782 = vpop.f32.mrf.mxu0
        %v6783 = vadd.f32 0.0, %v6782
        %v6784 = vpop.f32.mrf.mxu0
        %v6785 = vpop.f32.mrf.mxu0
        %v6786 = vadd.f32 0.0, %v6785
        %v6787 = vpop.f32.mrf.mxu0
        %6788 = vmatprep.mubr.bf16.mxu0 0
        %6789 = vmatmul.mubr.bf16.gmra.mxu0 %v5604
        %v6790 = vpop.f32.mrf.mxu0
        %v6791 = vadd.f32 0.0, %v6790
        %v6792 = vpop.f32.mrf.mxu0
        %v6793 = vpop.f32.mrf.mxu0
        %v6794 = vadd.f32 0.0, %v6793
        %v6795 = vpop.f32.mrf.mxu0
        %6796 = vmatprep.mubr.bf16.mxu0 0
        %6797 = vmatmul.mubr.bf16.gmra.mxu0 %v5606
        %v6798 = vpop.f32.mrf.mxu0
        %v6799 = vadd.f32 0.0, %v6798
        %v6800 = vpop.f32.mrf.mxu0
        %v6801 = vpop.f32.mrf.mxu0
        %v6802 = vadd.f32 0.0, %v6801
        %v6803 = vpop.f32.mrf.mxu0
        %6804 = vmatprep.mubr.bf16.mxu0 0
        %6805 = vmatmul.mubr.bf16.gmra.mxu0 %v5608
        %v6806 = vpop.f32.mrf.mxu0
        %v6807 = vadd.f32 0.0, %v6806
        %v6808 = vpop.f32.mrf.mxu0
        %v6809 = vpop.f32.mrf.mxu0
        %v6810 = vadd.f32 0.0, %v6809
        %v6811 = vpop.f32.mrf.mxu0
        %6812 = vmatprep.mubr.bf16.mxu0 0
        %6813 = vmatmul.mubr.bf16.gmra.mxu0 %v5610
        %v6814 = vpop.f32.mrf.mxu0
        %v6815 = vadd.f32 0.0, %v6814
        %v6816 = vpop.f32.mrf.mxu0
        %v6817 = vpop.f32.mrf.mxu0
        %v6818 = vadd.f32 0.0, %v6817
        %v6819 = vpop.f32.mrf.mxu0
        %6820 = vmatprep.mubr.bf16.mxu0 0
        %6821 = vmatmul.mubr.bf16.gmra.mxu0 %v5612
        %v6822 = vpop.f32.mrf.mxu0
        %v6823 = vadd.f32 0.0, %v6822
        %v6824 = vpop.f32.mrf.mxu0
        %v6825 = vpop.f32.mrf.mxu0
        %v6826 = vadd.f32 0.0, %v6825
        %v6827 = vpop.f32.mrf.mxu0
        %6828 = vmatprep.mubr.bf16.mxu0 0
        %6829 = vmatmul.mubr.bf16.gmra.mxu0 %v5614
        %v6830 = vpop.f32.mrf.mxu0
        %v6831 = vadd.f32 0.0, %v6830
        %v6832 = vpop.f32.mrf.mxu0
        %v6833 = vpop.f32.mrf.mxu0
        %v6834 = vadd.f32 0.0, %v6833
        %v6835 = vpop.f32.mrf.mxu0
        %6836 = vmatprep.mubr.bf16.mxu0 0
        %6837 = vmatmul.mubr.bf16.gmra.mxu0 %v5616
        %v6838 = vpop.f32.mrf.mxu0
        %v6839 = vadd.f32 0.0, %v6838
        %v6840 = vpop.f32.mrf.mxu0
        %v6841 = vpop.f32.mrf.mxu0
        %v6842 = vadd.f32 0.0, %v6841
        %v6843 = vpop.f32.mrf.mxu0
        %6844 = vmatprep.mubr.bf16.mxu0 0
        %6845 = vmatmul.mubr.bf16.gmra.mxu0 %v5618
        %v6846 = vpop.f32.mrf.mxu0
        %v6847 = vadd.f32 0.0, %v6846
        %v6848 = vpop.f32.mrf.mxu0
        %v6849 = vpop.f32.mrf.mxu0
        %v6850 = vadd.f32 0.0, %v6849
        %v6851 = vpop.f32.mrf.mxu0
        %6852 = vmatprep.mubr.bf16.mxu0 0
        %6853 = vmatmul.mubr.bf16.gmra.mxu0 %v5620
        %v6854 = vpop.f32.mrf.mxu0
        %v6855 = vadd.f32 0.0, %v6854
        %v6856 = vpop.f32.mrf.mxu0
        %v6857 = vpop.f32.mrf.mxu0
        %v6858 = vadd.f32 0.0, %v6857
        %v6859 = vpop.f32.mrf.mxu0
        %6860 = vmatprep.mubr.bf16.mxu0 0
        %6861 = vmatmul.mubr.bf16.gmra.mxu0 %v5622
        %v6862 = vpop.f32.mrf.mxu0
        %v6863 = vadd.f32 0.0, %v6862
        %v6864 = vpop.f32.mrf.mxu0
        %v6865 = vpop.f32.mrf.mxu0
        %v6866 = vadd.f32 0.0, %v6865
        %v6867 = vpop.f32.mrf.mxu0
        %6868 = vmatprep.mubr.bf16.mxu0 0
        %6869 = vmatmul.mubr.bf16.gmra.mxu0 %v5624
        %v6870 = vpop.f32.mrf.mxu0
        %v6871 = vadd.f32 0.0, %v6870
        %v6872 = vpop.f32.mrf.mxu0
        %v6873 = vpop.f32.mrf.mxu0
        %v6874 = vadd.f32 0.0, %v6873
        %v6875 = vpop.f32.mrf.mxu0
        %6876 = vmatprep.mubr.bf16.mxu0 0
        %6877 = vmatmul.mubr.bf16.gmra.mxu0 %v5626
        %v6878 = vpop.f32.mrf.mxu0
        %v6879 = vadd.f32 0.0, %v6878
        %v6880 = vpop.f32.mrf.mxu0
        %v6881 = vpop.f32.mrf.mxu0
        %v6882 = vadd.f32 0.0, %v6881
        %v6883 = vpop.f32.mrf.mxu0
        %6884 = vmatprep.mubr.bf16.mxu0 0
        %6885 = vmatmul.mubr.bf16.gmra.mxu0 %v5628
        %v6886 = vpop.f32.mrf.mxu0
        %v6887 = vadd.f32 0.0, %v6886
        %v6888 = vpop.f32.mrf.mxu0
        %v6889 = vpop.f32.mrf.mxu0
        %v6890 = vadd.f32 0.0, %v6889
        %v6891 = vpop.f32.mrf.mxu0
        %6892 = vmatprep.mubr.bf16.mxu0 0
        %6893 = vmatmul.mubr.bf16.gmra.mxu0 %v6124
        %v6894 = vpop.f32.mrf.mxu0
        %v6895 = vadd.f32 0.0, %v6894
        %v6896 = vpop.f32.mrf.mxu0
        %v6897 = vpop.f32.mrf.mxu0
        %v6898 = vadd.f32 0.0, %v6897
        %v6899 = vpop.f32.mrf.mxu0
        %6900 = vmatprep.mubr.bf16.mxu0 0
        %6901 = vmatmul.mubr.bf16.gmra.mxu0 %v6743
        %v6902 = vpop.f32.mrf.mxu0
        %v6903 = vadd.f32 0.0, %v6902
        %v6904 = vpop.f32.mrf.mxu0
        %v6905 = vpop.f32.mrf.mxu0
        %v6906 = vadd.f32 0.0, %v6905
        %v6907 = vpop.f32.mrf.mxu0
        %6908 = vdwg.mxu0
        %v6909 = vadd.f32 %v6708, %v6783
        %v6910 = vadd.f32 %v6709, %v6786
        %v6911 = vadd.f32 %v6710, %v6791
        %v6912 = vadd.f32 %v6711, %v6794
        %v6913 = vadd.f32 %v6712, %v6799
        %v6914 = vadd.f32 %v6713, %v6802
        %v6915 = vadd.f32 %v6714, %v6807
        %v6916 = vadd.f32 %v6715, %v6810
        %v6917 = vadd.f32 %v6716, %v6815
        %v6918 = vadd.f32 %v6717, %v6818
        %v6919 = vadd.f32 %v6718, %v6823
        %v6920 = vadd.f32 %v6719, %v6826
        %v6921 = vadd.f32 %v6720, %v6831
        %v6922 = vadd.f32 %v6721, %v6834
        %v6923 = vadd.f32 %v6722, %v6839
        %v6924 = vadd.f32 %v6723, %v6842
        %v6925 = vadd.f32 %v6724, %v6847
        %v6926 = vadd.f32 %v6725, %v6850
        %v6927 = vadd.f32 %v6726, %v6855
        %v6928 = vadd.f32 %v6727, %v6858
        %v6929 = vadd.f32 %v6728, %v6863
        %v6930 = vadd.f32 %v6729, %v6866
        %v6931 = vadd.f32 %v6730, %v6871
        %v6932 = vadd.f32 %v6731, %v6874
        %v6933 = vadd.f32 %v6732, %v6879
        %v6934 = vadd.f32 %v6733, %v6882
        %v6935 = vadd.f32 %v6734, %v6887
        %v6936 = vadd.f32 %v6735, %v6890
        %v6937 = vadd.f32 %v6736, %v6895
        %v6938 = vadd.f32 %v6737, %v6898
        %v6939 = vadd.f32 %v6738, %v6903
        %v6940 = vadd.f32 %v6739, %v6906
        %s6941 = scalar_lea.vmem %s3, 14
        %v6942 = vld [vmem:[%s6941] sm:$0x3]
        %v6943 = vshrl.u32 %v5186, 16
        %v6945 = vshll.u32 %v5186, 16
        %v6947 = vrot.slane %v6945, 1
        %v6948 = vor.u32 %v6943, %v6947
        %v6950 = vshll.u32 %v5187, 16
        %v6952 = vrot.slane %v6950, 1
        %v6953 = vsel %vm5191, %v6948, %v6952
        %v6955 = vsel %vm5384, %v6953, 0
        %v6958 = vsel %vm5433, %v6942, 0
        %6960 = vmatprep.subr.bf16.mxu0 0
        %6961 = vmatpush1.bf16.msra.mxu0 0
        %6962 = vmatprep.subr.bf16.mxu0 0
        %6963 = vmatpush1.bf16.msra.mxu0 0
        %6964 = vmatprep.subr.bf16.mxu0 0
        %6965 = vmatpush1.bf16.msra.mxu0 0
        %6966 = vmatprep.subr.bf16.mxu0 0
        %6967 = vmatpush1.bf16.msra.mxu0 0
        %6968 = vmatprep.subr.bf16.mxu0 0
        %6969 = vmatpush1.bf16.msra.mxu0 0
        %6970 = vmatprep.subr.bf16.mxu0 0
        %6971 = vmatpush1.bf16.msra.mxu0 0
        %6972 = vmatprep.subr.bf16.mxu0 0
        %6973 = vmatpush1.bf16.msra.mxu0 0
        %6974 = vmatprep.subr.bf16.mxu0 0
        %6975 = vmatpush1.bf16.msra.mxu0 %v6958
        %6976 = vmatprep.subr.bf16.mxu0 0
        %6977 = vmatpush2.bf16.msra.mxu0 0
        %6978 = vmatprep.subr.bf16.mxu0 0
        %6979 = vmatpush2.bf16.msra.mxu0 0
        %6980 = vmatprep.subr.bf16.mxu0 0
        %6981 = vmatpush2.bf16.msra.mxu0 0
        %6982 = vmatprep.subr.bf16.mxu0 0
        %6983 = vmatpush2.bf16.msra.mxu0 0
        %6984 = vmatprep.subr.bf16.mxu0 0
        %6985 = vmatpush2.bf16.msra.mxu0 0
        %6986 = vmatprep.subr.bf16.mxu0 0
        %6987 = vmatpush2.bf16.msra.mxu0 0
        %6988 = vmatprep.subr.bf16.mxu0 0
        %6989 = vmatpush2.bf16.msra.mxu0 0
        %6990 = vmatprep.subr.bf16.mxu0 0
        %6991 = vmatpush2.bf16.msra.mxu0 0
        %6992 = vmatprep.mubr.bf16.mxu0 0
        %6993 = vmatmul.mubr.bf16.gmra.mxu0 %v5392
        %v6994 = vpop.f32.mrf.mxu0
        %v6995 = vadd.f32 0.0, %v6994
        %v6996 = vpop.f32.mrf.mxu0
        %v6997 = vpop.f32.mrf.mxu0
        %v6998 = vadd.f32 0.0, %v6997
        %v6999 = vpop.f32.mrf.mxu0
        %7000 = vmatprep.mubr.bf16.mxu0 0
        %7001 = vmatmul.mubr.bf16.gmra.mxu0 %v5395
        %v7002 = vpop.f32.mrf.mxu0
        %v7003 = vadd.f32 0.0, %v7002
        %v7004 = vpop.f32.mrf.mxu0
        %v7005 = vpop.f32.mrf.mxu0
        %v7006 = vadd.f32 0.0, %v7005
        %v7007 = vpop.f32.mrf.mxu0
        %7008 = vmatprep.mubr.bf16.mxu0 0
        %7009 = vmatmul.mubr.bf16.gmra.mxu0 %v5398
        %v7010 = vpop.f32.mrf.mxu0
        %v7011 = vadd.f32 0.0, %v7010
        %v7012 = vpop.f32.mrf.mxu0
        %v7013 = vpop.f32.mrf.mxu0
        %v7014 = vadd.f32 0.0, %v7013
        %v7015 = vpop.f32.mrf.mxu0
        %7016 = vmatprep.mubr.bf16.mxu0 0
        %7017 = vmatmul.mubr.bf16.gmra.mxu0 %v5401
        %v7018 = vpop.f32.mrf.mxu0
        %v7019 = vadd.f32 0.0, %v7018
        %v7020 = vpop.f32.mrf.mxu0
        %v7021 = vpop.f32.mrf.mxu0
        %v7022 = vadd.f32 0.0, %v7021
        %v7023 = vpop.f32.mrf.mxu0
        %7024 = vmatprep.mubr.bf16.mxu0 0
        %7025 = vmatmul.mubr.bf16.gmra.mxu0 %v5404
        %v7026 = vpop.f32.mrf.mxu0
        %v7027 = vadd.f32 0.0, %v7026
        %v7028 = vpop.f32.mrf.mxu0
        %v7029 = vpop.f32.mrf.mxu0
        %v7030 = vadd.f32 0.0, %v7029
        %v7031 = vpop.f32.mrf.mxu0
        %7032 = vmatprep.mubr.bf16.mxu0 0
        %7033 = vmatmul.mubr.bf16.gmra.mxu0 %v5407
        %v7034 = vpop.f32.mrf.mxu0
        %v7035 = vadd.f32 0.0, %v7034
        %v7036 = vpop.f32.mrf.mxu0
        %v7037 = vpop.f32.mrf.mxu0
        %v7038 = vadd.f32 0.0, %v7037
        %v7039 = vpop.f32.mrf.mxu0
        %7040 = vmatprep.mubr.bf16.mxu0 0
        %7041 = vmatmul.mubr.bf16.gmra.mxu0 %v5410
        %v7042 = vpop.f32.mrf.mxu0
        %v7043 = vadd.f32 0.0, %v7042
        %v7044 = vpop.f32.mrf.mxu0
        %v7045 = vpop.f32.mrf.mxu0
        %v7046 = vadd.f32 0.0, %v7045
        %v7047 = vpop.f32.mrf.mxu0
        %7048 = vmatprep.mubr.bf16.mxu0 0
        %7049 = vmatmul.mubr.bf16.gmra.mxu0 %v5413
        %v7050 = vpop.f32.mrf.mxu0
        %v7051 = vadd.f32 0.0, %v7050
        %v7052 = vpop.f32.mrf.mxu0
        %v7053 = vpop.f32.mrf.mxu0
        %v7054 = vadd.f32 0.0, %v7053
        %v7055 = vpop.f32.mrf.mxu0
        %7056 = vmatprep.mubr.bf16.mxu0 0
        %7057 = vmatmul.mubr.bf16.gmra.mxu0 %v5416
        %v7058 = vpop.f32.mrf.mxu0
        %v7059 = vadd.f32 0.0, %v7058
        %v7060 = vpop.f32.mrf.mxu0
        %v7061 = vpop.f32.mrf.mxu0
        %v7062 = vadd.f32 0.0, %v7061
        %v7063 = vpop.f32.mrf.mxu0
        %7064 = vmatprep.mubr.bf16.mxu0 0
        %7065 = vmatmul.mubr.bf16.gmra.mxu0 %v5419
        %v7066 = vpop.f32.mrf.mxu0
        %v7067 = vadd.f32 0.0, %v7066
        %v7068 = vpop.f32.mrf.mxu0
        %v7069 = vpop.f32.mrf.mxu0
        %v7070 = vadd.f32 0.0, %v7069
        %v7071 = vpop.f32.mrf.mxu0
        %7072 = vmatprep.mubr.bf16.mxu0 0
        %7073 = vmatmul.mubr.bf16.gmra.mxu0 %v5422
        %v7074 = vpop.f32.mrf.mxu0
        %v7075 = vadd.f32 0.0, %v7074
        %v7076 = vpop.f32.mrf.mxu0
        %v7077 = vpop.f32.mrf.mxu0
        %v7078 = vadd.f32 0.0, %v7077
        %v7079 = vpop.f32.mrf.mxu0
        %7080 = vmatprep.mubr.bf16.mxu0 0
        %7081 = vmatmul.mubr.bf16.gmra.mxu0 %v5425
        %v7082 = vpop.f32.mrf.mxu0
        %v7083 = vadd.f32 0.0, %v7082
        %v7084 = vpop.f32.mrf.mxu0
        %v7085 = vpop.f32.mrf.mxu0
        %v7086 = vadd.f32 0.0, %v7085
        %v7087 = vpop.f32.mrf.mxu0
        %7088 = vmatprep.mubr.bf16.mxu0 0
        %7089 = vmatmul.mubr.bf16.gmra.mxu0 %v5428
        %v7090 = vpop.f32.mrf.mxu0
        %v7091 = vadd.f32 0.0, %v7090
        %v7092 = vpop.f32.mrf.mxu0
        %v7093 = vpop.f32.mrf.mxu0
        %v7094 = vadd.f32 0.0, %v7093
        %v7095 = vpop.f32.mrf.mxu0
        %7096 = vmatprep.mubr.bf16.mxu0 0
        %7097 = vmatmul.mubr.bf16.gmra.mxu0 %v5431
        %v7098 = vpop.f32.mrf.mxu0
        %v7099 = vadd.f32 0.0, %v7098
        %v7100 = vpop.f32.mrf.mxu0
        %v7101 = vpop.f32.mrf.mxu0
        %v7102 = vadd.f32 0.0, %v7101
        %v7103 = vpop.f32.mrf.mxu0
        %7104 = vmatprep.mubr.bf16.mxu0 0
        %7105 = vmatmul.mubr.bf16.gmra.mxu0 %v6336
        %v7106 = vpop.f32.mrf.mxu0
        %v7107 = vadd.f32 0.0, %v7106
        %v7108 = vpop.f32.mrf.mxu0
        %v7109 = vpop.f32.mrf.mxu0
        %v7110 = vadd.f32 0.0, %v7109
        %v7111 = vpop.f32.mrf.mxu0
        %7112 = vmatprep.mubr.bf16.mxu0 0
        %7113 = vmatmul.mubr.bf16.gmra.mxu0 %v6955
        %v7114 = vpop.f32.mrf.mxu0
        %v7115 = vadd.f32 0.0, %v7114
        %v7116 = vpop.f32.mrf.mxu0
        %v7117 = vpop.f32.mrf.mxu0
        %v7118 = vadd.f32 0.0, %v7117
        %v7119 = vpop.f32.mrf.mxu0
        %7120 = vdwg.mxu0
        %v7121 = vadd.f32 %v6909, %v6995
        %v7122 = vadd.f32 %v6910, %v6998
        %v7123 = vadd.f32 %v6911, %v7003
        %v7124 = vadd.f32 %v6912, %v7006
        %v7125 = vadd.f32 %v6913, %v7011
        %v7126 = vadd.f32 %v6914, %v7014
        %v7127 = vadd.f32 %v6915, %v7019
        %v7128 = vadd.f32 %v6916, %v7022
        %v7129 = vadd.f32 %v6917, %v7027
        %v7130 = vadd.f32 %v6918, %v7030
        %v7131 = vadd.f32 %v6919, %v7035
        %v7132 = vadd.f32 %v6920, %v7038
        %v7133 = vadd.f32 %v6921, %v7043
        %v7134 = vadd.f32 %v6922, %v7046
        %v7135 = vadd.f32 %v6923, %v7051
        %v7136 = vadd.f32 %v6924, %v7054
        %v7137 = vadd.f32 %v6925, %v7059
        %v7138 = vadd.f32 %v6926, %v7062
        %v7139 = vadd.f32 %v6927, %v7067
        %v7140 = vadd.f32 %v6928, %v7070
        %v7141 = vadd.f32 %v6929, %v7075
        %v7142 = vadd.f32 %v6930, %v7078
        %v7143 = vadd.f32 %v6931, %v7083
        %v7144 = vadd.f32 %v6932, %v7086
        %v7145 = vadd.f32 %v6933, %v7091
        %v7146 = vadd.f32 %v6934, %v7094
        %v7147 = vadd.f32 %v6935, %v7099
        %v7148 = vadd.f32 %v6936, %v7102
        %v7149 = vadd.f32 %v6937, %v7107
        %v7150 = vadd.f32 %v6938, %v7110
        %v7151 = vadd.f32 %v6939, %v7115
        %v7152 = vadd.f32 %v6940, %v7118
        %s7153 = scalar_lea.vmem %s3, 16
        %v7154 = vld [vmem:[%s7153] sm:$0x3]
        %v7157 = vrot.slane %v5186, 1
        %v7158 = vrot.slane %v5187, 1
        %v7159 = vsel %vm5828, %v7157, %v7158
        %v7161 = vsel %vm5384, %v7159, 0
        %v7164 = vsel %vm5433, %v7154, 0
        %7166 = vmatprep.subr.bf16.mxu0 0
        %7167 = vmatpush1.bf16.msra.mxu0 0
        %7168 = vmatprep.subr.bf16.mxu0 0
        %7169 = vmatpush1.bf16.msra.mxu0 0
        %7170 = vmatprep.subr.bf16.mxu0 0
        %7171 = vmatpush1.bf16.msra.mxu0 0
        %7172 = vmatprep.subr.bf16.mxu0 0
        %7173 = vmatpush1.bf16.msra.mxu0 0
        %7174 = vmatprep.subr.bf16.mxu0 0
        %7175 = vmatpush1.bf16.msra.mxu0 0
        %7176 = vmatprep.subr.bf16.mxu0 0
        %7177 = vmatpush1.bf16.msra.mxu0 0
        %7178 = vmatprep.subr.bf16.mxu0 0
        %7179 = vmatpush1.bf16.msra.mxu0 0
        %7180 = vmatprep.subr.bf16.mxu0 0
        %7181 = vmatpush1.bf16.msra.mxu0 %v7164
        %7182 = vmatprep.subr.bf16.mxu0 0
        %7183 = vmatpush2.bf16.msra.mxu0 0
        %7184 = vmatprep.subr.bf16.mxu0 0
        %7185 = vmatpush2.bf16.msra.mxu0 0
        %7186 = vmatprep.subr.bf16.mxu0 0
        %7187 = vmatpush2.bf16.msra.mxu0 0
        %7188 = vmatprep.subr.bf16.mxu0 0
        %7189 = vmatpush2.bf16.msra.mxu0 0
        %7190 = vmatprep.subr.bf16.mxu0 0
        %7191 = vmatpush2.bf16.msra.mxu0 0
        %7192 = vmatprep.subr.bf16.mxu0 0
        %7193 = vmatpush2.bf16.msra.mxu0 0
        %7194 = vmatprep.subr.bf16.mxu0 0
        %7195 = vmatpush2.bf16.msra.mxu0 0
        %7196 = vmatprep.subr.bf16.mxu0 0
        %7197 = vmatpush2.bf16.msra.mxu0 0
        %7198 = vmatprep.mubr.bf16.mxu0 0
        %7199 = vmatmul.mubr.bf16.gmra.mxu0 %v5884
        %v7200 = vpop.f32.mrf.mxu0
        %v7201 = vadd.f32 0.0, %v7200
        %v7202 = vpop.f32.mrf.mxu0
        %v7203 = vpop.f32.mrf.mxu0
        %v7204 = vadd.f32 0.0, %v7203
        %v7205 = vpop.f32.mrf.mxu0
        %7206 = vmatprep.mubr.bf16.mxu0 0
        %7207 = vmatmul.mubr.bf16.gmra.mxu0 %v5887
        %v7208 = vpop.f32.mrf.mxu0
        %v7209 = vadd.f32 0.0, %v7208
        %v7210 = vpop.f32.mrf.mxu0
        %v7211 = vpop.f32.mrf.mxu0
        %v7212 = vadd.f32 0.0, %v7211
        %v7213 = vpop.f32.mrf.mxu0
        %7214 = vmatprep.mubr.bf16.mxu0 0
        %7215 = vmatmul.mubr.bf16.gmra.mxu0 %v5890
        %v7216 = vpop.f32.mrf.mxu0
        %v7217 = vadd.f32 0.0, %v7216
        %v7218 = vpop.f32.mrf.mxu0
        %v7219 = vpop.f32.mrf.mxu0
        %v7220 = vadd.f32 0.0, %v7219
        %v7221 = vpop.f32.mrf.mxu0
        %7222 = vmatprep.mubr.bf16.mxu0 0
        %7223 = vmatmul.mubr.bf16.gmra.mxu0 %v5893
        %v7224 = vpop.f32.mrf.mxu0
        %v7225 = vadd.f32 0.0, %v7224
        %v7226 = vpop.f32.mrf.mxu0
        %v7227 = vpop.f32.mrf.mxu0
        %v7228 = vadd.f32 0.0, %v7227
        %v7229 = vpop.f32.mrf.mxu0
        %7230 = vmatprep.mubr.bf16.mxu0 0
        %7231 = vmatmul.mubr.bf16.gmra.mxu0 %v5896
        %v7232 = vpop.f32.mrf.mxu0
        %v7233 = vadd.f32 0.0, %v7232
        %v7234 = vpop.f32.mrf.mxu0
        %v7235 = vpop.f32.mrf.mxu0
        %v7236 = vadd.f32 0.0, %v7235
        %v7237 = vpop.f32.mrf.mxu0
        %7238 = vmatprep.mubr.bf16.mxu0 0
        %7239 = vmatmul.mubr.bf16.gmra.mxu0 %v5899
        %v7240 = vpop.f32.mrf.mxu0
        %v7241 = vadd.f32 0.0, %v7240
        %v7242 = vpop.f32.mrf.mxu0
        %v7243 = vpop.f32.mrf.mxu0
        %v7244 = vadd.f32 0.0, %v7243
        %v7245 = vpop.f32.mrf.mxu0
        %7246 = vmatprep.mubr.bf16.mxu0 0
        %7247 = vmatmul.mubr.bf16.gmra.mxu0 %v5902
        %v7248 = vpop.f32.mrf.mxu0
        %v7249 = vadd.f32 0.0, %v7248
        %v7250 = vpop.f32.mrf.mxu0
        %v7251 = vpop.f32.mrf.mxu0
        %v7252 = vadd.f32 0.0, %v7251
        %v7253 = vpop.f32.mrf.mxu0
        %7254 = vmatprep.mubr.bf16.mxu0 0
        %7255 = vmatmul.mubr.bf16.gmra.mxu0 %v5905
        %v7256 = vpop.f32.mrf.mxu0
        %v7257 = vadd.f32 0.0, %v7256
        %v7258 = vpop.f32.mrf.mxu0
        %v7259 = vpop.f32.mrf.mxu0
        %v7260 = vadd.f32 0.0, %v7259
        %v7261 = vpop.f32.mrf.mxu0
        %7262 = vmatprep.mubr.bf16.mxu0 0
        %7263 = vmatmul.mubr.bf16.gmra.mxu0 %v5908
        %v7264 = vpop.f32.mrf.mxu0
        %v7265 = vadd.f32 0.0, %v7264
        %v7266 = vpop.f32.mrf.mxu0
        %v7267 = vpop.f32.mrf.mxu0
        %v7268 = vadd.f32 0.0, %v7267
        %v7269 = vpop.f32.mrf.mxu0
        %7270 = vmatprep.mubr.bf16.mxu0 0
        %7271 = vmatmul.mubr.bf16.gmra.mxu0 %v5911
        %v7272 = vpop.f32.mrf.mxu0
        %v7273 = vadd.f32 0.0, %v7272
        %v7274 = vpop.f32.mrf.mxu0
        %v7275 = vpop.f32.mrf.mxu0
        %v7276 = vadd.f32 0.0, %v7275
        %v7277 = vpop.f32.mrf.mxu0
        %7278 = vmatprep.mubr.bf16.mxu0 0
        %7279 = vmatmul.mubr.bf16.gmra.mxu0 %v5914
        %v7280 = vpop.f32.mrf.mxu0
        %v7281 = vadd.f32 0.0, %v7280
        %v7282 = vpop.f32.mrf.mxu0
        %v7283 = vpop.f32.mrf.mxu0
        %v7284 = vadd.f32 0.0, %v7283
        %v7285 = vpop.f32.mrf.mxu0
        %7286 = vmatprep.mubr.bf16.mxu0 0
        %7287 = vmatmul.mubr.bf16.gmra.mxu0 %v5917
        %v7288 = vpop.f32.mrf.mxu0
        %v7289 = vadd.f32 0.0, %v7288
        %v7290 = vpop.f32.mrf.mxu0
        %v7291 = vpop.f32.mrf.mxu0
        %v7292 = vadd.f32 0.0, %v7291
        %v7293 = vpop.f32.mrf.mxu0
        %7294 = vmatprep.mubr.bf16.mxu0 0
        %7295 = vmatmul.mubr.bf16.gmra.mxu0 %v5920
        %v7296 = vpop.f32.mrf.mxu0
        %v7297 = vadd.f32 0.0, %v7296
        %v7298 = vpop.f32.mrf.mxu0
        %v7299 = vpop.f32.mrf.mxu0
        %v7300 = vadd.f32 0.0, %v7299
        %v7301 = vpop.f32.mrf.mxu0
        %7302 = vmatprep.mubr.bf16.mxu0 0
        %7303 = vmatmul.mubr.bf16.gmra.mxu0 %v5923
        %v7304 = vpop.f32.mrf.mxu0
        %v7305 = vadd.f32 0.0, %v7304
        %v7306 = vpop.f32.mrf.mxu0
        %v7307 = vpop.f32.mrf.mxu0
        %v7308 = vadd.f32 0.0, %v7307
        %v7309 = vpop.f32.mrf.mxu0
        %7310 = vmatprep.mubr.bf16.mxu0 0
        %7311 = vmatmul.mubr.bf16.gmra.mxu0 %v6542
        %v7312 = vpop.f32.mrf.mxu0
        %v7313 = vadd.f32 0.0, %v7312
        %v7314 = vpop.f32.mrf.mxu0
        %v7315 = vpop.f32.mrf.mxu0
        %v7316 = vadd.f32 0.0, %v7315
        %v7317 = vpop.f32.mrf.mxu0
        %7318 = vmatprep.mubr.bf16.mxu0 0
        %7319 = vmatmul.mubr.bf16.gmra.mxu0 %v7161
        %v7320 = vpop.f32.mrf.mxu0
        %v7321 = vadd.f32 0.0, %v7320
        %v7322 = vpop.f32.mrf.mxu0
        %v7323 = vpop.f32.mrf.mxu0
        %v7324 = vadd.f32 0.0, %v7323
        %v7325 = vpop.f32.mrf.mxu0
        %7326 = vdwg.mxu0
        %v7327 = vadd.f32 %v7121, %v7201
        %v7328 = vadd.f32 %v7122, %v7204
        %v7329 = vadd.f32 %v7123, %v7209
        %v7330 = vadd.f32 %v7124, %v7212
        %v7331 = vadd.f32 %v7125, %v7217
        %v7332 = vadd.f32 %v7126, %v7220
        %v7333 = vadd.f32 %v7127, %v7225
        %v7334 = vadd.f32 %v7128, %v7228
        %v7335 = vadd.f32 %v7129, %v7233
        %v7336 = vadd.f32 %v7130, %v7236
        %v7337 = vadd.f32 %v7131, %v7241
        %v7338 = vadd.f32 %v7132, %v7244
        %v7339 = vadd.f32 %v7133, %v7249
        %v7340 = vadd.f32 %v7134, %v7252
        %v7341 = vadd.f32 %v7135, %v7257
        %v7342 = vadd.f32 %v7136, %v7260
        %v7343 = vadd.f32 %v7137, %v7265
        %v7344 = vadd.f32 %v7138, %v7268
        %v7345 = vadd.f32 %v7139, %v7273
        %v7346 = vadd.f32 %v7140, %v7276
        %v7347 = vadd.f32 %v7141, %v7281
        %v7348 = vadd.f32 %v7142, %v7284
        %v7349 = vadd.f32 %v7143, %v7289
        %v7350 = vadd.f32 %v7144, %v7292
        %v7351 = vadd.f32 %v7145, %v7297
        %v7352 = vadd.f32 %v7146, %v7300
        %v7353 = vadd.f32 %v7147, %v7305
        %v7354 = vadd.f32 %v7148, %v7308
        %v7355 = vadd.f32 %v7149, %v7313
        %v7356 = vadd.f32 %v7150, %v7316
        %v7357 = vadd.f32 %v7151, %v7321
        %v7358 = vadd.f32 %v7152, %v7324
        %v7359 = vld [vmem:[%s4] sm:$0x1]
        %v7361 = vlaneseq
        %v7362 = vshrl.u32 %v7361, 7
        %v7363 = vsub.s32 0, %v7362
        %v7364 = vrot.slane %v7359, %v7363
        %v7366 = vadd.f32 %v7327, %v7364
        %v7367 = vadd.f32 %v7328, %v7364
        %v7368 = vadd.f32 %v7329, %v7364
        %v7369 = vadd.f32 %v7330, %v7364
        %v7370 = vadd.f32 %v7331, %v7364
        %v7371 = vadd.f32 %v7332, %v7364
        %v7372 = vadd.f32 %v7333, %v7364
        %v7373 = vadd.f32 %v7334, %v7364
        %v7374 = vadd.f32 %v7335, %v7364
        %v7375 = vadd.f32 %v7336, %v7364
        %v7376 = vadd.f32 %v7337, %v7364
        %v7377 = vadd.f32 %v7338, %v7364
        %v7378 = vadd.f32 %v7339, %v7364
        %v7379 = vadd.f32 %v7340, %v7364
        %v7380 = vadd.f32 %v7341, %v7364
        %v7381 = vadd.f32 %v7342, %v7364
        %v7382 = vadd.f32 %v7343, %v7364
        %v7383 = vadd.f32 %v7344, %v7364
        %v7384 = vadd.f32 %v7345, %v7364
        %v7385 = vadd.f32 %v7346, %v7364
        %v7386 = vadd.f32 %v7347, %v7364
        %v7387 = vadd.f32 %v7348, %v7364
        %v7388 = vadd.f32 %v7349, %v7364
        %v7389 = vadd.f32 %v7350, %v7364
        %v7390 = vadd.f32 %v7351, %v7364
        %v7391 = vadd.f32 %v7352, %v7364
        %v7392 = vadd.f32 %v7353, %v7364
        %v7393 = vadd.f32 %v7354, %v7364
        %v7394 = vadd.f32 %v7355, %v7364
        %v7395 = vadd.f32 %v7356, %v7364
        %v7396 = vadd.f32 %v7357, %v7364
        %v7397 = vadd.f32 %v7358, %v7364
        %v7398 = vmax.f32 %v7366, 0.0
        %v7399 = vmax.f32 %v7367, 0.0
        %v7400 = vmax.f32 %v7368, 0.0
        %v7401 = vmax.f32 %v7369, 0.0
        %v7402 = vmax.f32 %v7370, 0.0
        %v7403 = vmax.f32 %v7371, 0.0
        %v7404 = vmax.f32 %v7372, 0.0
        %v7405 = vmax.f32 %v7373, 0.0
        %v7406 = vmax.f32 %v7374, 0.0
        %v7407 = vmax.f32 %v7375, 0.0
        %v7408 = vmax.f32 %v7376, 0.0
        %v7409 = vmax.f32 %v7377, 0.0
        %v7410 = vmax.f32 %v7378, 0.0
        %v7411 = vmax.f32 %v7379, 0.0
        %v7412 = vmax.f32 %v7380, 0.0
        %v7413 = vmax.f32 %v7381, 0.0
        %v7414 = vmax.f32 %v7382, 0.0
        %v7415 = vmax.f32 %v7383, 0.0
        %v7416 = vmax.f32 %v7384, 0.0
        %v7417 = vmax.f32 %v7385, 0.0
        %v7418 = vmax.f32 %v7386, 0.0
        %v7419 = vmax.f32 %v7387, 0.0
        %v7420 = vmax.f32 %v7388, 0.0
        %v7421 = vmax.f32 %v7389, 0.0
        %v7422 = vmax.f32 %v7390, 0.0
        %v7423 = vmax.f32 %v7391, 0.0
        %v7424 = vmax.f32 %v7392, 0.0
        %v7425 = vmax.f32 %v7393, 0.0
        %v7426 = vmax.f32 %v7394, 0.0
        %v7427 = vmax.f32 %v7395, 0.0
        %v7428 = vmax.f32 %v7396, 0.0
        %v7429 = vmax.f32 %v7397, 0.0
        %v7430 = vpack.c.bf16 %v7399, %v7398
        %v7431 = vpack.c.bf16 %v7401, %v7400
        %v7432 = vpack.c.bf16 %v7403, %v7402
        %v7433 = vpack.c.bf16 %v7405, %v7404
        %v7434 = vpack.c.bf16 %v7407, %v7406
        %v7435 = vpack.c.bf16 %v7409, %v7408
        %v7436 = vpack.c.bf16 %v7411, %v7410
        %v7437 = vpack.c.bf16 %v7413, %v7412
        %v7438 = vpack.c.bf16 %v7415, %v7414
        %v7439 = vpack.c.bf16 %v7417, %v7416
        %v7440 = vpack.c.bf16 %v7419, %v7418
        %v7441 = vpack.c.bf16 %v7421, %v7420
        %v7442 = vpack.c.bf16 %v7423, %v7422
        %v7443 = vpack.c.bf16 %v7425, %v7424
        %v7444 = vpack.c.bf16 %v7427, %v7426
        %v7445 = vpack.c.bf16 %v7429, %v7428
        %v7446 = vld [vmem:[%s5] sm:$0x3]
        %v7447 = vld [vmem:[%s6] sm:$0x1]
        %v7449 = vlaneseq
        %v7450 = vshrl.u32 %v7449, 7
        %v7451 = vsub.s32 0, %v7450
        %v7452 = vrot.slane %v7447, %v7451
        %v7455 = vsel %vm5384, %v7430, 0
        %v7458 = vsel %vm5384, %v7431, 0
        %v7461 = vsel %vm5384, %v7432, 0
        %v7464 = vsel %vm5384, %v7433, 0
        %v7467 = vsel %vm5384, %v7434, 0
        %v7470 = vsel %vm5384, %v7435, 0
        %v7473 = vsel %vm5384, %v7436, 0
        %v7476 = vsel %vm5384, %v7437, 0
        %v7479 = vsel %vm5384, %v7438, 0
        %v7482 = vsel %vm5384, %v7439, 0
        %v7485 = vsel %vm5384, %v7440, 0
        %v7488 = vsel %vm5384, %v7441, 0
        %v7491 = vsel %vm5384, %v7442, 0
        %v7494 = vsel %vm5384, %v7443, 0
        %v7497 = vsel %vm5384, %v7444, 0
        %v7500 = vsel %vm5384, %v7445, 0
        %v7503 = vsel %vm5433, %v7446, 0
        %7505 = vmatprep.subr.bf16.mxu0 0
        %7506 = vmatpush1.bf16.msra.mxu0 0
        %7507 = vmatprep.subr.bf16.mxu0 0
        %7508 = vmatpush1.bf16.msra.mxu0 0
        %7509 = vmatprep.subr.bf16.mxu0 0
        %7510 = vmatpush1.bf16.msra.mxu0 0
        %7511 = vmatprep.subr.bf16.mxu0 0
        %7512 = vmatpush1.bf16.msra.mxu0 0
        %7513 = vmatprep.subr.bf16.mxu0 0
        %7514 = vmatpush1.bf16.msra.mxu0 0
        %7515 = vmatprep.subr.bf16.mxu0 0
        %7516 = vmatpush1.bf16.msra.mxu0 0
        %7517 = vmatprep.subr.bf16.mxu0 0
        %7518 = vmatpush1.bf16.msra.mxu0 0
        %7519 = vmatprep.subr.bf16.mxu0 0
        %7520 = vmatpush1.bf16.msra.mxu0 %v7503
        %7521 = vmatprep.subr.bf16.mxu0 0
        %7522 = vmatpush2.bf16.msra.mxu0 0
        %7523 = vmatprep.subr.bf16.mxu0 0
        %7524 = vmatpush2.bf16.msra.mxu0 0
        %7525 = vmatprep.subr.bf16.mxu0 0
        %7526 = vmatpush2.bf16.msra.mxu0 0
        %7527 = vmatprep.subr.bf16.mxu0 0
        %7528 = vmatpush2.bf16.msra.mxu0 0
        %7529 = vmatprep.subr.bf16.mxu0 0
        %7530 = vmatpush2.bf16.msra.mxu0 0
        %7531 = vmatprep.subr.bf16.mxu0 0
        %7532 = vmatpush2.bf16.msra.mxu0 0
        %7533 = vmatprep.subr.bf16.mxu0 0
        %7534 = vmatpush2.bf16.msra.mxu0 0
        %7535 = vmatprep.subr.bf16.mxu0 0
        %7536 = vmatpush2.bf16.msra.mxu0 0
        %7537 = vmatprep.mubr.bf16.mxu0 0
        %7538 = vmatmul.mubr.bf16.gmra.mxu0 %v7455
        %v7539 = vpop.f32.mrf.mxu0
        %v7540 = vadd.f32 %v7452, %v7539
        %v7541 = vpop.f32.mrf.mxu0
        %v7542 = vpop.f32.mrf.mxu0
        %v7543 = vadd.f32 %v7452, %v7542
        %v7544 = vpop.f32.mrf.mxu0
        %7545 = vmatprep.mubr.bf16.mxu0 0
        %7546 = vmatmul.mubr.bf16.gmra.mxu0 %v7458
        %v7547 = vpop.f32.mrf.mxu0
        %v7548 = vadd.f32 %v7452, %v7547
        %v7549 = vpop.f32.mrf.mxu0
        %v7550 = vpop.f32.mrf.mxu0
        %v7551 = vadd.f32 %v7452, %v7550
        %v7552 = vpop.f32.mrf.mxu0
        %7553 = vmatprep.mubr.bf16.mxu0 0
        %7554 = vmatmul.mubr.bf16.gmra.mxu0 %v7461
        %v7555 = vpop.f32.mrf.mxu0
        %v7556 = vadd.f32 %v7452, %v7555
        %v7557 = vpop.f32.mrf.mxu0
        %v7558 = vpop.f32.mrf.mxu0
        %v7559 = vadd.f32 %v7452, %v7558
        %v7560 = vpop.f32.mrf.mxu0
        %7561 = vmatprep.mubr.bf16.mxu0 0
        %7562 = vmatmul.mubr.bf16.gmra.mxu0 %v7464
        %v7563 = vpop.f32.mrf.mxu0
        %v7564 = vadd.f32 %v7452, %v7563
        %v7565 = vpop.f32.mrf.mxu0
        %v7566 = vpop.f32.mrf.mxu0
        %v7567 = vadd.f32 %v7452, %v7566
        %v7568 = vpop.f32.mrf.mxu0
        %7569 = vmatprep.mubr.bf16.mxu0 0
        %7570 = vmatmul.mubr.bf16.gmra.mxu0 %v7467
        %v7571 = vpop.f32.mrf.mxu0
        %v7572 = vadd.f32 %v7452, %v7571
        %v7573 = vpop.f32.mrf.mxu0
        %v7574 = vpop.f32.mrf.mxu0
        %v7575 = vadd.f32 %v7452, %v7574
        %v7576 = vpop.f32.mrf.mxu0
        %7577 = vmatprep.mubr.bf16.mxu0 0
        %7578 = vmatmul.mubr.bf16.gmra.mxu0 %v7470
        %v7579 = vpop.f32.mrf.mxu0
        %v7580 = vadd.f32 %v7452, %v7579
        %v7581 = vpop.f32.mrf.mxu0
        %v7582 = vpop.f32.mrf.mxu0
        %v7583 = vadd.f32 %v7452, %v7582
        %v7584 = vpop.f32.mrf.mxu0
        %7585 = vmatprep.mubr.bf16.mxu0 0
        %7586 = vmatmul.mubr.bf16.gmra.mxu0 %v7473
        %v7587 = vpop.f32.mrf.mxu0
        %v7588 = vadd.f32 %v7452, %v7587
        %v7589 = vpop.f32.mrf.mxu0
        %v7590 = vpop.f32.mrf.mxu0
        %v7591 = vadd.f32 %v7452, %v7590
        %v7592 = vpop.f32.mrf.mxu0
        %7593 = vmatprep.mubr.bf16.mxu0 0
        %7594 = vmatmul.mubr.bf16.gmra.mxu0 %v7476
        %v7595 = vpop.f32.mrf.mxu0
        %v7596 = vadd.f32 %v7452, %v7595
        %v7597 = vpop.f32.mrf.mxu0
        %v7598 = vpop.f32.mrf.mxu0
        %v7599 = vadd.f32 %v7452, %v7598
        %v7600 = vpop.f32.mrf.mxu0
        %7601 = vmatprep.mubr.bf16.mxu0 0
        %7602 = vmatmul.mubr.bf16.gmra.mxu0 %v7479
        %v7603 = vpop.f32.mrf.mxu0
        %v7604 = vadd.f32 %v7452, %v7603
        %v7605 = vpop.f32.mrf.mxu0
        %v7606 = vpop.f32.mrf.mxu0
        %v7607 = vadd.f32 %v7452, %v7606
        %v7608 = vpop.f32.mrf.mxu0
        %7609 = vmatprep.mubr.bf16.mxu0 0
        %7610 = vmatmul.mubr.bf16.gmra.mxu0 %v7482
        %v7611 = vpop.f32.mrf.mxu0
        %v7612 = vadd.f32 %v7452, %v7611
        %v7613 = vpop.f32.mrf.mxu0
        %v7614 = vpop.f32.mrf.mxu0
        %v7615 = vadd.f32 %v7452, %v7614
        %v7616 = vpop.f32.mrf.mxu0
        %7617 = vmatprep.mubr.bf16.mxu0 0
        %7618 = vmatmul.mubr.bf16.gmra.mxu0 %v7485
        %v7619 = vpop.f32.mrf.mxu0
        %v7620 = vadd.f32 %v7452, %v7619
        %v7621 = vpop.f32.mrf.mxu0
        %v7622 = vpop.f32.mrf.mxu0
        %v7623 = vadd.f32 %v7452, %v7622
        %v7624 = vpop.f32.mrf.mxu0
        %7625 = vmatprep.mubr.bf16.mxu0 0
        %7626 = vmatmul.mubr.bf16.gmra.mxu0 %v7488
        %v7627 = vpop.f32.mrf.mxu0
        %v7628 = vadd.f32 %v7452, %v7627
        %v7629 = vpop.f32.mrf.mxu0
        %v7630 = vpop.f32.mrf.mxu0
        %v7631 = vadd.f32 %v7452, %v7630
        %v7632 = vpop.f32.mrf.mxu0
        %7633 = vmatprep.mubr.bf16.mxu0 0
        %7634 = vmatmul.mubr.bf16.gmra.mxu0 %v7491
        %v7635 = vpop.f32.mrf.mxu0
        %v7636 = vadd.f32 %v7452, %v7635
        %v7637 = vpop.f32.mrf.mxu0
        %v7638 = vpop.f32.mrf.mxu0
        %v7639 = vadd.f32 %v7452, %v7638
        %v7640 = vpop.f32.mrf.mxu0
        %7641 = vmatprep.mubr.bf16.mxu0 0
        %7642 = vmatmul.mubr.bf16.gmra.mxu0 %v7494
        %v7643 = vpop.f32.mrf.mxu0
        %v7644 = vadd.f32 %v7452, %v7643
        %v7645 = vpop.f32.mrf.mxu0
        %v7646 = vpop.f32.mrf.mxu0
        %v7647 = vadd.f32 %v7452, %v7646
        %v7648 = vpop.f32.mrf.mxu0
        %7649 = vmatprep.mubr.bf16.mxu0 0
        %7650 = vmatmul.mubr.bf16.gmra.mxu0 %v7497
        %v7651 = vpop.f32.mrf.mxu0
        %v7652 = vadd.f32 %v7452, %v7651
        %v7653 = vpop.f32.mrf.mxu0
        %v7654 = vpop.f32.mrf.mxu0
        %v7655 = vadd.f32 %v7452, %v7654
        %v7656 = vpop.f32.mrf.mxu0
        %7657 = vmatprep.mubr.bf16.mxu0 0
        %7658 = vmatmul.mubr.bf16.gmra.mxu0 %v7500
        %v7659 = vpop.f32.mrf.mxu0
        %v7660 = vadd.f32 %v7452, %v7659
        %v7661 = vpop.f32.mrf.mxu0
        %v7662 = vpop.f32.mrf.mxu0
        %v7663 = vadd.f32 %v7452, %v7662
        %v7664 = vpop.f32.mrf.mxu0
        %7665 = vdwg.mxu0
        %vm7698 = vcmask 1040384
        %v7699 = vrot.slane %v7540, 7
        %v7700 = vrot.slane %v7543, 7
        %v7701 = vsel %vm7698, %v7699, %v7700
        %v7702 = vrot.slane %v7548, 7
        %v7703 = vrot.slane %v7551, 7
        %v7704 = vsel %vm7698, %v7702, %v7703
        %v7705 = vrot.slane %v7556, 7
        %v7706 = vrot.slane %v7559, 7
        %v7707 = vsel %vm7698, %v7705, %v7706
        %v7708 = vrot.slane %v7564, 7
        %v7709 = vrot.slane %v7567, 7
        %v7710 = vsel %vm7698, %v7708, %v7709
        %v7711 = vrot.slane %v7572, 7
        %v7712 = vrot.slane %v7575, 7
        %v7713 = vsel %vm7698, %v7711, %v7712
        %v7714 = vrot.slane %v7580, 7
        %v7715 = vrot.slane %v7583, 7
        %v7716 = vsel %vm7698, %v7714, %v7715
        %v7717 = vrot.slane %v7588, 7
        %v7718 = vrot.slane %v7591, 7
        %v7719 = vsel %vm7698, %v7717, %v7718
        %v7720 = vrot.slane %v7596, 7
        %v7721 = vrot.slane %v7599, 7
        %v7722 = vsel %vm7698, %v7720, %v7721
        %v7723 = vrot.slane %v7604, 7
        %v7724 = vrot.slane %v7607, 7
        %v7725 = vsel %vm7698, %v7723, %v7724
        %v7726 = vrot.slane %v7612, 7
        %v7727 = vrot.slane %v7615, 7
        %v7728 = vsel %vm7698, %v7726, %v7727
        %v7729 = vrot.slane %v7620, 7
        %v7730 = vrot.slane %v7623, 7
        %v7731 = vsel %vm7698, %v7729, %v7730
        %v7732 = vrot.slane %v7628, 7
        %v7733 = vrot.slane %v7631, 7
        %v7734 = vsel %vm7698, %v7732, %v7733
        %v7735 = vrot.slane %v7636, 7
        %v7736 = vrot.slane %v7639, 7
        %v7737 = vsel %vm7698, %v7735, %v7736
        %v7738 = vrot.slane %v7644, 7
        %v7739 = vrot.slane %v7647, 7
        %v7740 = vsel %vm7698, %v7738, %v7739
        %v7741 = vrot.slane %v7652, 7
        %v7742 = vrot.slane %v7655, 7
        %v7743 = vsel %vm7698, %v7741, %v7742
        %v7744 = vrot.slane %v7660, 7
        %v7745 = vrot.slane %v7663, 7
        %v7746 = vsel %vm7698, %v7744, %v7745
        %v7795 = vadd.f32 %v299, %v7699
        %v7796 = vadd.f32 %v300, %v7701
        %v7797 = vadd.f32 %v301, %v7700
        %v7798 = vadd.f32 %v302, %v7702
        %v7799 = vadd.f32 %v303, %v7704
        %v7800 = vadd.f32 %v304, %v7703
        %v7801 = vadd.f32 %v305, %v7705
        %v7802 = vadd.f32 %v306, %v7707
        %v7803 = vadd.f32 %v307, %v7706
        %v7804 = vadd.f32 %v308, %v7708
        %v7805 = vadd.f32 %v309, %v7710
        %v7806 = vadd.f32 %v310, %v7709
        %v7807 = vadd.f32 %v311, %v7711
        %v7808 = vadd.f32 %v312, %v7713
        %v7809 = vadd.f32 %v313, %v7712
        %v7810 = vadd.f32 %v314, %v7714
        %v7811 = vadd.f32 %v315, %v7716
        %v7812 = vadd.f32 %v316, %v7715
        %v7813 = vadd.f32 %v317, %v7717
        %v7814 = vadd.f32 %v318, %v7719
        %v7815 = vadd.f32 %v319, %v7718
        %v7816 = vadd.f32 %v320, %v7720
        %v7817 = vadd.f32 %v321, %v7722
        %v7818 = vadd.f32 %v322, %v7721
        %v7819 = vadd.f32 %v323, %v7723
        %v7820 = vadd.f32 %v324, %v7725
        %v7821 = vadd.f32 %v325, %v7724
        %v7822 = vadd.f32 %v326, %v7726
        %v7823 = vadd.f32 %v327, %v7728
        %v7824 = vadd.f32 %v328, %v7727
        %v7825 = vadd.f32 %v329, %v7729
        %v7826 = vadd.f32 %v330, %v7731
        %v7827 = vadd.f32 %v331, %v7730
        %v7828 = vadd.f32 %v332, %v7732
        %v7829 = vadd.f32 %v333, %v7734
        %v7830 = vadd.f32 %v334, %v7733
        %v7831 = vadd.f32 %v335, %v7735
        %v7832 = vadd.f32 %v336, %v7737
        %v7833 = vadd.f32 %v337, %v7736
        %v7834 = vadd.f32 %v338, %v7738
        %v7835 = vadd.f32 %v339, %v7740
        %v7836 = vadd.f32 %v340, %v7739
        %v7837 = vadd.f32 %v341, %v7741
        %v7838 = vadd.f32 %v342, %v7743
        %v7839 = vadd.f32 %v343, %v7742
        %v7840 = vadd.f32 %v344, %v7744
        %v7841 = vadd.f32 %v345, %v7746
        %v7842 = vadd.f32 %v346, %v7745
        %v7843 = vmax.f32 %v7795, 0.0
        %v7844 = vmax.f32 %v7796, 0.0
        %v7845 = vmax.f32 %v7797, 0.0
        %v7846 = vmax.f32 %v7798, 0.0
        %v7847 = vmax.f32 %v7799, 0.0
        %v7848 = vmax.f32 %v7800, 0.0
        %v7849 = vmax.f32 %v7801, 0.0
        %v7850 = vmax.f32 %v7802, 0.0
        %v7851 = vmax.f32 %v7803, 0.0
        %v7852 = vmax.f32 %v7804, 0.0
        %v7853 = vmax.f32 %v7805, 0.0
        %v7854 = vmax.f32 %v7806, 0.0
        %v7855 = vmax.f32 %v7807, 0.0
        %v7856 = vmax.f32 %v7808, 0.0
        %v7857 = vmax.f32 %v7809, 0.0
        %v7858 = vmax.f32 %v7810, 0.0
        %v7859 = vmax.f32 %v7811, 0.0
        %v7860 = vmax.f32 %v7812, 0.0
        %v7861 = vmax.f32 %v7813, 0.0
        %v7862 = vmax.f32 %v7814, 0.0
        %v7863 = vmax.f32 %v7815, 0.0
        %v7864 = vmax.f32 %v7816, 0.0
        %v7865 = vmax.f32 %v7817, 0.0
        %v7866 = vmax.f32 %v7818, 0.0
        %v7867 = vmax.f32 %v7819, 0.0
        %v7868 = vmax.f32 %v7820, 0.0
        %v7869 = vmax.f32 %v7821, 0.0
        %v7870 = vmax.f32 %v7822, 0.0
        %v7871 = vmax.f32 %v7823, 0.0
        %v7872 = vmax.f32 %v7824, 0.0
        %v7873 = vmax.f32 %v7825, 0.0
        %v7874 = vmax.f32 %v7826, 0.0
        %v7875 = vmax.f32 %v7827, 0.0
        %v7876 = vmax.f32 %v7828, 0.0
        %v7877 = vmax.f32 %v7829, 0.0
        %v7878 = vmax.f32 %v7830, 0.0
        %v7879 = vmax.f32 %v7831, 0.0
        %v7880 = vmax.f32 %v7832, 0.0
        %v7881 = vmax.f32 %v7833, 0.0
        %v7882 = vmax.f32 %v7834, 0.0
        %v7883 = vmax.f32 %v7835, 0.0
        %v7884 = vmax.f32 %v7836, 0.0
        %v7885 = vmax.f32 %v7837, 0.0
        %v7886 = vmax.f32 %v7838, 0.0
        %v7887 = vmax.f32 %v7839, 0.0
        %v7888 = vmax.f32 %v7840, 0.0
        %v7889 = vmax.f32 %v7841, 0.0
        %v7890 = vmax.f32 %v7842, 0.0
        %vm7891 = vcmask 130049
        %7892 = vst.msk [vmem:[%s285 - $0x1] sm:$0xfe] %vm7891, %v7843
        %7893 = vst.msk [vmem:[%s285 + $0x7] sm:$0xff] %vm2637, %v7844
        %vm7894 = vcmask 122880
        %7895 = vst.msk [vmem:[%s285 + $0xf] sm:$0x1] %vm7894, %v7845
        %7896 = vst.msk [vmem:[%s285 + $0xf] sm:$0xfe] %vm7891, %v7846
        %7897 = vst.msk [vmem:[%s285 + $0x17] sm:$0xff] %vm2637, %v7847
        %7898 = vst.msk [vmem:[%s285 + $0x1f] sm:$0x1] %vm7894, %v7848
        %7899 = vst.msk [vmem:[%s285 + $0x1f] sm:$0xfe] %vm7891, %v7849
        %7900 = vst.msk [vmem:[%s285 + $0x27] sm:$0xff] %vm2637, %v7850
        %7901 = vst.msk [vmem:[%s285 + $0x2f] sm:$0x1] %vm7894, %v7851
        %7902 = vst.msk [vmem:[%s285 + $0x2f] sm:$0xfe] %vm7891, %v7852
        %7903 = vst.msk [vmem:[%s285 + $0x37] sm:$0xff] %vm2637, %v7853
        %7904 = vst.msk [vmem:[%s285 + $0x3f] sm:$0x1] %vm7894, %v7854
        %7905 = vst.msk [vmem:[%s285 + $0x3f] sm:$0xfe] %vm7891, %v7855
        %7906 = vst.msk [vmem:[%s285 + $0x47] sm:$0xff] %vm2637, %v7856
        %7907 = vst.msk [vmem:[%s285 + $0x4f] sm:$0x1] %vm7894, %v7857
        %7908 = vst.msk [vmem:[%s285 + $0x4f] sm:$0xfe] %vm7891, %v7858
        %7909 = vst.msk [vmem:[%s285 + $0x57] sm:$0xff] %vm2637, %v7859
        %7910 = vst.msk [vmem:[%s285 + $0x5f] sm:$0x1] %vm7894, %v7860
        %7911 = vst.msk [vmem:[%s285 + $0x5f] sm:$0xfe] %vm7891, %v7861
        %7912 = vst.msk [vmem:[%s285 + $0x67] sm:$0xff] %vm2637, %v7862
        %7913 = vst.msk [vmem:[%s285 + $0x6f] sm:$0x1] %vm7894, %v7863
        %7914 = vst.msk [vmem:[%s285 + $0x6f] sm:$0xfe] %vm7891, %v7864
        %7915 = vst.msk [vmem:[%s285 + $0x77] sm:$0xff] %vm2637, %v7865
        %7916 = vst.msk [vmem:[%s285 + $0x7f] sm:$0x1] %vm7894, %v7866
        %7917 = vst.msk [vmem:[%s285 + $0x7f] sm:$0xfe] %vm7891, %v7867
        %7918 = vst.msk [vmem:[%s285 + $0x87] sm:$0xff] %vm2637, %v7868
        %7919 = vst.msk [vmem:[%s285 + $0x8f] sm:$0x1] %vm7894, %v7869
        %7920 = vst.msk [vmem:[%s285 + $0x8f] sm:$0xfe] %vm7891, %v7870
        %7921 = vst.msk [vmem:[%s285 + $0x97] sm:$0xff] %vm2637, %v7871
        %7922 = vst.msk [vmem:[%s285 + $0x9f] sm:$0x1] %vm7894, %v7872
        %7923 = vst.msk [vmem:[%s285 + $0x9f] sm:$0xfe] %vm7891, %v7873
        %7924 = vst.msk [vmem:[%s285 + $0xa7] sm:$0xff] %vm2637, %v7874
        %7925 = vst.msk [vmem:[%s285 + $0xaf] sm:$0x1] %vm7894, %v7875
        %7926 = vst.msk [vmem:[%s285 + $0xaf] sm:$0xfe] %vm7891, %v7876
        %7927 = vst.msk [vmem:[%s285 + $0xb7] sm:$0xff] %vm2637, %v7877
        %7928 = vst.msk [vmem:[%s285 + $0xbf] sm:$0x1] %vm7894, %v7878
        %7929 = vst.msk [vmem:[%s285 + $0xbf] sm:$0xfe] %vm7891, %v7879
        %7930 = vst.msk [vmem:[%s285 + $0xc7] sm:$0xff] %vm2637, %v7880
        %7931 = vst.msk [vmem:[%s285 + $0xcf] sm:$0x1] %vm7894, %v7881
        %7932 = vst.msk [vmem:[%s285 + $0xcf] sm:$0xfe] %vm7891, %v7882
        %7933 = vst.msk [vmem:[%s285 + $0xd7] sm:$0xff] %vm2637, %v7883
        %7934 = vst.msk [vmem:[%s285 + $0xdf] sm:$0x1] %vm7894, %v7884
        %7935 = vst.msk [vmem:[%s285 + $0xdf] sm:$0xfe] %vm7891, %v7885
        %7936 = vst.msk [vmem:[%s285 + $0xe7] sm:$0xff] %vm2637, %v7886
        %7937 = vst.msk [vmem:[%s285 + $0xef] sm:$0x1] %vm7894, %v7887
        %7938 = vst.msk [vmem:[%s285 + $0xef] sm:$0xfe] %vm7891, %v7888
        %7939 = vst.msk [vmem:[%s285 + $0xf7] sm:$0xff] %vm2637, %v7889
        %7940 = vst.msk [vmem:[%s285 + $0xff] sm:$0x1] %vm7894, %v7890
        %s7941 = sand.u32 %s195, 1
        %s7942 = scalar_lea.sflag [#allocation3], %s7941
        %s7943 = sand.u32 %s195, 1
        %s7944 = smul.addr %s7943, 256
        %s7945 = scalar_lea.vmem [#allocation2], %s7944
        // Predicated region
        $region49: #{tpu_custom_call.1} parent=47 // pred_check
          %p7946 = pneg %p205
        $region50: #{tpu_custom_call.1} parent=47 // pred_check_branch
          %7948 = sbr.rel (%p7946) target = $region52
        $region51: #{tpu_custom_call.1} parent=47 // pred_region
          %s7949 = smul.u32 16, %s26
          %s7951 = ssub.s32 4096, 4096
          %7952 = vsyncadd %s7942, %s7951
          %s7953 = smul.addr %s7949, 2
          %s7954 = smul.addr %s25, 32
          %s7955 = sadd.s32 %s7953, %s7954
          %s7956 = smul.addr %s7955, 128
          %s7957 = scalar_lea.hbm %s7, %s7956
          %s7958 = sshll.u32 %s7945, 4
          %s7959 = int_to_ptr.vmem [resolvable:$true] %s7958
          %7964 = dma.vmem_to_hbm [thread:$0]  %s7959, 4096, %s7957, %s7942, 128, 128, 8
        $region52: #{tpu_custom_call.1} parent=47 // pred_fallthru
          _
      $region48: #{tpu_custom_call.1} parent=5 // pred_fallthru
        _
      %p7965 = scmp.le.s32.totalorder 2, %s16
      // Predicated region
      $region53: #{tpu_custom_call.1} parent=5 // pred_check
        %p7966 = pneg %p7965
      $region54: #{tpu_custom_call.1} parent=5 // pred_check_branch
        %7968 = sbr.rel (%p7966) target = $region56
      $region55: #{tpu_custom_call.1} parent=5 // pred_region
        %s7969 = ssub.s32 %s16, 2
        // Predicated region
        $region57: #{tpu_custom_call.1} parent=55 // pred_check
          %p7970 = pneg %p211
        $region58: #{tpu_custom_call.1} parent=55 // pred_check_branch
          %7972 = sbr.rel (%p7970) target = $region60
        $region59: #{tpu_custom_call.1} parent=55 // pred_region
          %s7973 = sand.u32 %s196, 1
          %s7974 = scalar_lea.sflag [#allocation3], %s7973
          %s7975 = sand.u32 %s196, 1
          %s7976 = smul.addr %s7975, 256
          %s7977 = scalar_lea.vmem [#allocation2], %s7976
          %7978 = dma.done %s7974, 4096
        $region60: #{tpu_custom_call.1} parent=55 // pred_fallthru
          _
      $region56: #{tpu_custom_call.1} parent=5 // pred_fallthru
        _
    $region6: #{tpu_custom_call.1} parent=1 // loop_footer
      %s20 = sadd.s32 1, %s16
    $region7: #{tpu_custom_call.1} parent=1 // loop_footer_branch
      %15 = sbr.rel target = $region3
    $region8: #{tpu_custom_call.1} parent=1 // loop_exit
      _
    %7979 = vsyncpa [#allocation3], 1
    %s7980 = scalar_lea.sflag [#allocation3], 1
    %7981 = vsyncpa %s7980, 1

</llo_original>
